<compile_context>
chip_gen: v6e
topology: v6e:2x2x1
jax: 0.10.0
libtpu: 0.0.40
codegen_flags: <defaults>
</compile_context>

<pallas_src>
import functools

import jax
import jax.numpy as jnp
from jax.experimental import pallas as pl
from jax.experimental.pallas import tpu as pltpu


def _round_up(x, m):
    return ((x + m - 1) // m) * m


# ----------------------------------------------------------------------------- kernel
def fused_mlp_kernel(x_ref, w1_ref, b1_ref, w2_hbm, b2_ref, w3_hbm, b3_ref,
                     o_ref, w2_vmem, w3_vmem, sem):
    """One batch tile of relu(x@W1+b1) -> relu(@W2+b2) -> @W3+b3 (padded widths).

    W1/b1/b2/b3 arrive via the (single-buffered) BlockSpec pipeline; W2/W3 are DMA'd
    manually from HBM into persistent VMEM scratch on each core's first batch step,
    overlapped with the layer-1 matmul.
    """
    step = pl.program_id(1)          # inner (arbitrary) batch-step axis

    w2_cp = pltpu.make_async_copy(w2_hbm, w2_vmem, sem.at[0])
    w3_cp = pltpu.make_async_copy(w3_hbm, w3_vmem, sem.at[1])

    @pl.when(step == 0)
    def _start_weight_dma():         # issue before any compute; hidden behind layer 1
        w2_cp.start()
        w3_cp.start()

    # ---- layer 1: (tm, K1) @ (K1, H1), f32 accumulate, bias+ReLU in f32 -> bf16.
    h = jnp.dot(x_ref[...], w1_ref[...], preferred_element_type=jnp.float32)
    h = jnp.maximum(h + b1_ref[...], 0.0).astype(jnp.bfloat16)

    @pl.when(step == 0)
    def _wait_weight_dma():          # W2/W3 only needed from here on
        w2_cp.wait()
        w3_cp.wait()

    # ---- layers 2 + 3, chunked over H2 so the live f32 intermediate is (tm, 512).
    tm = x_ref.shape[0]
    h2p = w2_vmem.shape[1]
    np_ = o_ref.shape[1]
    chunk = 512
    acc = jnp.zeros((tm, np_), jnp.float32)
    for c0 in range(0, h2p, chunk):  # static 4-iteration loop (H2p = 2048)
        h2 = jnp.dot(h, w2_vmem[:, c0:c0 + chunk],
                     preferred_element_type=jnp.float32)
        h2 = jnp.maximum(h2 + b2_ref[:, c0:c0 + chunk], 0.0).astype(jnp.bfloat16)
        acc = acc + jnp.dot(h2, w3_vmem[c0:c0 + chunk, :],
                            preferred_element_type=jnp.float32)

    o_ref[...] = (acc + b3_ref[...]).astype(o_ref.dtype)


# ----------------------------------------------------------------------------- params
def init_richboynet_params(key, hidden_size_1=1000, hidden_size_2=2000):
    """nn.Linear-style init (uniform +/- 1/sqrt(fan_in)); weights stored (in, out) == W.T."""
    dims = [(28 * 28, hidden_size_1), (hidden_size_1, hidden_size_2), (hidden_size_2, 10)]
    params = []
    for fan_in, fan_out in dims:
        key, kw, kb = jax.random.split(key, 3)
        bound = 1.0 / jnp.sqrt(fan_in)
        w = jax.random.uniform(kw, (fan_in, fan_out), jnp.float32, -bound, bound)
        b = jax.random.uniform(kb, (fan_out,), jnp.float32, -bound, bound)
        params.append((w, b))
    return params


def pack_params(params):
    """Pad weights/biases once to 128-multiples; weights -> bf16, biases stay f32 (1, Np)."""
    packed = []
    for w, b in params:
        K, N = w.shape
        Kp, Np = _round_up(K, 128), _round_up(N, 128)
        wp = jnp.pad(w, ((0, Kp - K), (0, Np - N))).astype(jnp.bfloat16)
        bp = jnp.pad(b, (0, Np - N)).reshape(1, Np).astype(jnp.float32)
        packed.append((wp, bp))
    return packed


# ----------------------------------------------------------------------------- forward
def richboynet_forward(img, packed_params, *, tm_max=256):
    """Forward identical to RichBoyNet.forward; img is (N,1,28,28) or (N,28,28)."""
    (w1p, b1p), (w2p, b2p), (w3p, b3p) = packed_params
    x = img.reshape(-1, 28 * 28).astype(jnp.float32)      # img.view(-1, 784)
    M, K = x.shape

    K1p, H1p = w1p.shape
    _, H2p = w2p.shape
    _, Np = w3p.shape

    # Batch tile: multiple of 16 (bf16 sublane packing); when the batch is large
    # enough for >= 2 tiles of 128, cap tm so we always get >= 2 tiles (v7x megacore).
    m16 = _round_up(M, 16)
    if m16 >= 2 * 128:
        tm = min(tm_max, _round_up(-(-m16 // 2), 16))
    else:
        tm = min(tm_max, m16)

    n_tiles = -(-M // tm)
    n_cores = 2 if n_tiles >= 2 else 1         # outer "parallel" axis (v7x: 2 TCs)
    steps = -(-n_tiles // n_cores)
    Mp = tm * n_cores * steps

    # Only the activation gets padded per call (rows to tile multiple, cols to padded K).
    xp = jnp.pad(x, ((0, Mp - M), (0, K1p - K))).astype(jnp.bfloat16)

    batch_map = lambda c, i: (c * steps + i, 0)
    const_map = lambda c, i: (0, 0)            # resident blocks: same block every step
    resident = pl.Buffered(1)                  # constant index_map -> single buffer

    out = pl.pallas_call(
        fused_mlp_kernel,
        out_shape=jax.ShapeDtypeStruct((Mp, Np), jnp.float32),
        grid_spec=pltpu.PrefetchScalarGridSpec(
            num_scalar_prefetch=0,
            grid=(n_cores, steps),
            in_specs=[
                pl.BlockSpec((tm, K1p), batch_map),                              # x tile
                pl.BlockSpec((K1p, H1p), const_map, pipeline_mode=resident),     # W1
                pl.BlockSpec((1, H1p), const_map, pipeline_mode=resident),       # b1
                pl.BlockSpec(memory_space=pl.ANY),                               # W2 (HBM)
                pl.BlockSpec((1, H2p), const_map, pipeline_mode=resident),       # b2
                pl.BlockSpec(memory_space=pl.ANY),                               # W3 (HBM)
                pl.BlockSpec((1, Np), const_map, pipeline_mode=resident),        # b3
            ],
            out_specs=pl.BlockSpec((tm, Np), batch_map),
            scratch_shapes=[
                pltpu.VMEM((H1p, H2p), jnp.bfloat16),    # W2 resident copy (per core)
                pltpu.VMEM((H2p, Np), jnp.bfloat16),     # W3 resident copy (per core)
                pltpu.SemaphoreType.DMA((2,)),
            ],
        ),
        compiler_params=pltpu.CompilerParams(
            dimension_semantics=("parallel", "arbitrary"),
            vmem_limit_bytes=32 * 1024 * 1024,
        ),
    )(xp, w1p, b1p, w2p, b2p, w3p, b3p)

    return out[:M, :10]


# ----------------------------------------------------------------------------- main
if __name__ == "__main__":
    key = jax.random.PRNGKey(0)
    k_params, k_img = jax.random.split(key)

    params = init_richboynet_params(k_params)
    packed = pack_params(params)

    forward = jax.jit(functools.partial(richboynet_forward))

    # Reference with the same bf16 cast points / f32 accumulation (plain JAX).
    def ref_forward(xf, ps):
        (w1, b1), (w2, b2), (w3, b3) = ps
        h = jnp.dot(xf.astype(jnp.bfloat16), w1.astype(jnp.bfloat16),
                    preferred_element_type=jnp.float32) + b1
        h = jnp.maximum(h, 0.0)
        h = jnp.dot(h.astype(jnp.bfloat16), w2.astype(jnp.bfloat16),
                    preferred_element_type=jnp.float32) + b2
        h = jnp.maximum(h, 0.0)
        return jnp.dot(h.astype(jnp.bfloat16), w3.astype(jnp.bfloat16),
                       preferred_element_type=jnp.float32) + b3

    # --- small MNIST-shaped NCHW batch: single-tile grid path.
    img = jax.random.normal(k_img, (2, 1, 28, 28), dtype=jnp.float32)
    logits = forward(img, packed)
    jax.block_until_ready(logits)
    assert logits.shape == (2, 10), logits.shape
    assert logits.dtype == jnp.float32

    x_flat = img.reshape(-1, 28 * 28)
    ref = ref_forward(x_flat, params)
    assert jnp.allclose(logits, ref, atol=2e-2, rtol=2e-2), float(
        jnp.max(jnp.abs(logits - ref)))

    # Loose sanity check against the pure-f32 PyTorch-equivalent math.
    ref32 = jnp.maximum(x_flat @ params[0][0] + params[0][1], 0.0)
    ref32 = jnp.maximum(ref32 @ params[1][0] + params[1][1], 0.0)
    ref32 = ref32 @ params[2][0] + params[2][1]
    assert jnp.allclose(logits, ref32, atol=1e-1, rtol=1e-1)

    # --- larger batch: exercises the 2-way outer split, multi-step grid and row padding.
    img_big = jax.random.normal(jax.random.PRNGKey(1), (300, 1, 28, 28), dtype=jnp.float32)
    logits_big = forward(img_big, packed)
    jax.block_until_ready(logits_big)
    assert logits_big.shape == (300, 10), logits_big.shape
    ref_big = ref_forward(img_big.reshape(-1, 28 * 28), params)
    assert jnp.allclose(logits_big, ref_big, atol=2e-2, rtol=2e-2), float(
        jnp.max(jnp.abs(logits_big - ref_big)))

    print("KERNEL_OK")
</pallas_src>

<mosaic_0001>
module attributes {stable_mosaic.version = 11 : i64} {
  func.func @fused_mlp_kernel(%arg0: i32, %arg1: i32, %arg2: memref<16x896xbf16, #tpu.memory_space<vmem>>, %arg3: memref<896x1024xbf16, #tpu.memory_space<vmem>>, %arg4: memref<1x1024xf32, #tpu.memory_space<vmem>>, %arg5: memref<1024x2048xbf16, #tpu.memory_space<any>>, %arg6: memref<1x2048xf32, #tpu.memory_space<vmem>>, %arg7: memref<2048x128xbf16, #tpu.memory_space<any>>, %arg8: memref<1x128xf32, #tpu.memory_space<vmem>>, %arg9: memref<16x128xf32, #tpu.memory_space<vmem>>, %arg10: memref<1024x2048xbf16, #tpu.memory_space<vmem>>, %arg11: memref<2048x128xbf16, #tpu.memory_space<vmem>>, %arg12: memref<2x!tpu.dma_semaphore, #tpu.memory_space<semaphore_mem>>) attributes {dimension_semantics = [#tpu.dimension_semantics<parallel>, #tpu.dimension_semantics<arbitrary>], iteration_bounds = array<i64: 1, 1>, scalar_prefetch = 0 : i64, scratch_operands = 3 : i64, tpu.core_type = #tpu.core_type<tc>, window_params = [{transform_indices = @transform_0, window_bounds = array<i64: 16, 896>}, {pipeline_mode = #tpu.pipeline_mode<synchronous>, transform_indices = @transform_1, window_bounds = array<i64: 896, 1024>}, {pipeline_mode = #tpu.pipeline_mode<synchronous>, transform_indices = @transform_2, window_bounds = array<i64: 1, 1024>}, {}, {pipeline_mode = #tpu.pipeline_mode<synchronous>, transform_indices = @transform_4, window_bounds = array<i64: 1, 2048>}, {}, {pipeline_mode = #tpu.pipeline_mode<synchronous>, transform_indices = @transform_6, window_bounds = array<i64: 1, 128>}, {transform_indices = @transform_7, window_bounds = array<i64: 16, 128>}]} {
    %c0_i32 = arith.constant 0 : i32
    %0 = arith.cmpi eq, %arg1, %c0_i32 : i32
    %1 = arith.extui %0 : i1 to i32
    %c0_i32_0 = arith.constant 0 : i32
    %c1_i32 = arith.constant 1 : i32
    %c0_i32_1 = arith.constant 0 : i32
    %2 = arith.cmpi ne, %1, %c0_i32_1 : i32
    scf.if %2 {
      %64 = tpu.memref_slice %arg12[%c0_i32_0] : memref<2x!tpu.dma_semaphore, #tpu.memory_space<semaphore_mem>> -> memref<1x!tpu.dma_semaphore, #tpu.memory_space<semaphore_mem>>
      %65 = tpu.memref_squeeze %64 : memref<1x!tpu.dma_semaphore, #tpu.memory_space<semaphore_mem>> -> memref<!tpu.dma_semaphore, #tpu.memory_space<semaphore_mem>>
      tpu.enqueue_dma source(%arg5 : memref<1024x2048xbf16, #tpu.memory_space<any>>) target(%arg10 : memref<1024x2048xbf16, #tpu.memory_space<vmem>>) target_semaphore(%65 : memref<!tpu.dma_semaphore, #tpu.memory_space<semaphore_mem>>)
      %66 = tpu.memref_slice %arg12[%c1_i32] : memref<2x!tpu.dma_semaphore, #tpu.memory_space<semaphore_mem>> -> memref<1x!tpu.dma_semaphore, #tpu.memory_space<semaphore_mem>>
      %67 = tpu.memref_squeeze %66 : memref<1x!tpu.dma_semaphore, #tpu.memory_space<semaphore_mem>> -> memref<!tpu.dma_semaphore, #tpu.memory_space<semaphore_mem>>
      tpu.enqueue_dma source(%arg7 : memref<2048x128xbf16, #tpu.memory_space<any>>) target(%arg11 : memref<2048x128xbf16, #tpu.memory_space<vmem>>) target_semaphore(%67 : memref<!tpu.dma_semaphore, #tpu.memory_space<semaphore_mem>>)
    } else {
    }
    %c0 = arith.constant 0 : index
    %c0_2 = arith.constant 0 : index
    %3 = vector.load %arg2[%c0, %c0_2] : memref<16x896xbf16, #tpu.memory_space<vmem>>, vector<16x896xbf16>
    %c0_3 = arith.constant 0 : index
    %c0_4 = arith.constant 0 : index
    %4 = vector.load %arg3[%c0_3, %c0_4] : memref<896x1024xbf16, #tpu.memory_space<vmem>>, vector<896x1024xbf16>
    %cst = arith.constant dense<0.000000e+00> : vector<16x1024xf32>
    %5 = tpu.matmul %3, %4, %cst {dimension_numbers = #tpu.dot_dimension_numbers<[1], [0], [0], [1], [0, 0, 1, 1], [], []>} : vector<16x896xbf16>, vector<896x1024xbf16>, vector<16x1024xf32> -> vector<16x1024xf32>
    %c0_5 = arith.constant 0 : index
    %c0_6 = arith.constant 0 : index
    %6 = vector.load %arg4[%c0_5, %c0_6] : memref<1x1024xf32, #tpu.memory_space<vmem>>, vector<1x1024xf32>
    %7 = vector.broadcast %6 : vector<1x1024xf32> to vector<16x1024xf32>
    %8 = arith.addf %5, %7 : vector<16x1024xf32>
    %cst_7 = arith.constant 0.000000e+00 : f32
    %9 = vector.broadcast %cst_7 : f32 to vector<16x1024xf32>
    %10 = arith.maximumf %8, %9 : vector<16x1024xf32>
    %11 = arith.truncf %10 : vector<16x1024xf32> to vector<16x1024xbf16>
    %c0_i32_8 = arith.constant 0 : i32
    %12 = arith.cmpi eq, %arg1, %c0_i32_8 : i32
    %13 = arith.extui %12 : i1 to i32
    %c0_i32_9 = arith.constant 0 : i32
    %c1_i32_10 = arith.constant 1 : i32
    %c0_i32_11 = arith.constant 0 : i32
    %14 = arith.cmpi ne, %13, %c0_i32_11 : i32
    scf.if %14 {
      %64 = tpu.memref_slice %arg12[%c0_i32_9] : memref<2x!tpu.dma_semaphore, #tpu.memory_space<semaphore_mem>> -> memref<1x!tpu.dma_semaphore, #tpu.memory_space<semaphore_mem>>
      %65 = tpu.memref_squeeze %64 : memref<1x!tpu.dma_semaphore, #tpu.memory_space<semaphore_mem>> -> memref<!tpu.dma_semaphore, #tpu.memory_space<semaphore_mem>>
      tpu.wait_dma2 semaphore(%65 : memref<!tpu.dma_semaphore, #tpu.memory_space<semaphore_mem>>) src(%arg5 : memref<1024x2048xbf16, #tpu.memory_space<any>>) dst(%arg10 : memref<1024x2048xbf16, #tpu.memory_space<vmem>>)
      %66 = tpu.memref_slice %arg12[%c1_i32_10] : memref<2x!tpu.dma_semaphore, #tpu.memory_space<semaphore_mem>> -> memref<1x!tpu.dma_semaphore, #tpu.memory_space<semaphore_mem>>
      %67 = tpu.memref_squeeze %66 : memref<1x!tpu.dma_semaphore, #tpu.memory_space<semaphore_mem>> -> memref<!tpu.dma_semaphore, #tpu.memory_space<semaphore_mem>>
      tpu.wait_dma2 semaphore(%67 : memref<!tpu.dma_semaphore, #tpu.memory_space<semaphore_mem>>) src(%arg7 : memref<2048x128xbf16, #tpu.memory_space<any>>) dst(%arg11 : memref<2048x128xbf16, #tpu.memory_space<vmem>>)
    } else {
    }
    %cst_12 = arith.constant 0.000000e+00 : f32
    %15 = vector.broadcast %cst_12 : f32 to vector<16x128xf32>
    %c0_13 = arith.constant 0 : index
    %c0_14 = arith.constant 0 : index
    %16 = vector.load %arg10[%c0_13, %c0_14] : memref<1024x2048xbf16, #tpu.memory_space<vmem>>, vector<1024x512xbf16>
    %cst_15 = arith.constant dense<0.000000e+00> : vector<16x512xf32>
    %17 = tpu.matmul %11, %16, %cst_15 {dimension_numbers = #tpu.dot_dimension_numbers<[1], [0], [0], [1], [0, 0, 1, 1], [], []>} : vector<16x1024xbf16>, vector<1024x512xbf16>, vector<16x512xf32> -> vector<16x512xf32>
    %c0_16 = arith.constant 0 : index
    %c0_17 = arith.constant 0 : index
    %18 = vector.load %arg6[%c0_16, %c0_17] : memref<1x2048xf32, #tpu.memory_space<vmem>>, vector<1x512xf32>
    %19 = vector.broadcast %18 : vector<1x512xf32> to vector<16x512xf32>
    %20 = arith.addf %17, %19 : vector<16x512xf32>
    %cst_18 = arith.constant 0.000000e+00 : f32
    %21 = vector.broadcast %cst_18 : f32 to vector<16x512xf32>
    %22 = arith.maximumf %20, %21 : vector<16x512xf32>
    %23 = arith.truncf %22 : vector<16x512xf32> to vector<16x512xbf16>
    %c0_19 = arith.constant 0 : index
    %c0_20 = arith.constant 0 : index
    %24 = vector.load %arg11[%c0_19, %c0_20] : memref<2048x128xbf16, #tpu.memory_space<vmem>>, vector<512x128xbf16>
    %cst_21 = arith.constant dense<0.000000e+00> : vector<16x128xf32>
    %25 = tpu.matmul %23, %24, %cst_21 {dimension_numbers = #tpu.dot_dimension_numbers<[1], [0], [0], [1], [0, 0, 1, 1], [], []>} : vector<16x512xbf16>, vector<512x128xbf16>, vector<16x128xf32> -> vector<16x128xf32>
    %26 = arith.addf %15, %25 : vector<16x128xf32>
    %c0_22 = arith.constant 0 : index
    %c512 = arith.constant 512 : index
    %27 = vector.load %arg10[%c0_22, %c512] : memref<1024x2048xbf16, #tpu.memory_space<vmem>>, vector<1024x512xbf16>
    %cst_23 = arith.constant dense<0.000000e+00> : vector<16x512xf32>
    %28 = tpu.matmul %11, %27, %cst_23 {dimension_numbers = #tpu.dot_dimension_numbers<[1], [0], [0], [1], [0, 0, 1, 1], [], []>} : vector<16x1024xbf16>, vector<1024x512xbf16>, vector<16x512xf32> -> vector<16x512xf32>
    %c0_24 = arith.constant 0 : index
    %c512_25 = arith.constant 512 : index
    %29 = vector.load %arg6[%c0_24, %c512_25] : memref<1x2048xf32, #tpu.memory_space<vmem>>, vector<1x512xf32>
    %30 = vector.broadcast %29 : vector<1x512xf32> to vector<16x512xf32>
    %31 = arith.addf %28, %30 : vector<16x512xf32>
    %cst_26 = arith.constant 0.000000e+00 : f32
    %32 = vector.broadcast %cst_26 : f32 to vector<16x512xf32>
    %33 = arith.maximumf %31, %32 : vector<16x512xf32>
    %34 = arith.truncf %33 : vector<16x512xf32> to vector<16x512xbf16>
    %c512_27 = arith.constant 512 : index
    %c0_28 = arith.constant 0 : index
    %35 = vector.load %arg11[%c512_27, %c0_28] : memref<2048x128xbf16, #tpu.memory_space<vmem>>, vector<512x128xbf16>
    %cst_29 = arith.constant dense<0.000000e+00> : vector<16x128xf32>
    %36 = tpu.matmul %34, %35, %cst_29 {dimension_numbers = #tpu.dot_dimension_numbers<[1], [0], [0], [1], [0, 0, 1, 1], [], []>} : vector<16x512xbf16>, vector<512x128xbf16>, vector<16x128xf32> -> vector<16x128xf32>
    %37 = arith.addf %26, %36 : vector<16x128xf32>
    %c0_30 = arith.constant 0 : index
    %c1024 = arith.constant 1024 : index
    %38 = vector.load %arg10[%c0_30, %c1024] : memref<1024x2048xbf16, #tpu.memory_space<vmem>>, vector<1024x512xbf16>
    %cst_31 = arith.constant dense<0.000000e+00> : vector<16x512xf32>
    %39 = tpu.matmul %11, %38, %cst_31 {dimension_numbers = #tpu.dot_dimension_numbers<[1], [0], [0], [1], [0, 0, 1, 1], [], []>} : vector<16x1024xbf16>, vector<1024x512xbf16>, vector<16x512xf32> -> vector<16x512xf32>
    %c0_32 = arith.constant 0 : index
    %c1024_33 = arith.constant 1024 : index
    %40 = vector.load %arg6[%c0_32, %c1024_33] : memref<1x2048xf32, #tpu.memory_space<vmem>>, vector<1x512xf32>
    %41 = vector.broadcast %40 : vector<1x512xf32> to vector<16x512xf32>
    %42 = arith.addf %39, %41 : vector<16x512xf32>
    %cst_34 = arith.constant 0.000000e+00 : f32
    %43 = vector.broadcast %cst_34 : f32 to vector<16x512xf32>
    %44 = arith.maximumf %42, %43 : vector<16x512xf32>
    %45 = arith.truncf %44 : vector<16x512xf32> to vector<16x512xbf16>
    %c1024_35 = arith.constant 1024 : index
    %c0_36 = arith.constant 0 : index
    %46 = vector.load %arg11[%c1024_35, %c0_36] : memref<2048x128xbf16, #tpu.memory_space<vmem>>, vector<512x128xbf16>
    %cst_37 = arith.constant dense<0.000000e+00> : vector<16x128xf32>
    %47 = tpu.matmul %45, %46, %cst_37 {dimension_numbers = #tpu.dot_dimension_numbers<[1], [0], [0], [1], [0, 0, 1, 1], [], []>} : vector<16x512xbf16>, vector<512x128xbf16>, vector<16x128xf32> -> vector<16x128xf32>
    %48 = arith.addf %37, %47 : vector<16x128xf32>
    %c0_38 = arith.constant 0 : index
    %c1536 = arith.constant 1536 : index
    %49 = vector.load %arg10[%c0_38, %c1536] : memref<1024x2048xbf16, #tpu.memory_space<vmem>>, vector<1024x512xbf16>
    %cst_39 = arith.constant dense<0.000000e+00> : vector<16x512xf32>
    %50 = tpu.matmul %11, %49, %cst_39 {dimension_numbers = #tpu.dot_dimension_numbers<[1], [0], [0], [1], [0, 0, 1, 1], [], []>} : vector<16x1024xbf16>, vector<1024x512xbf16>, vector<16x512xf32> -> vector<16x512xf32>
    %c0_40 = arith.constant 0 : index
    %c1536_41 = arith.constant 1536 : index
    %51 = vector.load %arg6[%c0_40, %c1536_41] : memref<1x2048xf32, #tpu.memory_space<vmem>>, vector<1x512xf32>
    %52 = vector.broadcast %51 : vector<1x512xf32> to vector<16x512xf32>
    %53 = arith.addf %50, %52 : vector<16x512xf32>
    %cst_42 = arith.constant 0.000000e+00 : f32
    %54 = vector.broadcast %cst_42 : f32 to vector<16x512xf32>
    %55 = arith.maximumf %53, %54 : vector<16x512xf32>
    %56 = arith.truncf %55 : vector<16x512xf32> to vector<16x512xbf16>
    %c1536_43 = arith.constant 1536 : index
    %c0_44 = arith.constant 0 : index
    %57 = vector.load %arg11[%c1536_43, %c0_44] : memref<2048x128xbf16, #tpu.memory_space<vmem>>, vector<512x128xbf16>
    %cst_45 = arith.constant dense<0.000000e+00> : vector<16x128xf32>
    %58 = tpu.matmul %56, %57, %cst_45 {dimension_numbers = #tpu.dot_dimension_numbers<[1], [0], [0], [1], [0, 0, 1, 1], [], []>} : vector<16x512xbf16>, vector<512x128xbf16>, vector<16x128xf32> -> vector<16x128xf32>
    %59 = arith.addf %48, %58 : vector<16x128xf32>
    %c0_46 = arith.constant 0 : index
    %c0_47 = arith.constant 0 : index
    %60 = vector.load %arg8[%c0_46, %c0_47] : memref<1x128xf32, #tpu.memory_space<vmem>>, vector<1x128xf32>
    %61 = vector.broadcast %60 : vector<1x128xf32> to vector<16x128xf32>
    %62 = arith.addf %59, %61 : vector<16x128xf32>
    %c0_48 = arith.constant 0 : index
    %c0_49 = arith.constant 0 : index
    %63 = vector.load %arg9[%c0_48, %c0_49] : memref<16x128xf32, #tpu.memory_space<vmem>>, vector<16x128xf32>
    tpu.vector_store %arg9[%c0_48, %c0_49], %62 {strides = array<i32>} : memref<16x128xf32, #tpu.memory_space<vmem>>, vector<16x128xf32>,
    return
  }
  func.func @transform_0(%arg0: i32, %arg1: i32) -> (i32, i32) {
    %c1_i32 = arith.constant 1 : i32
    %0 = arith.muli %arg0, %c1_i32 : i32
    %1 = arith.addi %0, %arg1 : i32
    %c0_i32 = arith.constant 0 : i32
    %c0_i32_0 = arith.constant 0 : i32
    return %1, %c0_i32 : i32, i32
  }
  func.func @transform_1(%arg0: i32, %arg1: i32) -> (i32, i32) {
    %c0_i32 = arith.constant 0 : i32
    %c0_i32_0 = arith.constant 0 : i32
    %c0_i32_1 = arith.constant 0 : i32
    return %c0_i32, %c0_i32_0 : i32, i32
  }
  func.func @transform_2(%arg0: i32, %arg1: i32) -> (i32, i32) {
    %c0_i32 = arith.constant 0 : i32
    %c0_i32_0 = arith.constant 0 : i32
    %c0_i32_1 = arith.constant 0 : i32
    return %c0_i32, %c0_i32_0 : i32, i32
  }
  func.func @transform_4(%arg0: i32, %arg1: i32) -> (i32, i32) {
    %c0_i32 = arith.constant 0 : i32
    %c0_i32_0 = arith.constant 0 : i32
    %c0_i32_1 = arith.constant 0 : i32
    return %c0_i32, %c0_i32_0 : i32, i32
  }
  func.func @transform_6(%arg0: i32, %arg1: i32) -> (i32, i32) {
    %c0_i32 = arith.constant 0 : i32
    %c0_i32_0 = arith.constant 0 : i32
    %c0_i32_1 = arith.constant 0 : i32
    return %c0_i32, %c0_i32_0 : i32, i32
  }
  func.func @transform_7(%arg0: i32, %arg1: i32) -> (i32, i32) {
    %c1_i32 = arith.constant 1 : i32
    %0 = arith.muli %arg0, %c1_i32 : i32
    %1 = arith.addi %0, %arg1 : i32
    %c0_i32 = arith.constant 0 : i32
    %c0_i32_0 = arith.constant 0 : i32
    return %1, %c0_i32 : i32, i32
  }
}

</mosaic_0001>

<llo_original>
// kernel: richboynet_forward.1
$region0: #{richboynet_forward.1}
  #allocation0 [shape = 'u32[]', space=smem, size = 0x4, offset = 0x4, fixed_abs, tag = 'smem constant byte address 0x4 - core index']
  #allocation1 [shape = 'u32[144,128]{1,0:T(1,128)}', space=vmem, size = 0x12000, scoped, tag = 'internal scratch']
  #allocation2 [shape = 'bf16[1024,2048]{1,0:T(8,128)(2,1)}', space=vmem, size = 0x400000, scoped, tag = 'scratch operand']
  #allocation3 [shape = 'bf16[2048,128]{1,0:T(8,128)(2,1)}', space=vmem, size = 0x80000, scoped, tag = 'scratch operand']
  #allocation4 [shape = 's32[2]{0}', space=sflag, size = 0x8, scoped, tag = 'scratch operand']
  #allocation12 [shape = 's32[]', space=sflag, size = 0x4, offset = 0, fixed_abs, tag = 'sflag constant byte address 0x0 - dummy sync flag']
  #allocation13 [shape = 's32[]', space=sflag, size = 0x4, offset = 0, fixed_abs, tag = 'sflag constant byte address 0x0 - dummy sync flag']
  #allocation14 [shape = 'u32[]', space=smem, size = 0x4, offset = 0x44, fixed_abs, tag = 'smem constant byte address 0x44 - assertion arg 0']
  #allocation15 [shape = 'u32[]', space=smem, size = 0x4, offset = 0x48, fixed_abs, tag = 'smem constant byte address 0x48 - assertion arg 1']
  #allocation16 [shape = 's32[]', space=sflag, size = 0x4, offset = 0, fixed_abs, tag = 'sflag constant byte address 0x0 - dummy sync flag']
  #allocation17 [shape = 's32[]', space=sflag, size = 0x4, offset = 0, fixed_abs, tag = 'sflag constant byte address 0x0 - dummy sync flag']
  %s0 = inlined_call_operand.vmem [shape: bf16[16,896], index: 0, kind: input, shape index: {}]
  %s1 = inlined_call_operand.hbm [shape: bf16[896,1024], index: 1, kind: input, shape index: {}]
  %s2 = inlined_call_operand.hbm [shape: f32[1,1024], index: 2, kind: input, shape index: {}]
  %s3 = inlined_call_operand.hbm [shape: bf16[1024,2048], index: 3, kind: input, shape index: {}]
  %s4 = inlined_call_operand.hbm [shape: f32[1,2048], index: 4, kind: input, shape index: {}]
  %s5 = inlined_call_operand.hbm [shape: bf16[2048,128], index: 5, kind: input, shape index: {}]
  %s6 = inlined_call_operand.hbm [shape: f32[1,128], index: 6, kind: input, shape index: {}]
  %s7 = inlined_call_operand.vmem [shape: f32[16,128], index: 7, kind: output, shape index: {}]
  %s8 = sld [smem:[#allocation0]]
  $region62: #{richboynet_forward.1} parent=0
    _
  %s10 = ssub.s32 1, %s8
  %s11 = scalar_select 0, %s10, %s8
  $region1: #{richboynet_forward.1} parent=0
    #allocation5 [shape = 'u8[1835008]{0}', space=vmem, size = 0x1c0000, scoped, tag = 'input window, operand 1, single buffered']
    #allocation6 [shape = 's32[1]{0}', space=sflag, size = 0x4, scoped, tag = 'scoped memory for richboynet_forward.1']
    #allocation7 [shape = 'u8[4096]{0}', space=vmem, size = 0x1000, scoped, tag = 'input window, operand 2, single buffered']
    #allocation8 [shape = 's32[1]{0}', space=sflag, size = 0x4, scoped, tag = 'scoped memory for richboynet_forward.1']
    #allocation9 [shape = 'u8[8192]{0}', space=vmem, size = 0x2000, scoped, tag = 'input window, operand 4, single buffered']
    #allocation10 [shape = 'u8[512]{0}', space=vmem, size = 0x400, scoped, tag = 'input window, operand 6, single buffered']
    #allocation11 [shape = 's32[1]{0}', space=sflag, size = 0x4, scoped, tag = 'scoped memory for richboynet_forward.1']
    %12 = vsyncpa [#allocation6], 0
    %13 = vsyncpa [#allocation8], 0
    %14 = vsyncpa [#allocation11], 0
    // Predicated region
    $region2: #{richboynet_forward.1} parent=1 // pred_check
      _
    $region3: #{richboynet_forward.1} parent=1 // pred_check_branch
      %16 = sbr.rel (0) target = $region5
    $region4: #{richboynet_forward.1} parent=1 // pred_region
      %s17 = sadd.s32 0, 0
      %s18 = smul.u32 2, %s17
      %p19 = scmp.lt.s32.totalorder %s18, 1
      %s20 = scalar_select %p19, %s18, 1
      %s21 = smul.addr %s20, 7
      %s22 = smul.addr %s21, 4
      %s23 = scalar_lea.vmem %s0, %s22
      %s24 = sadd.s32 0, 0
      %s25 = smul.u32 2, %s24
    $region5: #{richboynet_forward.1} parent=1 // pred_fallthru
      _
    // Predicated region
    $region6: #{richboynet_forward.1} parent=1 // pred_check
      _
    $region7: #{richboynet_forward.1} parent=1 // pred_check_branch
      %27 = sbr.rel (0) target = $region9
    $region8: #{richboynet_forward.1} parent=1 // pred_region
      %s29 = ssub.s32 57344, 57344
      %30 = vsyncadd [#allocation6], %s29
      %s31 = sshll.u32 [#allocation5], 4
      %s32 = int_to_ptr.vmem [resolvable:$true] %s31
      %37 = dma.hbm_to_vmem [thread:$0]  %s1, 57344, %s32, [#allocation6], 512, 512, 32
    $region9: #{richboynet_forward.1} parent=1 // pred_fallthru
      _
    // Predicated region
    $region10: #{richboynet_forward.1} parent=1 // pred_check
      _
    $region11: #{richboynet_forward.1} parent=1 // pred_check_branch
      %39 = sbr.rel (0) target = $region13
    $region12: #{richboynet_forward.1} parent=1 // pred_region
      %s41 = ssub.s32 128, 128
      %42 = vsyncadd [#allocation8], %s41
      %s44 = sshll.u32 [#allocation7], 4
      %s45 = int_to_ptr.vmem [resolvable:$true] %s44
      %47 = dma.hbm_to_vmem [thread:$0]  %s2, 128, %s45, [#allocation8]
    $region13: #{richboynet_forward.1} parent=1 // pred_fallthru
      _
    // Predicated region
    $region14: #{richboynet_forward.1} parent=1 // pred_check
      _
    $region15: #{richboynet_forward.1} parent=1 // pred_check_branch
      %49 = sbr.rel (0) target = $region17
    $region16: #{richboynet_forward.1} parent=1 // pred_region
      %s51 = ssub.s32 256, 256
      %52 = vsyncadd [#allocation8], %s51
      %s54 = sshll.u32 [#allocation9], 4
      %s55 = int_to_ptr.vmem [resolvable:$true] %s54
      %57 = dma.hbm_to_vmem [thread:$0]  %s4, 256, %s55, [#allocation8]
    $region17: #{richboynet_forward.1} parent=1 // pred_fallthru
      _
    // Predicated region
    $region18: #{richboynet_forward.1} parent=1 // pred_check
      _
    $region19: #{richboynet_forward.1} parent=1 // pred_check_branch
      %59 = sbr.rel (0) target = $region21
    $region20: #{richboynet_forward.1} parent=1 // pred_region
      %s61 = ssub.s32 16, 16
      %62 = vsyncadd [#allocation11], %s61
      %s64 = sshll.u32 [#allocation10], 4
      %s65 = int_to_ptr.vmem [resolvable:$true] %s64
      %67 = dma.hbm_to_vmem [thread:$0]  %s6, 16, %s65, [#allocation11]
    $region21: #{richboynet_forward.1} parent=1 // pred_fallthru
      _
    // Predicated region
    $region22: #{richboynet_forward.1} parent=1 // pred_check
      _
    $region23: #{richboynet_forward.1} parent=1 // pred_check_branch
      %69 = sbr.rel (0) target = $region25
    $region24: #{richboynet_forward.1} parent=1 // pred_region
      %70 = dma.done [#allocation6], 57344
    $region25: #{richboynet_forward.1} parent=1 // pred_fallthru
      _
    // Predicated region
    $region26: #{richboynet_forward.1} parent=1 // pred_check
      _
    $region27: #{richboynet_forward.1} parent=1 // pred_check_branch
      %72 = sbr.rel (0) target = $region29
    $region28: #{richboynet_forward.1} parent=1 // pred_region
      %73 = dma.done [#allocation8], 128
    $region29: #{richboynet_forward.1} parent=1 // pred_fallthru
      _
    // Predicated region
    $region30: #{richboynet_forward.1} parent=1 // pred_check
      _
    $region31: #{richboynet_forward.1} parent=1 // pred_check_branch
      %75 = sbr.rel (0) target = $region33
    $region32: #{richboynet_forward.1} parent=1 // pred_region
      %76 = dma.done [#allocation8], 256
    $region33: #{richboynet_forward.1} parent=1 // pred_fallthru
      _
    // Predicated region
    $region34: #{richboynet_forward.1} parent=1 // pred_check
      _
    $region35: #{richboynet_forward.1} parent=1 // pred_check_branch
      %78 = sbr.rel (0) target = $region37
    $region36: #{richboynet_forward.1} parent=1 // pred_region
      %79 = dma.done [#allocation11], 16
    $region37: #{richboynet_forward.1} parent=1 // pred_fallthru
      _
    %s80 = sadd.s32 0, 0
    %s81 = smul.u32 2, %s80
    %p82 = scmp.lt.s32.totalorder %s81, 1
    %s83 = scalar_select %p82, %s81, 1
    %s84 = smul.addr %s83, 7
    %s85 = smul.addr %s84, 4
    %s86 = scalar_lea.vmem %s0, %s85
    %s87 = sadd.s32 0, 0
    %s88 = smul.u32 2, %s87
    %p89 = scmp.lt.s32.totalorder %s88, 1
    %s90 = scalar_select %p89, %s88, 1
    %s91 = smul.addr %s90, 8
    %s92 = scalar_lea.vmem %s7, %s91
    %s93 = sadd.s32 0, 0
    %s94 = smul.u32 2, %s93
    %p95 = scmp.lt.s32.totalorder %s94, 1
    %s96 = scalar_select %p95, %s94, 1
    %s97 = smul.addr %s96, 7
    %s98 = smul.addr %s97, 4
    %s99 = scalar_lea.vmem %s0, %s98
    %s100 = sadd.s32 0, 0
    %s101 = smul.u32 2, %s100
    %s102 = sadd.s32 0, 0
    %s103 = smul.u32 2, %s102
    %p104 = scmp.lt.s32.totalorder %s103, 1
    %s105 = scalar_select %p104, %s103, 1
    %s106 = smul.addr %s105, 8
    %s107 = scalar_lea.vmem %s7, %s106
    %s108 = sadd.s32 0, 0
    %s109 = smul.u32 2, %s108
    %p111 = scmp.eq.s32.totalorder 0, 0
    // Predicated region
    $region38: #{richboynet_forward.1} parent=1 // pred_check
      %p112 = pneg %p111
    $region39: #{richboynet_forward.1} parent=1 // pred_check_branch
      %114 = sbr.rel (%p112) target = $region41
    $region40: #{richboynet_forward.1} parent=1 // pred_region
      // Predicated region
      $region42: #{richboynet_forward.1} parent=40 // pred_check
        _
      $region43: #{richboynet_forward.1} parent=40 // pred_check_branch
        %116 = sbr.rel target = $region45
      $region44: #{richboynet_forward.1} parent=40 // pred_region
        %117 = sst [smem:[#allocation14]] [#allocation13]
        %118 = sst [smem:[#allocation15]] [#allocation12]
      $region45: #{richboynet_forward.1} parent=40 // pred_fallthru
        _
      %120 = shalt.err (0)
      %s122 = sshll.u32 [#allocation2], 4
      %s123 = int_to_ptr.vmem [resolvable:$true] %s122
      %125 = dma.hbm_to_vmem [thread:$0]  %s3, 131072, %s123, [#allocation4]
      %s126 = scalar_lea.sflag [#allocation4], 1
      // Predicated region
      $region46: #{richboynet_forward.1} parent=40 // pred_check
        _
      $region47: #{richboynet_forward.1} parent=40 // pred_check_branch
        %128 = sbr.rel target = $region49
      $region48: #{richboynet_forward.1} parent=40 // pred_region
        %129 = sst [smem:[#allocation14]] [#allocation17]
        %130 = sst [smem:[#allocation15]] [#allocation16]
      $region49: #{richboynet_forward.1} parent=40 // pred_fallthru
        _
      %132 = shalt.err (0)
      %s134 = sshll.u32 [#allocation3], 4
      %s135 = int_to_ptr.vmem [resolvable:$true] %s134
      %137 = dma.hbm_to_vmem [thread:$0]  %s5, 16384, %s135, %s126
    $region41: #{richboynet_forward.1} parent=1 // pred_fallthru
      _
    %v138 = vld [vmem:[%s99] sm:$0xff]
    %v139 = vld [vmem:[%s99 + $0x8] sm:$0xff]
    %v140 = vld [vmem:[%s99 + $0x10] sm:$0xff]
    %v141 = vld [vmem:[%s99 + $0x18] sm:$0xf]
    %v142 = vld [vmem:[%s99 + $0x1c] sm:$0xff]
    %v143 = vld [vmem:[%s99 + $0x24] sm:$0xff]
    %v144 = vld [vmem:[%s99 + $0x2c] sm:$0xff]
    %v145 = vld [vmem:[%s99 + $0x34] sm:$0xf]
    %v146 = vld [vmem:[#allocation5] sm:$0xff]
    %v147 = vld [vmem:[#allocation5 + $0x8] sm:$0xff]
    %v148 = vld [vmem:[#allocation5 + $0x10] sm:$0xff]
    %v149 = vld [vmem:[#allocation5 + $0x18] sm:$0xff]
    %v150 = vld [vmem:[#allocation5 + $0x20] sm:$0xff]
    %v151 = vld [vmem:[#allocation5 + $0x28] sm:$0xff]
    %v152 = vld [vmem:[#allocation5 + $0x30] sm:$0xff]
    %v153 = vld [vmem:[#allocation5 + $0x38] sm:$0xff]
    %v154 = vld [vmem:[#allocation5 + $0x40] sm:$0xff]
    %v155 = vld [vmem:[#allocation5 + $0x48] sm:$0xff]
    %v156 = vld [vmem:[#allocation5 + $0x50] sm:$0xff]
    %v157 = vld [vmem:[#allocation5 + $0x58] sm:$0xff]
    %v158 = vld [vmem:[#allocation5 + $0x60] sm:$0xff]
    %v159 = vld [vmem:[#allocation5 + $0x68] sm:$0xff]
    %v160 = vld [vmem:[#allocation5 + $0x70] sm:$0xff]
    %v161 = vld [vmem:[#allocation5 + $0x78] sm:$0xff]
    %v162 = vld [vmem:[#allocation5 + $0x80] sm:$0xff]
    %v163 = vld [vmem:[#allocation5 + $0x88] sm:$0xff]
    %v164 = vld [vmem:[#allocation5 + $0x90] sm:$0xff]
    %v165 = vld [vmem:[#allocation5 + $0x98] sm:$0xff]
    %v166 = vld [vmem:[#allocation5 + $0xa0] sm:$0xff]
    %v167 = vld [vmem:[#allocation5 + $0xa8] sm:$0xff]
    %v168 = vld [vmem:[#allocation5 + $0xb0] sm:$0xff]
    %v169 = vld [vmem:[#allocation5 + $0xb8] sm:$0xff]
    %v170 = vld [vmem:[#allocation5 + $0xc0] sm:$0xff]
    %v171 = vld [vmem:[#allocation5 + $0xc8] sm:$0xff]
    %v172 = vld [vmem:[#allocation5 + $0xd0] sm:$0xff]
    %v173 = vld [vmem:[#allocation5 + $0xd8] sm:$0xff]
    %v174 = vld [vmem:[#allocation5 + $0xe0] sm:$0xff]
    %v175 = vld [vmem:[#allocation5 + $0xe8] sm:$0xff]
    %v176 = vld [vmem:[#allocation5 + $0xf0] sm:$0xff]
    %v177 = vld [vmem:[#allocation5 + $0xf8] sm:$0xff]
    %v178 = vld [vmem:[#allocation5 + $0x100] sm:$0xff]
    %v179 = vld [vmem:[#allocation5 + $0x108] sm:$0xff]
    %v180 = vld [vmem:[#allocation5 + $0x110] sm:$0xff]
    %v181 = vld [vmem:[#allocation5 + $0x118] sm:$0xff]
    %v182 = vld [vmem:[#allocation5 + $0x120] sm:$0xff]
    %v183 = vld [vmem:[#allocation5 + $0x128] sm:$0xff]
    %v184 = vld [vmem:[#allocation5 + $0x130] sm:$0xff]
    %v185 = vld [vmem:[#allocation5 + $0x138] sm:$0xff]
    %v186 = vld [vmem:[#allocation5 + $0x140] sm:$0xff]
    %v187 = vld [vmem:[#allocation5 + $0x148] sm:$0xff]
    %v188 = vld [vmem:[#allocation5 + $0x150] sm:$0xff]
    %v189 = vld [vmem:[#allocation5 + $0x158] sm:$0xff]
    %v190 = vld [vmem:[#allocation5 + $0x160] sm:$0xff]
    %v191 = vld [vmem:[#allocation5 + $0x168] sm:$0xff]
    %v192 = vld [vmem:[#allocation5 + $0x170] sm:$0xff]
    %v193 = vld [vmem:[#allocation5 + $0x178] sm:$0xff]
    %v194 = vld [vmem:[#allocation5 + $0x180] sm:$0xff]
    %v195 = vld [vmem:[#allocation5 + $0x188] sm:$0xff]
    %v196 = vld [vmem:[#allocation5 + $0x190] sm:$0xff]
    %v197 = vld [vmem:[#allocation5 + $0x198] sm:$0xff]
    %v198 = vld [vmem:[#allocation5 + $0x1a0] sm:$0xff]
    %v199 = vld [vmem:[#allocation5 + $0x1a8] sm:$0xff]
    %v200 = vld [vmem:[#allocation5 + $0x1b0] sm:$0xff]
    %v201 = vld [vmem:[#allocation5 + $0x1b8] sm:$0xff]
    %v202 = vld [vmem:[#allocation5 + $0x1c0] sm:$0xff]
    %v203 = vld [vmem:[#allocation5 + $0x1c8] sm:$0xff]
    %v204 = vld [vmem:[#allocation5 + $0x1d0] sm:$0xff]
    %v205 = vld [vmem:[#allocation5 + $0x1d8] sm:$0xff]
    %v206 = vld [vmem:[#allocation5 + $0x1e0] sm:$0xff]
    %v207 = vld [vmem:[#allocation5 + $0x1e8] sm:$0xff]
    %v208 = vld [vmem:[#allocation5 + $0x1f0] sm:$0xff]
    %v209 = vld [vmem:[#allocation5 + $0x1f8] sm:$0xff]
    %v210 = vld [vmem:[#allocation5 + $0x200] sm:$0xff]
    %v211 = vld [vmem:[#allocation5 + $0x208] sm:$0xff]
    %v212 = vld [vmem:[#allocation5 + $0x210] sm:$0xff]
    %v213 = vld [vmem:[#allocation5 + $0x218] sm:$0xff]
    %v214 = vld [vmem:[#allocation5 + $0x220] sm:$0xff]
    %v215 = vld [vmem:[#allocation5 + $0x228] sm:$0xff]
    %v216 = vld [vmem:[#allocation5 + $0x230] sm:$0xff]
    %v217 = vld [vmem:[#allocation5 + $0x238] sm:$0xff]
    %v218 = vld [vmem:[#allocation5 + $0x240] sm:$0xff]
    %v219 = vld [vmem:[#allocation5 + $0x248] sm:$0xff]
    %v220 = vld [vmem:[#allocation5 + $0x250] sm:$0xff]
    %v221 = vld [vmem:[#allocation5 + $0x258] sm:$0xff]
    %v222 = vld [vmem:[#allocation5 + $0x260] sm:$0xff]
    %v223 = vld [vmem:[#allocation5 + $0x268] sm:$0xff]
    %v224 = vld [vmem:[#allocation5 + $0x270] sm:$0xff]
    %v225 = vld [vmem:[#allocation5 + $0x278] sm:$0xff]
    %v226 = vld [vmem:[#allocation5 + $0x280] sm:$0xff]
    %v227 = vld [vmem:[#allocation5 + $0x288] sm:$0xff]
    %v228 = vld [vmem:[#allocation5 + $0x290] sm:$0xff]
    %v229 = vld [vmem:[#allocation5 + $0x298] sm:$0xff]
    %v230 = vld [vmem:[#allocation5 + $0x2a0] sm:$0xff]
    %v231 = vld [vmem:[#allocation5 + $0x2a8] sm:$0xff]
    %v232 = vld [vmem:[#allocation5 + $0x2b0] sm:$0xff]
    %v233 = vld [vmem:[#allocation5 + $0x2b8] sm:$0xff]
    %v234 = vld [vmem:[#allocation5 + $0x2c0] sm:$0xff]
    %v235 = vld [vmem:[#allocation5 + $0x2c8] sm:$0xff]
    %v236 = vld [vmem:[#allocation5 + $0x2d0] sm:$0xff]
    %v237 = vld [vmem:[#allocation5 + $0x2d8] sm:$0xff]
    %v238 = vld [vmem:[#allocation5 + $0x2e0] sm:$0xff]
    %v239 = vld [vmem:[#allocation5 + $0x2e8] sm:$0xff]
    %v240 = vld [vmem:[#allocation5 + $0x2f0] sm:$0xff]
    %v241 = vld [vmem:[#allocation5 + $0x2f8] sm:$0xff]
    %v242 = vld [vmem:[#allocation5 + $0x300] sm:$0xff]
    %v243 = vld [vmem:[#allocation5 + $0x308] sm:$0xff]
    %v244 = vld [vmem:[#allocation5 + $0x310] sm:$0xff]
    %v245 = vld [vmem:[#allocation5 + $0x318] sm:$0xff]
    %v246 = vld [vmem:[#allocation5 + $0x320] sm:$0xff]
    %v247 = vld [vmem:[#allocation5 + $0x328] sm:$0xff]
    %v248 = vld [vmem:[#allocation5 + $0x330] sm:$0xff]
    %v249 = vld [vmem:[#allocation5 + $0x338] sm:$0xff]
    %v250 = vld [vmem:[#allocation5 + $0x340] sm:$0xff]
    %v251 = vld [vmem:[#allocation5 + $0x348] sm:$0xff]
    %v252 = vld [vmem:[#allocation5 + $0x350] sm:$0xff]
    %v253 = vld [vmem:[#allocation5 + $0x358] sm:$0xff]
    %v254 = vld [vmem:[#allocation5 + $0x360] sm:$0xff]
    %v255 = vld [vmem:[#allocation5 + $0x368] sm:$0xff]
    %v256 = vld [vmem:[#allocation5 + $0x370] sm:$0xff]
    %v257 = vld [vmem:[#allocation5 + $0x378] sm:$0xff]
    %v258 = vld [vmem:[#allocation5 + $0x380] sm:$0xff]
    %v259 = vld [vmem:[#allocation5 + $0x388] sm:$0xff]
    %v260 = vld [vmem:[#allocation5 + $0x390] sm:$0xff]
    %v261 = vld [vmem:[#allocation5 + $0x398] sm:$0xff]
    %v262 = vld [vmem:[#allocation5 + $0x3a0] sm:$0xff]
    %v263 = vld [vmem:[#allocation5 + $0x3a8] sm:$0xff]
    %v264 = vld [vmem:[#allocation5 + $0x3b0] sm:$0xff]
    %v265 = vld [vmem:[#allocation5 + $0x3b8] sm:$0xff]
    %v266 = vld [vmem:[#allocation5 + $0x3c0] sm:$0xff]
    %v267 = vld [vmem:[#allocation5 + $0x3c8] sm:$0xff]
    %v268 = vld [vmem:[#allocation5 + $0x3d0] sm:$0xff]
    %v269 = vld [vmem:[#allocation5 + $0x3d8] sm:$0xff]
    %v270 = vld [vmem:[#allocation5 + $0x3e0] sm:$0xff]
    %v271 = vld [vmem:[#allocation5 + $0x3e8] sm:$0xff]
    %v272 = vld [vmem:[#allocation5 + $0x3f0] sm:$0xff]
    %v273 = vld [vmem:[#allocation5 + $0x3f8] sm:$0xff]
    %v274 = vld [vmem:[#allocation5 + $0x400] sm:$0xff]
    %v275 = vld [vmem:[#allocation5 + $0x408] sm:$0xff]
    %v276 = vld [vmem:[#allocation5 + $0x410] sm:$0xff]
    %v277 = vld [vmem:[#allocation5 + $0x418] sm:$0xff]
    %v278 = vld [vmem:[#allocation5 + $0x420] sm:$0xff]
    %v279 = vld [vmem:[#allocation5 + $0x428] sm:$0xff]
    %v280 = vld [vmem:[#allocation5 + $0x430] sm:$0xff]
    %v281 = vld [vmem:[#allocation5 + $0x438] sm:$0xff]
    %v282 = vld [vmem:[#allocation5 + $0x440] sm:$0xff]
    %v283 = vld [vmem:[#allocation5 + $0x448] sm:$0xff]
    %v284 = vld [vmem:[#allocation5 + $0x450] sm:$0xff]
    %v285 = vld [vmem:[#allocation5 + $0x458] sm:$0xff]
    %v286 = vld [vmem:[#allocation5 + $0x460] sm:$0xff]
    %v287 = vld [vmem:[#allocation5 + $0x468] sm:$0xff]
    %v288 = vld [vmem:[#allocation5 + $0x470] sm:$0xff]
    %v289 = vld [vmem:[#allocation5 + $0x478] sm:$0xff]
    %v290 = vld [vmem:[#allocation5 + $0x480] sm:$0xff]
    %v291 = vld [vmem:[#allocation5 + $0x488] sm:$0xff]
    %v292 = vld [vmem:[#allocation5 + $0x490] sm:$0xff]
    %v293 = vld [vmem:[#allocation5 + $0x498] sm:$0xff]
    %v294 = vld [vmem:[#allocation5 + $0x4a0] sm:$0xff]
    %v295 = vld [vmem:[#allocation5 + $0x4a8] sm:$0xff]
    %v296 = vld [vmem:[#allocation5 + $0x4b0] sm:$0xff]
    %v297 = vld [vmem:[#allocation5 + $0x4b8] sm:$0xff]
    %v298 = vld [vmem:[#allocation5 + $0x4c0] sm:$0xff]
    %v299 = vld [vmem:[#allocation5 + $0x4c8] sm:$0xff]
    %v300 = vld [vmem:[#allocation5 + $0x4d0] sm:$0xff]
    %v301 = vld [vmem:[#allocation5 + $0x4d8] sm:$0xff]
    %v302 = vld [vmem:[#allocation5 + $0x4e0] sm:$0xff]
    %v303 = vld [vmem:[#allocation5 + $0x4e8] sm:$0xff]
    %v304 = vld [vmem:[#allocation5 + $0x4f0] sm:$0xff]
    %v305 = vld [vmem:[#allocation5 + $0x4f8] sm:$0xff]
    %v306 = vld [vmem:[#allocation5 + $0x500] sm:$0xff]
    %v307 = vld [vmem:[#allocation5 + $0x508] sm:$0xff]
    %v308 = vld [vmem:[#allocation5 + $0x510] sm:$0xff]
    %v309 = vld [vmem:[#allocation5 + $0x518] sm:$0xff]
    %v310 = vld [vmem:[#allocation5 + $0x520] sm:$0xff]
    %v311 = vld [vmem:[#allocation5 + $0x528] sm:$0xff]
    %v312 = vld [vmem:[#allocation5 + $0x530] sm:$0xff]
    %v313 = vld [vmem:[#allocation5 + $0x538] sm:$0xff]
    %v314 = vld [vmem:[#allocation5 + $0x540] sm:$0xff]
    %v315 = vld [vmem:[#allocation5 + $0x548] sm:$0xff]
    %v316 = vld [vmem:[#allocation5 + $0x550] sm:$0xff]
    %v317 = vld [vmem:[#allocation5 + $0x558] sm:$0xff]
    %v318 = vld [vmem:[#allocation5 + $0x560] sm:$0xff]
    %v319 = vld [vmem:[#allocation5 + $0x568] sm:$0xff]
    %v320 = vld [vmem:[#allocation5 + $0x570] sm:$0xff]
    %v321 = vld [vmem:[#allocation5 + $0x578] sm:$0xff]
    %v322 = vld [vmem:[#allocation5 + $0x580] sm:$0xff]
    %v323 = vld [vmem:[#allocation5 + $0x588] sm:$0xff]
    %v324 = vld [vmem:[#allocation5 + $0x590] sm:$0xff]
    %v325 = vld [vmem:[#allocation5 + $0x598] sm:$0xff]
    %v326 = vld [vmem:[#allocation5 + $0x5a0] sm:$0xff]
    %v327 = vld [vmem:[#allocation5 + $0x5a8] sm:$0xff]
    %v328 = vld [vmem:[#allocation5 + $0x5b0] sm:$0xff]
    %v329 = vld [vmem:[#allocation5 + $0x5b8] sm:$0xff]
    %v330 = vld [vmem:[#allocation5 + $0x5c0] sm:$0xff]
    %v331 = vld [vmem:[#allocation5 + $0x5c8] sm:$0xff]
    %v332 = vld [vmem:[#allocation5 + $0x5d0] sm:$0xff]
    %v333 = vld [vmem:[#allocation5 + $0x5d8] sm:$0xff]
    %v334 = vld [vmem:[#allocation5 + $0x5e0] sm:$0xff]
    %v335 = vld [vmem:[#allocation5 + $0x5e8] sm:$0xff]
    %v336 = vld [vmem:[#allocation5 + $0x5f0] sm:$0xff]
    %v337 = vld [vmem:[#allocation5 + $0x5f8] sm:$0xff]
    %v338 = vld [vmem:[#allocation5 + $0x600] sm:$0xff]
    %v339 = vld [vmem:[#allocation5 + $0x608] sm:$0xff]
    %v340 = vld [vmem:[#allocation5 + $0x610] sm:$0xff]
    %v341 = vld [vmem:[#allocation5 + $0x618] sm:$0xff]
    %v342 = vld [vmem:[#allocation5 + $0x620] sm:$0xff]
    %v343 = vld [vmem:[#allocation5 + $0x628] sm:$0xff]
    %v344 = vld [vmem:[#allocation5 + $0x630] sm:$0xff]
    %v345 = vld [vmem:[#allocation5 + $0x638] sm:$0xff]
    %v346 = vld [vmem:[#allocation5 + $0x640] sm:$0xff]
    %v347 = vld [vmem:[#allocation5 + $0x648] sm:$0xff]
    %v348 = vld [vmem:[#allocation5 + $0x650] sm:$0xff]
    %v349 = vld [vmem:[#allocation5 + $0x658] sm:$0xff]
    %v350 = vld [vmem:[#allocation5 + $0x660] sm:$0xff]
    %v351 = vld [vmem:[#allocation5 + $0x668] sm:$0xff]
    %v352 = vld [vmem:[#allocation5 + $0x670] sm:$0xff]
    %v353 = vld [vmem:[#allocation5 + $0x678] sm:$0xff]
    %v354 = vld [vmem:[#allocation5 + $0x680] sm:$0xff]
    %v355 = vld [vmem:[#allocation5 + $0x688] sm:$0xff]
    %v356 = vld [vmem:[#allocation5 + $0x690] sm:$0xff]
    %v357 = vld [vmem:[#allocation5 + $0x698] sm:$0xff]
    %v358 = vld [vmem:[#allocation5 + $0x6a0] sm:$0xff]
    %v359 = vld [vmem:[#allocation5 + $0x6a8] sm:$0xff]
    %v360 = vld [vmem:[#allocation5 + $0x6b0] sm:$0xff]
    %v361 = vld [vmem:[#allocation5 + $0x6b8] sm:$0xff]
    %v362 = vld [vmem:[#allocation5 + $0x6c0] sm:$0xff]
    %v363 = vld [vmem:[#allocation5 + $0x6c8] sm:$0xff]
    %v364 = vld [vmem:[#allocation5 + $0x6d0] sm:$0xff]
    %v365 = vld [vmem:[#allocation5 + $0x6d8] sm:$0xff]
    %v366 = vld [vmem:[#allocation5 + $0x6e0] sm:$0xff]
    %v367 = vld [vmem:[#allocation5 + $0x6e8] sm:$0xff]
    %v368 = vld [vmem:[#allocation5 + $0x6f0] sm:$0xff]
    %v369 = vld [vmem:[#allocation5 + $0x6f8] sm:$0xff]
    %v370 = vld [vmem:[#allocation5 + $0x700] sm:$0xff]
    %v371 = vld [vmem:[#allocation5 + $0x708] sm:$0xff]
    %v372 = vld [vmem:[#allocation5 + $0x710] sm:$0xff]
    %v373 = vld [vmem:[#allocation5 + $0x718] sm:$0xff]
    %v374 = vld [vmem:[#allocation5 + $0x720] sm:$0xff]
    %v375 = vld [vmem:[#allocation5 + $0x728] sm:$0xff]
    %v376 = vld [vmem:[#allocation5 + $0x730] sm:$0xff]
    %v377 = vld [vmem:[#allocation5 + $0x738] sm:$0xff]
    %v378 = vld [vmem:[#allocation5 + $0x740] sm:$0xff]
    %v379 = vld [vmem:[#allocation5 + $0x748] sm:$0xff]
    %v380 = vld [vmem:[#allocation5 + $0x750] sm:$0xff]
    %v381 = vld [vmem:[#allocation5 + $0x758] sm:$0xff]
    %v382 = vld [vmem:[#allocation5 + $0x760] sm:$0xff]
    %v383 = vld [vmem:[#allocation5 + $0x768] sm:$0xff]
    %v384 = vld [vmem:[#allocation5 + $0x770] sm:$0xff]
    %v385 = vld [vmem:[#allocation5 + $0x778] sm:$0xff]
    %v386 = vld [vmem:[#allocation5 + $0x780] sm:$0xff]
    %v387 = vld [vmem:[#allocation5 + $0x788] sm:$0xff]
    %v388 = vld [vmem:[#allocation5 + $0x790] sm:$0xff]
    %v389 = vld [vmem:[#allocation5 + $0x798] sm:$0xff]
    %v390 = vld [vmem:[#allocation5 + $0x7a0] sm:$0xff]
    %v391 = vld [vmem:[#allocation5 + $0x7a8] sm:$0xff]
    %v392 = vld [vmem:[#allocation5 + $0x7b0] sm:$0xff]
    %v393 = vld [vmem:[#allocation5 + $0x7b8] sm:$0xff]
    %v394 = vld [vmem:[#allocation5 + $0x7c0] sm:$0xff]
    %v395 = vld [vmem:[#allocation5 + $0x7c8] sm:$0xff]
    %v396 = vld [vmem:[#allocation5 + $0x7d0] sm:$0xff]
    %v397 = vld [vmem:[#allocation5 + $0x7d8] sm:$0xff]
    %v398 = vld [vmem:[#allocation5 + $0x7e0] sm:$0xff]
    %v399 = vld [vmem:[#allocation5 + $0x7e8] sm:$0xff]
    %v400 = vld [vmem:[#allocation5 + $0x7f0] sm:$0xff]
    %v401 = vld [vmem:[#allocation5 + $0x7f8] sm:$0xff]
    %v402 = vld [vmem:[#allocation5 + $0x800] sm:$0xff]
    %v403 = vld [vmem:[#allocation5 + $0x808] sm:$0xff]
    %v404 = vld [vmem:[#allocation5 + $0x810] sm:$0xff]
    %v405 = vld [vmem:[#allocation5 + $0x818] sm:$0xff]
    %v406 = vld [vmem:[#allocation5 + $0x820] sm:$0xff]
    %v407 = vld [vmem:[#allocation5 + $0x828] sm:$0xff]
    %v408 = vld [vmem:[#allocation5 + $0x830] sm:$0xff]
    %v409 = vld [vmem:[#allocation5 + $0x838] sm:$0xff]
    %v410 = vld [vmem:[#allocation5 + $0x840] sm:$0xff]
    %v411 = vld [vmem:[#allocation5 + $0x848] sm:$0xff]
    %v412 = vld [vmem:[#allocation5 + $0x850] sm:$0xff]
    %v413 = vld [vmem:[#allocation5 + $0x858] sm:$0xff]
    %v414 = vld [vmem:[#allocation5 + $0x860] sm:$0xff]
    %v415 = vld [vmem:[#allocation5 + $0x868] sm:$0xff]
    %v416 = vld [vmem:[#allocation5 + $0x870] sm:$0xff]
    %v417 = vld [vmem:[#allocation5 + $0x878] sm:$0xff]
    %v418 = vld [vmem:[#allocation5 + $0x880] sm:$0xff]
    %v419 = vld [vmem:[#allocation5 + $0x888] sm:$0xff]
    %v420 = vld [vmem:[#allocation5 + $0x890] sm:$0xff]
    %v421 = vld [vmem:[#allocation5 + $0x898] sm:$0xff]
    %v422 = vld [vmem:[#allocation5 + $0x8a0] sm:$0xff]
    %v423 = vld [vmem:[#allocation5 + $0x8a8] sm:$0xff]
    %v424 = vld [vmem:[#allocation5 + $0x8b0] sm:$0xff]
    %v425 = vld [vmem:[#allocation5 + $0x8b8] sm:$0xff]
    %v426 = vld [vmem:[#allocation5 + $0x8c0] sm:$0xff]
    %v427 = vld [vmem:[#allocation5 + $0x8c8] sm:$0xff]
    %v428 = vld [vmem:[#allocation5 + $0x8d0] sm:$0xff]
    %v429 = vld [vmem:[#allocation5 + $0x8d8] sm:$0xff]
    %v430 = vld [vmem:[#allocation5 + $0x8e0] sm:$0xff]
    %v431 = vld [vmem:[#allocation5 + $0x8e8] sm:$0xff]
    %v432 = vld [vmem:[#allocation5 + $0x8f0] sm:$0xff]
    %v433 = vld [vmem:[#allocation5 + $0x8f8] sm:$0xff]
    %v434 = vld [vmem:[#allocation5 + $0x900] sm:$0xff]
    %v435 = vld [vmem:[#allocation5 + $0x908] sm:$0xff]
    %v436 = vld [vmem:[#allocation5 + $0x910] sm:$0xff]
    %v437 = vld [vmem:[#allocation5 + $0x918] sm:$0xff]
    %v438 = vld [vmem:[#allocation5 + $0x920] sm:$0xff]
    %v439 = vld [vmem:[#allocation5 + $0x928] sm:$0xff]
    %v440 = vld [vmem:[#allocation5 + $0x930] sm:$0xff]
    %v441 = vld [vmem:[#allocation5 + $0x938] sm:$0xff]
    %v442 = vld [vmem:[#allocation5 + $0x940] sm:$0xff]
    %v443 = vld [vmem:[#allocation5 + $0x948] sm:$0xff]
    %v444 = vld [vmem:[#allocation5 + $0x950] sm:$0xff]
    %v445 = vld [vmem:[#allocation5 + $0x958] sm:$0xff]
    %v446 = vld [vmem:[#allocation5 + $0x960] sm:$0xff]
    %v447 = vld [vmem:[#allocation5 + $0x968] sm:$0xff]
    %v448 = vld [vmem:[#allocation5 + $0x970] sm:$0xff]
    %v449 = vld [vmem:[#allocation5 + $0x978] sm:$0xff]
    %v450 = vld [vmem:[#allocation5 + $0x980] sm:$0xff]
    %v451 = vld [vmem:[#allocation5 + $0x988] sm:$0xff]
    %v452 = vld [vmem:[#allocation5 + $0x990] sm:$0xff]
    %v453 = vld [vmem:[#allocation5 + $0x998] sm:$0xff]
    %v454 = vld [vmem:[#allocation5 + $0x9a0] sm:$0xff]
    %v455 = vld [vmem:[#allocation5 + $0x9a8] sm:$0xff]
    %v456 = vld [vmem:[#allocation5 + $0x9b0] sm:$0xff]
    %v457 = vld [vmem:[#allocation5 + $0x9b8] sm:$0xff]
    %v458 = vld [vmem:[#allocation5 + $0x9c0] sm:$0xff]
    %v459 = vld [vmem:[#allocation5 + $0x9c8] sm:$0xff]
    %v460 = vld [vmem:[#allocation5 + $0x9d0] sm:$0xff]
    %v461 = vld [vmem:[#allocation5 + $0x9d8] sm:$0xff]
    %v462 = vld [vmem:[#allocation5 + $0x9e0] sm:$0xff]
    %v463 = vld [vmem:[#allocation5 + $0x9e8] sm:$0xff]
    %v464 = vld [vmem:[#allocation5 + $0x9f0] sm:$0xff]
    %v465 = vld [vmem:[#allocation5 + $0x9f8] sm:$0xff]
    %v466 = vld [vmem:[#allocation5 + $0xa00] sm:$0xff]
    %v467 = vld [vmem:[#allocation5 + $0xa08] sm:$0xff]
    %v468 = vld [vmem:[#allocation5 + $0xa10] sm:$0xff]
    %v469 = vld [vmem:[#allocation5 + $0xa18] sm:$0xff]
    %v470 = vld [vmem:[#allocation5 + $0xa20] sm:$0xff]
    %v471 = vld [vmem:[#allocation5 + $0xa28] sm:$0xff]
    %v472 = vld [vmem:[#allocation5 + $0xa30] sm:$0xff]
    %v473 = vld [vmem:[#allocation5 + $0xa38] sm:$0xff]
    %v474 = vld [vmem:[#allocation5 + $0xa40] sm:$0xff]
    %v475 = vld [vmem:[#allocation5 + $0xa48] sm:$0xff]
    %v476 = vld [vmem:[#allocation5 + $0xa50] sm:$0xff]
    %v477 = vld [vmem:[#allocation5 + $0xa58] sm:$0xff]
    %v478 = vld [vmem:[#allocation5 + $0xa60] sm:$0xff]
    %v479 = vld [vmem:[#allocation5 + $0xa68] sm:$0xff]
    %v480 = vld [vmem:[#allocation5 + $0xa70] sm:$0xff]
    %v481 = vld [vmem:[#allocation5 + $0xa78] sm:$0xff]
    %v482 = vld [vmem:[#allocation5 + $0xa80] sm:$0xff]
    %v483 = vld [vmem:[#allocation5 + $0xa88] sm:$0xff]
    %v484 = vld [vmem:[#allocation5 + $0xa90] sm:$0xff]
    %v485 = vld [vmem:[#allocation5 + $0xa98] sm:$0xff]
    %v486 = vld [vmem:[#allocation5 + $0xaa0] sm:$0xff]
    %v487 = vld [vmem:[#allocation5 + $0xaa8] sm:$0xff]
    %v488 = vld [vmem:[#allocation5 + $0xab0] sm:$0xff]
    %v489 = vld [vmem:[#allocation5 + $0xab8] sm:$0xff]
    %v490 = vld [vmem:[#allocation5 + $0xac0] sm:$0xff]
    %v491 = vld [vmem:[#allocation5 + $0xac8] sm:$0xff]
    %v492 = vld [vmem:[#allocation5 + $0xad0] sm:$0xff]
    %v493 = vld [vmem:[#allocation5 + $0xad8] sm:$0xff]
    %v494 = vld [vmem:[#allocation5 + $0xae0] sm:$0xff]
    %v495 = vld [vmem:[#allocation5 + $0xae8] sm:$0xff]
    %v496 = vld [vmem:[#allocation5 + $0xaf0] sm:$0xff]
    %v497 = vld [vmem:[#allocation5 + $0xaf8] sm:$0xff]
    %v498 = vld [vmem:[#allocation5 + $0xb00] sm:$0xff]
    %v499 = vld [vmem:[#allocation5 + $0xb08] sm:$0xff]
    %v500 = vld [vmem:[#allocation5 + $0xb10] sm:$0xff]
    %v501 = vld [vmem:[#allocation5 + $0xb18] sm:$0xff]
    %v502 = vld [vmem:[#allocation5 + $0xb20] sm:$0xff]
    %v503 = vld [vmem:[#allocation5 + $0xb28] sm:$0xff]
    %v504 = vld [vmem:[#allocation5 + $0xb30] sm:$0xff]
    %v505 = vld [vmem:[#allocation5 + $0xb38] sm:$0xff]
    %v506 = vld [vmem:[#allocation5 + $0xb40] sm:$0xff]
    %v507 = vld [vmem:[#allocation5 + $0xb48] sm:$0xff]
    %v508 = vld [vmem:[#allocation5 + $0xb50] sm:$0xff]
    %v509 = vld [vmem:[#allocation5 + $0xb58] sm:$0xff]
    %v510 = vld [vmem:[#allocation5 + $0xb60] sm:$0xff]
    %v511 = vld [vmem:[#allocation5 + $0xb68] sm:$0xff]
    %v512 = vld [vmem:[#allocation5 + $0xb70] sm:$0xff]
    %v513 = vld [vmem:[#allocation5 + $0xb78] sm:$0xff]
    %v514 = vld [vmem:[#allocation5 + $0xb80] sm:$0xff]
    %v515 = vld [vmem:[#allocation5 + $0xb88] sm:$0xff]
    %v516 = vld [vmem:[#allocation5 + $0xb90] sm:$0xff]
    %v517 = vld [vmem:[#allocation5 + $0xb98] sm:$0xff]
    %v518 = vld [vmem:[#allocation5 + $0xba0] sm:$0xff]
    %v519 = vld [vmem:[#allocation5 + $0xba8] sm:$0xff]
    %v520 = vld [vmem:[#allocation5 + $0xbb0] sm:$0xff]
    %v521 = vld [vmem:[#allocation5 + $0xbb8] sm:$0xff]
    %v522 = vld [vmem:[#allocation5 + $0xbc0] sm:$0xff]
    %v523 = vld [vmem:[#allocation5 + $0xbc8] sm:$0xff]
    %v524 = vld [vmem:[#allocation5 + $0xbd0] sm:$0xff]
    %v525 = vld [vmem:[#allocation5 + $0xbd8] sm:$0xff]
    %v526 = vld [vmem:[#allocation5 + $0xbe0] sm:$0xff]
    %v527 = vld [vmem:[#allocation5 + $0xbe8] sm:$0xff]
    %v528 = vld [vmem:[#allocation5 + $0xbf0] sm:$0xff]
    %v529 = vld [vmem:[#allocation5 + $0xbf8] sm:$0xff]
    %v530 = vld [vmem:[#allocation5 + $0xc00] sm:$0xff]
    %v531 = vld [vmem:[#allocation5 + $0xc08] sm:$0xff]
    %v532 = vld [vmem:[#allocation5 + $0xc10] sm:$0xff]
    %v533 = vld [vmem:[#allocation5 + $0xc18] sm:$0xff]
    %v534 = vld [vmem:[#allocation5 + $0xc20] sm:$0xff]
    %v535 = vld [vmem:[#allocation5 + $0xc28] sm:$0xff]
    %v536 = vld [vmem:[#allocation5 + $0xc30] sm:$0xff]
    %v537 = vld [vmem:[#allocation5 + $0xc38] sm:$0xff]
    %v538 = vld [vmem:[#allocation5 + $0xc40] sm:$0xff]
    %v539 = vld [vmem:[#allocation5 + $0xc48] sm:$0xff]
    %v540 = vld [vmem:[#allocation5 + $0xc50] sm:$0xff]
    %v541 = vld [vmem:[#allocation5 + $0xc58] sm:$0xff]
    %v542 = vld [vmem:[#allocation5 + $0xc60] sm:$0xff]
    %v543 = vld [vmem:[#allocation5 + $0xc68] sm:$0xff]
    %v544 = vld [vmem:[#allocation5 + $0xc70] sm:$0xff]
    %v545 = vld [vmem:[#allocation5 + $0xc78] sm:$0xff]
    %v546 = vld [vmem:[#allocation5 + $0xc80] sm:$0xff]
    %v547 = vld [vmem:[#allocation5 + $0xc88] sm:$0xff]
    %v548 = vld [vmem:[#allocation5 + $0xc90] sm:$0xff]
    %v549 = vld [vmem:[#allocation5 + $0xc98] sm:$0xff]
    %v550 = vld [vmem:[#allocation5 + $0xca0] sm:$0xff]
    %v551 = vld [vmem:[#allocation5 + $0xca8] sm:$0xff]
    %v552 = vld [vmem:[#allocation5 + $0xcb0] sm:$0xff]
    %v553 = vld [vmem:[#allocation5 + $0xcb8] sm:$0xff]
    %v554 = vld [vmem:[#allocation5 + $0xcc0] sm:$0xff]
    %v555 = vld [vmem:[#allocation5 + $0xcc8] sm:$0xff]
    %v556 = vld [vmem:[#allocation5 + $0xcd0] sm:$0xff]
    %v557 = vld [vmem:[#allocation5 + $0xcd8] sm:$0xff]
    %v558 = vld [vmem:[#allocation5 + $0xce0] sm:$0xff]
    %v559 = vld [vmem:[#allocation5 + $0xce8] sm:$0xff]
    %v560 = vld [vmem:[#allocation5 + $0xcf0] sm:$0xff]
    %v561 = vld [vmem:[#allocation5 + $0xcf8] sm:$0xff]
    %v562 = vld [vmem:[#allocation5 + $0xd00] sm:$0xff]
    %v563 = vld [vmem:[#allocation5 + $0xd08] sm:$0xff]
    %v564 = vld [vmem:[#allocation5 + $0xd10] sm:$0xff]
    %v565 = vld [vmem:[#allocation5 + $0xd18] sm:$0xff]
    %v566 = vld [vmem:[#allocation5 + $0xd20] sm:$0xff]
    %v567 = vld [vmem:[#allocation5 + $0xd28] sm:$0xff]
    %v568 = vld [vmem:[#allocation5 + $0xd30] sm:$0xff]
    %v569 = vld [vmem:[#allocation5 + $0xd38] sm:$0xff]
    %v570 = vld [vmem:[#allocation5 + $0xd40] sm:$0xff]
    %v571 = vld [vmem:[#allocation5 + $0xd48] sm:$0xff]
    %v572 = vld [vmem:[#allocation5 + $0xd50] sm:$0xff]
    %v573 = vld [vmem:[#allocation5 + $0xd58] sm:$0xff]
    %v574 = vld [vmem:[#allocation5 + $0xd60] sm:$0xff]
    %v575 = vld [vmem:[#allocation5 + $0xd68] sm:$0xff]
    %v576 = vld [vmem:[#allocation5 + $0xd70] sm:$0xff]
    %v577 = vld [vmem:[#allocation5 + $0xd78] sm:$0xff]
    %v578 = vld [vmem:[#allocation5 + $0xd80] sm:$0xff]
    %v579 = vld [vmem:[#allocation5 + $0xd88] sm:$0xff]
    %v580 = vld [vmem:[#allocation5 + $0xd90] sm:$0xff]
    %v581 = vld [vmem:[#allocation5 + $0xd98] sm:$0xff]
    %v582 = vld [vmem:[#allocation5 + $0xda0] sm:$0xff]
    %v583 = vld [vmem:[#allocation5 + $0xda8] sm:$0xff]
    %v584 = vld [vmem:[#allocation5 + $0xdb0] sm:$0xff]
    %v585 = vld [vmem:[#allocation5 + $0xdb8] sm:$0xff]
    %v586 = vld [vmem:[#allocation5 + $0xdc0] sm:$0xff]
    %v587 = vld [vmem:[#allocation5 + $0xdc8] sm:$0xff]
    %v588 = vld [vmem:[#allocation5 + $0xdd0] sm:$0xff]
    %v589 = vld [vmem:[#allocation5 + $0xdd8] sm:$0xff]
    %v590 = vld [vmem:[#allocation5 + $0xde0] sm:$0xff]
    %v591 = vld [vmem:[#allocation5 + $0xde8] sm:$0xff]
    %v592 = vld [vmem:[#allocation5 + $0xdf0] sm:$0xff]
    %v593 = vld [vmem:[#allocation5 + $0xdf8] sm:$0xff]
    %v594 = vld [vmem:[#allocation7] sm:$0xff]
    %v596 = vlaneseq
    %v597 = vshrl.u32 %v596, 7
    %v598 = vsub.s32 0, %v597
    %v599 = vrot.slane %v594, %v598
    %v600 = vlaneseq
    %v601 = vshrl.u32 %v600, 7
    %v602 = vsub.s32 1, %v601
    %v603 = vrot.slane %v594, %v602
    %v604 = vlaneseq
    %v605 = vshrl.u32 %v604, 7
    %v606 = vsub.s32 2, %v605
    %v607 = vrot.slane %v594, %v606
    %v608 = vlaneseq
    %v609 = vshrl.u32 %v608, 7
    %v610 = vsub.s32 3, %v609
    %v611 = vrot.slane %v594, %v610
    %v612 = vlaneseq
    %v613 = vshrl.u32 %v612, 7
    %v614 = vsub.s32 4, %v613
    %v615 = vrot.slane %v594, %v614
    %v616 = vlaneseq
    %v617 = vshrl.u32 %v616, 7
    %v618 = vsub.s32 5, %v617
    %v619 = vrot.slane %v594, %v618
    %v620 = vlaneseq
    %v621 = vshrl.u32 %v620, 7
    %v622 = vsub.s32 6, %v621
    %v623 = vrot.slane %v594, %v622
    %v624 = vlaneseq
    %v625 = vshrl.u32 %v624, 7
    %v626 = vsub.s32 7, %v625
    %v627 = vrot.slane %v594, %v626
    %v644 = vunpack.c.l.b16 %v138
    %v645 = vunpack.c.h.b16 %v138
    %v646 = vunpack.c.l.b16 %v139
    %v647 = vunpack.c.h.b16 %v139
    %v648 = vunpack.c.l.b16 %v140
    %v649 = vunpack.c.h.b16 %v140
    %v650 = vunpack.c.l.b16 %v141
    %v651 = vunpack.c.l.b16 %v142
    %v652 = vunpack.c.h.b16 %v142
    %v653 = vunpack.c.l.b16 %v143
    %v654 = vunpack.c.h.b16 %v143
    %v655 = vunpack.c.l.b16 %v144
    %v656 = vunpack.c.h.b16 %v144
    %v657 = vunpack.c.l.b16 %v145
    %v658 = vpack.c.b16 %v651, %v644
    %v659 = vpack.c.b16 %v652, %v645
    %v660 = vpack.c.b16 %v653, %v646
    %v661 = vpack.c.b16 %v654, %v647
    %v662 = vpack.c.b16 %v655, %v648
    %v663 = vpack.c.b16 %v656, %v649
    %v664 = vpack.c.b16 %v657, %v650
    %v1120 = vunpack.c.l.b16 %v146
    %v1121 = vunpack.c.h.b16 %v146
    %v1122 = vunpack.c.l.b16 %v147
    %v1123 = vunpack.c.h.b16 %v147
    %v1124 = vunpack.c.l.b16 %v148
    %v1125 = vunpack.c.h.b16 %v148
    %v1126 = vunpack.c.l.b16 %v149
    %v1127 = vunpack.c.h.b16 %v149
    %v1128 = vunpack.c.l.b16 %v150
    %v1129 = vunpack.c.h.b16 %v150
    %v1130 = vunpack.c.l.b16 %v151
    %v1131 = vunpack.c.h.b16 %v151
    %v1132 = vunpack.c.l.b16 %v152
    %v1133 = vunpack.c.h.b16 %v152
    %v1134 = vunpack.c.l.b16 %v153
    %v1135 = vunpack.c.h.b16 %v153
    %v1136 = vunpack.c.l.b16 %v154
    %v1137 = vunpack.c.h.b16 %v154
    %v1138 = vunpack.c.l.b16 %v155
    %v1139 = vunpack.c.h.b16 %v155
    %v1140 = vunpack.c.l.b16 %v156
    %v1141 = vunpack.c.h.b16 %v156
    %v1142 = vunpack.c.l.b16 %v157
    %v1143 = vunpack.c.h.b16 %v157
    %v1144 = vunpack.c.l.b16 %v158
    %v1145 = vunpack.c.h.b16 %v158
    %v1146 = vunpack.c.l.b16 %v159
    %v1147 = vunpack.c.h.b16 %v159
    %v1148 = vunpack.c.l.b16 %v160
    %v1149 = vunpack.c.h.b16 %v160
    %v1150 = vunpack.c.l.b16 %v161
    %v1151 = vunpack.c.h.b16 %v161
    %v1152 = vunpack.c.l.b16 %v162
    %v1153 = vunpack.c.h.b16 %v162
    %v1154 = vunpack.c.l.b16 %v163
    %v1155 = vunpack.c.h.b16 %v163
    %v1156 = vunpack.c.l.b16 %v164
    %v1157 = vunpack.c.h.b16 %v164
    %v1158 = vunpack.c.l.b16 %v165
    %v1159 = vunpack.c.h.b16 %v165
    %v1160 = vunpack.c.l.b16 %v166
    %v1161 = vunpack.c.h.b16 %v166
    %v1162 = vunpack.c.l.b16 %v167
    %v1163 = vunpack.c.h.b16 %v167
    %v1164 = vunpack.c.l.b16 %v168
    %v1165 = vunpack.c.h.b16 %v168
    %v1166 = vunpack.c.l.b16 %v169
    %v1167 = vunpack.c.h.b16 %v169
    %v1168 = vunpack.c.l.b16 %v170
    %v1169 = vunpack.c.h.b16 %v170
    %v1170 = vunpack.c.l.b16 %v171
    %v1171 = vunpack.c.h.b16 %v171
    %v1172 = vunpack.c.l.b16 %v172
    %v1173 = vunpack.c.h.b16 %v172
    %v1174 = vunpack.c.l.b16 %v173
    %v1175 = vunpack.c.h.b16 %v173
    %v1176 = vunpack.c.l.b16 %v174
    %v1177 = vunpack.c.h.b16 %v174
    %v1178 = vunpack.c.l.b16 %v175
    %v1179 = vunpack.c.h.b16 %v175
    %v1180 = vunpack.c.l.b16 %v176
    %v1181 = vunpack.c.h.b16 %v176
    %v1182 = vunpack.c.l.b16 %v177
    %v1183 = vunpack.c.h.b16 %v177
    %v1184 = vunpack.c.l.b16 %v178
    %v1185 = vunpack.c.h.b16 %v178
    %v1186 = vunpack.c.l.b16 %v179
    %v1187 = vunpack.c.h.b16 %v179
    %v1188 = vunpack.c.l.b16 %v180
    %v1189 = vunpack.c.h.b16 %v180
    %v1190 = vunpack.c.l.b16 %v181
    %v1191 = vunpack.c.h.b16 %v181
    %v1192 = vunpack.c.l.b16 %v182
    %v1193 = vunpack.c.h.b16 %v182
    %v1194 = vunpack.c.l.b16 %v183
    %v1195 = vunpack.c.h.b16 %v183
    %v1196 = vunpack.c.l.b16 %v184
    %v1197 = vunpack.c.h.b16 %v184
    %v1198 = vunpack.c.l.b16 %v185
    %v1199 = vunpack.c.h.b16 %v185
    %v1200 = vunpack.c.l.b16 %v186
    %v1201 = vunpack.c.h.b16 %v186
    %v1202 = vunpack.c.l.b16 %v187
    %v1203 = vunpack.c.h.b16 %v187
    %v1204 = vunpack.c.l.b16 %v188
    %v1205 = vunpack.c.h.b16 %v188
    %v1206 = vunpack.c.l.b16 %v189
    %v1207 = vunpack.c.h.b16 %v189
    %v1208 = vunpack.c.l.b16 %v190
    %v1209 = vunpack.c.h.b16 %v190
    %v1210 = vunpack.c.l.b16 %v191
    %v1211 = vunpack.c.h.b16 %v191
    %v1212 = vunpack.c.l.b16 %v192
    %v1213 = vunpack.c.h.b16 %v192
    %v1214 = vunpack.c.l.b16 %v193
    %v1215 = vunpack.c.h.b16 %v193
    %v1216 = vunpack.c.l.b16 %v194
    %v1217 = vunpack.c.h.b16 %v194
    %v1218 = vunpack.c.l.b16 %v195
    %v1219 = vunpack.c.h.b16 %v195
    %v1220 = vunpack.c.l.b16 %v196
    %v1221 = vunpack.c.h.b16 %v196
    %v1222 = vunpack.c.l.b16 %v197
    %v1223 = vunpack.c.h.b16 %v197
    %v1224 = vunpack.c.l.b16 %v198
    %v1225 = vunpack.c.h.b16 %v198
    %v1226 = vunpack.c.l.b16 %v199
    %v1227 = vunpack.c.h.b16 %v199
    %v1228 = vunpack.c.l.b16 %v200
    %v1229 = vunpack.c.h.b16 %v200
    %v1230 = vunpack.c.l.b16 %v201
    %v1231 = vunpack.c.h.b16 %v201
    %v1232 = vunpack.c.l.b16 %v202
    %v1233 = vunpack.c.h.b16 %v202
    %v1234 = vunpack.c.l.b16 %v203
    %v1235 = vunpack.c.h.b16 %v203
    %v1236 = vunpack.c.l.b16 %v204
    %v1237 = vunpack.c.h.b16 %v204
    %v1238 = vunpack.c.l.b16 %v205
    %v1239 = vunpack.c.h.b16 %v205
    %v1240 = vunpack.c.l.b16 %v206
    %v1241 = vunpack.c.h.b16 %v206
    %v1242 = vunpack.c.l.b16 %v207
    %v1243 = vunpack.c.h.b16 %v207
    %v1244 = vunpack.c.l.b16 %v208
    %v1245 = vunpack.c.h.b16 %v208
    %v1246 = vunpack.c.l.b16 %v209
    %v1247 = vunpack.c.h.b16 %v209
    %v1248 = vunpack.c.l.b16 %v210
    %v1249 = vunpack.c.h.b16 %v210
    %v1250 = vunpack.c.l.b16 %v211
    %v1251 = vunpack.c.h.b16 %v211
    %v1252 = vunpack.c.l.b16 %v212
    %v1253 = vunpack.c.h.b16 %v212
    %v1254 = vunpack.c.l.b16 %v213
    %v1255 = vunpack.c.h.b16 %v213
    %v1256 = vunpack.c.l.b16 %v214
    %v1257 = vunpack.c.h.b16 %v214
    %v1258 = vunpack.c.l.b16 %v215
    %v1259 = vunpack.c.h.b16 %v215
    %v1260 = vunpack.c.l.b16 %v216
    %v1261 = vunpack.c.h.b16 %v216
    %v1262 = vunpack.c.l.b16 %v217
    %v1263 = vunpack.c.h.b16 %v217
    %v1264 = vunpack.c.l.b16 %v218
    %v1265 = vunpack.c.h.b16 %v218
    %v1266 = vunpack.c.l.b16 %v219
    %v1267 = vunpack.c.h.b16 %v219
    %v1268 = vunpack.c.l.b16 %v220
    %v1269 = vunpack.c.h.b16 %v220
    %v1270 = vunpack.c.l.b16 %v221
    %v1271 = vunpack.c.h.b16 %v221
    %v1272 = vunpack.c.l.b16 %v222
    %v1273 = vunpack.c.h.b16 %v222
    %v1274 = vunpack.c.l.b16 %v223
    %v1275 = vunpack.c.h.b16 %v223
    %v1276 = vunpack.c.l.b16 %v224
    %v1277 = vunpack.c.h.b16 %v224
    %v1278 = vunpack.c.l.b16 %v225
    %v1279 = vunpack.c.h.b16 %v225
    %v1280 = vunpack.c.l.b16 %v226
    %v1281 = vunpack.c.h.b16 %v226
    %v1282 = vunpack.c.l.b16 %v227
    %v1283 = vunpack.c.h.b16 %v227
    %v1284 = vunpack.c.l.b16 %v228
    %v1285 = vunpack.c.h.b16 %v228
    %v1286 = vunpack.c.l.b16 %v229
    %v1287 = vunpack.c.h.b16 %v229
    %v1288 = vunpack.c.l.b16 %v230
    %v1289 = vunpack.c.h.b16 %v230
    %v1290 = vunpack.c.l.b16 %v231
    %v1291 = vunpack.c.h.b16 %v231
    %v1292 = vunpack.c.l.b16 %v232
    %v1293 = vunpack.c.h.b16 %v232
    %v1294 = vunpack.c.l.b16 %v233
    %v1295 = vunpack.c.h.b16 %v233
    %v1296 = vunpack.c.l.b16 %v234
    %v1297 = vunpack.c.h.b16 %v234
    %v1298 = vunpack.c.l.b16 %v235
    %v1299 = vunpack.c.h.b16 %v235
    %v1300 = vunpack.c.l.b16 %v236
    %v1301 = vunpack.c.h.b16 %v236
    %v1302 = vunpack.c.l.b16 %v237
    %v1303 = vunpack.c.h.b16 %v237
    %v1304 = vunpack.c.l.b16 %v238
    %v1305 = vunpack.c.h.b16 %v238
    %v1306 = vunpack.c.l.b16 %v239
    %v1307 = vunpack.c.h.b16 %v239
    %v1308 = vunpack.c.l.b16 %v240
    %v1309 = vunpack.c.h.b16 %v240
    %v1310 = vunpack.c.l.b16 %v241
    %v1311 = vunpack.c.h.b16 %v241
    %v1312 = vunpack.c.l.b16 %v242
    %v1313 = vunpack.c.h.b16 %v242
    %v1314 = vunpack.c.l.b16 %v243
    %v1315 = vunpack.c.h.b16 %v243
    %v1316 = vunpack.c.l.b16 %v244
    %v1317 = vunpack.c.h.b16 %v244
    %v1318 = vunpack.c.l.b16 %v245
    %v1319 = vunpack.c.h.b16 %v245
    %v1320 = vunpack.c.l.b16 %v246
    %v1321 = vunpack.c.h.b16 %v246
    %v1322 = vunpack.c.l.b16 %v247
    %v1323 = vunpack.c.h.b16 %v247
    %v1324 = vunpack.c.l.b16 %v248
    %v1325 = vunpack.c.h.b16 %v248
    %v1326 = vunpack.c.l.b16 %v249
    %v1327 = vunpack.c.h.b16 %v249
    %v1328 = vunpack.c.l.b16 %v250
    %v1329 = vunpack.c.h.b16 %v250
    %v1330 = vunpack.c.l.b16 %v251
    %v1331 = vunpack.c.h.b16 %v251
    %v1332 = vunpack.c.l.b16 %v252
    %v1333 = vunpack.c.h.b16 %v252
    %v1334 = vunpack.c.l.b16 %v253
    %v1335 = vunpack.c.h.b16 %v253
    %v1336 = vunpack.c.l.b16 %v254
    %v1337 = vunpack.c.h.b16 %v254
    %v1338 = vunpack.c.l.b16 %v255
    %v1339 = vunpack.c.h.b16 %v255
    %v1340 = vunpack.c.l.b16 %v256
    %v1341 = vunpack.c.h.b16 %v256
    %v1342 = vunpack.c.l.b16 %v257
    %v1343 = vunpack.c.h.b16 %v257
    %v1344 = vunpack.c.l.b16 %v258
    %v1345 = vunpack.c.h.b16 %v258
    %v1346 = vunpack.c.l.b16 %v259
    %v1347 = vunpack.c.h.b16 %v259
    %v1348 = vunpack.c.l.b16 %v260
    %v1349 = vunpack.c.h.b16 %v260
    %v1350 = vunpack.c.l.b16 %v261
    %v1351 = vunpack.c.h.b16 %v261
    %v1352 = vunpack.c.l.b16 %v262
    %v1353 = vunpack.c.h.b16 %v262
    %v1354 = vunpack.c.l.b16 %v263
    %v1355 = vunpack.c.h.b16 %v263
    %v1356 = vunpack.c.l.b16 %v264
    %v1357 = vunpack.c.h.b16 %v264
    %v1358 = vunpack.c.l.b16 %v265
    %v1359 = vunpack.c.h.b16 %v265
    %v1360 = vunpack.c.l.b16 %v266
    %v1361 = vunpack.c.h.b16 %v266
    %v1362 = vunpack.c.l.b16 %v267
    %v1363 = vunpack.c.h.b16 %v267
    %v1364 = vunpack.c.l.b16 %v268
    %v1365 = vunpack.c.h.b16 %v268
    %v1366 = vunpack.c.l.b16 %v269
    %v1367 = vunpack.c.h.b16 %v269
    %v1368 = vunpack.c.l.b16 %v270
    %v1369 = vunpack.c.h.b16 %v270
    %v1370 = vunpack.c.l.b16 %v271
    %v1371 = vunpack.c.h.b16 %v271
    %v1372 = vunpack.c.l.b16 %v272
    %v1373 = vunpack.c.h.b16 %v272
    %v1374 = vunpack.c.l.b16 %v273
    %v1375 = vunpack.c.h.b16 %v273
    %v1376 = vunpack.c.l.b16 %v274
    %v1377 = vunpack.c.h.b16 %v274
    %v1378 = vunpack.c.l.b16 %v275
    %v1379 = vunpack.c.h.b16 %v275
    %v1380 = vunpack.c.l.b16 %v276
    %v1381 = vunpack.c.h.b16 %v276
    %v1382 = vunpack.c.l.b16 %v277
    %v1383 = vunpack.c.h.b16 %v277
    %v1384 = vunpack.c.l.b16 %v278
    %v1385 = vunpack.c.h.b16 %v278
    %v1386 = vunpack.c.l.b16 %v279
    %v1387 = vunpack.c.h.b16 %v279
    %v1388 = vunpack.c.l.b16 %v280
    %v1389 = vunpack.c.h.b16 %v280
    %v1390 = vunpack.c.l.b16 %v281
    %v1391 = vunpack.c.h.b16 %v281
    %v1392 = vunpack.c.l.b16 %v282
    %v1393 = vunpack.c.h.b16 %v282
    %v1394 = vunpack.c.l.b16 %v283
    %v1395 = vunpack.c.h.b16 %v283
    %v1396 = vunpack.c.l.b16 %v284
    %v1397 = vunpack.c.h.b16 %v284
    %v1398 = vunpack.c.l.b16 %v285
    %v1399 = vunpack.c.h.b16 %v285
    %v1400 = vunpack.c.l.b16 %v286
    %v1401 = vunpack.c.h.b16 %v286
    %v1402 = vunpack.c.l.b16 %v287
    %v1403 = vunpack.c.h.b16 %v287
    %v1404 = vunpack.c.l.b16 %v288
    %v1405 = vunpack.c.h.b16 %v288
    %v1406 = vunpack.c.l.b16 %v289
    %v1407 = vunpack.c.h.b16 %v289
    %v1408 = vunpack.c.l.b16 %v290
    %v1409 = vunpack.c.h.b16 %v290
    %v1410 = vunpack.c.l.b16 %v291
    %v1411 = vunpack.c.h.b16 %v291
    %v1412 = vunpack.c.l.b16 %v292
    %v1413 = vunpack.c.h.b16 %v292
    %v1414 = vunpack.c.l.b16 %v293
    %v1415 = vunpack.c.h.b16 %v293
    %v1416 = vunpack.c.l.b16 %v294
    %v1417 = vunpack.c.h.b16 %v294
    %v1418 = vunpack.c.l.b16 %v295
    %v1419 = vunpack.c.h.b16 %v295
    %v1420 = vunpack.c.l.b16 %v296
    %v1421 = vunpack.c.h.b16 %v296
    %v1422 = vunpack.c.l.b16 %v297
    %v1423 = vunpack.c.h.b16 %v297
    %v1424 = vunpack.c.l.b16 %v298
    %v1425 = vunpack.c.h.b16 %v298
    %v1426 = vunpack.c.l.b16 %v299
    %v1427 = vunpack.c.h.b16 %v299
    %v1428 = vunpack.c.l.b16 %v300
    %v1429 = vunpack.c.h.b16 %v300
    %v1430 = vunpack.c.l.b16 %v301
    %v1431 = vunpack.c.h.b16 %v301
    %v1432 = vunpack.c.l.b16 %v302
    %v1433 = vunpack.c.h.b16 %v302
    %v1434 = vunpack.c.l.b16 %v303
    %v1435 = vunpack.c.h.b16 %v303
    %v1436 = vunpack.c.l.b16 %v304
    %v1437 = vunpack.c.h.b16 %v304
    %v1438 = vunpack.c.l.b16 %v305
    %v1439 = vunpack.c.h.b16 %v305
    %v1440 = vunpack.c.l.b16 %v306
    %v1441 = vunpack.c.h.b16 %v306
    %v1442 = vunpack.c.l.b16 %v307
    %v1443 = vunpack.c.h.b16 %v307
    %v1444 = vunpack.c.l.b16 %v308
    %v1445 = vunpack.c.h.b16 %v308
    %v1446 = vunpack.c.l.b16 %v309
    %v1447 = vunpack.c.h.b16 %v309
    %v1448 = vunpack.c.l.b16 %v310
    %v1449 = vunpack.c.h.b16 %v310
    %v1450 = vunpack.c.l.b16 %v311
    %v1451 = vunpack.c.h.b16 %v311
    %v1452 = vunpack.c.l.b16 %v312
    %v1453 = vunpack.c.h.b16 %v312
    %v1454 = vunpack.c.l.b16 %v313
    %v1455 = vunpack.c.h.b16 %v313
    %v1456 = vunpack.c.l.b16 %v314
    %v1457 = vunpack.c.h.b16 %v314
    %v1458 = vunpack.c.l.b16 %v315
    %v1459 = vunpack.c.h.b16 %v315
    %v1460 = vunpack.c.l.b16 %v316
    %v1461 = vunpack.c.h.b16 %v316
    %v1462 = vunpack.c.l.b16 %v317
    %v1463 = vunpack.c.h.b16 %v317
    %v1464 = vunpack.c.l.b16 %v318
    %v1465 = vunpack.c.h.b16 %v318
    %v1466 = vunpack.c.l.b16 %v319
    %v1467 = vunpack.c.h.b16 %v319
    %v1468 = vunpack.c.l.b16 %v320
    %v1469 = vunpack.c.h.b16 %v320
    %v1470 = vunpack.c.l.b16 %v321
    %v1471 = vunpack.c.h.b16 %v321
    %v1472 = vunpack.c.l.b16 %v322
    %v1473 = vunpack.c.h.b16 %v322
    %v1474 = vunpack.c.l.b16 %v323
    %v1475 = vunpack.c.h.b16 %v323
    %v1476 = vunpack.c.l.b16 %v324
    %v1477 = vunpack.c.h.b16 %v324
    %v1478 = vunpack.c.l.b16 %v325
    %v1479 = vunpack.c.h.b16 %v325
    %v1480 = vunpack.c.l.b16 %v326
    %v1481 = vunpack.c.h.b16 %v326
    %v1482 = vunpack.c.l.b16 %v327
    %v1483 = vunpack.c.h.b16 %v327
    %v1484 = vunpack.c.l.b16 %v328
    %v1485 = vunpack.c.h.b16 %v328
    %v1486 = vunpack.c.l.b16 %v329
    %v1487 = vunpack.c.h.b16 %v329
    %v1488 = vunpack.c.l.b16 %v330
    %v1489 = vunpack.c.h.b16 %v330
    %v1490 = vunpack.c.l.b16 %v331
    %v1491 = vunpack.c.h.b16 %v331
    %v1492 = vunpack.c.l.b16 %v332
    %v1493 = vunpack.c.h.b16 %v332
    %v1494 = vunpack.c.l.b16 %v333
    %v1495 = vunpack.c.h.b16 %v333
    %v1496 = vunpack.c.l.b16 %v334
    %v1497 = vunpack.c.h.b16 %v334
    %v1498 = vunpack.c.l.b16 %v335
    %v1499 = vunpack.c.h.b16 %v335
    %v1500 = vunpack.c.l.b16 %v336
    %v1501 = vunpack.c.h.b16 %v336
    %v1502 = vunpack.c.l.b16 %v337
    %v1503 = vunpack.c.h.b16 %v337
    %v1504 = vunpack.c.l.b16 %v338
    %v1505 = vunpack.c.h.b16 %v338
    %v1506 = vunpack.c.l.b16 %v339
    %v1507 = vunpack.c.h.b16 %v339
    %v1508 = vunpack.c.l.b16 %v340
    %v1509 = vunpack.c.h.b16 %v340
    %v1510 = vunpack.c.l.b16 %v341
    %v1511 = vunpack.c.h.b16 %v341
    %v1512 = vunpack.c.l.b16 %v342
    %v1513 = vunpack.c.h.b16 %v342
    %v1514 = vunpack.c.l.b16 %v343
    %v1515 = vunpack.c.h.b16 %v343
    %v1516 = vunpack.c.l.b16 %v344
    %v1517 = vunpack.c.h.b16 %v344
    %v1518 = vunpack.c.l.b16 %v345
    %v1519 = vunpack.c.h.b16 %v345
    %v1520 = vunpack.c.l.b16 %v346
    %v1521 = vunpack.c.h.b16 %v346
    %v1522 = vunpack.c.l.b16 %v347
    %v1523 = vunpack.c.h.b16 %v347
    %v1524 = vunpack.c.l.b16 %v348
    %v1525 = vunpack.c.h.b16 %v348
    %v1526 = vunpack.c.l.b16 %v349
    %v1527 = vunpack.c.h.b16 %v349
    %v1528 = vunpack.c.l.b16 %v350
    %v1529 = vunpack.c.h.b16 %v350
    %v1530 = vunpack.c.l.b16 %v351
    %v1531 = vunpack.c.h.b16 %v351
    %v1532 = vunpack.c.l.b16 %v352
    %v1533 = vunpack.c.h.b16 %v352
    %v1534 = vunpack.c.l.b16 %v353
    %v1535 = vunpack.c.h.b16 %v353
    %v1536 = vunpack.c.l.b16 %v354
    %v1537 = vunpack.c.h.b16 %v354
    %v1538 = vunpack.c.l.b16 %v355
    %v1539 = vunpack.c.h.b16 %v355
    %v1540 = vunpack.c.l.b16 %v356
    %v1541 = vunpack.c.h.b16 %v356
    %v1542 = vunpack.c.l.b16 %v357
    %v1543 = vunpack.c.h.b16 %v357
    %v1544 = vunpack.c.l.b16 %v358
    %v1545 = vunpack.c.h.b16 %v358
    %v1546 = vunpack.c.l.b16 %v359
    %v1547 = vunpack.c.h.b16 %v359
    %v1548 = vunpack.c.l.b16 %v360
    %v1549 = vunpack.c.h.b16 %v360
    %v1550 = vunpack.c.l.b16 %v361
    %v1551 = vunpack.c.h.b16 %v361
    %v1552 = vunpack.c.l.b16 %v362
    %v1553 = vunpack.c.h.b16 %v362
    %v1554 = vunpack.c.l.b16 %v363
    %v1555 = vunpack.c.h.b16 %v363
    %v1556 = vunpack.c.l.b16 %v364
    %v1557 = vunpack.c.h.b16 %v364
    %v1558 = vunpack.c.l.b16 %v365
    %v1559 = vunpack.c.h.b16 %v365
    %v1560 = vunpack.c.l.b16 %v366
    %v1561 = vunpack.c.h.b16 %v366
    %v1562 = vunpack.c.l.b16 %v367
    %v1563 = vunpack.c.h.b16 %v367
    %v1564 = vunpack.c.l.b16 %v368
    %v1565 = vunpack.c.h.b16 %v368
    %v1566 = vunpack.c.l.b16 %v369
    %v1567 = vunpack.c.h.b16 %v369
    %v1568 = vunpack.c.l.b16 %v370
    %v1569 = vunpack.c.h.b16 %v370
    %v1570 = vunpack.c.l.b16 %v371
    %v1571 = vunpack.c.h.b16 %v371
    %v1572 = vunpack.c.l.b16 %v372
    %v1573 = vunpack.c.h.b16 %v372
    %v1574 = vunpack.c.l.b16 %v373
    %v1575 = vunpack.c.h.b16 %v373
    %v1576 = vunpack.c.l.b16 %v374
    %v1577 = vunpack.c.h.b16 %v374
    %v1578 = vunpack.c.l.b16 %v375
    %v1579 = vunpack.c.h.b16 %v375
    %v1580 = vunpack.c.l.b16 %v376
    %v1581 = vunpack.c.h.b16 %v376
    %v1582 = vunpack.c.l.b16 %v377
    %v1583 = vunpack.c.h.b16 %v377
    %v1584 = vunpack.c.l.b16 %v378
    %v1585 = vunpack.c.h.b16 %v378
    %v1586 = vunpack.c.l.b16 %v379
    %v1587 = vunpack.c.h.b16 %v379
    %v1588 = vunpack.c.l.b16 %v380
    %v1589 = vunpack.c.h.b16 %v380
    %v1590 = vunpack.c.l.b16 %v381
    %v1591 = vunpack.c.h.b16 %v381
    %v1592 = vunpack.c.l.b16 %v382
    %v1593 = vunpack.c.h.b16 %v382
    %v1594 = vunpack.c.l.b16 %v383
    %v1595 = vunpack.c.h.b16 %v383
    %v1596 = vunpack.c.l.b16 %v384
    %v1597 = vunpack.c.h.b16 %v384
    %v1598 = vunpack.c.l.b16 %v385
    %v1599 = vunpack.c.h.b16 %v385
    %v1600 = vunpack.c.l.b16 %v386
    %v1601 = vunpack.c.h.b16 %v386
    %v1602 = vunpack.c.l.b16 %v387
    %v1603 = vunpack.c.h.b16 %v387
    %v1604 = vunpack.c.l.b16 %v388
    %v1605 = vunpack.c.h.b16 %v388
    %v1606 = vunpack.c.l.b16 %v389
    %v1607 = vunpack.c.h.b16 %v389
    %v1608 = vunpack.c.l.b16 %v390
    %v1609 = vunpack.c.h.b16 %v390
    %v1610 = vunpack.c.l.b16 %v391
    %v1611 = vunpack.c.h.b16 %v391
    %v1612 = vunpack.c.l.b16 %v392
    %v1613 = vunpack.c.h.b16 %v392
    %v1614 = vunpack.c.l.b16 %v393
    %v1615 = vunpack.c.h.b16 %v393
    %v1616 = vunpack.c.l.b16 %v394
    %v1617 = vunpack.c.h.b16 %v394
    %v1618 = vunpack.c.l.b16 %v395
    %v1619 = vunpack.c.h.b16 %v395
    %v1620 = vunpack.c.l.b16 %v396
    %v1621 = vunpack.c.h.b16 %v396
    %v1622 = vunpack.c.l.b16 %v397
    %v1623 = vunpack.c.h.b16 %v397
    %v1624 = vunpack.c.l.b16 %v398
    %v1625 = vunpack.c.h.b16 %v398
    %v1626 = vunpack.c.l.b16 %v399
    %v1627 = vunpack.c.h.b16 %v399
    %v1628 = vunpack.c.l.b16 %v400
    %v1629 = vunpack.c.h.b16 %v400
    %v1630 = vunpack.c.l.b16 %v401
    %v1631 = vunpack.c.h.b16 %v401
    %v1632 = vunpack.c.l.b16 %v402
    %v1633 = vunpack.c.h.b16 %v402
    %v1634 = vunpack.c.l.b16 %v403
    %v1635 = vunpack.c.h.b16 %v403
    %v1636 = vunpack.c.l.b16 %v404
    %v1637 = vunpack.c.h.b16 %v404
    %v1638 = vunpack.c.l.b16 %v405
    %v1639 = vunpack.c.h.b16 %v405
    %v1640 = vunpack.c.l.b16 %v406
    %v1641 = vunpack.c.h.b16 %v406
    %v1642 = vunpack.c.l.b16 %v407
    %v1643 = vunpack.c.h.b16 %v407
    %v1644 = vunpack.c.l.b16 %v408
    %v1645 = vunpack.c.h.b16 %v408
    %v1646 = vunpack.c.l.b16 %v409
    %v1647 = vunpack.c.h.b16 %v409
    %v1648 = vunpack.c.l.b16 %v410
    %v1649 = vunpack.c.h.b16 %v410
    %v1650 = vunpack.c.l.b16 %v411
    %v1651 = vunpack.c.h.b16 %v411
    %v1652 = vunpack.c.l.b16 %v412
    %v1653 = vunpack.c.h.b16 %v412
    %v1654 = vunpack.c.l.b16 %v413
    %v1655 = vunpack.c.h.b16 %v413
    %v1656 = vunpack.c.l.b16 %v414
    %v1657 = vunpack.c.h.b16 %v414
    %v1658 = vunpack.c.l.b16 %v415
    %v1659 = vunpack.c.h.b16 %v415
    %v1660 = vunpack.c.l.b16 %v416
    %v1661 = vunpack.c.h.b16 %v416
    %v1662 = vunpack.c.l.b16 %v417
    %v1663 = vunpack.c.h.b16 %v417
    %v1664 = vunpack.c.l.b16 %v418
    %v1665 = vunpack.c.h.b16 %v418
    %v1666 = vunpack.c.l.b16 %v419
    %v1667 = vunpack.c.h.b16 %v419
    %v1668 = vunpack.c.l.b16 %v420
    %v1669 = vunpack.c.h.b16 %v420
    %v1670 = vunpack.c.l.b16 %v421
    %v1671 = vunpack.c.h.b16 %v421
    %v1672 = vunpack.c.l.b16 %v422
    %v1673 = vunpack.c.h.b16 %v422
    %v1674 = vunpack.c.l.b16 %v423
    %v1675 = vunpack.c.h.b16 %v423
    %v1676 = vunpack.c.l.b16 %v424
    %v1677 = vunpack.c.h.b16 %v424
    %v1678 = vunpack.c.l.b16 %v425
    %v1679 = vunpack.c.h.b16 %v425
    %v1680 = vunpack.c.l.b16 %v426
    %v1681 = vunpack.c.h.b16 %v426
    %v1682 = vunpack.c.l.b16 %v427
    %v1683 = vunpack.c.h.b16 %v427
    %v1684 = vunpack.c.l.b16 %v428
    %v1685 = vunpack.c.h.b16 %v428
    %v1686 = vunpack.c.l.b16 %v429
    %v1687 = vunpack.c.h.b16 %v429
    %v1688 = vunpack.c.l.b16 %v430
    %v1689 = vunpack.c.h.b16 %v430
    %v1690 = vunpack.c.l.b16 %v431
    %v1691 = vunpack.c.h.b16 %v431
    %v1692 = vunpack.c.l.b16 %v432
    %v1693 = vunpack.c.h.b16 %v432
    %v1694 = vunpack.c.l.b16 %v433
    %v1695 = vunpack.c.h.b16 %v433
    %v1696 = vunpack.c.l.b16 %v434
    %v1697 = vunpack.c.h.b16 %v434
    %v1698 = vunpack.c.l.b16 %v435
    %v1699 = vunpack.c.h.b16 %v435
    %v1700 = vunpack.c.l.b16 %v436
    %v1701 = vunpack.c.h.b16 %v436
    %v1702 = vunpack.c.l.b16 %v437
    %v1703 = vunpack.c.h.b16 %v437
    %v1704 = vunpack.c.l.b16 %v438
    %v1705 = vunpack.c.h.b16 %v438
    %v1706 = vunpack.c.l.b16 %v439
    %v1707 = vunpack.c.h.b16 %v439
    %v1708 = vunpack.c.l.b16 %v440
    %v1709 = vunpack.c.h.b16 %v440
    %v1710 = vunpack.c.l.b16 %v441
    %v1711 = vunpack.c.h.b16 %v441
    %v1712 = vunpack.c.l.b16 %v442
    %v1713 = vunpack.c.h.b16 %v442
    %v1714 = vunpack.c.l.b16 %v443
    %v1715 = vunpack.c.h.b16 %v443
    %v1716 = vunpack.c.l.b16 %v444
    %v1717 = vunpack.c.h.b16 %v444
    %v1718 = vunpack.c.l.b16 %v445
    %v1719 = vunpack.c.h.b16 %v445
    %v1720 = vunpack.c.l.b16 %v446
    %v1721 = vunpack.c.h.b16 %v446
    %v1722 = vunpack.c.l.b16 %v447
    %v1723 = vunpack.c.h.b16 %v447
    %v1724 = vunpack.c.l.b16 %v448
    %v1725 = vunpack.c.h.b16 %v448
    %v1726 = vunpack.c.l.b16 %v449
    %v1727 = vunpack.c.h.b16 %v449
    %v1728 = vunpack.c.l.b16 %v450
    %v1729 = vunpack.c.h.b16 %v450
    %v1730 = vunpack.c.l.b16 %v451
    %v1731 = vunpack.c.h.b16 %v451
    %v1732 = vunpack.c.l.b16 %v452
    %v1733 = vunpack.c.h.b16 %v452
    %v1734 = vunpack.c.l.b16 %v453
    %v1735 = vunpack.c.h.b16 %v453
    %v1736 = vunpack.c.l.b16 %v454
    %v1737 = vunpack.c.h.b16 %v454
    %v1738 = vunpack.c.l.b16 %v455
    %v1739 = vunpack.c.h.b16 %v455
    %v1740 = vunpack.c.l.b16 %v456
    %v1741 = vunpack.c.h.b16 %v456
    %v1742 = vunpack.c.l.b16 %v457
    %v1743 = vunpack.c.h.b16 %v457
    %v1744 = vunpack.c.l.b16 %v458
    %v1745 = vunpack.c.h.b16 %v458
    %v1746 = vunpack.c.l.b16 %v459
    %v1747 = vunpack.c.h.b16 %v459
    %v1748 = vunpack.c.l.b16 %v460
    %v1749 = vunpack.c.h.b16 %v460
    %v1750 = vunpack.c.l.b16 %v461
    %v1751 = vunpack.c.h.b16 %v461
    %v1752 = vunpack.c.l.b16 %v462
    %v1753 = vunpack.c.h.b16 %v462
    %v1754 = vunpack.c.l.b16 %v463
    %v1755 = vunpack.c.h.b16 %v463
    %v1756 = vunpack.c.l.b16 %v464
    %v1757 = vunpack.c.h.b16 %v464
    %v1758 = vunpack.c.l.b16 %v465
    %v1759 = vunpack.c.h.b16 %v465
    %v1760 = vunpack.c.l.b16 %v466
    %v1761 = vunpack.c.h.b16 %v466
    %v1762 = vunpack.c.l.b16 %v467
    %v1763 = vunpack.c.h.b16 %v467
    %v1764 = vunpack.c.l.b16 %v468
    %v1765 = vunpack.c.h.b16 %v468
    %v1766 = vunpack.c.l.b16 %v469
    %v1767 = vunpack.c.h.b16 %v469
    %v1768 = vunpack.c.l.b16 %v470
    %v1769 = vunpack.c.h.b16 %v470
    %v1770 = vunpack.c.l.b16 %v471
    %v1771 = vunpack.c.h.b16 %v471
    %v1772 = vunpack.c.l.b16 %v472
    %v1773 = vunpack.c.h.b16 %v472
    %v1774 = vunpack.c.l.b16 %v473
    %v1775 = vunpack.c.h.b16 %v473
    %v1776 = vunpack.c.l.b16 %v474
    %v1777 = vunpack.c.h.b16 %v474
    %v1778 = vunpack.c.l.b16 %v475
    %v1779 = vunpack.c.h.b16 %v475
    %v1780 = vunpack.c.l.b16 %v476
    %v1781 = vunpack.c.h.b16 %v476
    %v1782 = vunpack.c.l.b16 %v477
    %v1783 = vunpack.c.h.b16 %v477
    %v1784 = vunpack.c.l.b16 %v478
    %v1785 = vunpack.c.h.b16 %v478
    %v1786 = vunpack.c.l.b16 %v479
    %v1787 = vunpack.c.h.b16 %v479
    %v1788 = vunpack.c.l.b16 %v480
    %v1789 = vunpack.c.h.b16 %v480
    %v1790 = vunpack.c.l.b16 %v481
    %v1791 = vunpack.c.h.b16 %v481
    %v1792 = vunpack.c.l.b16 %v482
    %v1793 = vunpack.c.h.b16 %v482
    %v1794 = vunpack.c.l.b16 %v483
    %v1795 = vunpack.c.h.b16 %v483
    %v1796 = vunpack.c.l.b16 %v484
    %v1797 = vunpack.c.h.b16 %v484
    %v1798 = vunpack.c.l.b16 %v485
    %v1799 = vunpack.c.h.b16 %v485
    %v1800 = vunpack.c.l.b16 %v486
    %v1801 = vunpack.c.h.b16 %v486
    %v1802 = vunpack.c.l.b16 %v487
    %v1803 = vunpack.c.h.b16 %v487
    %v1804 = vunpack.c.l.b16 %v488
    %v1805 = vunpack.c.h.b16 %v488
    %v1806 = vunpack.c.l.b16 %v489
    %v1807 = vunpack.c.h.b16 %v489
    %v1808 = vunpack.c.l.b16 %v490
    %v1809 = vunpack.c.h.b16 %v490
    %v1810 = vunpack.c.l.b16 %v491
    %v1811 = vunpack.c.h.b16 %v491
    %v1812 = vunpack.c.l.b16 %v492
    %v1813 = vunpack.c.h.b16 %v492
    %v1814 = vunpack.c.l.b16 %v493
    %v1815 = vunpack.c.h.b16 %v493
    %v1816 = vunpack.c.l.b16 %v494
    %v1817 = vunpack.c.h.b16 %v494
    %v1818 = vunpack.c.l.b16 %v495
    %v1819 = vunpack.c.h.b16 %v495
    %v1820 = vunpack.c.l.b16 %v496
    %v1821 = vunpack.c.h.b16 %v496
    %v1822 = vunpack.c.l.b16 %v497
    %v1823 = vunpack.c.h.b16 %v497
    %v1824 = vunpack.c.l.b16 %v498
    %v1825 = vunpack.c.h.b16 %v498
    %v1826 = vunpack.c.l.b16 %v499
    %v1827 = vunpack.c.h.b16 %v499
    %v1828 = vunpack.c.l.b16 %v500
    %v1829 = vunpack.c.h.b16 %v500
    %v1830 = vunpack.c.l.b16 %v501
    %v1831 = vunpack.c.h.b16 %v501
    %v1832 = vunpack.c.l.b16 %v502
    %v1833 = vunpack.c.h.b16 %v502
    %v1834 = vunpack.c.l.b16 %v503
    %v1835 = vunpack.c.h.b16 %v503
    %v1836 = vunpack.c.l.b16 %v504
    %v1837 = vunpack.c.h.b16 %v504
    %v1838 = vunpack.c.l.b16 %v505
    %v1839 = vunpack.c.h.b16 %v505
    %v1840 = vunpack.c.l.b16 %v506
    %v1841 = vunpack.c.h.b16 %v506
    %v1842 = vunpack.c.l.b16 %v507
    %v1843 = vunpack.c.h.b16 %v507
    %v1844 = vunpack.c.l.b16 %v508
    %v1845 = vunpack.c.h.b16 %v508
    %v1846 = vunpack.c.l.b16 %v509
    %v1847 = vunpack.c.h.b16 %v509
    %v1848 = vunpack.c.l.b16 %v510
    %v1849 = vunpack.c.h.b16 %v510
    %v1850 = vunpack.c.l.b16 %v511
    %v1851 = vunpack.c.h.b16 %v511
    %v1852 = vunpack.c.l.b16 %v512
    %v1853 = vunpack.c.h.b16 %v512
    %v1854 = vunpack.c.l.b16 %v513
    %v1855 = vunpack.c.h.b16 %v513
    %v1856 = vunpack.c.l.b16 %v514
    %v1857 = vunpack.c.h.b16 %v514
    %v1858 = vunpack.c.l.b16 %v515
    %v1859 = vunpack.c.h.b16 %v515
    %v1860 = vunpack.c.l.b16 %v516
    %v1861 = vunpack.c.h.b16 %v516
    %v1862 = vunpack.c.l.b16 %v517
    %v1863 = vunpack.c.h.b16 %v517
    %v1864 = vunpack.c.l.b16 %v518
    %v1865 = vunpack.c.h.b16 %v518
    %v1866 = vunpack.c.l.b16 %v519
    %v1867 = vunpack.c.h.b16 %v519
    %v1868 = vunpack.c.l.b16 %v520
    %v1869 = vunpack.c.h.b16 %v520
    %v1870 = vunpack.c.l.b16 %v521
    %v1871 = vunpack.c.h.b16 %v521
    %v1872 = vunpack.c.l.b16 %v522
    %v1873 = vunpack.c.h.b16 %v522
    %v1874 = vunpack.c.l.b16 %v523
    %v1875 = vunpack.c.h.b16 %v523
    %v1876 = vunpack.c.l.b16 %v524
    %v1877 = vunpack.c.h.b16 %v524
    %v1878 = vunpack.c.l.b16 %v525
    %v1879 = vunpack.c.h.b16 %v525
    %v1880 = vunpack.c.l.b16 %v526
    %v1881 = vunpack.c.h.b16 %v526
    %v1882 = vunpack.c.l.b16 %v527
    %v1883 = vunpack.c.h.b16 %v527
    %v1884 = vunpack.c.l.b16 %v528
    %v1885 = vunpack.c.h.b16 %v528
    %v1886 = vunpack.c.l.b16 %v529
    %v1887 = vunpack.c.h.b16 %v529
    %v1888 = vunpack.c.l.b16 %v530
    %v1889 = vunpack.c.h.b16 %v530
    %v1890 = vunpack.c.l.b16 %v531
    %v1891 = vunpack.c.h.b16 %v531
    %v1892 = vunpack.c.l.b16 %v532
    %v1893 = vunpack.c.h.b16 %v532
    %v1894 = vunpack.c.l.b16 %v533
    %v1895 = vunpack.c.h.b16 %v533
    %v1896 = vunpack.c.l.b16 %v534
    %v1897 = vunpack.c.h.b16 %v534
    %v1898 = vunpack.c.l.b16 %v535
    %v1899 = vunpack.c.h.b16 %v535
    %v1900 = vunpack.c.l.b16 %v536
    %v1901 = vunpack.c.h.b16 %v536
    %v1902 = vunpack.c.l.b16 %v537
    %v1903 = vunpack.c.h.b16 %v537
    %v1904 = vunpack.c.l.b16 %v538
    %v1905 = vunpack.c.h.b16 %v538
    %v1906 = vunpack.c.l.b16 %v539
    %v1907 = vunpack.c.h.b16 %v539
    %v1908 = vunpack.c.l.b16 %v540
    %v1909 = vunpack.c.h.b16 %v540
    %v1910 = vunpack.c.l.b16 %v541
    %v1911 = vunpack.c.h.b16 %v541
    %v1912 = vunpack.c.l.b16 %v542
    %v1913 = vunpack.c.h.b16 %v542
    %v1914 = vunpack.c.l.b16 %v543
    %v1915 = vunpack.c.h.b16 %v543
    %v1916 = vunpack.c.l.b16 %v544
    %v1917 = vunpack.c.h.b16 %v544
    %v1918 = vunpack.c.l.b16 %v545
    %v1919 = vunpack.c.h.b16 %v545
    %v1920 = vunpack.c.l.b16 %v546
    %v1921 = vunpack.c.h.b16 %v546
    %v1922 = vunpack.c.l.b16 %v547
    %v1923 = vunpack.c.h.b16 %v547
    %v1924 = vunpack.c.l.b16 %v548
    %v1925 = vunpack.c.h.b16 %v548
    %v1926 = vunpack.c.l.b16 %v549
    %v1927 = vunpack.c.h.b16 %v549
    %v1928 = vunpack.c.l.b16 %v550
    %v1929 = vunpack.c.h.b16 %v550
    %v1930 = vunpack.c.l.b16 %v551
    %v1931 = vunpack.c.h.b16 %v551
    %v1932 = vunpack.c.l.b16 %v552
    %v1933 = vunpack.c.h.b16 %v552
    %v1934 = vunpack.c.l.b16 %v553
    %v1935 = vunpack.c.h.b16 %v553
    %v1936 = vunpack.c.l.b16 %v554
    %v1937 = vunpack.c.h.b16 %v554
    %v1938 = vunpack.c.l.b16 %v555
    %v1939 = vunpack.c.h.b16 %v555
    %v1940 = vunpack.c.l.b16 %v556
    %v1941 = vunpack.c.h.b16 %v556
    %v1942 = vunpack.c.l.b16 %v557
    %v1943 = vunpack.c.h.b16 %v557
    %v1944 = vunpack.c.l.b16 %v558
    %v1945 = vunpack.c.h.b16 %v558
    %v1946 = vunpack.c.l.b16 %v559
    %v1947 = vunpack.c.h.b16 %v559
    %v1948 = vunpack.c.l.b16 %v560
    %v1949 = vunpack.c.h.b16 %v560
    %v1950 = vunpack.c.l.b16 %v561
    %v1951 = vunpack.c.h.b16 %v561
    %v1952 = vunpack.c.l.b16 %v562
    %v1953 = vunpack.c.h.b16 %v562
    %v1954 = vunpack.c.l.b16 %v563
    %v1955 = vunpack.c.h.b16 %v563
    %v1956 = vunpack.c.l.b16 %v564
    %v1957 = vunpack.c.h.b16 %v564
    %v1958 = vunpack.c.l.b16 %v565
    %v1959 = vunpack.c.h.b16 %v565
    %v1960 = vunpack.c.l.b16 %v566
    %v1961 = vunpack.c.h.b16 %v566
    %v1962 = vunpack.c.l.b16 %v567
    %v1963 = vunpack.c.h.b16 %v567
    %v1964 = vunpack.c.l.b16 %v568
    %v1965 = vunpack.c.h.b16 %v568
    %v1966 = vunpack.c.l.b16 %v569
    %v1967 = vunpack.c.h.b16 %v569
    %v1968 = vunpack.c.l.b16 %v570
    %v1969 = vunpack.c.h.b16 %v570
    %v1970 = vunpack.c.l.b16 %v571
    %v1971 = vunpack.c.h.b16 %v571
    %v1972 = vunpack.c.l.b16 %v572
    %v1973 = vunpack.c.h.b16 %v572
    %v1974 = vunpack.c.l.b16 %v573
    %v1975 = vunpack.c.h.b16 %v573
    %v1976 = vunpack.c.l.b16 %v574
    %v1977 = vunpack.c.h.b16 %v574
    %v1978 = vunpack.c.l.b16 %v575
    %v1979 = vunpack.c.h.b16 %v575
    %v1980 = vunpack.c.l.b16 %v576
    %v1981 = vunpack.c.h.b16 %v576
    %v1982 = vunpack.c.l.b16 %v577
    %v1983 = vunpack.c.h.b16 %v577
    %v1984 = vunpack.c.l.b16 %v578
    %v1985 = vunpack.c.h.b16 %v578
    %v1986 = vunpack.c.l.b16 %v579
    %v1987 = vunpack.c.h.b16 %v579
    %v1988 = vunpack.c.l.b16 %v580
    %v1989 = vunpack.c.h.b16 %v580
    %v1990 = vunpack.c.l.b16 %v581
    %v1991 = vunpack.c.h.b16 %v581
    %v1992 = vunpack.c.l.b16 %v582
    %v1993 = vunpack.c.h.b16 %v582
    %v1994 = vunpack.c.l.b16 %v583
    %v1995 = vunpack.c.h.b16 %v583
    %v1996 = vunpack.c.l.b16 %v584
    %v1997 = vunpack.c.h.b16 %v584
    %v1998 = vunpack.c.l.b16 %v585
    %v1999 = vunpack.c.h.b16 %v585
    %v2000 = vunpack.c.l.b16 %v586
    %v2001 = vunpack.c.h.b16 %v586
    %v2002 = vunpack.c.l.b16 %v587
    %v2003 = vunpack.c.h.b16 %v587
    %v2004 = vunpack.c.l.b16 %v588
    %v2005 = vunpack.c.h.b16 %v588
    %v2006 = vunpack.c.l.b16 %v589
    %v2007 = vunpack.c.h.b16 %v589
    %v2008 = vunpack.c.l.b16 %v590
    %v2009 = vunpack.c.h.b16 %v590
    %v2010 = vunpack.c.l.b16 %v591
    %v2011 = vunpack.c.h.b16 %v591
    %v2012 = vunpack.c.l.b16 %v592
    %v2013 = vunpack.c.h.b16 %v592
    %v2014 = vunpack.c.l.b16 %v593
    %v2015 = vunpack.c.h.b16 %v593
    %v2016 = vpack.c.b16 %v1128, %v1120
    %v2017 = vpack.c.b16 %v1129, %v1121
    %v2018 = vpack.c.b16 %v1130, %v1122
    %v2019 = vpack.c.b16 %v1131, %v1123
    %v2020 = vpack.c.b16 %v1132, %v1124
    %v2021 = vpack.c.b16 %v1133, %v1125
    %v2022 = vpack.c.b16 %v1134, %v1126
    %v2023 = vpack.c.b16 %v1135, %v1127
    %v2024 = vpack.c.b16 %v1144, %v1136
    %v2025 = vpack.c.b16 %v1145, %v1137
    %v2026 = vpack.c.b16 %v1146, %v1138
    %v2027 = vpack.c.b16 %v1147, %v1139
    %v2028 = vpack.c.b16 %v1148, %v1140
    %v2029 = vpack.c.b16 %v1149, %v1141
    %v2030 = vpack.c.b16 %v1150, %v1142
    %v2031 = vpack.c.b16 %v1151, %v1143
    %v2032 = vpack.c.b16 %v1160, %v1152
    %v2033 = vpack.c.b16 %v1161, %v1153
    %v2034 = vpack.c.b16 %v1162, %v1154
    %v2035 = vpack.c.b16 %v1163, %v1155
    %v2036 = vpack.c.b16 %v1164, %v1156
    %v2037 = vpack.c.b16 %v1165, %v1157
    %v2038 = vpack.c.b16 %v1166, %v1158
    %v2039 = vpack.c.b16 %v1167, %v1159
    %v2040 = vpack.c.b16 %v1176, %v1168
    %v2041 = vpack.c.b16 %v1177, %v1169
    %v2042 = vpack.c.b16 %v1178, %v1170
    %v2043 = vpack.c.b16 %v1179, %v1171
    %v2044 = vpack.c.b16 %v1180, %v1172
    %v2045 = vpack.c.b16 %v1181, %v1173
    %v2046 = vpack.c.b16 %v1182, %v1174
    %v2047 = vpack.c.b16 %v1183, %v1175
    %v2048 = vpack.c.b16 %v1192, %v1184
    %v2049 = vpack.c.b16 %v1193, %v1185
    %v2050 = vpack.c.b16 %v1194, %v1186
    %v2051 = vpack.c.b16 %v1195, %v1187
    %v2052 = vpack.c.b16 %v1196, %v1188
    %v2053 = vpack.c.b16 %v1197, %v1189
    %v2054 = vpack.c.b16 %v1198, %v1190
    %v2055 = vpack.c.b16 %v1199, %v1191
    %v2056 = vpack.c.b16 %v1208, %v1200
    %v2057 = vpack.c.b16 %v1209, %v1201
    %v2058 = vpack.c.b16 %v1210, %v1202
    %v2059 = vpack.c.b16 %v1211, %v1203
    %v2060 = vpack.c.b16 %v1212, %v1204
    %v2061 = vpack.c.b16 %v1213, %v1205
    %v2062 = vpack.c.b16 %v1214, %v1206
    %v2063 = vpack.c.b16 %v1215, %v1207
    %v2064 = vpack.c.b16 %v1224, %v1216
    %v2065 = vpack.c.b16 %v1225, %v1217
    %v2066 = vpack.c.b16 %v1226, %v1218
    %v2067 = vpack.c.b16 %v1227, %v1219
    %v2068 = vpack.c.b16 %v1228, %v1220
    %v2069 = vpack.c.b16 %v1229, %v1221
    %v2070 = vpack.c.b16 %v1230, %v1222
    %v2071 = vpack.c.b16 %v1231, %v1223
    %v2072 = vpack.c.b16 %v1240, %v1232
    %v2073 = vpack.c.b16 %v1241, %v1233
    %v2074 = vpack.c.b16 %v1242, %v1234
    %v2075 = vpack.c.b16 %v1243, %v1235
    %v2076 = vpack.c.b16 %v1244, %v1236
    %v2077 = vpack.c.b16 %v1245, %v1237
    %v2078 = vpack.c.b16 %v1246, %v1238
    %v2079 = vpack.c.b16 %v1247, %v1239
    %v2080 = vpack.c.b16 %v1256, %v1248
    %v2081 = vpack.c.b16 %v1257, %v1249
    %v2082 = vpack.c.b16 %v1258, %v1250
    %v2083 = vpack.c.b16 %v1259, %v1251
    %v2084 = vpack.c.b16 %v1260, %v1252
    %v2085 = vpack.c.b16 %v1261, %v1253
    %v2086 = vpack.c.b16 %v1262, %v1254
    %v2087 = vpack.c.b16 %v1263, %v1255
    %v2088 = vpack.c.b16 %v1272, %v1264
    %v2089 = vpack.c.b16 %v1273, %v1265
    %v2090 = vpack.c.b16 %v1274, %v1266
    %v2091 = vpack.c.b16 %v1275, %v1267
    %v2092 = vpack.c.b16 %v1276, %v1268
    %v2093 = vpack.c.b16 %v1277, %v1269
    %v2094 = vpack.c.b16 %v1278, %v1270
    %v2095 = vpack.c.b16 %v1279, %v1271
    %v2096 = vpack.c.b16 %v1288, %v1280
    %v2097 = vpack.c.b16 %v1289, %v1281
    %v2098 = vpack.c.b16 %v1290, %v1282
    %v2099 = vpack.c.b16 %v1291, %v1283
    %v2100 = vpack.c.b16 %v1292, %v1284
    %v2101 = vpack.c.b16 %v1293, %v1285
    %v2102 = vpack.c.b16 %v1294, %v1286
    %v2103 = vpack.c.b16 %v1295, %v1287
    %v2104 = vpack.c.b16 %v1304, %v1296
    %v2105 = vpack.c.b16 %v1305, %v1297
    %v2106 = vpack.c.b16 %v1306, %v1298
    %v2107 = vpack.c.b16 %v1307, %v1299
    %v2108 = vpack.c.b16 %v1308, %v1300
    %v2109 = vpack.c.b16 %v1309, %v1301
    %v2110 = vpack.c.b16 %v1310, %v1302
    %v2111 = vpack.c.b16 %v1311, %v1303
    %v2112 = vpack.c.b16 %v1320, %v1312
    %v2113 = vpack.c.b16 %v1321, %v1313
    %v2114 = vpack.c.b16 %v1322, %v1314
    %v2115 = vpack.c.b16 %v1323, %v1315
    %v2116 = vpack.c.b16 %v1324, %v1316
    %v2117 = vpack.c.b16 %v1325, %v1317
    %v2118 = vpack.c.b16 %v1326, %v1318
    %v2119 = vpack.c.b16 %v1327, %v1319
    %v2120 = vpack.c.b16 %v1336, %v1328
    %v2121 = vpack.c.b16 %v1337, %v1329
    %v2122 = vpack.c.b16 %v1338, %v1330
    %v2123 = vpack.c.b16 %v1339, %v1331
    %v2124 = vpack.c.b16 %v1340, %v1332
    %v2125 = vpack.c.b16 %v1341, %v1333
    %v2126 = vpack.c.b16 %v1342, %v1334
    %v2127 = vpack.c.b16 %v1343, %v1335
    %v2128 = vpack.c.b16 %v1352, %v1344
    %v2129 = vpack.c.b16 %v1353, %v1345
    %v2130 = vpack.c.b16 %v1354, %v1346
    %v2131 = vpack.c.b16 %v1355, %v1347
    %v2132 = vpack.c.b16 %v1356, %v1348
    %v2133 = vpack.c.b16 %v1357, %v1349
    %v2134 = vpack.c.b16 %v1358, %v1350
    %v2135 = vpack.c.b16 %v1359, %v1351
    %v2136 = vpack.c.b16 %v1368, %v1360
    %v2137 = vpack.c.b16 %v1369, %v1361
    %v2138 = vpack.c.b16 %v1370, %v1362
    %v2139 = vpack.c.b16 %v1371, %v1363
    %v2140 = vpack.c.b16 %v1372, %v1364
    %v2141 = vpack.c.b16 %v1373, %v1365
    %v2142 = vpack.c.b16 %v1374, %v1366
    %v2143 = vpack.c.b16 %v1375, %v1367
    %v2144 = vpack.c.b16 %v1384, %v1376
    %v2145 = vpack.c.b16 %v1385, %v1377
    %v2146 = vpack.c.b16 %v1386, %v1378
    %v2147 = vpack.c.b16 %v1387, %v1379
    %v2148 = vpack.c.b16 %v1388, %v1380
    %v2149 = vpack.c.b16 %v1389, %v1381
    %v2150 = vpack.c.b16 %v1390, %v1382
    %v2151 = vpack.c.b16 %v1391, %v1383
    %v2152 = vpack.c.b16 %v1400, %v1392
    %v2153 = vpack.c.b16 %v1401, %v1393
    %v2154 = vpack.c.b16 %v1402, %v1394
    %v2155 = vpack.c.b16 %v1403, %v1395
    %v2156 = vpack.c.b16 %v1404, %v1396
    %v2157 = vpack.c.b16 %v1405, %v1397
    %v2158 = vpack.c.b16 %v1406, %v1398
    %v2159 = vpack.c.b16 %v1407, %v1399
    %v2160 = vpack.c.b16 %v1416, %v1408
    %v2161 = vpack.c.b16 %v1417, %v1409
    %v2162 = vpack.c.b16 %v1418, %v1410
    %v2163 = vpack.c.b16 %v1419, %v1411
    %v2164 = vpack.c.b16 %v1420, %v1412
    %v2165 = vpack.c.b16 %v1421, %v1413
    %v2166 = vpack.c.b16 %v1422, %v1414
    %v2167 = vpack.c.b16 %v1423, %v1415
    %v2168 = vpack.c.b16 %v1432, %v1424
    %v2169 = vpack.c.b16 %v1433, %v1425
    %v2170 = vpack.c.b16 %v1434, %v1426
    %v2171 = vpack.c.b16 %v1435, %v1427
    %v2172 = vpack.c.b16 %v1436, %v1428
    %v2173 = vpack.c.b16 %v1437, %v1429
    %v2174 = vpack.c.b16 %v1438, %v1430
    %v2175 = vpack.c.b16 %v1439, %v1431
    %v2176 = vpack.c.b16 %v1448, %v1440
    %v2177 = vpack.c.b16 %v1449, %v1441
    %v2178 = vpack.c.b16 %v1450, %v1442
    %v2179 = vpack.c.b16 %v1451, %v1443
    %v2180 = vpack.c.b16 %v1452, %v1444
    %v2181 = vpack.c.b16 %v1453, %v1445
    %v2182 = vpack.c.b16 %v1454, %v1446
    %v2183 = vpack.c.b16 %v1455, %v1447
    %v2184 = vpack.c.b16 %v1464, %v1456
    %v2185 = vpack.c.b16 %v1465, %v1457
    %v2186 = vpack.c.b16 %v1466, %v1458
    %v2187 = vpack.c.b16 %v1467, %v1459
    %v2188 = vpack.c.b16 %v1468, %v1460
    %v2189 = vpack.c.b16 %v1469, %v1461
    %v2190 = vpack.c.b16 %v1470, %v1462
    %v2191 = vpack.c.b16 %v1471, %v1463
    %v2192 = vpack.c.b16 %v1480, %v1472
    %v2193 = vpack.c.b16 %v1481, %v1473
    %v2194 = vpack.c.b16 %v1482, %v1474
    %v2195 = vpack.c.b16 %v1483, %v1475
    %v2196 = vpack.c.b16 %v1484, %v1476
    %v2197 = vpack.c.b16 %v1485, %v1477
    %v2198 = vpack.c.b16 %v1486, %v1478
    %v2199 = vpack.c.b16 %v1487, %v1479
    %v2200 = vpack.c.b16 %v1496, %v1488
    %v2201 = vpack.c.b16 %v1497, %v1489
    %v2202 = vpack.c.b16 %v1498, %v1490
    %v2203 = vpack.c.b16 %v1499, %v1491
    %v2204 = vpack.c.b16 %v1500, %v1492
    %v2205 = vpack.c.b16 %v1501, %v1493
    %v2206 = vpack.c.b16 %v1502, %v1494
    %v2207 = vpack.c.b16 %v1503, %v1495
    %v2208 = vpack.c.b16 %v1512, %v1504
    %v2209 = vpack.c.b16 %v1513, %v1505
    %v2210 = vpack.c.b16 %v1514, %v1506
    %v2211 = vpack.c.b16 %v1515, %v1507
    %v2212 = vpack.c.b16 %v1516, %v1508
    %v2213 = vpack.c.b16 %v1517, %v1509
    %v2214 = vpack.c.b16 %v1518, %v1510
    %v2215 = vpack.c.b16 %v1519, %v1511
    %v2216 = vpack.c.b16 %v1528, %v1520
    %v2217 = vpack.c.b16 %v1529, %v1521
    %v2218 = vpack.c.b16 %v1530, %v1522
    %v2219 = vpack.c.b16 %v1531, %v1523
    %v2220 = vpack.c.b16 %v1532, %v1524
    %v2221 = vpack.c.b16 %v1533, %v1525
    %v2222 = vpack.c.b16 %v1534, %v1526
    %v2223 = vpack.c.b16 %v1535, %v1527
    %v2224 = vpack.c.b16 %v1544, %v1536
    %v2225 = vpack.c.b16 %v1545, %v1537
    %v2226 = vpack.c.b16 %v1546, %v1538
    %v2227 = vpack.c.b16 %v1547, %v1539
    %v2228 = vpack.c.b16 %v1548, %v1540
    %v2229 = vpack.c.b16 %v1549, %v1541
    %v2230 = vpack.c.b16 %v1550, %v1542
    %v2231 = vpack.c.b16 %v1551, %v1543
    %v2232 = vpack.c.b16 %v1560, %v1552
    %v2233 = vpack.c.b16 %v1561, %v1553
    %v2234 = vpack.c.b16 %v1562, %v1554
    %v2235 = vpack.c.b16 %v1563, %v1555
    %v2236 = vpack.c.b16 %v1564, %v1556
    %v2237 = vpack.c.b16 %v1565, %v1557
    %v2238 = vpack.c.b16 %v1566, %v1558
    %v2239 = vpack.c.b16 %v1567, %v1559
    %v2240 = vpack.c.b16 %v1576, %v1568
    %v2241 = vpack.c.b16 %v1577, %v1569
    %v2242 = vpack.c.b16 %v1578, %v1570
    %v2243 = vpack.c.b16 %v1579, %v1571
    %v2244 = vpack.c.b16 %v1580, %v1572
    %v2245 = vpack.c.b16 %v1581, %v1573
    %v2246 = vpack.c.b16 %v1582, %v1574
    %v2247 = vpack.c.b16 %v1583, %v1575
    %v2248 = vpack.c.b16 %v1592, %v1584
    %v2249 = vpack.c.b16 %v1593, %v1585
    %v2250 = vpack.c.b16 %v1594, %v1586
    %v2251 = vpack.c.b16 %v1595, %v1587
    %v2252 = vpack.c.b16 %v1596, %v1588
    %v2253 = vpack.c.b16 %v1597, %v1589
    %v2254 = vpack.c.b16 %v1598, %v1590
    %v2255 = vpack.c.b16 %v1599, %v1591
    %v2256 = vpack.c.b16 %v1608, %v1600
    %v2257 = vpack.c.b16 %v1609, %v1601
    %v2258 = vpack.c.b16 %v1610, %v1602
    %v2259 = vpack.c.b16 %v1611, %v1603
    %v2260 = vpack.c.b16 %v1612, %v1604
    %v2261 = vpack.c.b16 %v1613, %v1605
    %v2262 = vpack.c.b16 %v1614, %v1606
    %v2263 = vpack.c.b16 %v1615, %v1607
    %v2264 = vpack.c.b16 %v1624, %v1616
    %v2265 = vpack.c.b16 %v1625, %v1617
    %v2266 = vpack.c.b16 %v1626, %v1618
    %v2267 = vpack.c.b16 %v1627, %v1619
    %v2268 = vpack.c.b16 %v1628, %v1620
    %v2269 = vpack.c.b16 %v1629, %v1621
    %v2270 = vpack.c.b16 %v1630, %v1622
    %v2271 = vpack.c.b16 %v1631, %v1623
    %v2272 = vpack.c.b16 %v1640, %v1632
    %v2273 = vpack.c.b16 %v1641, %v1633
    %v2274 = vpack.c.b16 %v1642, %v1634
    %v2275 = vpack.c.b16 %v1643, %v1635
    %v2276 = vpack.c.b16 %v1644, %v1636
    %v2277 = vpack.c.b16 %v1645, %v1637
    %v2278 = vpack.c.b16 %v1646, %v1638
    %v2279 = vpack.c.b16 %v1647, %v1639
    %v2280 = vpack.c.b16 %v1656, %v1648
    %v2281 = vpack.c.b16 %v1657, %v1649
    %v2282 = vpack.c.b16 %v1658, %v1650
    %v2283 = vpack.c.b16 %v1659, %v1651
    %v2284 = vpack.c.b16 %v1660, %v1652
    %v2285 = vpack.c.b16 %v1661, %v1653
    %v2286 = vpack.c.b16 %v1662, %v1654
    %v2287 = vpack.c.b16 %v1663, %v1655
    %v2288 = vpack.c.b16 %v1672, %v1664
    %v2289 = vpack.c.b16 %v1673, %v1665
    %v2290 = vpack.c.b16 %v1674, %v1666
    %v2291 = vpack.c.b16 %v1675, %v1667
    %v2292 = vpack.c.b16 %v1676, %v1668
    %v2293 = vpack.c.b16 %v1677, %v1669
    %v2294 = vpack.c.b16 %v1678, %v1670
    %v2295 = vpack.c.b16 %v1679, %v1671
    %v2296 = vpack.c.b16 %v1688, %v1680
    %v2297 = vpack.c.b16 %v1689, %v1681
    %v2298 = vpack.c.b16 %v1690, %v1682
    %v2299 = vpack.c.b16 %v1691, %v1683
    %v2300 = vpack.c.b16 %v1692, %v1684
    %v2301 = vpack.c.b16 %v1693, %v1685
    %v2302 = vpack.c.b16 %v1694, %v1686
    %v2303 = vpack.c.b16 %v1695, %v1687
    %v2304 = vpack.c.b16 %v1704, %v1696
    %v2305 = vpack.c.b16 %v1705, %v1697
    %v2306 = vpack.c.b16 %v1706, %v1698
    %v2307 = vpack.c.b16 %v1707, %v1699
    %v2308 = vpack.c.b16 %v1708, %v1700
    %v2309 = vpack.c.b16 %v1709, %v1701
    %v2310 = vpack.c.b16 %v1710, %v1702
    %v2311 = vpack.c.b16 %v1711, %v1703
    %v2312 = vpack.c.b16 %v1720, %v1712
    %v2313 = vpack.c.b16 %v1721, %v1713
    %v2314 = vpack.c.b16 %v1722, %v1714
    %v2315 = vpack.c.b16 %v1723, %v1715
    %v2316 = vpack.c.b16 %v1724, %v1716
    %v2317 = vpack.c.b16 %v1725, %v1717
    %v2318 = vpack.c.b16 %v1726, %v1718
    %v2319 = vpack.c.b16 %v1727, %v1719
    %v2320 = vpack.c.b16 %v1736, %v1728
    %v2321 = vpack.c.b16 %v1737, %v1729
    %v2322 = vpack.c.b16 %v1738, %v1730
    %v2323 = vpack.c.b16 %v1739, %v1731
    %v2324 = vpack.c.b16 %v1740, %v1732
    %v2325 = vpack.c.b16 %v1741, %v1733
    %v2326 = vpack.c.b16 %v1742, %v1734
    %v2327 = vpack.c.b16 %v1743, %v1735
    %v2328 = vpack.c.b16 %v1752, %v1744
    %v2329 = vpack.c.b16 %v1753, %v1745
    %v2330 = vpack.c.b16 %v1754, %v1746
    %v2331 = vpack.c.b16 %v1755, %v1747
    %v2332 = vpack.c.b16 %v1756, %v1748
    %v2333 = vpack.c.b16 %v1757, %v1749
    %v2334 = vpack.c.b16 %v1758, %v1750
    %v2335 = vpack.c.b16 %v1759, %v1751
    %v2336 = vpack.c.b16 %v1768, %v1760
    %v2337 = vpack.c.b16 %v1769, %v1761
    %v2338 = vpack.c.b16 %v1770, %v1762
    %v2339 = vpack.c.b16 %v1771, %v1763
    %v2340 = vpack.c.b16 %v1772, %v1764
    %v2341 = vpack.c.b16 %v1773, %v1765
    %v2342 = vpack.c.b16 %v1774, %v1766
    %v2343 = vpack.c.b16 %v1775, %v1767
    %v2344 = vpack.c.b16 %v1784, %v1776
    %v2345 = vpack.c.b16 %v1785, %v1777
    %v2346 = vpack.c.b16 %v1786, %v1778
    %v2347 = vpack.c.b16 %v1787, %v1779
    %v2348 = vpack.c.b16 %v1788, %v1780
    %v2349 = vpack.c.b16 %v1789, %v1781
    %v2350 = vpack.c.b16 %v1790, %v1782
    %v2351 = vpack.c.b16 %v1791, %v1783
    %v2352 = vpack.c.b16 %v1800, %v1792
    %v2353 = vpack.c.b16 %v1801, %v1793
    %v2354 = vpack.c.b16 %v1802, %v1794
    %v2355 = vpack.c.b16 %v1803, %v1795
    %v2356 = vpack.c.b16 %v1804, %v1796
    %v2357 = vpack.c.b16 %v1805, %v1797
    %v2358 = vpack.c.b16 %v1806, %v1798
    %v2359 = vpack.c.b16 %v1807, %v1799
    %v2360 = vpack.c.b16 %v1816, %v1808
    %v2361 = vpack.c.b16 %v1817, %v1809
    %v2362 = vpack.c.b16 %v1818, %v1810
    %v2363 = vpack.c.b16 %v1819, %v1811
    %v2364 = vpack.c.b16 %v1820, %v1812
    %v2365 = vpack.c.b16 %v1821, %v1813
    %v2366 = vpack.c.b16 %v1822, %v1814
    %v2367 = vpack.c.b16 %v1823, %v1815
    %v2368 = vpack.c.b16 %v1832, %v1824
    %v2369 = vpack.c.b16 %v1833, %v1825
    %v2370 = vpack.c.b16 %v1834, %v1826
    %v2371 = vpack.c.b16 %v1835, %v1827
    %v2372 = vpack.c.b16 %v1836, %v1828
    %v2373 = vpack.c.b16 %v1837, %v1829
    %v2374 = vpack.c.b16 %v1838, %v1830
    %v2375 = vpack.c.b16 %v1839, %v1831
    %v2376 = vpack.c.b16 %v1848, %v1840
    %v2377 = vpack.c.b16 %v1849, %v1841
    %v2378 = vpack.c.b16 %v1850, %v1842
    %v2379 = vpack.c.b16 %v1851, %v1843
    %v2380 = vpack.c.b16 %v1852, %v1844
    %v2381 = vpack.c.b16 %v1853, %v1845
    %v2382 = vpack.c.b16 %v1854, %v1846
    %v2383 = vpack.c.b16 %v1855, %v1847
    %v2384 = vpack.c.b16 %v1864, %v1856
    %v2385 = vpack.c.b16 %v1865, %v1857
    %v2386 = vpack.c.b16 %v1866, %v1858
    %v2387 = vpack.c.b16 %v1867, %v1859
    %v2388 = vpack.c.b16 %v1868, %v1860
    %v2389 = vpack.c.b16 %v1869, %v1861
    %v2390 = vpack.c.b16 %v1870, %v1862
    %v2391 = vpack.c.b16 %v1871, %v1863
    %v2392 = vpack.c.b16 %v1880, %v1872
    %v2393 = vpack.c.b16 %v1881, %v1873
    %v2394 = vpack.c.b16 %v1882, %v1874
    %v2395 = vpack.c.b16 %v1883, %v1875
    %v2396 = vpack.c.b16 %v1884, %v1876
    %v2397 = vpack.c.b16 %v1885, %v1877
    %v2398 = vpack.c.b16 %v1886, %v1878
    %v2399 = vpack.c.b16 %v1887, %v1879
    %v2400 = vpack.c.b16 %v1896, %v1888
    %v2401 = vpack.c.b16 %v1897, %v1889
    %v2402 = vpack.c.b16 %v1898, %v1890
    %v2403 = vpack.c.b16 %v1899, %v1891
    %v2404 = vpack.c.b16 %v1900, %v1892
    %v2405 = vpack.c.b16 %v1901, %v1893
    %v2406 = vpack.c.b16 %v1902, %v1894
    %v2407 = vpack.c.b16 %v1903, %v1895
    %v2408 = vpack.c.b16 %v1912, %v1904
    %v2409 = vpack.c.b16 %v1913, %v1905
    %v2410 = vpack.c.b16 %v1914, %v1906
    %v2411 = vpack.c.b16 %v1915, %v1907
    %v2412 = vpack.c.b16 %v1916, %v1908
    %v2413 = vpack.c.b16 %v1917, %v1909
    %v2414 = vpack.c.b16 %v1918, %v1910
    %v2415 = vpack.c.b16 %v1919, %v1911
    %v2416 = vpack.c.b16 %v1928, %v1920
    %v2417 = vpack.c.b16 %v1929, %v1921
    %v2418 = vpack.c.b16 %v1930, %v1922
    %v2419 = vpack.c.b16 %v1931, %v1923
    %v2420 = vpack.c.b16 %v1932, %v1924
    %v2421 = vpack.c.b16 %v1933, %v1925
    %v2422 = vpack.c.b16 %v1934, %v1926
    %v2423 = vpack.c.b16 %v1935, %v1927
    %v2424 = vpack.c.b16 %v1944, %v1936
    %v2425 = vpack.c.b16 %v1945, %v1937
    %v2426 = vpack.c.b16 %v1946, %v1938
    %v2427 = vpack.c.b16 %v1947, %v1939
    %v2428 = vpack.c.b16 %v1948, %v1940
    %v2429 = vpack.c.b16 %v1949, %v1941
    %v2430 = vpack.c.b16 %v1950, %v1942
    %v2431 = vpack.c.b16 %v1951, %v1943
    %v2432 = vpack.c.b16 %v1960, %v1952
    %v2433 = vpack.c.b16 %v1961, %v1953
    %v2434 = vpack.c.b16 %v1962, %v1954
    %v2435 = vpack.c.b16 %v1963, %v1955
    %v2436 = vpack.c.b16 %v1964, %v1956
    %v2437 = vpack.c.b16 %v1965, %v1957
    %v2438 = vpack.c.b16 %v1966, %v1958
    %v2439 = vpack.c.b16 %v1967, %v1959
    %v2440 = vpack.c.b16 %v1976, %v1968
    %v2441 = vpack.c.b16 %v1977, %v1969
    %v2442 = vpack.c.b16 %v1978, %v1970
    %v2443 = vpack.c.b16 %v1979, %v1971
    %v2444 = vpack.c.b16 %v1980, %v1972
    %v2445 = vpack.c.b16 %v1981, %v1973
    %v2446 = vpack.c.b16 %v1982, %v1974
    %v2447 = vpack.c.b16 %v1983, %v1975
    %v2448 = vpack.c.b16 %v1992, %v1984
    %v2449 = vpack.c.b16 %v1993, %v1985
    %v2450 = vpack.c.b16 %v1994, %v1986
    %v2451 = vpack.c.b16 %v1995, %v1987
    %v2452 = vpack.c.b16 %v1996, %v1988
    %v2453 = vpack.c.b16 %v1997, %v1989
    %v2454 = vpack.c.b16 %v1998, %v1990
    %v2455 = vpack.c.b16 %v1999, %v1991
    %v2456 = vpack.c.b16 %v2008, %v2000
    %v2457 = vpack.c.b16 %v2009, %v2001
    %v2458 = vpack.c.b16 %v2010, %v2002
    %v2459 = vpack.c.b16 %v2011, %v2003
    %v2460 = vpack.c.b16 %v2012, %v2004
    %v2461 = vpack.c.b16 %v2013, %v2005
    %v2462 = vpack.c.b16 %v2014, %v2006
    %v2463 = vpack.c.b16 %v2015, %v2007
    %2912 = vmatprep.subr.bf16.mxu0 %v2073
    %2913 = vmatpush1.bf16.msra.mxu0 %v2072
    %2914 = vmatprep.subr.bf16.mxu0 %v2065
    %2915 = vmatpush1.bf16.msra.mxu0 %v2064
    %2916 = vmatprep.subr.bf16.mxu0 %v2057
    %2917 = vmatpush1.bf16.msra.mxu0 %v2056
    %2918 = vmatprep.subr.bf16.mxu0 %v2049
    %2919 = vmatpush1.bf16.msra.mxu0 %v2048
    %2920 = vmatprep.subr.bf16.mxu0 %v2041
    %2921 = vmatpush1.bf16.msra.mxu0 %v2040
    %2922 = vmatprep.subr.bf16.mxu0 %v2033
    %2923 = vmatpush1.bf16.msra.mxu0 %v2032
    %2924 = vmatprep.subr.bf16.mxu0 %v2025
    %2925 = vmatpush1.bf16.msra.mxu0 %v2024
    %2926 = vmatprep.subr.bf16.mxu0 %v2017
    %2927 = vmatpush1.bf16.msra.mxu0 %v2016
    %2928 = vmatprep.subr.bf16.mxu0 %v2137
    %2929 = vmatpush2.bf16.msra.mxu0 %v2136
    %2930 = vmatprep.subr.bf16.mxu0 %v2129
    %2931 = vmatpush2.bf16.msra.mxu0 %v2128
    %2932 = vmatprep.subr.bf16.mxu0 %v2121
    %2933 = vmatpush2.bf16.msra.mxu0 %v2120
    %2934 = vmatprep.subr.bf16.mxu0 %v2113
    %2935 = vmatpush2.bf16.msra.mxu0 %v2112
    %2936 = vmatprep.subr.bf16.mxu0 %v2105
    %2937 = vmatpush2.bf16.msra.mxu0 %v2104
    %2938 = vmatprep.subr.bf16.mxu0 %v2097
    %2939 = vmatpush2.bf16.msra.mxu0 %v2096
    %2940 = vmatprep.subr.bf16.mxu0 %v2089
    %2941 = vmatpush2.bf16.msra.mxu0 %v2088
    %2942 = vmatprep.subr.bf16.mxu0 %v2081
    %2943 = vmatpush2.bf16.msra.mxu0 %v2080
    %2944 = vmatprep.mubr.bf16.mxu0 %v659
    %2945 = vmatmul.mubr.bf16.gmra.mxu0 %v658
    %v2946 = vpop.f32.mrf.mxu0
    %v2947 = vadd.f32 %v599, %v2946
    %v2948 = vpop.f32.mrf.mxu0
    %v2949 = vadd.f32 %v603, %v2948
    %v2950 = vpop.f32.mrf.mxu0
    %v2951 = vadd.f32 %v599, %v2950
    %v2952 = vpop.f32.mrf.mxu0
    %v2953 = vadd.f32 %v603, %v2952
    %2954 = vdwg.mxu0
    %2955 = vmatprep.subr.bf16.mxu0 %v2201
    %2956 = vmatpush1.bf16.msra.mxu0 %v2200
    %2957 = vmatprep.subr.bf16.mxu0 %v2193
    %2958 = vmatpush1.bf16.msra.mxu0 %v2192
    %2959 = vmatprep.subr.bf16.mxu0 %v2185
    %2960 = vmatpush1.bf16.msra.mxu0 %v2184
    %2961 = vmatprep.subr.bf16.mxu0 %v2177
    %2962 = vmatpush1.bf16.msra.mxu0 %v2176
    %2963 = vmatprep.subr.bf16.mxu0 %v2169
    %2964 = vmatpush1.bf16.msra.mxu0 %v2168
    %2965 = vmatprep.subr.bf16.mxu0 %v2161
    %2966 = vmatpush1.bf16.msra.mxu0 %v2160
    %2967 = vmatprep.subr.bf16.mxu0 %v2153
    %2968 = vmatpush1.bf16.msra.mxu0 %v2152
    %2969 = vmatprep.subr.bf16.mxu0 %v2145
    %2970 = vmatpush1.bf16.msra.mxu0 %v2144
    %2971 = vmatprep.subr.bf16.mxu0 %v2265
    %2972 = vmatpush2.bf16.msra.mxu0 %v2264
    %2973 = vmatprep.subr.bf16.mxu0 %v2257
    %2974 = vmatpush2.bf16.msra.mxu0 %v2256
    %2975 = vmatprep.subr.bf16.mxu0 %v2249
    %2976 = vmatpush2.bf16.msra.mxu0 %v2248
    %2977 = vmatprep.subr.bf16.mxu0 %v2241
    %2978 = vmatpush2.bf16.msra.mxu0 %v2240
    %2979 = vmatprep.subr.bf16.mxu0 %v2233
    %2980 = vmatpush2.bf16.msra.mxu0 %v2232
    %2981 = vmatprep.subr.bf16.mxu0 %v2225
    %2982 = vmatpush2.bf16.msra.mxu0 %v2224
    %2983 = vmatprep.subr.bf16.mxu0 %v2217
    %2984 = vmatpush2.bf16.msra.mxu0 %v2216
    %2985 = vmatprep.subr.bf16.mxu0 %v2209
    %2986 = vmatpush2.bf16.msra.mxu0 %v2208
    %2987 = vmatprep.mubr.bf16.mxu0 %v661
    %2988 = vmatmul.mubr.bf16.gmra.mxu0 %v660
    %v2989 = vpop.f32.mrf.mxu0
    %v2990 = vadd.f32 %v2947, %v2989
    %v2991 = vpop.f32.mrf.mxu0
    %v2992 = vadd.f32 %v2949, %v2991
    %v2993 = vpop.f32.mrf.mxu0
    %v2994 = vadd.f32 %v2951, %v2993
    %v2995 = vpop.f32.mrf.mxu0
    %v2996 = vadd.f32 %v2953, %v2995
    %2997 = vdwg.mxu0
    %2998 = vmatprep.subr.bf16.mxu0 %v2329
    %2999 = vmatpush1.bf16.msra.mxu0 %v2328
    %3000 = vmatprep.subr.bf16.mxu0 %v2321
    %3001 = vmatpush1.bf16.msra.mxu0 %v2320
    %3002 = vmatprep.subr.bf16.mxu0 %v2313
    %3003 = vmatpush1.bf16.msra.mxu0 %v2312
    %3004 = vmatprep.subr.bf16.mxu0 %v2305
    %3005 = vmatpush1.bf16.msra.mxu0 %v2304
    %3006 = vmatprep.subr.bf16.mxu0 %v2297
    %3007 = vmatpush1.bf16.msra.mxu0 %v2296
    %3008 = vmatprep.subr.bf16.mxu0 %v2289
    %3009 = vmatpush1.bf16.msra.mxu0 %v2288
    %3010 = vmatprep.subr.bf16.mxu0 %v2281
    %3011 = vmatpush1.bf16.msra.mxu0 %v2280
    %3012 = vmatprep.subr.bf16.mxu0 %v2273
    %3013 = vmatpush1.bf16.msra.mxu0 %v2272
    %3014 = vmatprep.subr.bf16.mxu0 %v2393
    %3015 = vmatpush2.bf16.msra.mxu0 %v2392
    %3016 = vmatprep.subr.bf16.mxu0 %v2385
    %3017 = vmatpush2.bf16.msra.mxu0 %v2384
    %3018 = vmatprep.subr.bf16.mxu0 %v2377
    %3019 = vmatpush2.bf16.msra.mxu0 %v2376
    %3020 = vmatprep.subr.bf16.mxu0 %v2369
    %3021 = vmatpush2.bf16.msra.mxu0 %v2368
    %3022 = vmatprep.subr.bf16.mxu0 %v2361
    %3023 = vmatpush2.bf16.msra.mxu0 %v2360
    %3024 = vmatprep.subr.bf16.mxu0 %v2353
    %3025 = vmatpush2.bf16.msra.mxu0 %v2352
    %3026 = vmatprep.subr.bf16.mxu0 %v2345
    %3027 = vmatpush2.bf16.msra.mxu0 %v2344
    %3028 = vmatprep.subr.bf16.mxu0 %v2337
    %3029 = vmatpush2.bf16.msra.mxu0 %v2336
    %3030 = vmatprep.mubr.bf16.mxu0 %v663
    %3031 = vmatmul.mubr.bf16.gmra.mxu0 %v662
    %v3032 = vpop.f32.mrf.mxu0
    %v3033 = vadd.f32 %v2990, %v3032
    %v3034 = vpop.f32.mrf.mxu0
    %v3035 = vadd.f32 %v2992, %v3034
    %v3036 = vpop.f32.mrf.mxu0
    %v3037 = vadd.f32 %v2994, %v3036
    %v3038 = vpop.f32.mrf.mxu0
    %v3039 = vadd.f32 %v2996, %v3038
    %3040 = vdwg.mxu0
    %3041 = vmatprep.subr.bf16.mxu0 %v2457
    %3042 = vmatpush1.bf16.msra.mxu0 %v2456
    %3043 = vmatprep.subr.bf16.mxu0 %v2449
    %3044 = vmatpush1.bf16.msra.mxu0 %v2448
    %3045 = vmatprep.subr.bf16.mxu0 %v2441
    %3046 = vmatpush1.bf16.msra.mxu0 %v2440
    %3047 = vmatprep.subr.bf16.mxu0 %v2433
    %3048 = vmatpush1.bf16.msra.mxu0 %v2432
    %3049 = vmatprep.subr.bf16.mxu0 %v2425
    %3050 = vmatpush1.bf16.msra.mxu0 %v2424
    %3051 = vmatprep.subr.bf16.mxu0 %v2417
    %3052 = vmatpush1.bf16.msra.mxu0 %v2416
    %3053 = vmatprep.subr.bf16.mxu0 %v2409
    %3054 = vmatpush1.bf16.msra.mxu0 %v2408
    %3055 = vmatprep.subr.bf16.mxu0 %v2401
    %3056 = vmatpush1.bf16.msra.mxu0 %v2400
    %3057 = vmatprep.subr.bf16.mxu0 0
    %3058 = vmatpush2.bf16.msra.mxu0 0
    %3059 = vmatprep.subr.bf16.mxu0 0
    %3060 = vmatpush2.bf16.msra.mxu0 0
    %3061 = vmatprep.subr.bf16.mxu0 0
    %3062 = vmatpush2.bf16.msra.mxu0 0
    %3063 = vmatprep.subr.bf16.mxu0 0
    %3064 = vmatpush2.bf16.msra.mxu0 0
    %3065 = vmatprep.subr.bf16.mxu0 0
    %3066 = vmatpush2.bf16.msra.mxu0 0
    %3067 = vmatprep.subr.bf16.mxu0 0
    %3068 = vmatpush2.bf16.msra.mxu0 0
    %3069 = vmatprep.subr.bf16.mxu0 0
    %3070 = vmatpush2.bf16.msra.mxu0 0
    %3071 = vmatprep.subr.bf16.mxu0 0
    %3072 = vmatpush2.bf16.msra.mxu0 0
    %3073 = vmatprep.mubr.bf16.mxu0 0
    %3074 = vmatmul.mubr.bf16.gmra.mxu0 %v664
    %v3075 = vpop.f32.mrf.mxu0
    %v3076 = vadd.f32 %v3033, %v3075
    %v3077 = vpop.f32.mrf.mxu0
    %v3078 = vadd.f32 %v3035, %v3077
    %v3079 = vpop.f32.mrf.mxu0
    %v3080 = vadd.f32 %v3037, %v3079
    %v3081 = vpop.f32.mrf.mxu0
    %v3082 = vadd.f32 %v3039, %v3081
    %3083 = vdwg.mxu0
    %3084 = vmatprep.subr.bf16.mxu0 %v2075
    %3085 = vmatpush1.bf16.msra.mxu0 %v2074
    %3086 = vmatprep.subr.bf16.mxu0 %v2067
    %3087 = vmatpush1.bf16.msra.mxu0 %v2066
    %3088 = vmatprep.subr.bf16.mxu0 %v2059
    %3089 = vmatpush1.bf16.msra.mxu0 %v2058
    %3090 = vmatprep.subr.bf16.mxu0 %v2051
    %3091 = vmatpush1.bf16.msra.mxu0 %v2050
    %3092 = vmatprep.subr.bf16.mxu0 %v2043
    %3093 = vmatpush1.bf16.msra.mxu0 %v2042
    %3094 = vmatprep.subr.bf16.mxu0 %v2035
    %3095 = vmatpush1.bf16.msra.mxu0 %v2034
    %3096 = vmatprep.subr.bf16.mxu0 %v2027
    %3097 = vmatpush1.bf16.msra.mxu0 %v2026
    %3098 = vmatprep.subr.bf16.mxu0 %v2019
    %3099 = vmatpush1.bf16.msra.mxu0 %v2018
    %3100 = vmatprep.subr.bf16.mxu0 %v2139
    %3101 = vmatpush2.bf16.msra.mxu0 %v2138
    %3102 = vmatprep.subr.bf16.mxu0 %v2131
    %3103 = vmatpush2.bf16.msra.mxu0 %v2130
    %3104 = vmatprep.subr.bf16.mxu0 %v2123
    %3105 = vmatpush2.bf16.msra.mxu0 %v2122
    %3106 = vmatprep.subr.bf16.mxu0 %v2115
    %3107 = vmatpush2.bf16.msra.mxu0 %v2114
    %3108 = vmatprep.subr.bf16.mxu0 %v2107
    %3109 = vmatpush2.bf16.msra.mxu0 %v2106
    %3110 = vmatprep.subr.bf16.mxu0 %v2099
    %3111 = vmatpush2.bf16.msra.mxu0 %v2098
    %3112 = vmatprep.subr.bf16.mxu0 %v2091
    %3113 = vmatpush2.bf16.msra.mxu0 %v2090
    %3114 = vmatprep.subr.bf16.mxu0 %v2083
    %3115 = vmatpush2.bf16.msra.mxu0 %v2082
    %3116 = vmatprep.mubr.bf16.mxu0 %v659
    %3117 = vmatmul.mubr.bf16.gmra.mxu0 %v658
    %v3118 = vpop.f32.mrf.mxu0
    %v3119 = vadd.f32 %v607, %v3118
    %v3120 = vpop.f32.mrf.mxu0
    %v3121 = vadd.f32 %v611, %v3120
    %v3122 = vpop.f32.mrf.mxu0
    %v3123 = vadd.f32 %v607, %v3122
    %v3124 = vpop.f32.mrf.mxu0
    %v3125 = vadd.f32 %v611, %v3124
    %3126 = vdwg.mxu0
    %3127 = vmatprep.subr.bf16.mxu0 %v2203
    %3128 = vmatpush1.bf16.msra.mxu0 %v2202
    %3129 = vmatprep.subr.bf16.mxu0 %v2195
    %3130 = vmatpush1.bf16.msra.mxu0 %v2194
    %3131 = vmatprep.subr.bf16.mxu0 %v2187
    %3132 = vmatpush1.bf16.msra.mxu0 %v2186
    %3133 = vmatprep.subr.bf16.mxu0 %v2179
    %3134 = vmatpush1.bf16.msra.mxu0 %v2178
    %3135 = vmatprep.subr.bf16.mxu0 %v2171
    %3136 = vmatpush1.bf16.msra.mxu0 %v2170
    %3137 = vmatprep.subr.bf16.mxu0 %v2163
    %3138 = vmatpush1.bf16.msra.mxu0 %v2162
    %3139 = vmatprep.subr.bf16.mxu0 %v2155
    %3140 = vmatpush1.bf16.msra.mxu0 %v2154
    %3141 = vmatprep.subr.bf16.mxu0 %v2147
    %3142 = vmatpush1.bf16.msra.mxu0 %v2146
    %3143 = vmatprep.subr.bf16.mxu0 %v2267
    %3144 = vmatpush2.bf16.msra.mxu0 %v2266
    %3145 = vmatprep.subr.bf16.mxu0 %v2259
    %3146 = vmatpush2.bf16.msra.mxu0 %v2258
    %3147 = vmatprep.subr.bf16.mxu0 %v2251
    %3148 = vmatpush2.bf16.msra.mxu0 %v2250
    %3149 = vmatprep.subr.bf16.mxu0 %v2243
    %3150 = vmatpush2.bf16.msra.mxu0 %v2242
    %3151 = vmatprep.subr.bf16.mxu0 %v2235
    %3152 = vmatpush2.bf16.msra.mxu0 %v2234
    %3153 = vmatprep.subr.bf16.mxu0 %v2227
    %3154 = vmatpush2.bf16.msra.mxu0 %v2226
    %3155 = vmatprep.subr.bf16.mxu0 %v2219
    %3156 = vmatpush2.bf16.msra.mxu0 %v2218
    %3157 = vmatprep.subr.bf16.mxu0 %v2211
    %3158 = vmatpush2.bf16.msra.mxu0 %v2210
    %3159 = vmatprep.mubr.bf16.mxu0 %v661
    %3160 = vmatmul.mubr.bf16.gmra.mxu0 %v660
    %v3161 = vpop.f32.mrf.mxu0
    %v3162 = vadd.f32 %v3119, %v3161
    %v3163 = vpop.f32.mrf.mxu0
    %v3164 = vadd.f32 %v3121, %v3163
    %v3165 = vpop.f32.mrf.mxu0
    %v3166 = vadd.f32 %v3123, %v3165
    %v3167 = vpop.f32.mrf.mxu0
    %v3168 = vadd.f32 %v3125, %v3167
    %3169 = vdwg.mxu0
    %3170 = vmatprep.subr.bf16.mxu0 %v2331
    %3171 = vmatpush1.bf16.msra.mxu0 %v2330
    %3172 = vmatprep.subr.bf16.mxu0 %v2323
    %3173 = vmatpush1.bf16.msra.mxu0 %v2322
    %3174 = vmatprep.subr.bf16.mxu0 %v2315
    %3175 = vmatpush1.bf16.msra.mxu0 %v2314
    %3176 = vmatprep.subr.bf16.mxu0 %v2307
    %3177 = vmatpush1.bf16.msra.mxu0 %v2306
    %3178 = vmatprep.subr.bf16.mxu0 %v2299
    %3179 = vmatpush1.bf16.msra.mxu0 %v2298
    %3180 = vmatprep.subr.bf16.mxu0 %v2291
    %3181 = vmatpush1.bf16.msra.mxu0 %v2290
    %3182 = vmatprep.subr.bf16.mxu0 %v2283
    %3183 = vmatpush1.bf16.msra.mxu0 %v2282
    %3184 = vmatprep.subr.bf16.mxu0 %v2275
    %3185 = vmatpush1.bf16.msra.mxu0 %v2274
    %3186 = vmatprep.subr.bf16.mxu0 %v2395
    %3187 = vmatpush2.bf16.msra.mxu0 %v2394
    %3188 = vmatprep.subr.bf16.mxu0 %v2387
    %3189 = vmatpush2.bf16.msra.mxu0 %v2386
    %3190 = vmatprep.subr.bf16.mxu0 %v2379
    %3191 = vmatpush2.bf16.msra.mxu0 %v2378
    %3192 = vmatprep.subr.bf16.mxu0 %v2371
    %3193 = vmatpush2.bf16.msra.mxu0 %v2370
    %3194 = vmatprep.subr.bf16.mxu0 %v2363
    %3195 = vmatpush2.bf16.msra.mxu0 %v2362
    %3196 = vmatprep.subr.bf16.mxu0 %v2355
    %3197 = vmatpush2.bf16.msra.mxu0 %v2354
    %3198 = vmatprep.subr.bf16.mxu0 %v2347
    %3199 = vmatpush2.bf16.msra.mxu0 %v2346
    %3200 = vmatprep.subr.bf16.mxu0 %v2339
    %3201 = vmatpush2.bf16.msra.mxu0 %v2338
    %3202 = vmatprep.mubr.bf16.mxu0 %v663
    %3203 = vmatmul.mubr.bf16.gmra.mxu0 %v662
    %v3204 = vpop.f32.mrf.mxu0
    %v3205 = vadd.f32 %v3162, %v3204
    %v3206 = vpop.f32.mrf.mxu0
    %v3207 = vadd.f32 %v3164, %v3206
    %v3208 = vpop.f32.mrf.mxu0
    %v3209 = vadd.f32 %v3166, %v3208
    %v3210 = vpop.f32.mrf.mxu0
    %v3211 = vadd.f32 %v3168, %v3210
    %3212 = vdwg.mxu0
    %3213 = vmatprep.subr.bf16.mxu0 %v2459
    %3214 = vmatpush1.bf16.msra.mxu0 %v2458
    %3215 = vmatprep.subr.bf16.mxu0 %v2451
    %3216 = vmatpush1.bf16.msra.mxu0 %v2450
    %3217 = vmatprep.subr.bf16.mxu0 %v2443
    %3218 = vmatpush1.bf16.msra.mxu0 %v2442
    %3219 = vmatprep.subr.bf16.mxu0 %v2435
    %3220 = vmatpush1.bf16.msra.mxu0 %v2434
    %3221 = vmatprep.subr.bf16.mxu0 %v2427
    %3222 = vmatpush1.bf16.msra.mxu0 %v2426
    %3223 = vmatprep.subr.bf16.mxu0 %v2419
    %3224 = vmatpush1.bf16.msra.mxu0 %v2418
    %3225 = vmatprep.subr.bf16.mxu0 %v2411
    %3226 = vmatpush1.bf16.msra.mxu0 %v2410
    %3227 = vmatprep.subr.bf16.mxu0 %v2403
    %3228 = vmatpush1.bf16.msra.mxu0 %v2402
    %3229 = vmatprep.subr.bf16.mxu0 0
    %3230 = vmatpush2.bf16.msra.mxu0 0
    %3231 = vmatprep.subr.bf16.mxu0 0
    %3232 = vmatpush2.bf16.msra.mxu0 0
    %3233 = vmatprep.subr.bf16.mxu0 0
    %3234 = vmatpush2.bf16.msra.mxu0 0
    %3235 = vmatprep.subr.bf16.mxu0 0
    %3236 = vmatpush2.bf16.msra.mxu0 0
    %3237 = vmatprep.subr.bf16.mxu0 0
    %3238 = vmatpush2.bf16.msra.mxu0 0
    %3239 = vmatprep.subr.bf16.mxu0 0
    %3240 = vmatpush2.bf16.msra.mxu0 0
    %3241 = vmatprep.subr.bf16.mxu0 0
    %3242 = vmatpush2.bf16.msra.mxu0 0
    %3243 = vmatprep.subr.bf16.mxu0 0
    %3244 = vmatpush2.bf16.msra.mxu0 0
    %3245 = vmatprep.mubr.bf16.mxu0 0
    %3246 = vmatmul.mubr.bf16.gmra.mxu0 %v664
    %v3247 = vpop.f32.mrf.mxu0
    %v3248 = vadd.f32 %v3205, %v3247
    %v3249 = vpop.f32.mrf.mxu0
    %v3250 = vadd.f32 %v3207, %v3249
    %v3251 = vpop.f32.mrf.mxu0
    %v3252 = vadd.f32 %v3209, %v3251
    %v3253 = vpop.f32.mrf.mxu0
    %v3254 = vadd.f32 %v3211, %v3253
    %3255 = vdwg.mxu0
    %3256 = vmatprep.subr.bf16.mxu0 %v2077
    %3257 = vmatpush1.bf16.msra.mxu0 %v2076
    %3258 = vmatprep.subr.bf16.mxu0 %v2069
    %3259 = vmatpush1.bf16.msra.mxu0 %v2068
    %3260 = vmatprep.subr.bf16.mxu0 %v2061
    %3261 = vmatpush1.bf16.msra.mxu0 %v2060
    %3262 = vmatprep.subr.bf16.mxu0 %v2053
    %3263 = vmatpush1.bf16.msra.mxu0 %v2052
    %3264 = vmatprep.subr.bf16.mxu0 %v2045
    %3265 = vmatpush1.bf16.msra.mxu0 %v2044
    %3266 = vmatprep.subr.bf16.mxu0 %v2037
    %3267 = vmatpush1.bf16.msra.mxu0 %v2036
    %3268 = vmatprep.subr.bf16.mxu0 %v2029
    %3269 = vmatpush1.bf16.msra.mxu0 %v2028
    %3270 = vmatprep.subr.bf16.mxu0 %v2021
    %3271 = vmatpush1.bf16.msra.mxu0 %v2020
    %3272 = vmatprep.subr.bf16.mxu0 %v2141
    %3273 = vmatpush2.bf16.msra.mxu0 %v2140
    %3274 = vmatprep.subr.bf16.mxu0 %v2133
    %3275 = vmatpush2.bf16.msra.mxu0 %v2132
    %3276 = vmatprep.subr.bf16.mxu0 %v2125
    %3277 = vmatpush2.bf16.msra.mxu0 %v2124
    %3278 = vmatprep.subr.bf16.mxu0 %v2117
    %3279 = vmatpush2.bf16.msra.mxu0 %v2116
    %3280 = vmatprep.subr.bf16.mxu0 %v2109
    %3281 = vmatpush2.bf16.msra.mxu0 %v2108
    %3282 = vmatprep.subr.bf16.mxu0 %v2101
    %3283 = vmatpush2.bf16.msra.mxu0 %v2100
    %3284 = vmatprep.subr.bf16.mxu0 %v2093
    %3285 = vmatpush2.bf16.msra.mxu0 %v2092
    %3286 = vmatprep.subr.bf16.mxu0 %v2085
    %3287 = vmatpush2.bf16.msra.mxu0 %v2084
    %3288 = vmatprep.mubr.bf16.mxu0 %v659
    %3289 = vmatmul.mubr.bf16.gmra.mxu0 %v658
    %v3290 = vpop.f32.mrf.mxu0
    %v3291 = vadd.f32 %v615, %v3290
    %v3292 = vpop.f32.mrf.mxu0
    %v3293 = vadd.f32 %v619, %v3292
    %v3294 = vpop.f32.mrf.mxu0
    %v3295 = vadd.f32 %v615, %v3294
    %v3296 = vpop.f32.mrf.mxu0
    %v3297 = vadd.f32 %v619, %v3296
    %3298 = vdwg.mxu0
    %3299 = vmatprep.subr.bf16.mxu0 %v2205
    %3300 = vmatpush1.bf16.msra.mxu0 %v2204
    %3301 = vmatprep.subr.bf16.mxu0 %v2197
    %3302 = vmatpush1.bf16.msra.mxu0 %v2196
    %3303 = vmatprep.subr.bf16.mxu0 %v2189
    %3304 = vmatpush1.bf16.msra.mxu0 %v2188
    %3305 = vmatprep.subr.bf16.mxu0 %v2181
    %3306 = vmatpush1.bf16.msra.mxu0 %v2180
    %3307 = vmatprep.subr.bf16.mxu0 %v2173
    %3308 = vmatpush1.bf16.msra.mxu0 %v2172
    %3309 = vmatprep.subr.bf16.mxu0 %v2165
    %3310 = vmatpush1.bf16.msra.mxu0 %v2164
    %3311 = vmatprep.subr.bf16.mxu0 %v2157
    %3312 = vmatpush1.bf16.msra.mxu0 %v2156
    %3313 = vmatprep.subr.bf16.mxu0 %v2149
    %3314 = vmatpush1.bf16.msra.mxu0 %v2148
    %3315 = vmatprep.subr.bf16.mxu0 %v2269
    %3316 = vmatpush2.bf16.msra.mxu0 %v2268
    %3317 = vmatprep.subr.bf16.mxu0 %v2261
    %3318 = vmatpush2.bf16.msra.mxu0 %v2260
    %3319 = vmatprep.subr.bf16.mxu0 %v2253
    %3320 = vmatpush2.bf16.msra.mxu0 %v2252
    %3321 = vmatprep.subr.bf16.mxu0 %v2245
    %3322 = vmatpush2.bf16.msra.mxu0 %v2244
    %3323 = vmatprep.subr.bf16.mxu0 %v2237
    %3324 = vmatpush2.bf16.msra.mxu0 %v2236
    %3325 = vmatprep.subr.bf16.mxu0 %v2229
    %3326 = vmatpush2.bf16.msra.mxu0 %v2228
    %3327 = vmatprep.subr.bf16.mxu0 %v2221
    %3328 = vmatpush2.bf16.msra.mxu0 %v2220
    %3329 = vmatprep.subr.bf16.mxu0 %v2213
    %3330 = vmatpush2.bf16.msra.mxu0 %v2212
    %3331 = vmatprep.mubr.bf16.mxu0 %v661
    %3332 = vmatmul.mubr.bf16.gmra.mxu0 %v660
    %v3333 = vpop.f32.mrf.mxu0
    %v3334 = vadd.f32 %v3291, %v3333
    %v3335 = vpop.f32.mrf.mxu0
    %v3336 = vadd.f32 %v3293, %v3335
    %v3337 = vpop.f32.mrf.mxu0
    %v3338 = vadd.f32 %v3295, %v3337
    %v3339 = vpop.f32.mrf.mxu0
    %v3340 = vadd.f32 %v3297, %v3339
    %3341 = vdwg.mxu0
    %3342 = vmatprep.subr.bf16.mxu0 %v2333
    %3343 = vmatpush1.bf16.msra.mxu0 %v2332
    %3344 = vmatprep.subr.bf16.mxu0 %v2325
    %3345 = vmatpush1.bf16.msra.mxu0 %v2324
    %3346 = vmatprep.subr.bf16.mxu0 %v2317
    %3347 = vmatpush1.bf16.msra.mxu0 %v2316
    %3348 = vmatprep.subr.bf16.mxu0 %v2309
    %3349 = vmatpush1.bf16.msra.mxu0 %v2308
    %3350 = vmatprep.subr.bf16.mxu0 %v2301
    %3351 = vmatpush1.bf16.msra.mxu0 %v2300
    %3352 = vmatprep.subr.bf16.mxu0 %v2293
    %3353 = vmatpush1.bf16.msra.mxu0 %v2292
    %3354 = vmatprep.subr.bf16.mxu0 %v2285
    %3355 = vmatpush1.bf16.msra.mxu0 %v2284
    %3356 = vmatprep.subr.bf16.mxu0 %v2277
    %3357 = vmatpush1.bf16.msra.mxu0 %v2276
    %3358 = vmatprep.subr.bf16.mxu0 %v2397
    %3359 = vmatpush2.bf16.msra.mxu0 %v2396
    %3360 = vmatprep.subr.bf16.mxu0 %v2389
    %3361 = vmatpush2.bf16.msra.mxu0 %v2388
    %3362 = vmatprep.subr.bf16.mxu0 %v2381
    %3363 = vmatpush2.bf16.msra.mxu0 %v2380
    %3364 = vmatprep.subr.bf16.mxu0 %v2373
    %3365 = vmatpush2.bf16.msra.mxu0 %v2372
    %3366 = vmatprep.subr.bf16.mxu0 %v2365
    %3367 = vmatpush2.bf16.msra.mxu0 %v2364
    %3368 = vmatprep.subr.bf16.mxu0 %v2357
    %3369 = vmatpush2.bf16.msra.mxu0 %v2356
    %3370 = vmatprep.subr.bf16.mxu0 %v2349
    %3371 = vmatpush2.bf16.msra.mxu0 %v2348
    %3372 = vmatprep.subr.bf16.mxu0 %v2341
    %3373 = vmatpush2.bf16.msra.mxu0 %v2340
    %3374 = vmatprep.mubr.bf16.mxu0 %v663
    %3375 = vmatmul.mubr.bf16.gmra.mxu0 %v662
    %v3376 = vpop.f32.mrf.mxu0
    %v3377 = vadd.f32 %v3334, %v3376
    %v3378 = vpop.f32.mrf.mxu0
    %v3379 = vadd.f32 %v3336, %v3378
    %v3380 = vpop.f32.mrf.mxu0
    %v3381 = vadd.f32 %v3338, %v3380
    %v3382 = vpop.f32.mrf.mxu0
    %v3383 = vadd.f32 %v3340, %v3382
    %3384 = vdwg.mxu0
    %3385 = vmatprep.subr.bf16.mxu0 %v2461
    %3386 = vmatpush1.bf16.msra.mxu0 %v2460
    %3387 = vmatprep.subr.bf16.mxu0 %v2453
    %3388 = vmatpush1.bf16.msra.mxu0 %v2452
    %3389 = vmatprep.subr.bf16.mxu0 %v2445
    %3390 = vmatpush1.bf16.msra.mxu0 %v2444
    %3391 = vmatprep.subr.bf16.mxu0 %v2437
    %3392 = vmatpush1.bf16.msra.mxu0 %v2436
    %3393 = vmatprep.subr.bf16.mxu0 %v2429
    %3394 = vmatpush1.bf16.msra.mxu0 %v2428
    %3395 = vmatprep.subr.bf16.mxu0 %v2421
    %3396 = vmatpush1.bf16.msra.mxu0 %v2420
    %3397 = vmatprep.subr.bf16.mxu0 %v2413
    %3398 = vmatpush1.bf16.msra.mxu0 %v2412
    %3399 = vmatprep.subr.bf16.mxu0 %v2405
    %3400 = vmatpush1.bf16.msra.mxu0 %v2404
    %3401 = vmatprep.subr.bf16.mxu0 0
    %3402 = vmatpush2.bf16.msra.mxu0 0
    %3403 = vmatprep.subr.bf16.mxu0 0
    %3404 = vmatpush2.bf16.msra.mxu0 0
    %3405 = vmatprep.subr.bf16.mxu0 0
    %3406 = vmatpush2.bf16.msra.mxu0 0
    %3407 = vmatprep.subr.bf16.mxu0 0
    %3408 = vmatpush2.bf16.msra.mxu0 0
    %3409 = vmatprep.subr.bf16.mxu0 0
    %3410 = vmatpush2.bf16.msra.mxu0 0
    %3411 = vmatprep.subr.bf16.mxu0 0
    %3412 = vmatpush2.bf16.msra.mxu0 0
    %3413 = vmatprep.subr.bf16.mxu0 0
    %3414 = vmatpush2.bf16.msra.mxu0 0
    %3415 = vmatprep.subr.bf16.mxu0 0
    %3416 = vmatpush2.bf16.msra.mxu0 0
    %3417 = vmatprep.mubr.bf16.mxu0 0
    %3418 = vmatmul.mubr.bf16.gmra.mxu0 %v664
    %v3419 = vpop.f32.mrf.mxu0
    %v3420 = vadd.f32 %v3377, %v3419
    %v3421 = vpop.f32.mrf.mxu0
    %v3422 = vadd.f32 %v3379, %v3421
    %v3423 = vpop.f32.mrf.mxu0
    %v3424 = vadd.f32 %v3381, %v3423
    %v3425 = vpop.f32.mrf.mxu0
    %v3426 = vadd.f32 %v3383, %v3425
    %3427 = vdwg.mxu0
    %3428 = vmatprep.subr.bf16.mxu0 %v2079
    %3429 = vmatpush1.bf16.msra.mxu0 %v2078
    %3430 = vmatprep.subr.bf16.mxu0 %v2071
    %3431 = vmatpush1.bf16.msra.mxu0 %v2070
    %3432 = vmatprep.subr.bf16.mxu0 %v2063
    %3433 = vmatpush1.bf16.msra.mxu0 %v2062
    %3434 = vmatprep.subr.bf16.mxu0 %v2055
    %3435 = vmatpush1.bf16.msra.mxu0 %v2054
    %3436 = vmatprep.subr.bf16.mxu0 %v2047
    %3437 = vmatpush1.bf16.msra.mxu0 %v2046
    %3438 = vmatprep.subr.bf16.mxu0 %v2039
    %3439 = vmatpush1.bf16.msra.mxu0 %v2038
    %3440 = vmatprep.subr.bf16.mxu0 %v2031
    %3441 = vmatpush1.bf16.msra.mxu0 %v2030
    %3442 = vmatprep.subr.bf16.mxu0 %v2023
    %3443 = vmatpush1.bf16.msra.mxu0 %v2022
    %3444 = vmatprep.subr.bf16.mxu0 %v2143
    %3445 = vmatpush2.bf16.msra.mxu0 %v2142
    %3446 = vmatprep.subr.bf16.mxu0 %v2135
    %3447 = vmatpush2.bf16.msra.mxu0 %v2134
    %3448 = vmatprep.subr.bf16.mxu0 %v2127
    %3449 = vmatpush2.bf16.msra.mxu0 %v2126
    %3450 = vmatprep.subr.bf16.mxu0 %v2119
    %3451 = vmatpush2.bf16.msra.mxu0 %v2118
    %3452 = vmatprep.subr.bf16.mxu0 %v2111
    %3453 = vmatpush2.bf16.msra.mxu0 %v2110
    %3454 = vmatprep.subr.bf16.mxu0 %v2103
    %3455 = vmatpush2.bf16.msra.mxu0 %v2102
    %3456 = vmatprep.subr.bf16.mxu0 %v2095
    %3457 = vmatpush2.bf16.msra.mxu0 %v2094
    %3458 = vmatprep.subr.bf16.mxu0 %v2087
    %3459 = vmatpush2.bf16.msra.mxu0 %v2086
    %3460 = vmatprep.mubr.bf16.mxu0 %v659
    %3461 = vmatmul.mubr.bf16.gmra.mxu0 %v658
    %v3462 = vpop.f32.mrf.mxu0
    %v3463 = vadd.f32 %v623, %v3462
    %v3464 = vpop.f32.mrf.mxu0
    %v3465 = vadd.f32 %v627, %v3464
    %v3466 = vpop.f32.mrf.mxu0
    %v3467 = vadd.f32 %v623, %v3466
    %v3468 = vpop.f32.mrf.mxu0
    %v3469 = vadd.f32 %v627, %v3468
    %3470 = vdwg.mxu0
    %3471 = vmatprep.subr.bf16.mxu0 %v2207
    %3472 = vmatpush1.bf16.msra.mxu0 %v2206
    %3473 = vmatprep.subr.bf16.mxu0 %v2199
    %3474 = vmatpush1.bf16.msra.mxu0 %v2198
    %3475 = vmatprep.subr.bf16.mxu0 %v2191
    %3476 = vmatpush1.bf16.msra.mxu0 %v2190
    %3477 = vmatprep.subr.bf16.mxu0 %v2183
    %3478 = vmatpush1.bf16.msra.mxu0 %v2182
    %3479 = vmatprep.subr.bf16.mxu0 %v2175
    %3480 = vmatpush1.bf16.msra.mxu0 %v2174
    %3481 = vmatprep.subr.bf16.mxu0 %v2167
    %3482 = vmatpush1.bf16.msra.mxu0 %v2166
    %3483 = vmatprep.subr.bf16.mxu0 %v2159
    %3484 = vmatpush1.bf16.msra.mxu0 %v2158
    %3485 = vmatprep.subr.bf16.mxu0 %v2151
    %3486 = vmatpush1.bf16.msra.mxu0 %v2150
    %3487 = vmatprep.subr.bf16.mxu0 %v2271
    %3488 = vmatpush2.bf16.msra.mxu0 %v2270
    %3489 = vmatprep.subr.bf16.mxu0 %v2263
    %3490 = vmatpush2.bf16.msra.mxu0 %v2262
    %3491 = vmatprep.subr.bf16.mxu0 %v2255
    %3492 = vmatpush2.bf16.msra.mxu0 %v2254
    %3493 = vmatprep.subr.bf16.mxu0 %v2247
    %3494 = vmatpush2.bf16.msra.mxu0 %v2246
    %3495 = vmatprep.subr.bf16.mxu0 %v2239
    %3496 = vmatpush2.bf16.msra.mxu0 %v2238
    %3497 = vmatprep.subr.bf16.mxu0 %v2231
    %3498 = vmatpush2.bf16.msra.mxu0 %v2230
    %3499 = vmatprep.subr.bf16.mxu0 %v2223
    %3500 = vmatpush2.bf16.msra.mxu0 %v2222
    %3501 = vmatprep.subr.bf16.mxu0 %v2215
    %3502 = vmatpush2.bf16.msra.mxu0 %v2214
    %3503 = vmatprep.mubr.bf16.mxu0 %v661
    %3504 = vmatmul.mubr.bf16.gmra.mxu0 %v660
    %v3505 = vpop.f32.mrf.mxu0
    %v3506 = vadd.f32 %v3463, %v3505
    %v3507 = vpop.f32.mrf.mxu0
    %v3508 = vadd.f32 %v3465, %v3507
    %v3509 = vpop.f32.mrf.mxu0
    %v3510 = vadd.f32 %v3467, %v3509
    %v3511 = vpop.f32.mrf.mxu0
    %v3512 = vadd.f32 %v3469, %v3511
    %3513 = vdwg.mxu0
    %3514 = vmatprep.subr.bf16.mxu0 %v2335
    %3515 = vmatpush1.bf16.msra.mxu0 %v2334
    %3516 = vmatprep.subr.bf16.mxu0 %v2327
    %3517 = vmatpush1.bf16.msra.mxu0 %v2326
    %3518 = vmatprep.subr.bf16.mxu0 %v2319
    %3519 = vmatpush1.bf16.msra.mxu0 %v2318
    %3520 = vmatprep.subr.bf16.mxu0 %v2311
    %3521 = vmatpush1.bf16.msra.mxu0 %v2310
    %3522 = vmatprep.subr.bf16.mxu0 %v2303
    %3523 = vmatpush1.bf16.msra.mxu0 %v2302
    %3524 = vmatprep.subr.bf16.mxu0 %v2295
    %3525 = vmatpush1.bf16.msra.mxu0 %v2294
    %3526 = vmatprep.subr.bf16.mxu0 %v2287
    %3527 = vmatpush1.bf16.msra.mxu0 %v2286
    %3528 = vmatprep.subr.bf16.mxu0 %v2279
    %3529 = vmatpush1.bf16.msra.mxu0 %v2278
    %3530 = vmatprep.subr.bf16.mxu0 %v2399
    %3531 = vmatpush2.bf16.msra.mxu0 %v2398
    %3532 = vmatprep.subr.bf16.mxu0 %v2391
    %3533 = vmatpush2.bf16.msra.mxu0 %v2390
    %3534 = vmatprep.subr.bf16.mxu0 %v2383
    %3535 = vmatpush2.bf16.msra.mxu0 %v2382
    %3536 = vmatprep.subr.bf16.mxu0 %v2375
    %3537 = vmatpush2.bf16.msra.mxu0 %v2374
    %3538 = vmatprep.subr.bf16.mxu0 %v2367
    %3539 = vmatpush2.bf16.msra.mxu0 %v2366
    %3540 = vmatprep.subr.bf16.mxu0 %v2359
    %3541 = vmatpush2.bf16.msra.mxu0 %v2358
    %3542 = vmatprep.subr.bf16.mxu0 %v2351
    %3543 = vmatpush2.bf16.msra.mxu0 %v2350
    %3544 = vmatprep.subr.bf16.mxu0 %v2343
    %3545 = vmatpush2.bf16.msra.mxu0 %v2342
    %3546 = vmatprep.mubr.bf16.mxu0 %v663
    %3547 = vmatmul.mubr.bf16.gmra.mxu0 %v662
    %v3548 = vpop.f32.mrf.mxu0
    %v3549 = vadd.f32 %v3506, %v3548
    %v3550 = vpop.f32.mrf.mxu0
    %v3551 = vadd.f32 %v3508, %v3550
    %v3552 = vpop.f32.mrf.mxu0
    %v3553 = vadd.f32 %v3510, %v3552
    %v3554 = vpop.f32.mrf.mxu0
    %v3555 = vadd.f32 %v3512, %v3554
    %3556 = vdwg.mxu0
    %3557 = vmatprep.subr.bf16.mxu0 %v2463
    %3558 = vmatpush1.bf16.msra.mxu0 %v2462
    %3559 = vmatprep.subr.bf16.mxu0 %v2455
    %3560 = vmatpush1.bf16.msra.mxu0 %v2454
    %3561 = vmatprep.subr.bf16.mxu0 %v2447
    %3562 = vmatpush1.bf16.msra.mxu0 %v2446
    %3563 = vmatprep.subr.bf16.mxu0 %v2439
    %3564 = vmatpush1.bf16.msra.mxu0 %v2438
    %3565 = vmatprep.subr.bf16.mxu0 %v2431
    %3566 = vmatpush1.bf16.msra.mxu0 %v2430
    %3567 = vmatprep.subr.bf16.mxu0 %v2423
    %3568 = vmatpush1.bf16.msra.mxu0 %v2422
    %3569 = vmatprep.subr.bf16.mxu0 %v2415
    %3570 = vmatpush1.bf16.msra.mxu0 %v2414
    %3571 = vmatprep.subr.bf16.mxu0 %v2407
    %3572 = vmatpush1.bf16.msra.mxu0 %v2406
    %3573 = vmatprep.subr.bf16.mxu0 0
    %3574 = vmatpush2.bf16.msra.mxu0 0
    %3575 = vmatprep.subr.bf16.mxu0 0
    %3576 = vmatpush2.bf16.msra.mxu0 0
    %3577 = vmatprep.subr.bf16.mxu0 0
    %3578 = vmatpush2.bf16.msra.mxu0 0
    %3579 = vmatprep.subr.bf16.mxu0 0
    %3580 = vmatpush2.bf16.msra.mxu0 0
    %3581 = vmatprep.subr.bf16.mxu0 0
    %3582 = vmatpush2.bf16.msra.mxu0 0
    %3583 = vmatprep.subr.bf16.mxu0 0
    %3584 = vmatpush2.bf16.msra.mxu0 0
    %3585 = vmatprep.subr.bf16.mxu0 0
    %3586 = vmatpush2.bf16.msra.mxu0 0
    %3587 = vmatprep.subr.bf16.mxu0 0
    %3588 = vmatpush2.bf16.msra.mxu0 0
    %3589 = vmatprep.mubr.bf16.mxu0 0
    %3590 = vmatmul.mubr.bf16.gmra.mxu0 %v664
    %v3591 = vpop.f32.mrf.mxu0
    %v3592 = vadd.f32 %v3549, %v3591
    %v3593 = vpop.f32.mrf.mxu0
    %v3594 = vadd.f32 %v3551, %v3593
    %v3595 = vpop.f32.mrf.mxu0
    %v3596 = vadd.f32 %v3553, %v3595
    %v3597 = vpop.f32.mrf.mxu0
    %v3598 = vadd.f32 %v3555, %v3597
    %3599 = vdwg.mxu0
    %v3600 = vmax.f32 %v3076, 0.0
    %v3601 = vmax.f32 %v3078, 0.0
    %v3602 = vmax.f32 %v3248, 0.0
    %v3603 = vmax.f32 %v3250, 0.0
    %v3604 = vmax.f32 %v3420, 0.0
    %v3605 = vmax.f32 %v3422, 0.0
    %v3606 = vmax.f32 %v3592, 0.0
    %v3607 = vmax.f32 %v3594, 0.0
    %v3608 = vmax.f32 %v3080, 0.0
    %v3609 = vmax.f32 %v3082, 0.0
    %v3610 = vmax.f32 %v3252, 0.0
    %v3611 = vmax.f32 %v3254, 0.0
    %v3612 = vmax.f32 %v3424, 0.0
    %v3613 = vmax.f32 %v3426, 0.0
    %v3614 = vmax.f32 %v3596, 0.0
    %v3615 = vmax.f32 %v3598, 0.0
    %v3616 = vpack.c.bf16 %v3608, %v3600
    %v3617 = vpack.c.bf16 %v3609, %v3601
    %v3618 = vpack.c.bf16 %v3610, %v3602
    %v3619 = vpack.c.bf16 %v3611, %v3603
    %v3620 = vpack.c.bf16 %v3612, %v3604
    %v3621 = vpack.c.bf16 %v3613, %v3605
    %v3622 = vpack.c.bf16 %v3614, %v3606
    %v3623 = vpack.c.bf16 %v3615, %v3607
    // Predicated region
    $region50: #{richboynet_forward.1} parent=1 // pred_check
      %p3624 = pneg %p111
    $region51: #{richboynet_forward.1} parent=1 // pred_check_branch
      %3626 = sbr.rel (%p3624) target = $region53
    $region52: #{richboynet_forward.1} parent=1 // pred_region
      %s3627 = smul.u32 4, 128
      %s3628 = smul.u32 %s3627, 16
      %s3629 = sshll.u32 %s3628, 4
      %3630 = dma.done [#allocation4], %s3629
      %s3631 = scalar_lea.sflag [#allocation4], 1
      %s3632 = smul.u32 4, 256
      %s3633 = smul.u32 %s3632, 1
      %s3634 = sshll.u32 %s3633, 4
      %3635 = dma.done %s3631, %s3634
    $region53: #{richboynet_forward.1} parent=1 // pred_fallthru
      _
    %v3636 = vld [vmem:[#allocation2] sm:$0xff]
    %v3637 = vld [vmem:[#allocation2 + $0x8] sm:$0xff]
    %v3638 = vld [vmem:[#allocation2 + $0x40] sm:$0xff]
    %v3639 = vld [vmem:[#allocation2 + $0x48] sm:$0xff]
    %v3640 = vld [vmem:[#allocation2 + $0x80] sm:$0xff]
    %v3641 = vld [vmem:[#allocation2 + $0x88] sm:$0xff]
    %v3642 = vld [vmem:[#allocation2 + $0xc0] sm:$0xff]
    %v3643 = vld [vmem:[#allocation2 + $0xc8] sm:$0xff]
    %v3644 = vld [vmem:[#allocation2 + $0x100] sm:$0xff]
    %v3645 = vld [vmem:[#allocation2 + $0x108] sm:$0xff]
    %v3646 = vld [vmem:[#allocation2 + $0x140] sm:$0xff]
    %v3647 = vld [vmem:[#allocation2 + $0x148] sm:$0xff]
    %v3648 = vld [vmem:[#allocation2 + $0x180] sm:$0xff]
    %v3649 = vld [vmem:[#allocation2 + $0x188] sm:$0xff]
    %v3650 = vld [vmem:[#allocation2 + $0x1c0] sm:$0xff]
    %v3651 = vld [vmem:[#allocation2 + $0x1c8] sm:$0xff]
    %v3652 = vld [vmem:[#allocation2 + $0x200] sm:$0xff]
    %v3653 = vld [vmem:[#allocation2 + $0x208] sm:$0xff]
    %v3654 = vld [vmem:[#allocation2 + $0x240] sm:$0xff]
    %v3655 = vld [vmem:[#allocation2 + $0x248] sm:$0xff]
    %v3656 = vld [vmem:[#allocation2 + $0x280] sm:$0xff]
    %v3657 = vld [vmem:[#allocation2 + $0x288] sm:$0xff]
    %v3658 = vld [vmem:[#allocation2 + $0x2c0] sm:$0xff]
    %v3659 = vld [vmem:[#allocation2 + $0x2c8] sm:$0xff]
    %v3660 = vld [vmem:[#allocation2 + $0x300] sm:$0xff]
    %v3661 = vld [vmem:[#allocation2 + $0x308] sm:$0xff]
    %v3662 = vld [vmem:[#allocation2 + $0x340] sm:$0xff]
    %v3663 = vld [vmem:[#allocation2 + $0x348] sm:$0xff]
    %v3664 = vld [vmem:[#allocation2 + $0x380] sm:$0xff]
    %v3665 = vld [vmem:[#allocation2 + $0x388] sm:$0xff]
    %v3666 = vld [vmem:[#allocation2 + $0x3c0] sm:$0xff]
    %v3667 = vld [vmem:[#allocation2 + $0x3c8] sm:$0xff]
    %v3668 = vld [vmem:[#allocation2 + $0x400] sm:$0xff]
    %v3669 = vld [vmem:[#allocation2 + $0x408] sm:$0xff]
    %v3670 = vld [vmem:[#allocation2 + $0x440] sm:$0xff]
    %v3671 = vld [vmem:[#allocation2 + $0x448] sm:$0xff]
    %v3672 = vld [vmem:[#allocation2 + $0x480] sm:$0xff]
    %v3673 = vld [vmem:[#allocation2 + $0x488] sm:$0xff]
    %v3674 = vld [vmem:[#allocation2 + $0x4c0] sm:$0xff]
    %v3675 = vld [vmem:[#allocation2 + $0x4c8] sm:$0xff]
    %v3676 = vld [vmem:[#allocation2 + $0x500] sm:$0xff]
    %v3677 = vld [vmem:[#allocation2 + $0x508] sm:$0xff]
    %v3678 = vld [vmem:[#allocation2 + $0x540] sm:$0xff]
    %v3679 = vld [vmem:[#allocation2 + $0x548] sm:$0xff]
    %v3680 = vld [vmem:[#allocation2 + $0x580] sm:$0xff]
    %v3681 = vld [vmem:[#allocation2 + $0x588] sm:$0xff]
    %v3682 = vld [vmem:[#allocation2 + $0x5c0] sm:$0xff]
    %v3683 = vld [vmem:[#allocation2 + $0x5c8] sm:$0xff]
    %v3684 = vld [vmem:[#allocation2 + $0x600] sm:$0xff]
    %v3685 = vld [vmem:[#allocation2 + $0x608] sm:$0xff]
    %v3686 = vld [vmem:[#allocation2 + $0x640] sm:$0xff]
    %v3687 = vld [vmem:[#allocation2 + $0x648] sm:$0xff]
    %v3688 = vld [vmem:[#allocation2 + $0x680] sm:$0xff]
    %v3689 = vld [vmem:[#allocation2 + $0x688] sm:$0xff]
    %v3690 = vld [vmem:[#allocation2 + $0x6c0] sm:$0xff]
    %v3691 = vld [vmem:[#allocation2 + $0x6c8] sm:$0xff]
    %v3692 = vld [vmem:[#allocation2 + $0x700] sm:$0xff]
    %v3693 = vld [vmem:[#allocation2 + $0x708] sm:$0xff]
    %v3694 = vld [vmem:[#allocation2 + $0x740] sm:$0xff]
    %v3695 = vld [vmem:[#allocation2 + $0x748] sm:$0xff]
    %v3696 = vld [vmem:[#allocation2 + $0x780] sm:$0xff]
    %v3697 = vld [vmem:[#allocation2 + $0x788] sm:$0xff]
    %v3698 = vld [vmem:[#allocation2 + $0x7c0] sm:$0xff]
    %v3699 = vld [vmem:[#allocation2 + $0x7c8] sm:$0xff]
    %v3700 = vld [vmem:[#allocation2 + $0x800] sm:$0xff]
    %v3701 = vld [vmem:[#allocation2 + $0x808] sm:$0xff]
    %v3702 = vld [vmem:[#allocation2 + $0x840] sm:$0xff]
    %v3703 = vld [vmem:[#allocation2 + $0x848] sm:$0xff]
    %v3704 = vld [vmem:[#allocation2 + $0x880] sm:$0xff]
    %v3705 = vld [vmem:[#allocation2 + $0x888] sm:$0xff]
    %v3706 = vld [vmem:[#allocation2 + $0x8c0] sm:$0xff]
    %v3707 = vld [vmem:[#allocation2 + $0x8c8] sm:$0xff]
    %v3708 = vld [vmem:[#allocation2 + $0x900] sm:$0xff]
    %v3709 = vld [vmem:[#allocation2 + $0x908] sm:$0xff]
    %v3710 = vld [vmem:[#allocation2 + $0x940] sm:$0xff]
    %v3711 = vld [vmem:[#allocation2 + $0x948] sm:$0xff]
    %v3712 = vld [vmem:[#allocation2 + $0x980] sm:$0xff]
    %v3713 = vld [vmem:[#allocation2 + $0x988] sm:$0xff]
    %v3714 = vld [vmem:[#allocation2 + $0x9c0] sm:$0xff]
    %v3715 = vld [vmem:[#allocation2 + $0x9c8] sm:$0xff]
    %v3716 = vld [vmem:[#allocation2 + $0xa00] sm:$0xff]
    %v3717 = vld [vmem:[#allocation2 + $0xa08] sm:$0xff]
    %v3718 = vld [vmem:[#allocation2 + $0xa40] sm:$0xff]
    %v3719 = vld [vmem:[#allocation2 + $0xa48] sm:$0xff]
    %v3720 = vld [vmem:[#allocation2 + $0xa80] sm:$0xff]
    %v3721 = vld [vmem:[#allocation2 + $0xa88] sm:$0xff]
    %v3722 = vld [vmem:[#allocation2 + $0xac0] sm:$0xff]
    %v3723 = vld [vmem:[#allocation2 + $0xac8] sm:$0xff]
    %v3724 = vld [vmem:[#allocation2 + $0xb00] sm:$0xff]
    %v3725 = vld [vmem:[#allocation2 + $0xb08] sm:$0xff]
    %v3726 = vld [vmem:[#allocation2 + $0xb40] sm:$0xff]
    %v3727 = vld [vmem:[#allocation2 + $0xb48] sm:$0xff]
    %v3728 = vld [vmem:[#allocation2 + $0xb80] sm:$0xff]
    %v3729 = vld [vmem:[#allocation2 + $0xb88] sm:$0xff]
    %v3730 = vld [vmem:[#allocation2 + $0xbc0] sm:$0xff]
    %v3731 = vld [vmem:[#allocation2 + $0xbc8] sm:$0xff]
    %v3732 = vld [vmem:[#allocation2 + $0xc00] sm:$0xff]
    %v3733 = vld [vmem:[#allocation2 + $0xc08] sm:$0xff]
    %v3734 = vld [vmem:[#allocation2 + $0xc40] sm:$0xff]
    %v3735 = vld [vmem:[#allocation2 + $0xc48] sm:$0xff]
    %v3736 = vld [vmem:[#allocation2 + $0xc80] sm:$0xff]
    %v3737 = vld [vmem:[#allocation2 + $0xc88] sm:$0xff]
    %v3738 = vld [vmem:[#allocation2 + $0xcc0] sm:$0xff]
    %v3739 = vld [vmem:[#allocation2 + $0xcc8] sm:$0xff]
    %v3740 = vld [vmem:[#allocation2 + $0xd00] sm:$0xff]
    %v3741 = vld [vmem:[#allocation2 + $0xd08] sm:$0xff]
    %v3742 = vld [vmem:[#allocation2 + $0xd40] sm:$0xff]
    %v3743 = vld [vmem:[#allocation2 + $0xd48] sm:$0xff]
    %v3744 = vld [vmem:[#allocation2 + $0xd80] sm:$0xff]
    %v3745 = vld [vmem:[#allocation2 + $0xd88] sm:$0xff]
    %v3746 = vld [vmem:[#allocation2 + $0xdc0] sm:$0xff]
    %v3747 = vld [vmem:[#allocation2 + $0xdc8] sm:$0xff]
    %v3748 = vld [vmem:[#allocation2 + $0xe00] sm:$0xff]
    %v3749 = vld [vmem:[#allocation2 + $0xe08] sm:$0xff]
    %v3750 = vld [vmem:[#allocation2 + $0xe40] sm:$0xff]
    %v3751 = vld [vmem:[#allocation2 + $0xe48] sm:$0xff]
    %v3752 = vld [vmem:[#allocation2 + $0xe80] sm:$0xff]
    %v3753 = vld [vmem:[#allocation2 + $0xe88] sm:$0xff]
    %v3754 = vld [vmem:[#allocation2 + $0xec0] sm:$0xff]
    %v3755 = vld [vmem:[#allocation2 + $0xec8] sm:$0xff]
    %v3756 = vld [vmem:[#allocation2 + $0xf00] sm:$0xff]
    %v3757 = vld [vmem:[#allocation2 + $0xf08] sm:$0xff]
    %v3758 = vld [vmem:[#allocation2 + $0xf40] sm:$0xff]
    %v3759 = vld [vmem:[#allocation2 + $0xf48] sm:$0xff]
    %v3760 = vld [vmem:[#allocation2 + $0xf80] sm:$0xff]
    %v3761 = vld [vmem:[#allocation2 + $0xf88] sm:$0xff]
    %v3762 = vld [vmem:[#allocation2 + $0xfc0] sm:$0xff]
    %v3763 = vld [vmem:[#allocation2 + $0xfc8] sm:$0xff]
    %v3764 = vld [vmem:[#allocation2 + $0x1000] sm:$0xff]
    %v3765 = vld [vmem:[#allocation2 + $0x1008] sm:$0xff]
    %v3766 = vld [vmem:[#allocation2 + $0x1040] sm:$0xff]
    %v3767 = vld [vmem:[#allocation2 + $0x1048] sm:$0xff]
    %v3768 = vld [vmem:[#allocation2 + $0x1080] sm:$0xff]
    %v3769 = vld [vmem:[#allocation2 + $0x1088] sm:$0xff]
    %v3770 = vld [vmem:[#allocation2 + $0x10c0] sm:$0xff]
    %v3771 = vld [vmem:[#allocation2 + $0x10c8] sm:$0xff]
    %v3772 = vld [vmem:[#allocation2 + $0x1100] sm:$0xff]
    %v3773 = vld [vmem:[#allocation2 + $0x1108] sm:$0xff]
    %v3774 = vld [vmem:[#allocation2 + $0x1140] sm:$0xff]
    %v3775 = vld [vmem:[#allocation2 + $0x1148] sm:$0xff]
    %v3776 = vld [vmem:[#allocation2 + $0x1180] sm:$0xff]
    %v3777 = vld [vmem:[#allocation2 + $0x1188] sm:$0xff]
    %v3778 = vld [vmem:[#allocation2 + $0x11c0] sm:$0xff]
    %v3779 = vld [vmem:[#allocation2 + $0x11c8] sm:$0xff]
    %v3780 = vld [vmem:[#allocation2 + $0x1200] sm:$0xff]
    %v3781 = vld [vmem:[#allocation2 + $0x1208] sm:$0xff]
    %v3782 = vld [vmem:[#allocation2 + $0x1240] sm:$0xff]
    %v3783 = vld [vmem:[#allocation2 + $0x1248] sm:$0xff]
    %v3784 = vld [vmem:[#allocation2 + $0x1280] sm:$0xff]
    %v3785 = vld [vmem:[#allocation2 + $0x1288] sm:$0xff]
    %v3786 = vld [vmem:[#allocation2 + $0x12c0] sm:$0xff]
    %v3787 = vld [vmem:[#allocation2 + $0x12c8] sm:$0xff]
    %v3788 = vld [vmem:[#allocation2 + $0x1300] sm:$0xff]
    %v3789 = vld [vmem:[#allocation2 + $0x1308] sm:$0xff]
    %v3790 = vld [vmem:[#allocation2 + $0x1340] sm:$0xff]
    %v3791 = vld [vmem:[#allocation2 + $0x1348] sm:$0xff]
    %v3792 = vld [vmem:[#allocation2 + $0x1380] sm:$0xff]
    %v3793 = vld [vmem:[#allocation2 + $0x1388] sm:$0xff]
    %v3794 = vld [vmem:[#allocation2 + $0x13c0] sm:$0xff]
    %v3795 = vld [vmem:[#allocation2 + $0x13c8] sm:$0xff]
    %v3796 = vld [vmem:[#allocation2 + $0x1400] sm:$0xff]
    %v3797 = vld [vmem:[#allocation2 + $0x1408] sm:$0xff]
    %v3798 = vld [vmem:[#allocation2 + $0x1440] sm:$0xff]
    %v3799 = vld [vmem:[#allocation2 + $0x1448] sm:$0xff]
    %v3800 = vld [vmem:[#allocation2 + $0x1480] sm:$0xff]
    %v3801 = vld [vmem:[#allocation2 + $0x1488] sm:$0xff]
    %v3802 = vld [vmem:[#allocation2 + $0x14c0] sm:$0xff]
    %v3803 = vld [vmem:[#allocation2 + $0x14c8] sm:$0xff]
    %v3804 = vld [vmem:[#allocation2 + $0x1500] sm:$0xff]
    %v3805 = vld [vmem:[#allocation2 + $0x1508] sm:$0xff]
    %v3806 = vld [vmem:[#allocation2 + $0x1540] sm:$0xff]
    %v3807 = vld [vmem:[#allocation2 + $0x1548] sm:$0xff]
    %v3808 = vld [vmem:[#allocation2 + $0x1580] sm:$0xff]
    %v3809 = vld [vmem:[#allocation2 + $0x1588] sm:$0xff]
    %v3810 = vld [vmem:[#allocation2 + $0x15c0] sm:$0xff]
    %v3811 = vld [vmem:[#allocation2 + $0x15c8] sm:$0xff]
    %v3812 = vld [vmem:[#allocation2 + $0x1600] sm:$0xff]
    %v3813 = vld [vmem:[#allocation2 + $0x1608] sm:$0xff]
    %v3814 = vld [vmem:[#allocation2 + $0x1640] sm:$0xff]
    %v3815 = vld [vmem:[#allocation2 + $0x1648] sm:$0xff]
    %v3816 = vld [vmem:[#allocation2 + $0x1680] sm:$0xff]
    %v3817 = vld [vmem:[#allocation2 + $0x1688] sm:$0xff]
    %v3818 = vld [vmem:[#allocation2 + $0x16c0] sm:$0xff]
    %v3819 = vld [vmem:[#allocation2 + $0x16c8] sm:$0xff]
    %v3820 = vld [vmem:[#allocation2 + $0x1700] sm:$0xff]
    %v3821 = vld [vmem:[#allocation2 + $0x1708] sm:$0xff]
    %v3822 = vld [vmem:[#allocation2 + $0x1740] sm:$0xff]
    %v3823 = vld [vmem:[#allocation2 + $0x1748] sm:$0xff]
    %v3824 = vld [vmem:[#allocation2 + $0x1780] sm:$0xff]
    %v3825 = vld [vmem:[#allocation2 + $0x1788] sm:$0xff]
    %v3826 = vld [vmem:[#allocation2 + $0x17c0] sm:$0xff]
    %v3827 = vld [vmem:[#allocation2 + $0x17c8] sm:$0xff]
    %v3828 = vld [vmem:[#allocation2 + $0x1800] sm:$0xff]
    %v3829 = vld [vmem:[#allocation2 + $0x1808] sm:$0xff]
    %v3830 = vld [vmem:[#allocation2 + $0x1840] sm:$0xff]
    %v3831 = vld [vmem:[#allocation2 + $0x1848] sm:$0xff]
    %v3832 = vld [vmem:[#allocation2 + $0x1880] sm:$0xff]
    %v3833 = vld [vmem:[#allocation2 + $0x1888] sm:$0xff]
    %v3834 = vld [vmem:[#allocation2 + $0x18c0] sm:$0xff]
    %v3835 = vld [vmem:[#allocation2 + $0x18c8] sm:$0xff]
    %v3836 = vld [vmem:[#allocation2 + $0x1900] sm:$0xff]
    %v3837 = vld [vmem:[#allocation2 + $0x1908] sm:$0xff]
    %v3838 = vld [vmem:[#allocation2 + $0x1940] sm:$0xff]
    %v3839 = vld [vmem:[#allocation2 + $0x1948] sm:$0xff]
    %v3840 = vld [vmem:[#allocation2 + $0x1980] sm:$0xff]
    %v3841 = vld [vmem:[#allocation2 + $0x1988] sm:$0xff]
    %v3842 = vld [vmem:[#allocation2 + $0x19c0] sm:$0xff]
    %v3843 = vld [vmem:[#allocation2 + $0x19c8] sm:$0xff]
    %v3844 = vld [vmem:[#allocation2 + $0x1a00] sm:$0xff]
    %v3845 = vld [vmem:[#allocation2 + $0x1a08] sm:$0xff]
    %v3846 = vld [vmem:[#allocation2 + $0x1a40] sm:$0xff]
    %v3847 = vld [vmem:[#allocation2 + $0x1a48] sm:$0xff]
    %v3848 = vld [vmem:[#allocation2 + $0x1a80] sm:$0xff]
    %v3849 = vld [vmem:[#allocation2 + $0x1a88] sm:$0xff]
    %v3850 = vld [vmem:[#allocation2 + $0x1ac0] sm:$0xff]
    %v3851 = vld [vmem:[#allocation2 + $0x1ac8] sm:$0xff]
    %v3852 = vld [vmem:[#allocation2 + $0x1b00] sm:$0xff]
    %v3853 = vld [vmem:[#allocation2 + $0x1b08] sm:$0xff]
    %v3854 = vld [vmem:[#allocation2 + $0x1b40] sm:$0xff]
    %v3855 = vld [vmem:[#allocation2 + $0x1b48] sm:$0xff]
    %v3856 = vld [vmem:[#allocation2 + $0x1b80] sm:$0xff]
    %v3857 = vld [vmem:[#allocation2 + $0x1b88] sm:$0xff]
    %v3858 = vld [vmem:[#allocation2 + $0x1bc0] sm:$0xff]
    %v3859 = vld [vmem:[#allocation2 + $0x1bc8] sm:$0xff]
    %v3860 = vld [vmem:[#allocation2 + $0x1c00] sm:$0xff]
    %v3861 = vld [vmem:[#allocation2 + $0x1c08] sm:$0xff]
    %v3862 = vld [vmem:[#allocation2 + $0x1c40] sm:$0xff]
    %v3863 = vld [vmem:[#allocation2 + $0x1c48] sm:$0xff]
    %v3864 = vld [vmem:[#allocation2 + $0x1c80] sm:$0xff]
    %v3865 = vld [vmem:[#allocation2 + $0x1c88] sm:$0xff]
    %v3866 = vld [vmem:[#allocation2 + $0x1cc0] sm:$0xff]
    %v3867 = vld [vmem:[#allocation2 + $0x1cc8] sm:$0xff]
    %v3868 = vld [vmem:[#allocation2 + $0x1d00] sm:$0xff]
    %v3869 = vld [vmem:[#allocation2 + $0x1d08] sm:$0xff]
    %v3870 = vld [vmem:[#allocation2 + $0x1d40] sm:$0xff]
    %v3871 = vld [vmem:[#allocation2 + $0x1d48] sm:$0xff]
    %v3872 = vld [vmem:[#allocation2 + $0x1d80] sm:$0xff]
    %v3873 = vld [vmem:[#allocation2 + $0x1d88] sm:$0xff]
    %v3874 = vld [vmem:[#allocation2 + $0x1dc0] sm:$0xff]
    %v3875 = vld [vmem:[#allocation2 + $0x1dc8] sm:$0xff]
    %v3876 = vld [vmem:[#allocation2 + $0x1e00] sm:$0xff]
    %v3877 = vld [vmem:[#allocation2 + $0x1e08] sm:$0xff]
    %v3878 = vld [vmem:[#allocation2 + $0x1e40] sm:$0xff]
    %v3879 = vld [vmem:[#allocation2 + $0x1e48] sm:$0xff]
    %v3880 = vld [vmem:[#allocation2 + $0x1e80] sm:$0xff]
    %v3881 = vld [vmem:[#allocation2 + $0x1e88] sm:$0xff]
    %v3882 = vld [vmem:[#allocation2 + $0x1ec0] sm:$0xff]
    %v3883 = vld [vmem:[#allocation2 + $0x1ec8] sm:$0xff]
    %v3884 = vld [vmem:[#allocation2 + $0x1f00] sm:$0xff]
    %v3885 = vld [vmem:[#allocation2 + $0x1f08] sm:$0xff]
    %v3886 = vld [vmem:[#allocation2 + $0x1f40] sm:$0xff]
    %v3887 = vld [vmem:[#allocation2 + $0x1f48] sm:$0xff]
    %v3888 = vld [vmem:[#allocation2 + $0x1f80] sm:$0xff]
    %v3889 = vld [vmem:[#allocation2 + $0x1f88] sm:$0xff]
    %v3890 = vld [vmem:[#allocation2 + $0x1fc0] sm:$0xff]
    %v3891 = vld [vmem:[#allocation2 + $0x1fc8] sm:$0xff]
    %v3892 = vld [vmem:[#allocation9] sm:$0xf]
    %v3894 = vlaneseq
    %v3895 = vshrl.u32 %v3894, 7
    %v3896 = vsub.s32 0, %v3895
    %v3897 = vrot.slane %v3892, %v3896
    %v3898 = vlaneseq
    %v3899 = vshrl.u32 %v3898, 7
    %v3900 = vsub.s32 1, %v3899
    %v3901 = vrot.slane %v3892, %v3900
    %v3902 = vlaneseq
    %v3903 = vshrl.u32 %v3902, 7
    %v3904 = vsub.s32 2, %v3903
    %v3905 = vrot.slane %v3892, %v3904
    %v3906 = vlaneseq
    %v3907 = vshrl.u32 %v3906, 7
    %v3908 = vsub.s32 3, %v3907
    %v3909 = vrot.slane %v3892, %v3908
    %v4170 = vunpack.c.l.b16 %v3636
    %v4171 = vunpack.c.h.b16 %v3636
    %v4172 = vunpack.c.l.b16 %v3637
    %v4173 = vunpack.c.h.b16 %v3637
    %v4174 = vunpack.c.l.b16 %v3638
    %v4175 = vunpack.c.h.b16 %v3638
    %v4176 = vunpack.c.l.b16 %v3639
    %v4177 = vunpack.c.h.b16 %v3639
    %v4178 = vunpack.c.l.b16 %v3640
    %v4179 = vunpack.c.h.b16 %v3640
    %v4180 = vunpack.c.l.b16 %v3641
    %v4181 = vunpack.c.h.b16 %v3641
    %v4182 = vunpack.c.l.b16 %v3642
    %v4183 = vunpack.c.h.b16 %v3642
    %v4184 = vunpack.c.l.b16 %v3643
    %v4185 = vunpack.c.h.b16 %v3643
    %v4186 = vunpack.c.l.b16 %v3644
    %v4187 = vunpack.c.h.b16 %v3644
    %v4188 = vunpack.c.l.b16 %v3645
    %v4189 = vunpack.c.h.b16 %v3645
    %v4190 = vunpack.c.l.b16 %v3646
    %v4191 = vunpack.c.h.b16 %v3646
    %v4192 = vunpack.c.l.b16 %v3647
    %v4193 = vunpack.c.h.b16 %v3647
    %v4194 = vunpack.c.l.b16 %v3648
    %v4195 = vunpack.c.h.b16 %v3648
    %v4196 = vunpack.c.l.b16 %v3649
    %v4197 = vunpack.c.h.b16 %v3649
    %v4198 = vunpack.c.l.b16 %v3650
    %v4199 = vunpack.c.h.b16 %v3650
    %v4200 = vunpack.c.l.b16 %v3651
    %v4201 = vunpack.c.h.b16 %v3651
    %v4202 = vunpack.c.l.b16 %v3652
    %v4203 = vunpack.c.h.b16 %v3652
    %v4204 = vunpack.c.l.b16 %v3653
    %v4205 = vunpack.c.h.b16 %v3653
    %v4206 = vunpack.c.l.b16 %v3654
    %v4207 = vunpack.c.h.b16 %v3654
    %v4208 = vunpack.c.l.b16 %v3655
    %v4209 = vunpack.c.h.b16 %v3655
    %v4210 = vunpack.c.l.b16 %v3656
    %v4211 = vunpack.c.h.b16 %v3656
    %v4212 = vunpack.c.l.b16 %v3657
    %v4213 = vunpack.c.h.b16 %v3657
    %v4214 = vunpack.c.l.b16 %v3658
    %v4215 = vunpack.c.h.b16 %v3658
    %v4216 = vunpack.c.l.b16 %v3659
    %v4217 = vunpack.c.h.b16 %v3659
    %v4218 = vunpack.c.l.b16 %v3660
    %v4219 = vunpack.c.h.b16 %v3660
    %v4220 = vunpack.c.l.b16 %v3661
    %v4221 = vunpack.c.h.b16 %v3661
    %v4222 = vunpack.c.l.b16 %v3662
    %v4223 = vunpack.c.h.b16 %v3662
    %v4224 = vunpack.c.l.b16 %v3663
    %v4225 = vunpack.c.h.b16 %v3663
    %v4226 = vunpack.c.l.b16 %v3664
    %v4227 = vunpack.c.h.b16 %v3664
    %v4228 = vunpack.c.l.b16 %v3665
    %v4229 = vunpack.c.h.b16 %v3665
    %v4230 = vunpack.c.l.b16 %v3666
    %v4231 = vunpack.c.h.b16 %v3666
    %v4232 = vunpack.c.l.b16 %v3667
    %v4233 = vunpack.c.h.b16 %v3667
    %v4234 = vunpack.c.l.b16 %v3668
    %v4235 = vunpack.c.h.b16 %v3668
    %v4236 = vunpack.c.l.b16 %v3669
    %v4237 = vunpack.c.h.b16 %v3669
    %v4238 = vunpack.c.l.b16 %v3670
    %v4239 = vunpack.c.h.b16 %v3670
    %v4240 = vunpack.c.l.b16 %v3671
    %v4241 = vunpack.c.h.b16 %v3671
    %v4242 = vunpack.c.l.b16 %v3672
    %v4243 = vunpack.c.h.b16 %v3672
    %v4244 = vunpack.c.l.b16 %v3673
    %v4245 = vunpack.c.h.b16 %v3673
    %v4246 = vunpack.c.l.b16 %v3674
    %v4247 = vunpack.c.h.b16 %v3674
    %v4248 = vunpack.c.l.b16 %v3675
    %v4249 = vunpack.c.h.b16 %v3675
    %v4250 = vunpack.c.l.b16 %v3676
    %v4251 = vunpack.c.h.b16 %v3676
    %v4252 = vunpack.c.l.b16 %v3677
    %v4253 = vunpack.c.h.b16 %v3677
    %v4254 = vunpack.c.l.b16 %v3678
    %v4255 = vunpack.c.h.b16 %v3678
    %v4256 = vunpack.c.l.b16 %v3679
    %v4257 = vunpack.c.h.b16 %v3679
    %v4258 = vunpack.c.l.b16 %v3680
    %v4259 = vunpack.c.h.b16 %v3680
    %v4260 = vunpack.c.l.b16 %v3681
    %v4261 = vunpack.c.h.b16 %v3681
    %v4262 = vunpack.c.l.b16 %v3682
    %v4263 = vunpack.c.h.b16 %v3682
    %v4264 = vunpack.c.l.b16 %v3683
    %v4265 = vunpack.c.h.b16 %v3683
    %v4266 = vunpack.c.l.b16 %v3684
    %v4267 = vunpack.c.h.b16 %v3684
    %v4268 = vunpack.c.l.b16 %v3685
    %v4269 = vunpack.c.h.b16 %v3685
    %v4270 = vunpack.c.l.b16 %v3686
    %v4271 = vunpack.c.h.b16 %v3686
    %v4272 = vunpack.c.l.b16 %v3687
    %v4273 = vunpack.c.h.b16 %v3687
    %v4274 = vunpack.c.l.b16 %v3688
    %v4275 = vunpack.c.h.b16 %v3688
    %v4276 = vunpack.c.l.b16 %v3689
    %v4277 = vunpack.c.h.b16 %v3689
    %v4278 = vunpack.c.l.b16 %v3690
    %v4279 = vunpack.c.h.b16 %v3690
    %v4280 = vunpack.c.l.b16 %v3691
    %v4281 = vunpack.c.h.b16 %v3691
    %v4282 = vunpack.c.l.b16 %v3692
    %v4283 = vunpack.c.h.b16 %v3692
    %v4284 = vunpack.c.l.b16 %v3693
    %v4285 = vunpack.c.h.b16 %v3693
    %v4286 = vunpack.c.l.b16 %v3694
    %v4287 = vunpack.c.h.b16 %v3694
    %v4288 = vunpack.c.l.b16 %v3695
    %v4289 = vunpack.c.h.b16 %v3695
    %v4290 = vunpack.c.l.b16 %v3696
    %v4291 = vunpack.c.h.b16 %v3696
    %v4292 = vunpack.c.l.b16 %v3697
    %v4293 = vunpack.c.h.b16 %v3697
    %v4294 = vunpack.c.l.b16 %v3698
    %v4295 = vunpack.c.h.b16 %v3698
    %v4296 = vunpack.c.l.b16 %v3699
    %v4297 = vunpack.c.h.b16 %v3699
    %v4298 = vunpack.c.l.b16 %v3700
    %v4299 = vunpack.c.h.b16 %v3700
    %v4300 = vunpack.c.l.b16 %v3701
    %v4301 = vunpack.c.h.b16 %v3701
    %v4302 = vunpack.c.l.b16 %v3702
    %v4303 = vunpack.c.h.b16 %v3702
    %v4304 = vunpack.c.l.b16 %v3703
    %v4305 = vunpack.c.h.b16 %v3703
    %v4306 = vunpack.c.l.b16 %v3704
    %v4307 = vunpack.c.h.b16 %v3704
    %v4308 = vunpack.c.l.b16 %v3705
    %v4309 = vunpack.c.h.b16 %v3705
    %v4310 = vunpack.c.l.b16 %v3706
    %v4311 = vunpack.c.h.b16 %v3706
    %v4312 = vunpack.c.l.b16 %v3707
    %v4313 = vunpack.c.h.b16 %v3707
    %v4314 = vunpack.c.l.b16 %v3708
    %v4315 = vunpack.c.h.b16 %v3708
    %v4316 = vunpack.c.l.b16 %v3709
    %v4317 = vunpack.c.h.b16 %v3709
    %v4318 = vunpack.c.l.b16 %v3710
    %v4319 = vunpack.c.h.b16 %v3710
    %v4320 = vunpack.c.l.b16 %v3711
    %v4321 = vunpack.c.h.b16 %v3711
    %v4322 = vunpack.c.l.b16 %v3712
    %v4323 = vunpack.c.h.b16 %v3712
    %v4324 = vunpack.c.l.b16 %v3713
    %v4325 = vunpack.c.h.b16 %v3713
    %v4326 = vunpack.c.l.b16 %v3714
    %v4327 = vunpack.c.h.b16 %v3714
    %v4328 = vunpack.c.l.b16 %v3715
    %v4329 = vunpack.c.h.b16 %v3715
    %v4330 = vunpack.c.l.b16 %v3716
    %v4331 = vunpack.c.h.b16 %v3716
    %v4332 = vunpack.c.l.b16 %v3717
    %v4333 = vunpack.c.h.b16 %v3717
    %v4334 = vunpack.c.l.b16 %v3718
    %v4335 = vunpack.c.h.b16 %v3718
    %v4336 = vunpack.c.l.b16 %v3719
    %v4337 = vunpack.c.h.b16 %v3719
    %v4338 = vunpack.c.l.b16 %v3720
    %v4339 = vunpack.c.h.b16 %v3720
    %v4340 = vunpack.c.l.b16 %v3721
    %v4341 = vunpack.c.h.b16 %v3721
    %v4342 = vunpack.c.l.b16 %v3722
    %v4343 = vunpack.c.h.b16 %v3722
    %v4344 = vunpack.c.l.b16 %v3723
    %v4345 = vunpack.c.h.b16 %v3723
    %v4346 = vunpack.c.l.b16 %v3724
    %v4347 = vunpack.c.h.b16 %v3724
    %v4348 = vunpack.c.l.b16 %v3725
    %v4349 = vunpack.c.h.b16 %v3725
    %v4350 = vunpack.c.l.b16 %v3726
    %v4351 = vunpack.c.h.b16 %v3726
    %v4352 = vunpack.c.l.b16 %v3727
    %v4353 = vunpack.c.h.b16 %v3727
    %v4354 = vunpack.c.l.b16 %v3728
    %v4355 = vunpack.c.h.b16 %v3728
    %v4356 = vunpack.c.l.b16 %v3729
    %v4357 = vunpack.c.h.b16 %v3729
    %v4358 = vunpack.c.l.b16 %v3730
    %v4359 = vunpack.c.h.b16 %v3730
    %v4360 = vunpack.c.l.b16 %v3731
    %v4361 = vunpack.c.h.b16 %v3731
    %v4362 = vunpack.c.l.b16 %v3732
    %v4363 = vunpack.c.h.b16 %v3732
    %v4364 = vunpack.c.l.b16 %v3733
    %v4365 = vunpack.c.h.b16 %v3733
    %v4366 = vunpack.c.l.b16 %v3734
    %v4367 = vunpack.c.h.b16 %v3734
    %v4368 = vunpack.c.l.b16 %v3735
    %v4369 = vunpack.c.h.b16 %v3735
    %v4370 = vunpack.c.l.b16 %v3736
    %v4371 = vunpack.c.h.b16 %v3736
    %v4372 = vunpack.c.l.b16 %v3737
    %v4373 = vunpack.c.h.b16 %v3737
    %v4374 = vunpack.c.l.b16 %v3738
    %v4375 = vunpack.c.h.b16 %v3738
    %v4376 = vunpack.c.l.b16 %v3739
    %v4377 = vunpack.c.h.b16 %v3739
    %v4378 = vunpack.c.l.b16 %v3740
    %v4379 = vunpack.c.h.b16 %v3740
    %v4380 = vunpack.c.l.b16 %v3741
    %v4381 = vunpack.c.h.b16 %v3741
    %v4382 = vunpack.c.l.b16 %v3742
    %v4383 = vunpack.c.h.b16 %v3742
    %v4384 = vunpack.c.l.b16 %v3743
    %v4385 = vunpack.c.h.b16 %v3743
    %v4386 = vunpack.c.l.b16 %v3744
    %v4387 = vunpack.c.h.b16 %v3744
    %v4388 = vunpack.c.l.b16 %v3745
    %v4389 = vunpack.c.h.b16 %v3745
    %v4390 = vunpack.c.l.b16 %v3746
    %v4391 = vunpack.c.h.b16 %v3746
    %v4392 = vunpack.c.l.b16 %v3747
    %v4393 = vunpack.c.h.b16 %v3747
    %v4394 = vunpack.c.l.b16 %v3748
    %v4395 = vunpack.c.h.b16 %v3748
    %v4396 = vunpack.c.l.b16 %v3749
    %v4397 = vunpack.c.h.b16 %v3749
    %v4398 = vunpack.c.l.b16 %v3750
    %v4399 = vunpack.c.h.b16 %v3750
    %v4400 = vunpack.c.l.b16 %v3751
    %v4401 = vunpack.c.h.b16 %v3751
    %v4402 = vunpack.c.l.b16 %v3752
    %v4403 = vunpack.c.h.b16 %v3752
    %v4404 = vunpack.c.l.b16 %v3753
    %v4405 = vunpack.c.h.b16 %v3753
    %v4406 = vunpack.c.l.b16 %v3754
    %v4407 = vunpack.c.h.b16 %v3754
    %v4408 = vunpack.c.l.b16 %v3755
    %v4409 = vunpack.c.h.b16 %v3755
    %v4410 = vunpack.c.l.b16 %v3756
    %v4411 = vunpack.c.h.b16 %v3756
    %v4412 = vunpack.c.l.b16 %v3757
    %v4413 = vunpack.c.h.b16 %v3757
    %v4414 = vunpack.c.l.b16 %v3758
    %v4415 = vunpack.c.h.b16 %v3758
    %v4416 = vunpack.c.l.b16 %v3759
    %v4417 = vunpack.c.h.b16 %v3759
    %v4418 = vunpack.c.l.b16 %v3760
    %v4419 = vunpack.c.h.b16 %v3760
    %v4420 = vunpack.c.l.b16 %v3761
    %v4421 = vunpack.c.h.b16 %v3761
    %v4422 = vunpack.c.l.b16 %v3762
    %v4423 = vunpack.c.h.b16 %v3762
    %v4424 = vunpack.c.l.b16 %v3763
    %v4425 = vunpack.c.h.b16 %v3763
    %v4426 = vunpack.c.l.b16 %v3764
    %v4427 = vunpack.c.h.b16 %v3764
    %v4428 = vunpack.c.l.b16 %v3765
    %v4429 = vunpack.c.h.b16 %v3765
    %v4430 = vunpack.c.l.b16 %v3766
    %v4431 = vunpack.c.h.b16 %v3766
    %v4432 = vunpack.c.l.b16 %v3767
    %v4433 = vunpack.c.h.b16 %v3767
    %v4434 = vunpack.c.l.b16 %v3768
    %v4435 = vunpack.c.h.b16 %v3768
    %v4436 = vunpack.c.l.b16 %v3769
    %v4437 = vunpack.c.h.b16 %v3769
    %v4438 = vunpack.c.l.b16 %v3770
    %v4439 = vunpack.c.h.b16 %v3770
    %v4440 = vunpack.c.l.b16 %v3771
    %v4441 = vunpack.c.h.b16 %v3771
    %v4442 = vunpack.c.l.b16 %v3772
    %v4443 = vunpack.c.h.b16 %v3772
    %v4444 = vunpack.c.l.b16 %v3773
    %v4445 = vunpack.c.h.b16 %v3773
    %v4446 = vunpack.c.l.b16 %v3774
    %v4447 = vunpack.c.h.b16 %v3774
    %v4448 = vunpack.c.l.b16 %v3775
    %v4449 = vunpack.c.h.b16 %v3775
    %v4450 = vunpack.c.l.b16 %v3776
    %v4451 = vunpack.c.h.b16 %v3776
    %v4452 = vunpack.c.l.b16 %v3777
    %v4453 = vunpack.c.h.b16 %v3777
    %v4454 = vunpack.c.l.b16 %v3778
    %v4455 = vunpack.c.h.b16 %v3778
    %v4456 = vunpack.c.l.b16 %v3779
    %v4457 = vunpack.c.h.b16 %v3779
    %v4458 = vunpack.c.l.b16 %v3780
    %v4459 = vunpack.c.h.b16 %v3780
    %v4460 = vunpack.c.l.b16 %v3781
    %v4461 = vunpack.c.h.b16 %v3781
    %v4462 = vunpack.c.l.b16 %v3782
    %v4463 = vunpack.c.h.b16 %v3782
    %v4464 = vunpack.c.l.b16 %v3783
    %v4465 = vunpack.c.h.b16 %v3783
    %v4466 = vunpack.c.l.b16 %v3784
    %v4467 = vunpack.c.h.b16 %v3784
    %v4468 = vunpack.c.l.b16 %v3785
    %v4469 = vunpack.c.h.b16 %v3785
    %v4470 = vunpack.c.l.b16 %v3786
    %v4471 = vunpack.c.h.b16 %v3786
    %v4472 = vunpack.c.l.b16 %v3787
    %v4473 = vunpack.c.h.b16 %v3787
    %v4474 = vunpack.c.l.b16 %v3788
    %v4475 = vunpack.c.h.b16 %v3788
    %v4476 = vunpack.c.l.b16 %v3789
    %v4477 = vunpack.c.h.b16 %v3789
    %v4478 = vunpack.c.l.b16 %v3790
    %v4479 = vunpack.c.h.b16 %v3790
    %v4480 = vunpack.c.l.b16 %v3791
    %v4481 = vunpack.c.h.b16 %v3791
    %v4482 = vunpack.c.l.b16 %v3792
    %v4483 = vunpack.c.h.b16 %v3792
    %v4484 = vunpack.c.l.b16 %v3793
    %v4485 = vunpack.c.h.b16 %v3793
    %v4486 = vunpack.c.l.b16 %v3794
    %v4487 = vunpack.c.h.b16 %v3794
    %v4488 = vunpack.c.l.b16 %v3795
    %v4489 = vunpack.c.h.b16 %v3795
    %v4490 = vunpack.c.l.b16 %v3796
    %v4491 = vunpack.c.h.b16 %v3796
    %v4492 = vunpack.c.l.b16 %v3797
    %v4493 = vunpack.c.h.b16 %v3797
    %v4494 = vunpack.c.l.b16 %v3798
    %v4495 = vunpack.c.h.b16 %v3798
    %v4496 = vunpack.c.l.b16 %v3799
    %v4497 = vunpack.c.h.b16 %v3799
    %v4498 = vunpack.c.l.b16 %v3800
    %v4499 = vunpack.c.h.b16 %v3800
    %v4500 = vunpack.c.l.b16 %v3801
    %v4501 = vunpack.c.h.b16 %v3801
    %v4502 = vunpack.c.l.b16 %v3802
    %v4503 = vunpack.c.h.b16 %v3802
    %v4504 = vunpack.c.l.b16 %v3803
    %v4505 = vunpack.c.h.b16 %v3803
    %v4506 = vunpack.c.l.b16 %v3804
    %v4507 = vunpack.c.h.b16 %v3804
    %v4508 = vunpack.c.l.b16 %v3805
    %v4509 = vunpack.c.h.b16 %v3805
    %v4510 = vunpack.c.l.b16 %v3806
    %v4511 = vunpack.c.h.b16 %v3806
    %v4512 = vunpack.c.l.b16 %v3807
    %v4513 = vunpack.c.h.b16 %v3807
    %v4514 = vunpack.c.l.b16 %v3808
    %v4515 = vunpack.c.h.b16 %v3808
    %v4516 = vunpack.c.l.b16 %v3809
    %v4517 = vunpack.c.h.b16 %v3809
    %v4518 = vunpack.c.l.b16 %v3810
    %v4519 = vunpack.c.h.b16 %v3810
    %v4520 = vunpack.c.l.b16 %v3811
    %v4521 = vunpack.c.h.b16 %v3811
    %v4522 = vunpack.c.l.b16 %v3812
    %v4523 = vunpack.c.h.b16 %v3812
    %v4524 = vunpack.c.l.b16 %v3813
    %v4525 = vunpack.c.h.b16 %v3813
    %v4526 = vunpack.c.l.b16 %v3814
    %v4527 = vunpack.c.h.b16 %v3814
    %v4528 = vunpack.c.l.b16 %v3815
    %v4529 = vunpack.c.h.b16 %v3815
    %v4530 = vunpack.c.l.b16 %v3816
    %v4531 = vunpack.c.h.b16 %v3816
    %v4532 = vunpack.c.l.b16 %v3817
    %v4533 = vunpack.c.h.b16 %v3817
    %v4534 = vunpack.c.l.b16 %v3818
    %v4535 = vunpack.c.h.b16 %v3818
    %v4536 = vunpack.c.l.b16 %v3819
    %v4537 = vunpack.c.h.b16 %v3819
    %v4538 = vunpack.c.l.b16 %v3820
    %v4539 = vunpack.c.h.b16 %v3820
    %v4540 = vunpack.c.l.b16 %v3821
    %v4541 = vunpack.c.h.b16 %v3821
    %v4542 = vunpack.c.l.b16 %v3822
    %v4543 = vunpack.c.h.b16 %v3822
    %v4544 = vunpack.c.l.b16 %v3823
    %v4545 = vunpack.c.h.b16 %v3823
    %v4546 = vunpack.c.l.b16 %v3824
    %v4547 = vunpack.c.h.b16 %v3824
    %v4548 = vunpack.c.l.b16 %v3825
    %v4549 = vunpack.c.h.b16 %v3825
    %v4550 = vunpack.c.l.b16 %v3826
    %v4551 = vunpack.c.h.b16 %v3826
    %v4552 = vunpack.c.l.b16 %v3827
    %v4553 = vunpack.c.h.b16 %v3827
    %v4554 = vunpack.c.l.b16 %v3828
    %v4555 = vunpack.c.h.b16 %v3828
    %v4556 = vunpack.c.l.b16 %v3829
    %v4557 = vunpack.c.h.b16 %v3829
    %v4558 = vunpack.c.l.b16 %v3830
    %v4559 = vunpack.c.h.b16 %v3830
    %v4560 = vunpack.c.l.b16 %v3831
    %v4561 = vunpack.c.h.b16 %v3831
    %v4562 = vunpack.c.l.b16 %v3832
    %v4563 = vunpack.c.h.b16 %v3832
    %v4564 = vunpack.c.l.b16 %v3833
    %v4565 = vunpack.c.h.b16 %v3833
    %v4566 = vunpack.c.l.b16 %v3834
    %v4567 = vunpack.c.h.b16 %v3834
    %v4568 = vunpack.c.l.b16 %v3835
    %v4569 = vunpack.c.h.b16 %v3835
    %v4570 = vunpack.c.l.b16 %v3836
    %v4571 = vunpack.c.h.b16 %v3836
    %v4572 = vunpack.c.l.b16 %v3837
    %v4573 = vunpack.c.h.b16 %v3837
    %v4574 = vunpack.c.l.b16 %v3838
    %v4575 = vunpack.c.h.b16 %v3838
    %v4576 = vunpack.c.l.b16 %v3839
    %v4577 = vunpack.c.h.b16 %v3839
    %v4578 = vunpack.c.l.b16 %v3840
    %v4579 = vunpack.c.h.b16 %v3840
    %v4580 = vunpack.c.l.b16 %v3841
    %v4581 = vunpack.c.h.b16 %v3841
    %v4582 = vunpack.c.l.b16 %v3842
    %v4583 = vunpack.c.h.b16 %v3842
    %v4584 = vunpack.c.l.b16 %v3843
    %v4585 = vunpack.c.h.b16 %v3843
    %v4586 = vunpack.c.l.b16 %v3844
    %v4587 = vunpack.c.h.b16 %v3844
    %v4588 = vunpack.c.l.b16 %v3845
    %v4589 = vunpack.c.h.b16 %v3845
    %v4590 = vunpack.c.l.b16 %v3846
    %v4591 = vunpack.c.h.b16 %v3846
    %v4592 = vunpack.c.l.b16 %v3847
    %v4593 = vunpack.c.h.b16 %v3847
    %v4594 = vunpack.c.l.b16 %v3848
    %v4595 = vunpack.c.h.b16 %v3848
    %v4596 = vunpack.c.l.b16 %v3849
    %v4597 = vunpack.c.h.b16 %v3849
    %v4598 = vunpack.c.l.b16 %v3850
    %v4599 = vunpack.c.h.b16 %v3850
    %v4600 = vunpack.c.l.b16 %v3851
    %v4601 = vunpack.c.h.b16 %v3851
    %v4602 = vunpack.c.l.b16 %v3852
    %v4603 = vunpack.c.h.b16 %v3852
    %v4604 = vunpack.c.l.b16 %v3853
    %v4605 = vunpack.c.h.b16 %v3853
    %v4606 = vunpack.c.l.b16 %v3854
    %v4607 = vunpack.c.h.b16 %v3854
    %v4608 = vunpack.c.l.b16 %v3855
    %v4609 = vunpack.c.h.b16 %v3855
    %v4610 = vunpack.c.l.b16 %v3856
    %v4611 = vunpack.c.h.b16 %v3856
    %v4612 = vunpack.c.l.b16 %v3857
    %v4613 = vunpack.c.h.b16 %v3857
    %v4614 = vunpack.c.l.b16 %v3858
    %v4615 = vunpack.c.h.b16 %v3858
    %v4616 = vunpack.c.l.b16 %v3859
    %v4617 = vunpack.c.h.b16 %v3859
    %v4618 = vunpack.c.l.b16 %v3860
    %v4619 = vunpack.c.h.b16 %v3860
    %v4620 = vunpack.c.l.b16 %v3861
    %v4621 = vunpack.c.h.b16 %v3861
    %v4622 = vunpack.c.l.b16 %v3862
    %v4623 = vunpack.c.h.b16 %v3862
    %v4624 = vunpack.c.l.b16 %v3863
    %v4625 = vunpack.c.h.b16 %v3863
    %v4626 = vunpack.c.l.b16 %v3864
    %v4627 = vunpack.c.h.b16 %v3864
    %v4628 = vunpack.c.l.b16 %v3865
    %v4629 = vunpack.c.h.b16 %v3865
    %v4630 = vunpack.c.l.b16 %v3866
    %v4631 = vunpack.c.h.b16 %v3866
    %v4632 = vunpack.c.l.b16 %v3867
    %v4633 = vunpack.c.h.b16 %v3867
    %v4634 = vunpack.c.l.b16 %v3868
    %v4635 = vunpack.c.h.b16 %v3868
    %v4636 = vunpack.c.l.b16 %v3869
    %v4637 = vunpack.c.h.b16 %v3869
    %v4638 = vunpack.c.l.b16 %v3870
    %v4639 = vunpack.c.h.b16 %v3870
    %v4640 = vunpack.c.l.b16 %v3871
    %v4641 = vunpack.c.h.b16 %v3871
    %v4642 = vunpack.c.l.b16 %v3872
    %v4643 = vunpack.c.h.b16 %v3872
    %v4644 = vunpack.c.l.b16 %v3873
    %v4645 = vunpack.c.h.b16 %v3873
    %v4646 = vunpack.c.l.b16 %v3874
    %v4647 = vunpack.c.h.b16 %v3874
    %v4648 = vunpack.c.l.b16 %v3875
    %v4649 = vunpack.c.h.b16 %v3875
    %v4650 = vunpack.c.l.b16 %v3876
    %v4651 = vunpack.c.h.b16 %v3876
    %v4652 = vunpack.c.l.b16 %v3877
    %v4653 = vunpack.c.h.b16 %v3877
    %v4654 = vunpack.c.l.b16 %v3878
    %v4655 = vunpack.c.h.b16 %v3878
    %v4656 = vunpack.c.l.b16 %v3879
    %v4657 = vunpack.c.h.b16 %v3879
    %v4658 = vunpack.c.l.b16 %v3880
    %v4659 = vunpack.c.h.b16 %v3880
    %v4660 = vunpack.c.l.b16 %v3881
    %v4661 = vunpack.c.h.b16 %v3881
    %v4662 = vunpack.c.l.b16 %v3882
    %v4663 = vunpack.c.h.b16 %v3882
    %v4664 = vunpack.c.l.b16 %v3883
    %v4665 = vunpack.c.h.b16 %v3883
    %v4666 = vunpack.c.l.b16 %v3884
    %v4667 = vunpack.c.h.b16 %v3884
    %v4668 = vunpack.c.l.b16 %v3885
    %v4669 = vunpack.c.h.b16 %v3885
    %v4670 = vunpack.c.l.b16 %v3886
    %v4671 = vunpack.c.h.b16 %v3886
    %v4672 = vunpack.c.l.b16 %v3887
    %v4673 = vunpack.c.h.b16 %v3887
    %v4674 = vunpack.c.l.b16 %v3888
    %v4675 = vunpack.c.h.b16 %v3888
    %v4676 = vunpack.c.l.b16 %v3889
    %v4677 = vunpack.c.h.b16 %v3889
    %v4678 = vunpack.c.l.b16 %v3890
    %v4679 = vunpack.c.h.b16 %v3890
    %v4680 = vunpack.c.l.b16 %v3891
    %v4681 = vunpack.c.h.b16 %v3891
    %v4682 = vpack.c.b16 %v4174, %v4170
    %v4683 = vpack.c.b16 %v4175, %v4171
    %v4684 = vpack.c.b16 %v4176, %v4172
    %v4685 = vpack.c.b16 %v4177, %v4173
    %v4686 = vpack.c.b16 %v4182, %v4178
    %v4687 = vpack.c.b16 %v4183, %v4179
    %v4688 = vpack.c.b16 %v4184, %v4180
    %v4689 = vpack.c.b16 %v4185, %v4181
    %v4690 = vpack.c.b16 %v4190, %v4186
    %v4691 = vpack.c.b16 %v4191, %v4187
    %v4692 = vpack.c.b16 %v4192, %v4188
    %v4693 = vpack.c.b16 %v4193, %v4189
    %v4694 = vpack.c.b16 %v4198, %v4194
    %v4695 = vpack.c.b16 %v4199, %v4195
    %v4696 = vpack.c.b16 %v4200, %v4196
    %v4697 = vpack.c.b16 %v4201, %v4197
    %v4698 = vpack.c.b16 %v4206, %v4202
    %v4699 = vpack.c.b16 %v4207, %v4203
    %v4700 = vpack.c.b16 %v4208, %v4204
    %v4701 = vpack.c.b16 %v4209, %v4205
    %v4702 = vpack.c.b16 %v4214, %v4210
    %v4703 = vpack.c.b16 %v4215, %v4211
    %v4704 = vpack.c.b16 %v4216, %v4212
    %v4705 = vpack.c.b16 %v4217, %v4213
    %v4706 = vpack.c.b16 %v4222, %v4218
    %v4707 = vpack.c.b16 %v4223, %v4219
    %v4708 = vpack.c.b16 %v4224, %v4220
    %v4709 = vpack.c.b16 %v4225, %v4221
    %v4710 = vpack.c.b16 %v4230, %v4226
    %v4711 = vpack.c.b16 %v4231, %v4227
    %v4712 = vpack.c.b16 %v4232, %v4228
    %v4713 = vpack.c.b16 %v4233, %v4229
    %v4714 = vpack.c.b16 %v4238, %v4234
    %v4715 = vpack.c.b16 %v4239, %v4235
    %v4716 = vpack.c.b16 %v4240, %v4236
    %v4717 = vpack.c.b16 %v4241, %v4237
    %v4718 = vpack.c.b16 %v4246, %v4242
    %v4719 = vpack.c.b16 %v4247, %v4243
    %v4720 = vpack.c.b16 %v4248, %v4244
    %v4721 = vpack.c.b16 %v4249, %v4245
    %v4722 = vpack.c.b16 %v4254, %v4250
    %v4723 = vpack.c.b16 %v4255, %v4251
    %v4724 = vpack.c.b16 %v4256, %v4252
    %v4725 = vpack.c.b16 %v4257, %v4253
    %v4726 = vpack.c.b16 %v4262, %v4258
    %v4727 = vpack.c.b16 %v4263, %v4259
    %v4728 = vpack.c.b16 %v4264, %v4260
    %v4729 = vpack.c.b16 %v4265, %v4261
    %v4730 = vpack.c.b16 %v4270, %v4266
    %v4731 = vpack.c.b16 %v4271, %v4267
    %v4732 = vpack.c.b16 %v4272, %v4268
    %v4733 = vpack.c.b16 %v4273, %v4269
    %v4734 = vpack.c.b16 %v4278, %v4274
    %v4735 = vpack.c.b16 %v4279, %v4275
    %v4736 = vpack.c.b16 %v4280, %v4276
    %v4737 = vpack.c.b16 %v4281, %v4277
    %v4738 = vpack.c.b16 %v4286, %v4282
    %v4739 = vpack.c.b16 %v4287, %v4283
    %v4740 = vpack.c.b16 %v4288, %v4284
    %v4741 = vpack.c.b16 %v4289, %v4285
    %v4742 = vpack.c.b16 %v4294, %v4290
    %v4743 = vpack.c.b16 %v4295, %v4291
    %v4744 = vpack.c.b16 %v4296, %v4292
    %v4745 = vpack.c.b16 %v4297, %v4293
    %v4746 = vpack.c.b16 %v4302, %v4298
    %v4747 = vpack.c.b16 %v4303, %v4299
    %v4748 = vpack.c.b16 %v4304, %v4300
    %v4749 = vpack.c.b16 %v4305, %v4301
    %v4750 = vpack.c.b16 %v4310, %v4306
    %v4751 = vpack.c.b16 %v4311, %v4307
    %v4752 = vpack.c.b16 %v4312, %v4308
    %v4753 = vpack.c.b16 %v4313, %v4309
    %v4754 = vpack.c.b16 %v4318, %v4314
    %v4755 = vpack.c.b16 %v4319, %v4315
    %v4756 = vpack.c.b16 %v4320, %v4316
    %v4757 = vpack.c.b16 %v4321, %v4317
    %v4758 = vpack.c.b16 %v4326, %v4322
    %v4759 = vpack.c.b16 %v4327, %v4323
    %v4760 = vpack.c.b16 %v4328, %v4324
    %v4761 = vpack.c.b16 %v4329, %v4325
    %v4762 = vpack.c.b16 %v4334, %v4330
    %v4763 = vpack.c.b16 %v4335, %v4331
    %v4764 = vpack.c.b16 %v4336, %v4332
    %v4765 = vpack.c.b16 %v4337, %v4333
    %v4766 = vpack.c.b16 %v4342, %v4338
    %v4767 = vpack.c.b16 %v4343, %v4339
    %v4768 = vpack.c.b16 %v4344, %v4340
    %v4769 = vpack.c.b16 %v4345, %v4341
    %v4770 = vpack.c.b16 %v4350, %v4346
    %v4771 = vpack.c.b16 %v4351, %v4347
    %v4772 = vpack.c.b16 %v4352, %v4348
    %v4773 = vpack.c.b16 %v4353, %v4349
    %v4774 = vpack.c.b16 %v4358, %v4354
    %v4775 = vpack.c.b16 %v4359, %v4355
    %v4776 = vpack.c.b16 %v4360, %v4356
    %v4777 = vpack.c.b16 %v4361, %v4357
    %v4778 = vpack.c.b16 %v4366, %v4362
    %v4779 = vpack.c.b16 %v4367, %v4363
    %v4780 = vpack.c.b16 %v4368, %v4364
    %v4781 = vpack.c.b16 %v4369, %v4365
    %v4782 = vpack.c.b16 %v4374, %v4370
    %v4783 = vpack.c.b16 %v4375, %v4371
    %v4784 = vpack.c.b16 %v4376, %v4372
    %v4785 = vpack.c.b16 %v4377, %v4373
    %v4786 = vpack.c.b16 %v4382, %v4378
    %v4787 = vpack.c.b16 %v4383, %v4379
    %v4788 = vpack.c.b16 %v4384, %v4380
    %v4789 = vpack.c.b16 %v4385, %v4381
    %v4790 = vpack.c.b16 %v4390, %v4386
    %v4791 = vpack.c.b16 %v4391, %v4387
    %v4792 = vpack.c.b16 %v4392, %v4388
    %v4793 = vpack.c.b16 %v4393, %v4389
    %v4794 = vpack.c.b16 %v4398, %v4394
    %v4795 = vpack.c.b16 %v4399, %v4395
    %v4796 = vpack.c.b16 %v4400, %v4396
    %v4797 = vpack.c.b16 %v4401, %v4397
    %v4798 = vpack.c.b16 %v4406, %v4402
    %v4799 = vpack.c.b16 %v4407, %v4403
    %v4800 = vpack.c.b16 %v4408, %v4404
    %v4801 = vpack.c.b16 %v4409, %v4405
    %v4802 = vpack.c.b16 %v4414, %v4410
    %v4803 = vpack.c.b16 %v4415, %v4411
    %v4804 = vpack.c.b16 %v4416, %v4412
    %v4805 = vpack.c.b16 %v4417, %v4413
    %v4806 = vpack.c.b16 %v4422, %v4418
    %v4807 = vpack.c.b16 %v4423, %v4419
    %v4808 = vpack.c.b16 %v4424, %v4420
    %v4809 = vpack.c.b16 %v4425, %v4421
    %v4810 = vpack.c.b16 %v4430, %v4426
    %v4811 = vpack.c.b16 %v4431, %v4427
    %v4812 = vpack.c.b16 %v4432, %v4428
    %v4813 = vpack.c.b16 %v4433, %v4429
    %v4814 = vpack.c.b16 %v4438, %v4434
    %v4815 = vpack.c.b16 %v4439, %v4435
    %v4816 = vpack.c.b16 %v4440, %v4436
    %v4817 = vpack.c.b16 %v4441, %v4437
    %v4818 = vpack.c.b16 %v4446, %v4442
    %v4819 = vpack.c.b16 %v4447, %v4443
    %v4820 = vpack.c.b16 %v4448, %v4444
    %v4821 = vpack.c.b16 %v4449, %v4445
    %v4822 = vpack.c.b16 %v4454, %v4450
    %v4823 = vpack.c.b16 %v4455, %v4451
    %v4824 = vpack.c.b16 %v4456, %v4452
    %v4825 = vpack.c.b16 %v4457, %v4453
    %v4826 = vpack.c.b16 %v4462, %v4458
    %v4827 = vpack.c.b16 %v4463, %v4459
    %v4828 = vpack.c.b16 %v4464, %v4460
    %v4829 = vpack.c.b16 %v4465, %v4461
    %v4830 = vpack.c.b16 %v4470, %v4466
    %v4831 = vpack.c.b16 %v4471, %v4467
    %v4832 = vpack.c.b16 %v4472, %v4468
    %v4833 = vpack.c.b16 %v4473, %v4469
    %v4834 = vpack.c.b16 %v4478, %v4474
    %v4835 = vpack.c.b16 %v4479, %v4475
    %v4836 = vpack.c.b16 %v4480, %v4476
    %v4837 = vpack.c.b16 %v4481, %v4477
    %v4838 = vpack.c.b16 %v4486, %v4482
    %v4839 = vpack.c.b16 %v4487, %v4483
    %v4840 = vpack.c.b16 %v4488, %v4484
    %v4841 = vpack.c.b16 %v4489, %v4485
    %v4842 = vpack.c.b16 %v4494, %v4490
    %v4843 = vpack.c.b16 %v4495, %v4491
    %v4844 = vpack.c.b16 %v4496, %v4492
    %v4845 = vpack.c.b16 %v4497, %v4493
    %v4846 = vpack.c.b16 %v4502, %v4498
    %v4847 = vpack.c.b16 %v4503, %v4499
    %v4848 = vpack.c.b16 %v4504, %v4500
    %v4849 = vpack.c.b16 %v4505, %v4501
    %v4850 = vpack.c.b16 %v4510, %v4506
    %v4851 = vpack.c.b16 %v4511, %v4507
    %v4852 = vpack.c.b16 %v4512, %v4508
    %v4853 = vpack.c.b16 %v4513, %v4509
    %v4854 = vpack.c.b16 %v4518, %v4514
    %v4855 = vpack.c.b16 %v4519, %v4515
    %v4856 = vpack.c.b16 %v4520, %v4516
    %v4857 = vpack.c.b16 %v4521, %v4517
    %v4858 = vpack.c.b16 %v4526, %v4522
    %v4859 = vpack.c.b16 %v4527, %v4523
    %v4860 = vpack.c.b16 %v4528, %v4524
    %v4861 = vpack.c.b16 %v4529, %v4525
    %v4862 = vpack.c.b16 %v4534, %v4530
    %v4863 = vpack.c.b16 %v4535, %v4531
    %v4864 = vpack.c.b16 %v4536, %v4532
    %v4865 = vpack.c.b16 %v4537, %v4533
    %v4866 = vpack.c.b16 %v4542, %v4538
    %v4867 = vpack.c.b16 %v4543, %v4539
    %v4868 = vpack.c.b16 %v4544, %v4540
    %v4869 = vpack.c.b16 %v4545, %v4541
    %v4870 = vpack.c.b16 %v4550, %v4546
    %v4871 = vpack.c.b16 %v4551, %v4547
    %v4872 = vpack.c.b16 %v4552, %v4548
    %v4873 = vpack.c.b16 %v4553, %v4549
    %v4874 = vpack.c.b16 %v4558, %v4554
    %v4875 = vpack.c.b16 %v4559, %v4555
    %v4876 = vpack.c.b16 %v4560, %v4556
    %v4877 = vpack.c.b16 %v4561, %v4557
    %v4878 = vpack.c.b16 %v4566, %v4562
    %v4879 = vpack.c.b16 %v4567, %v4563
    %v4880 = vpack.c.b16 %v4568, %v4564
    %v4881 = vpack.c.b16 %v4569, %v4565
    %v4882 = vpack.c.b16 %v4574, %v4570
    %v4883 = vpack.c.b16 %v4575, %v4571
    %v4884 = vpack.c.b16 %v4576, %v4572
    %v4885 = vpack.c.b16 %v4577, %v4573
    %v4886 = vpack.c.b16 %v4582, %v4578
    %v4887 = vpack.c.b16 %v4583, %v4579
    %v4888 = vpack.c.b16 %v4584, %v4580
    %v4889 = vpack.c.b16 %v4585, %v4581
    %v4890 = vpack.c.b16 %v4590, %v4586
    %v4891 = vpack.c.b16 %v4591, %v4587
    %v4892 = vpack.c.b16 %v4592, %v4588
    %v4893 = vpack.c.b16 %v4593, %v4589
    %v4894 = vpack.c.b16 %v4598, %v4594
    %v4895 = vpack.c.b16 %v4599, %v4595
    %v4896 = vpack.c.b16 %v4600, %v4596
    %v4897 = vpack.c.b16 %v4601, %v4597
    %v4898 = vpack.c.b16 %v4606, %v4602
    %v4899 = vpack.c.b16 %v4607, %v4603
    %v4900 = vpack.c.b16 %v4608, %v4604
    %v4901 = vpack.c.b16 %v4609, %v4605
    %v4902 = vpack.c.b16 %v4614, %v4610
    %v4903 = vpack.c.b16 %v4615, %v4611
    %v4904 = vpack.c.b16 %v4616, %v4612
    %v4905 = vpack.c.b16 %v4617, %v4613
    %v4906 = vpack.c.b16 %v4622, %v4618
    %v4907 = vpack.c.b16 %v4623, %v4619
    %v4908 = vpack.c.b16 %v4624, %v4620
    %v4909 = vpack.c.b16 %v4625, %v4621
    %v4910 = vpack.c.b16 %v4630, %v4626
    %v4911 = vpack.c.b16 %v4631, %v4627
    %v4912 = vpack.c.b16 %v4632, %v4628
    %v4913 = vpack.c.b16 %v4633, %v4629
    %v4914 = vpack.c.b16 %v4638, %v4634
    %v4915 = vpack.c.b16 %v4639, %v4635
    %v4916 = vpack.c.b16 %v4640, %v4636
    %v4917 = vpack.c.b16 %v4641, %v4637
    %v4918 = vpack.c.b16 %v4646, %v4642
    %v4919 = vpack.c.b16 %v4647, %v4643
    %v4920 = vpack.c.b16 %v4648, %v4644
    %v4921 = vpack.c.b16 %v4649, %v4645
    %v4922 = vpack.c.b16 %v4654, %v4650
    %v4923 = vpack.c.b16 %v4655, %v4651
    %v4924 = vpack.c.b16 %v4656, %v4652
    %v4925 = vpack.c.b16 %v4657, %v4653
    %v4926 = vpack.c.b16 %v4662, %v4658
    %v4927 = vpack.c.b16 %v4663, %v4659
    %v4928 = vpack.c.b16 %v4664, %v4660
    %v4929 = vpack.c.b16 %v4665, %v4661
    %v4930 = vpack.c.b16 %v4670, %v4666
    %v4931 = vpack.c.b16 %v4671, %v4667
    %v4932 = vpack.c.b16 %v4672, %v4668
    %v4933 = vpack.c.b16 %v4673, %v4669
    %v4934 = vpack.c.b16 %v4678, %v4674
    %v4935 = vpack.c.b16 %v4679, %v4675
    %v4936 = vpack.c.b16 %v4680, %v4676
    %v4937 = vpack.c.b16 %v4681, %v4677
    %5194 = vmatprep.subr.bf16.mxu0 %v4711
    %5195 = vmatpush1.bf16.msra.mxu0 %v4710
    %5196 = vmatprep.subr.bf16.mxu0 %v4707
    %5197 = vmatpush1.bf16.msra.mxu0 %v4706
    %5198 = vmatprep.subr.bf16.mxu0 %v4703
    %5199 = vmatpush1.bf16.msra.mxu0 %v4702
    %5200 = vmatprep.subr.bf16.mxu0 %v4699
    %5201 = vmatpush1.bf16.msra.mxu0 %v4698
    %5202 = vmatprep.subr.bf16.mxu0 %v4695
    %5203 = vmatpush1.bf16.msra.mxu0 %v4694
    %5204 = vmatprep.subr.bf16.mxu0 %v4691
    %5205 = vmatpush1.bf16.msra.mxu0 %v4690
    %5206 = vmatprep.subr.bf16.mxu0 %v4687
    %5207 = vmatpush1.bf16.msra.mxu0 %v4686
    %5208 = vmatprep.subr.bf16.mxu0 %v4683
    %5209 = vmatpush1.bf16.msra.mxu0 %v4682
    %5210 = vmatprep.subr.bf16.mxu0 %v4743
    %5211 = vmatpush2.bf16.msra.mxu0 %v4742
    %5212 = vmatprep.subr.bf16.mxu0 %v4739
    %5213 = vmatpush2.bf16.msra.mxu0 %v4738
    %5214 = vmatprep.subr.bf16.mxu0 %v4735
    %5215 = vmatpush2.bf16.msra.mxu0 %v4734
    %5216 = vmatprep.subr.bf16.mxu0 %v4731
    %5217 = vmatpush2.bf16.msra.mxu0 %v4730
    %5218 = vmatprep.subr.bf16.mxu0 %v4727
    %5219 = vmatpush2.bf16.msra.mxu0 %v4726
    %5220 = vmatprep.subr.bf16.mxu0 %v4723
    %5221 = vmatpush2.bf16.msra.mxu0 %v4722
    %5222 = vmatprep.subr.bf16.mxu0 %v4719
    %5223 = vmatpush2.bf16.msra.mxu0 %v4718
    %5224 = vmatprep.subr.bf16.mxu0 %v4715
    %5225 = vmatpush2.bf16.msra.mxu0 %v4714
    %5226 = vmatprep.mubr.bf16.mxu0 %v3617
    %5227 = vmatmul.mubr.bf16.gmra.mxu0 %v3616
    %v5228 = vpop.f32.mrf.mxu0
    %v5229 = vadd.f32 %v3897, %v5228
    %v5230 = vpop.f32.mrf.mxu0
    %v5231 = vadd.f32 %v3901, %v5230
    %v5232 = vpop.f32.mrf.mxu0
    %v5233 = vadd.f32 %v3897, %v5232
    %v5234 = vpop.f32.mrf.mxu0
    %v5235 = vadd.f32 %v3901, %v5234
    %5236 = vdwg.mxu0
    %5237 = vmatprep.subr.bf16.mxu0 %v4775
    %5238 = vmatpush1.bf16.msra.mxu0 %v4774
    %5239 = vmatprep.subr.bf16.mxu0 %v4771
    %5240 = vmatpush1.bf16.msra.mxu0 %v4770
    %5241 = vmatprep.subr.bf16.mxu0 %v4767
    %5242 = vmatpush1.bf16.msra.mxu0 %v4766
    %5243 = vmatprep.subr.bf16.mxu0 %v4763
    %5244 = vmatpush1.bf16.msra.mxu0 %v4762
    %5245 = vmatprep.subr.bf16.mxu0 %v4759
    %5246 = vmatpush1.bf16.msra.mxu0 %v4758
    %5247 = vmatprep.subr.bf16.mxu0 %v4755
    %5248 = vmatpush1.bf16.msra.mxu0 %v4754
    %5249 = vmatprep.subr.bf16.mxu0 %v4751
    %5250 = vmatpush1.bf16.msra.mxu0 %v4750
    %5251 = vmatprep.subr.bf16.mxu0 %v4747
    %5252 = vmatpush1.bf16.msra.mxu0 %v4746
    %5253 = vmatprep.subr.bf16.mxu0 %v4807
    %5254 = vmatpush2.bf16.msra.mxu0 %v4806
    %5255 = vmatprep.subr.bf16.mxu0 %v4803
    %5256 = vmatpush2.bf16.msra.mxu0 %v4802
    %5257 = vmatprep.subr.bf16.mxu0 %v4799
    %5258 = vmatpush2.bf16.msra.mxu0 %v4798
    %5259 = vmatprep.subr.bf16.mxu0 %v4795
    %5260 = vmatpush2.bf16.msra.mxu0 %v4794
    %5261 = vmatprep.subr.bf16.mxu0 %v4791
    %5262 = vmatpush2.bf16.msra.mxu0 %v4790
    %5263 = vmatprep.subr.bf16.mxu0 %v4787
    %5264 = vmatpush2.bf16.msra.mxu0 %v4786
    %5265 = vmatprep.subr.bf16.mxu0 %v4783
    %5266 = vmatpush2.bf16.msra.mxu0 %v4782
    %5267 = vmatprep.subr.bf16.mxu0 %v4779
    %5268 = vmatpush2.bf16.msra.mxu0 %v4778
    %5269 = vmatprep.mubr.bf16.mxu0 %v3619
    %5270 = vmatmul.mubr.bf16.gmra.mxu0 %v3618
    %v5271 = vpop.f32.mrf.mxu0
    %v5272 = vadd.f32 %v5229, %v5271
    %v5273 = vpop.f32.mrf.mxu0
    %v5274 = vadd.f32 %v5231, %v5273
    %v5275 = vpop.f32.mrf.mxu0
    %v5276 = vadd.f32 %v5233, %v5275
    %v5277 = vpop.f32.mrf.mxu0
    %v5278 = vadd.f32 %v5235, %v5277
    %5279 = vdwg.mxu0
    %5280 = vmatprep.subr.bf16.mxu0 %v4839
    %5281 = vmatpush1.bf16.msra.mxu0 %v4838
    %5282 = vmatprep.subr.bf16.mxu0 %v4835
    %5283 = vmatpush1.bf16.msra.mxu0 %v4834
    %5284 = vmatprep.subr.bf16.mxu0 %v4831
    %5285 = vmatpush1.bf16.msra.mxu0 %v4830
    %5286 = vmatprep.subr.bf16.mxu0 %v4827
    %5287 = vmatpush1.bf16.msra.mxu0 %v4826
    %5288 = vmatprep.subr.bf16.mxu0 %v4823
    %5289 = vmatpush1.bf16.msra.mxu0 %v4822
    %5290 = vmatprep.subr.bf16.mxu0 %v4819
    %5291 = vmatpush1.bf16.msra.mxu0 %v4818
    %5292 = vmatprep.subr.bf16.mxu0 %v4815
    %5293 = vmatpush1.bf16.msra.mxu0 %v4814
    %5294 = vmatprep.subr.bf16.mxu0 %v4811
    %5295 = vmatpush1.bf16.msra.mxu0 %v4810
    %5296 = vmatprep.subr.bf16.mxu0 %v4871
    %5297 = vmatpush2.bf16.msra.mxu0 %v4870
    %5298 = vmatprep.subr.bf16.mxu0 %v4867
    %5299 = vmatpush2.bf16.msra.mxu0 %v4866
    %5300 = vmatprep.subr.bf16.mxu0 %v4863
    %5301 = vmatpush2.bf16.msra.mxu0 %v4862
    %5302 = vmatprep.subr.bf16.mxu0 %v4859
    %5303 = vmatpush2.bf16.msra.mxu0 %v4858
    %5304 = vmatprep.subr.bf16.mxu0 %v4855
    %5305 = vmatpush2.bf16.msra.mxu0 %v4854
    %5306 = vmatprep.subr.bf16.mxu0 %v4851
    %5307 = vmatpush2.bf16.msra.mxu0 %v4850
    %5308 = vmatprep.subr.bf16.mxu0 %v4847
    %5309 = vmatpush2.bf16.msra.mxu0 %v4846
    %5310 = vmatprep.subr.bf16.mxu0 %v4843
    %5311 = vmatpush2.bf16.msra.mxu0 %v4842
    %5312 = vmatprep.mubr.bf16.mxu0 %v3621
    %5313 = vmatmul.mubr.bf16.gmra.mxu0 %v3620
    %v5314 = vpop.f32.mrf.mxu0
    %v5315 = vadd.f32 %v5272, %v5314
    %v5316 = vpop.f32.mrf.mxu0
    %v5317 = vadd.f32 %v5274, %v5316
    %v5318 = vpop.f32.mrf.mxu0
    %v5319 = vadd.f32 %v5276, %v5318
    %v5320 = vpop.f32.mrf.mxu0
    %v5321 = vadd.f32 %v5278, %v5320
    %5322 = vdwg.mxu0
    %5323 = vmatprep.subr.bf16.mxu0 %v4903
    %5324 = vmatpush1.bf16.msra.mxu0 %v4902
    %5325 = vmatprep.subr.bf16.mxu0 %v4899
    %5326 = vmatpush1.bf16.msra.mxu0 %v4898
    %5327 = vmatprep.subr.bf16.mxu0 %v4895
    %5328 = vmatpush1.bf16.msra.mxu0 %v4894
    %5329 = vmatprep.subr.bf16.mxu0 %v4891
    %5330 = vmatpush1.bf16.msra.mxu0 %v4890
    %5331 = vmatprep.subr.bf16.mxu0 %v4887
    %5332 = vmatpush1.bf16.msra.mxu0 %v4886
    %5333 = vmatprep.subr.bf16.mxu0 %v4883
    %5334 = vmatpush1.bf16.msra.mxu0 %v4882
    %5335 = vmatprep.subr.bf16.mxu0 %v4879
    %5336 = vmatpush1.bf16.msra.mxu0 %v4878
    %5337 = vmatprep.subr.bf16.mxu0 %v4875
    %5338 = vmatpush1.bf16.msra.mxu0 %v4874
    %5339 = vmatprep.subr.bf16.mxu0 %v4935
    %5340 = vmatpush2.bf16.msra.mxu0 %v4934
    %5341 = vmatprep.subr.bf16.mxu0 %v4931
    %5342 = vmatpush2.bf16.msra.mxu0 %v4930
    %5343 = vmatprep.subr.bf16.mxu0 %v4927
    %5344 = vmatpush2.bf16.msra.mxu0 %v4926
    %5345 = vmatprep.subr.bf16.mxu0 %v4923
    %5346 = vmatpush2.bf16.msra.mxu0 %v4922
    %5347 = vmatprep.subr.bf16.mxu0 %v4919
    %5348 = vmatpush2.bf16.msra.mxu0 %v4918
    %5349 = vmatprep.subr.bf16.mxu0 %v4915
    %5350 = vmatpush2.bf16.msra.mxu0 %v4914
    %5351 = vmatprep.subr.bf16.mxu0 %v4911
    %5352 = vmatpush2.bf16.msra.mxu0 %v4910
    %5353 = vmatprep.subr.bf16.mxu0 %v4907
    %5354 = vmatpush2.bf16.msra.mxu0 %v4906
    %5355 = vmatprep.mubr.bf16.mxu0 %v3623
    %5356 = vmatmul.mubr.bf16.gmra.mxu0 %v3622
    %v5357 = vpop.f32.mrf.mxu0
    %v5358 = vadd.f32 %v5315, %v5357
    %v5359 = vpop.f32.mrf.mxu0
    %v5360 = vadd.f32 %v5317, %v5359
    %v5361 = vpop.f32.mrf.mxu0
    %v5362 = vadd.f32 %v5319, %v5361
    %v5363 = vpop.f32.mrf.mxu0
    %v5364 = vadd.f32 %v5321, %v5363
    %5365 = vdwg.mxu0
    %5366 = vmatprep.subr.bf16.mxu0 %v4713
    %5367 = vmatpush1.bf16.msra.mxu0 %v4712
    %5368 = vmatprep.subr.bf16.mxu0 %v4709
    %5369 = vmatpush1.bf16.msra.mxu0 %v4708
    %5370 = vmatprep.subr.bf16.mxu0 %v4705
    %5371 = vmatpush1.bf16.msra.mxu0 %v4704
    %5372 = vmatprep.subr.bf16.mxu0 %v4701
    %5373 = vmatpush1.bf16.msra.mxu0 %v4700
    %5374 = vmatprep.subr.bf16.mxu0 %v4697
    %5375 = vmatpush1.bf16.msra.mxu0 %v4696
    %5376 = vmatprep.subr.bf16.mxu0 %v4693
    %5377 = vmatpush1.bf16.msra.mxu0 %v4692
    %5378 = vmatprep.subr.bf16.mxu0 %v4689
    %5379 = vmatpush1.bf16.msra.mxu0 %v4688
    %5380 = vmatprep.subr.bf16.mxu0 %v4685
    %5381 = vmatpush1.bf16.msra.mxu0 %v4684
    %5382 = vmatprep.subr.bf16.mxu0 %v4745
    %5383 = vmatpush2.bf16.msra.mxu0 %v4744
    %5384 = vmatprep.subr.bf16.mxu0 %v4741
    %5385 = vmatpush2.bf16.msra.mxu0 %v4740
    %5386 = vmatprep.subr.bf16.mxu0 %v4737
    %5387 = vmatpush2.bf16.msra.mxu0 %v4736
    %5388 = vmatprep.subr.bf16.mxu0 %v4733
    %5389 = vmatpush2.bf16.msra.mxu0 %v4732
    %5390 = vmatprep.subr.bf16.mxu0 %v4729
    %5391 = vmatpush2.bf16.msra.mxu0 %v4728
    %5392 = vmatprep.subr.bf16.mxu0 %v4725
    %5393 = vmatpush2.bf16.msra.mxu0 %v4724
    %5394 = vmatprep.subr.bf16.mxu0 %v4721
    %5395 = vmatpush2.bf16.msra.mxu0 %v4720
    %5396 = vmatprep.subr.bf16.mxu0 %v4717
    %5397 = vmatpush2.bf16.msra.mxu0 %v4716
    %5398 = vmatprep.mubr.bf16.mxu0 %v3617
    %5399 = vmatmul.mubr.bf16.gmra.mxu0 %v3616
    %v5400 = vpop.f32.mrf.mxu0
    %v5401 = vadd.f32 %v3905, %v5400
    %v5402 = vpop.f32.mrf.mxu0
    %v5403 = vadd.f32 %v3909, %v5402
    %v5404 = vpop.f32.mrf.mxu0
    %v5405 = vadd.f32 %v3905, %v5404
    %v5406 = vpop.f32.mrf.mxu0
    %v5407 = vadd.f32 %v3909, %v5406
    %5408 = vdwg.mxu0
    %5409 = vmatprep.subr.bf16.mxu0 %v4777
    %5410 = vmatpush1.bf16.msra.mxu0 %v4776
    %5411 = vmatprep.subr.bf16.mxu0 %v4773
    %5412 = vmatpush1.bf16.msra.mxu0 %v4772
    %5413 = vmatprep.subr.bf16.mxu0 %v4769
    %5414 = vmatpush1.bf16.msra.mxu0 %v4768
    %5415 = vmatprep.subr.bf16.mxu0 %v4765
    %5416 = vmatpush1.bf16.msra.mxu0 %v4764
    %5417 = vmatprep.subr.bf16.mxu0 %v4761
    %5418 = vmatpush1.bf16.msra.mxu0 %v4760
    %5419 = vmatprep.subr.bf16.mxu0 %v4757
    %5420 = vmatpush1.bf16.msra.mxu0 %v4756
    %5421 = vmatprep.subr.bf16.mxu0 %v4753
    %5422 = vmatpush1.bf16.msra.mxu0 %v4752
    %5423 = vmatprep.subr.bf16.mxu0 %v4749
    %5424 = vmatpush1.bf16.msra.mxu0 %v4748
    %5425 = vmatprep.subr.bf16.mxu0 %v4809
    %5426 = vmatpush2.bf16.msra.mxu0 %v4808
    %5427 = vmatprep.subr.bf16.mxu0 %v4805
    %5428 = vmatpush2.bf16.msra.mxu0 %v4804
    %5429 = vmatprep.subr.bf16.mxu0 %v4801
    %5430 = vmatpush2.bf16.msra.mxu0 %v4800
    %5431 = vmatprep.subr.bf16.mxu0 %v4797
    %5432 = vmatpush2.bf16.msra.mxu0 %v4796
    %5433 = vmatprep.subr.bf16.mxu0 %v4793
    %5434 = vmatpush2.bf16.msra.mxu0 %v4792
    %5435 = vmatprep.subr.bf16.mxu0 %v4789
    %5436 = vmatpush2.bf16.msra.mxu0 %v4788
    %5437 = vmatprep.subr.bf16.mxu0 %v4785
    %5438 = vmatpush2.bf16.msra.mxu0 %v4784
    %5439 = vmatprep.subr.bf16.mxu0 %v4781
    %5440 = vmatpush2.bf16.msra.mxu0 %v4780
    %5441 = vmatprep.mubr.bf16.mxu0 %v3619
    %5442 = vmatmul.mubr.bf16.gmra.mxu0 %v3618
    %v5443 = vpop.f32.mrf.mxu0
    %v5444 = vadd.f32 %v5401, %v5443
    %v5445 = vpop.f32.mrf.mxu0
    %v5446 = vadd.f32 %v5403, %v5445
    %v5447 = vpop.f32.mrf.mxu0
    %v5448 = vadd.f32 %v5405, %v5447
    %v5449 = vpop.f32.mrf.mxu0
    %v5450 = vadd.f32 %v5407, %v5449
    %5451 = vdwg.mxu0
    %5452 = vmatprep.subr.bf16.mxu0 %v4841
    %5453 = vmatpush1.bf16.msra.mxu0 %v4840
    %5454 = vmatprep.subr.bf16.mxu0 %v4837
    %5455 = vmatpush1.bf16.msra.mxu0 %v4836
    %5456 = vmatprep.subr.bf16.mxu0 %v4833
    %5457 = vmatpush1.bf16.msra.mxu0 %v4832
    %5458 = vmatprep.subr.bf16.mxu0 %v4829
    %5459 = vmatpush1.bf16.msra.mxu0 %v4828
    %5460 = vmatprep.subr.bf16.mxu0 %v4825
    %5461 = vmatpush1.bf16.msra.mxu0 %v4824
    %5462 = vmatprep.subr.bf16.mxu0 %v4821
    %5463 = vmatpush1.bf16.msra.mxu0 %v4820
    %5464 = vmatprep.subr.bf16.mxu0 %v4817
    %5465 = vmatpush1.bf16.msra.mxu0 %v4816
    %5466 = vmatprep.subr.bf16.mxu0 %v4813
    %5467 = vmatpush1.bf16.msra.mxu0 %v4812
    %5468 = vmatprep.subr.bf16.mxu0 %v4873
    %5469 = vmatpush2.bf16.msra.mxu0 %v4872
    %5470 = vmatprep.subr.bf16.mxu0 %v4869
    %5471 = vmatpush2.bf16.msra.mxu0 %v4868
    %5472 = vmatprep.subr.bf16.mxu0 %v4865
    %5473 = vmatpush2.bf16.msra.mxu0 %v4864
    %5474 = vmatprep.subr.bf16.mxu0 %v4861
    %5475 = vmatpush2.bf16.msra.mxu0 %v4860
    %5476 = vmatprep.subr.bf16.mxu0 %v4857
    %5477 = vmatpush2.bf16.msra.mxu0 %v4856
    %5478 = vmatprep.subr.bf16.mxu0 %v4853
    %5479 = vmatpush2.bf16.msra.mxu0 %v4852
    %5480 = vmatprep.subr.bf16.mxu0 %v4849
    %5481 = vmatpush2.bf16.msra.mxu0 %v4848
    %5482 = vmatprep.subr.bf16.mxu0 %v4845
    %5483 = vmatpush2.bf16.msra.mxu0 %v4844
    %5484 = vmatprep.mubr.bf16.mxu0 %v3621
    %5485 = vmatmul.mubr.bf16.gmra.mxu0 %v3620
    %v5486 = vpop.f32.mrf.mxu0
    %v5487 = vadd.f32 %v5444, %v5486
    %v5488 = vpop.f32.mrf.mxu0
    %v5489 = vadd.f32 %v5446, %v5488
    %v5490 = vpop.f32.mrf.mxu0
    %v5491 = vadd.f32 %v5448, %v5490
    %v5492 = vpop.f32.mrf.mxu0
    %v5493 = vadd.f32 %v5450, %v5492
    %5494 = vdwg.mxu0
    %5495 = vmatprep.subr.bf16.mxu0 %v4905
    %5496 = vmatpush1.bf16.msra.mxu0 %v4904
    %5497 = vmatprep.subr.bf16.mxu0 %v4901
    %5498 = vmatpush1.bf16.msra.mxu0 %v4900
    %5499 = vmatprep.subr.bf16.mxu0 %v4897
    %5500 = vmatpush1.bf16.msra.mxu0 %v4896
    %5501 = vmatprep.subr.bf16.mxu0 %v4893
    %5502 = vmatpush1.bf16.msra.mxu0 %v4892
    %5503 = vmatprep.subr.bf16.mxu0 %v4889
    %5504 = vmatpush1.bf16.msra.mxu0 %v4888
    %5505 = vmatprep.subr.bf16.mxu0 %v4885
    %5506 = vmatpush1.bf16.msra.mxu0 %v4884
    %5507 = vmatprep.subr.bf16.mxu0 %v4881
    %5508 = vmatpush1.bf16.msra.mxu0 %v4880
    %5509 = vmatprep.subr.bf16.mxu0 %v4877
    %5510 = vmatpush1.bf16.msra.mxu0 %v4876
    %5511 = vmatprep.subr.bf16.mxu0 %v4937
    %5512 = vmatpush2.bf16.msra.mxu0 %v4936
    %5513 = vmatprep.subr.bf16.mxu0 %v4933
    %5514 = vmatpush2.bf16.msra.mxu0 %v4932
    %5515 = vmatprep.subr.bf16.mxu0 %v4929
    %5516 = vmatpush2.bf16.msra.mxu0 %v4928
    %5517 = vmatprep.subr.bf16.mxu0 %v4925
    %5518 = vmatpush2.bf16.msra.mxu0 %v4924
    %5519 = vmatprep.subr.bf16.mxu0 %v4921
    %5520 = vmatpush2.bf16.msra.mxu0 %v4920
    %5521 = vmatprep.subr.bf16.mxu0 %v4917
    %5522 = vmatpush2.bf16.msra.mxu0 %v4916
    %5523 = vmatprep.subr.bf16.mxu0 %v4913
    %5524 = vmatpush2.bf16.msra.mxu0 %v4912
    %5525 = vmatprep.subr.bf16.mxu0 %v4909
    %5526 = vmatpush2.bf16.msra.mxu0 %v4908
    %5527 = vmatprep.mubr.bf16.mxu0 %v3623
    %5528 = vmatmul.mubr.bf16.gmra.mxu0 %v3622
    %v5529 = vpop.f32.mrf.mxu0
    %v5530 = vadd.f32 %v5487, %v5529
    %v5531 = vpop.f32.mrf.mxu0
    %v5532 = vadd.f32 %v5489, %v5531
    %v5533 = vpop.f32.mrf.mxu0
    %v5534 = vadd.f32 %v5491, %v5533
    %v5535 = vpop.f32.mrf.mxu0
    %v5536 = vadd.f32 %v5493, %v5535
    %5537 = vdwg.mxu0
    %v5538 = vmax.f32 %v5358, 0.0
    %v5539 = vmax.f32 %v5360, 0.0
    %v5540 = vmax.f32 %v5530, 0.0
    %v5541 = vmax.f32 %v5532, 0.0
    %v5542 = vmax.f32 %v5362, 0.0
    %v5543 = vmax.f32 %v5364, 0.0
    %v5544 = vmax.f32 %v5534, 0.0
    %v5545 = vmax.f32 %v5536, 0.0
    %v5546 = vpack.c.bf16 %v5542, %v5538
    %v5547 = vpack.c.bf16 %v5543, %v5539
    %v5548 = vpack.c.bf16 %v5544, %v5540
    %v5549 = vpack.c.bf16 %v5545, %v5541
    %v5550 = vld [vmem:[#allocation3] sm:$0xf]
    %v5551 = vld [vmem:[#allocation3 + $0x4] sm:$0xf]
    %v5552 = vld [vmem:[#allocation3 + $0x8] sm:$0xf]
    %v5553 = vld [vmem:[#allocation3 + $0xc] sm:$0xf]
    %v5554 = vld [vmem:[#allocation3 + $0x10] sm:$0xf]
    %v5555 = vld [vmem:[#allocation3 + $0x14] sm:$0xf]
    %v5556 = vld [vmem:[#allocation3 + $0x18] sm:$0xf]
    %v5557 = vld [vmem:[#allocation3 + $0x1c] sm:$0xf]
    %v5558 = vld [vmem:[#allocation3 + $0x20] sm:$0xf]
    %v5559 = vld [vmem:[#allocation3 + $0x24] sm:$0xf]
    %v5560 = vld [vmem:[#allocation3 + $0x28] sm:$0xf]
    %v5561 = vld [vmem:[#allocation3 + $0x2c] sm:$0xf]
    %v5562 = vld [vmem:[#allocation3 + $0x30] sm:$0xf]
    %v5563 = vld [vmem:[#allocation3 + $0x34] sm:$0xf]
    %v5564 = vld [vmem:[#allocation3 + $0x38] sm:$0xf]
    %v5565 = vld [vmem:[#allocation3 + $0x3c] sm:$0xf]
    %v5566 = vld [vmem:[#allocation3 + $0x40] sm:$0xf]
    %v5567 = vld [vmem:[#allocation3 + $0x44] sm:$0xf]
    %v5568 = vld [vmem:[#allocation3 + $0x48] sm:$0xf]
    %v5569 = vld [vmem:[#allocation3 + $0x4c] sm:$0xf]
    %v5570 = vld [vmem:[#allocation3 + $0x50] sm:$0xf]
    %v5571 = vld [vmem:[#allocation3 + $0x54] sm:$0xf]
    %v5572 = vld [vmem:[#allocation3 + $0x58] sm:$0xf]
    %v5573 = vld [vmem:[#allocation3 + $0x5c] sm:$0xf]
    %v5574 = vld [vmem:[#allocation3 + $0x60] sm:$0xf]
    %v5575 = vld [vmem:[#allocation3 + $0x64] sm:$0xf]
    %v5576 = vld [vmem:[#allocation3 + $0x68] sm:$0xf]
    %v5577 = vld [vmem:[#allocation3 + $0x6c] sm:$0xf]
    %v5578 = vld [vmem:[#allocation3 + $0x70] sm:$0xf]
    %v5579 = vld [vmem:[#allocation3 + $0x74] sm:$0xf]
    %v5580 = vld [vmem:[#allocation3 + $0x78] sm:$0xf]
    %v5581 = vld [vmem:[#allocation3 + $0x7c] sm:$0xf]
    %v5582 = vld [vmem:[#allocation3 + $0x80] sm:$0xf]
    %v5583 = vld [vmem:[#allocation3 + $0x84] sm:$0xf]
    %v5584 = vld [vmem:[#allocation3 + $0x88] sm:$0xf]
    %v5585 = vld [vmem:[#allocation3 + $0x8c] sm:$0xf]
    %v5586 = vld [vmem:[#allocation3 + $0x90] sm:$0xf]
    %v5587 = vld [vmem:[#allocation3 + $0x94] sm:$0xf]
    %v5588 = vld [vmem:[#allocation3 + $0x98] sm:$0xf]
    %v5589 = vld [vmem:[#allocation3 + $0x9c] sm:$0xf]
    %v5590 = vld [vmem:[#allocation3 + $0xa0] sm:$0xf]
    %v5591 = vld [vmem:[#allocation3 + $0xa4] sm:$0xf]
    %v5592 = vld [vmem:[#allocation3 + $0xa8] sm:$0xf]
    %v5593 = vld [vmem:[#allocation3 + $0xac] sm:$0xf]
    %v5594 = vld [vmem:[#allocation3 + $0xb0] sm:$0xf]
    %v5595 = vld [vmem:[#allocation3 + $0xb4] sm:$0xf]
    %v5596 = vld [vmem:[#allocation3 + $0xb8] sm:$0xf]
    %v5597 = vld [vmem:[#allocation3 + $0xbc] sm:$0xf]
    %v5598 = vld [vmem:[#allocation3 + $0xc0] sm:$0xf]
    %v5599 = vld [vmem:[#allocation3 + $0xc4] sm:$0xf]
    %v5600 = vld [vmem:[#allocation3 + $0xc8] sm:$0xf]
    %v5601 = vld [vmem:[#allocation3 + $0xcc] sm:$0xf]
    %v5602 = vld [vmem:[#allocation3 + $0xd0] sm:$0xf]
    %v5603 = vld [vmem:[#allocation3 + $0xd4] sm:$0xf]
    %v5604 = vld [vmem:[#allocation3 + $0xd8] sm:$0xf]
    %v5605 = vld [vmem:[#allocation3 + $0xdc] sm:$0xf]
    %v5606 = vld [vmem:[#allocation3 + $0xe0] sm:$0xf]
    %v5607 = vld [vmem:[#allocation3 + $0xe4] sm:$0xf]
    %v5608 = vld [vmem:[#allocation3 + $0xe8] sm:$0xf]
    %v5609 = vld [vmem:[#allocation3 + $0xec] sm:$0xf]
    %v5610 = vld [vmem:[#allocation3 + $0xf0] sm:$0xf]
    %v5611 = vld [vmem:[#allocation3 + $0xf4] sm:$0xf]
    %v5612 = vld [vmem:[#allocation3 + $0xf8] sm:$0xf]
    %v5613 = vld [vmem:[#allocation3 + $0xfc] sm:$0xf]
    %v5614 = vld [vmem:[#allocation2 + $0x10] sm:$0xff]
    %v5615 = vld [vmem:[#allocation2 + $0x18] sm:$0xff]
    %v5616 = vld [vmem:[#allocation2 + $0x50] sm:$0xff]
    %v5617 = vld [vmem:[#allocation2 + $0x58] sm:$0xff]
    %v5618 = vld [vmem:[#allocation2 + $0x90] sm:$0xff]
    %v5619 = vld [vmem:[#allocation2 + $0x98] sm:$0xff]
    %v5620 = vld [vmem:[#allocation2 + $0xd0] sm:$0xff]
    %v5621 = vld [vmem:[#allocation2 + $0xd8] sm:$0xff]
    %v5622 = vld [vmem:[#allocation2 + $0x110] sm:$0xff]
    %v5623 = vld [vmem:[#allocation2 + $0x118] sm:$0xff]
    %v5624 = vld [vmem:[#allocation2 + $0x150] sm:$0xff]
    %v5625 = vld [vmem:[#allocation2 + $0x158] sm:$0xff]
    %v5626 = vld [vmem:[#allocation2 + $0x190] sm:$0xff]
    %v5627 = vld [vmem:[#allocation2 + $0x198] sm:$0xff]
    %v5628 = vld [vmem:[#allocation2 + $0x1d0] sm:$0xff]
    %v5629 = vld [vmem:[#allocation2 + $0x1d8] sm:$0xff]
    %v5630 = vld [vmem:[#allocation2 + $0x210] sm:$0xff]
    %v5631 = vld [vmem:[#allocation2 + $0x218] sm:$0xff]
    %v5632 = vld [vmem:[#allocation2 + $0x250] sm:$0xff]
    %v5633 = vld [vmem:[#allocation2 + $0x258] sm:$0xff]
    %v5634 = vld [vmem:[#allocation2 + $0x290] sm:$0xff]
    %v5635 = vld [vmem:[#allocation2 + $0x298] sm:$0xff]
    %v5636 = vld [vmem:[#allocation2 + $0x2d0] sm:$0xff]
    %v5637 = vld [vmem:[#allocation2 + $0x2d8] sm:$0xff]
    %v5638 = vld [vmem:[#allocation2 + $0x310] sm:$0xff]
    %v5639 = vld [vmem:[#allocation2 + $0x318] sm:$0xff]
    %v5640 = vld [vmem:[#allocation2 + $0x350] sm:$0xff]
    %v5641 = vld [vmem:[#allocation2 + $0x358] sm:$0xff]
    %v5642 = vld [vmem:[#allocation2 + $0x390] sm:$0xff]
    %v5643 = vld [vmem:[#allocation2 + $0x398] sm:$0xff]
    %v5644 = vld [vmem:[#allocation2 + $0x3d0] sm:$0xff]
    %v5645 = vld [vmem:[#allocation2 + $0x3d8] sm:$0xff]
    %v5646 = vld [vmem:[#allocation2 + $0x410] sm:$0xff]
    %v5647 = vld [vmem:[#allocation2 + $0x418] sm:$0xff]
    %v5648 = vld [vmem:[#allocation2 + $0x450] sm:$0xff]
    %v5649 = vld [vmem:[#allocation2 + $0x458] sm:$0xff]
    %v5650 = vld [vmem:[#allocation2 + $0x490] sm:$0xff]
    %v5651 = vld [vmem:[#allocation2 + $0x498] sm:$0xff]
    %v5652 = vld [vmem:[#allocation2 + $0x4d0] sm:$0xff]
    %v5653 = vld [vmem:[#allocation2 + $0x4d8] sm:$0xff]
    %v5654 = vld [vmem:[#allocation2 + $0x510] sm:$0xff]
    %v5655 = vld [vmem:[#allocation2 + $0x518] sm:$0xff]
    %v5656 = vld [vmem:[#allocation2 + $0x550] sm:$0xff]
    %v5657 = vld [vmem:[#allocation2 + $0x558] sm:$0xff]
    %v5658 = vld [vmem:[#allocation2 + $0x590] sm:$0xff]
    %v5659 = vld [vmem:[#allocation2 + $0x598] sm:$0xff]
    %v5660 = vld [vmem:[#allocation2 + $0x5d0] sm:$0xff]
    %v5661 = vld [vmem:[#allocation2 + $0x5d8] sm:$0xff]
    %v5662 = vld [vmem:[#allocation2 + $0x610] sm:$0xff]
    %v5663 = vld [vmem:[#allocation2 + $0x618] sm:$0xff]
    %v5664 = vld [vmem:[#allocation2 + $0x650] sm:$0xff]
    %v5665 = vld [vmem:[#allocation2 + $0x658] sm:$0xff]
    %v5666 = vld [vmem:[#allocation2 + $0x690] sm:$0xff]
    %v5667 = vld [vmem:[#allocation2 + $0x698] sm:$0xff]
    %v5668 = vld [vmem:[#allocation2 + $0x6d0] sm:$0xff]
    %v5669 = vld [vmem:[#allocation2 + $0x6d8] sm:$0xff]
    %v5670 = vld [vmem:[#allocation2 + $0x710] sm:$0xff]
    %v5671 = vld [vmem:[#allocation2 + $0x718] sm:$0xff]
    %v5672 = vld [vmem:[#allocation2 + $0x750] sm:$0xff]
    %v5673 = vld [vmem:[#allocation2 + $0x758] sm:$0xff]
    %v5674 = vld [vmem:[#allocation2 + $0x790] sm:$0xff]
    %v5675 = vld [vmem:[#allocation2 + $0x798] sm:$0xff]
    %v5676 = vld [vmem:[#allocation2 + $0x7d0] sm:$0xff]
    %v5677 = vld [vmem:[#allocation2 + $0x7d8] sm:$0xff]
    %v5678 = vld [vmem:[#allocation2 + $0x810] sm:$0xff]
    %v5679 = vld [vmem:[#allocation2 + $0x818] sm:$0xff]
    %v5680 = vld [vmem:[#allocation2 + $0x850] sm:$0xff]
    %v5681 = vld [vmem:[#allocation2 + $0x858] sm:$0xff]
    %v5682 = vld [vmem:[#allocation2 + $0x890] sm:$0xff]
    %v5683 = vld [vmem:[#allocation2 + $0x898] sm:$0xff]
    %v5684 = vld [vmem:[#allocation2 + $0x8d0] sm:$0xff]
    %v5685 = vld [vmem:[#allocation2 + $0x8d8] sm:$0xff]
    %v5686 = vld [vmem:[#allocation2 + $0x910] sm:$0xff]
    %v5687 = vld [vmem:[#allocation2 + $0x918] sm:$0xff]
    %v5688 = vld [vmem:[#allocation2 + $0x950] sm:$0xff]
    %v5689 = vld [vmem:[#allocation2 + $0x958] sm:$0xff]
    %v5690 = vld [vmem:[#allocation2 + $0x990] sm:$0xff]
    %v5691 = vld [vmem:[#allocation2 + $0x998] sm:$0xff]
    %v5692 = vld [vmem:[#allocation2 + $0x9d0] sm:$0xff]
    %v5693 = vld [vmem:[#allocation2 + $0x9d8] sm:$0xff]
    %v5694 = vld [vmem:[#allocation2 + $0xa10] sm:$0xff]
    %v5695 = vld [vmem:[#allocation2 + $0xa18] sm:$0xff]
    %v5696 = vld [vmem:[#allocation2 + $0xa50] sm:$0xff]
    %v5697 = vld [vmem:[#allocation2 + $0xa58] sm:$0xff]
    %v5698 = vld [vmem:[#allocation2 + $0xa90] sm:$0xff]
    %v5699 = vld [vmem:[#allocation2 + $0xa98] sm:$0xff]
    %v5700 = vld [vmem:[#allocation2 + $0xad0] sm:$0xff]
    %v5701 = vld [vmem:[#allocation2 + $0xad8] sm:$0xff]
    %v5702 = vld [vmem:[#allocation2 + $0xb10] sm:$0xff]
    %v5703 = vld [vmem:[#allocation2 + $0xb18] sm:$0xff]
    %v5704 = vld [vmem:[#allocation2 + $0xb50] sm:$0xff]
    %v5705 = vld [vmem:[#allocation2 + $0xb58] sm:$0xff]
    %v5706 = vld [vmem:[#allocation2 + $0xb90] sm:$0xff]
    %v5707 = vld [vmem:[#allocation2 + $0xb98] sm:$0xff]
    %v5708 = vld [vmem:[#allocation2 + $0xbd0] sm:$0xff]
    %v5709 = vld [vmem:[#allocation2 + $0xbd8] sm:$0xff]
    %v5710 = vld [vmem:[#allocation2 + $0xc10] sm:$0xff]
    %v5711 = vld [vmem:[#allocation2 + $0xc18] sm:$0xff]
    %v5712 = vld [vmem:[#allocation2 + $0xc50] sm:$0xff]
    %v5713 = vld [vmem:[#allocation2 + $0xc58] sm:$0xff]
    %v5714 = vld [vmem:[#allocation2 + $0xc90] sm:$0xff]
    %v5715 = vld [vmem:[#allocation2 + $0xc98] sm:$0xff]
    %v5716 = vld [vmem:[#allocation2 + $0xcd0] sm:$0xff]
    %v5717 = vld [vmem:[#allocation2 + $0xcd8] sm:$0xff]
    %v5718 = vld [vmem:[#allocation2 + $0xd10] sm:$0xff]
    %v5719 = vld [vmem:[#allocation2 + $0xd18] sm:$0xff]
    %v5720 = vld [vmem:[#allocation2 + $0xd50] sm:$0xff]
    %v5721 = vld [vmem:[#allocation2 + $0xd58] sm:$0xff]
    %v5722 = vld [vmem:[#allocation2 + $0xd90] sm:$0xff]
    %v5723 = vld [vmem:[#allocation2 + $0xd98] sm:$0xff]
    %v5724 = vld [vmem:[#allocation2 + $0xdd0] sm:$0xff]
    %v5725 = vld [vmem:[#allocation2 + $0xdd8] sm:$0xff]
    %v5726 = vld [vmem:[#allocation2 + $0xe10] sm:$0xff]
    %v5727 = vld [vmem:[#allocation2 + $0xe18] sm:$0xff]
    %v5728 = vld [vmem:[#allocation2 + $0xe50] sm:$0xff]
    %v5729 = vld [vmem:[#allocation2 + $0xe58] sm:$0xff]
    %v5730 = vld [vmem:[#allocation2 + $0xe90] sm:$0xff]
    %v5731 = vld [vmem:[#allocation2 + $0xe98] sm:$0xff]
    %v5732 = vld [vmem:[#allocation2 + $0xed0] sm:$0xff]
    %v5733 = vld [vmem:[#allocation2 + $0xed8] sm:$0xff]
    %v5734 = vld [vmem:[#allocation2 + $0xf10] sm:$0xff]
    %v5735 = vld [vmem:[#allocation2 + $0xf18] sm:$0xff]
    %v5736 = vld [vmem:[#allocation2 + $0xf50] sm:$0xff]
    %v5737 = vld [vmem:[#allocation2 + $0xf58] sm:$0xff]
    %v5738 = vld [vmem:[#allocation2 + $0xf90] sm:$0xff]
    %v5739 = vld [vmem:[#allocation2 + $0xf98] sm:$0xff]
    %v5740 = vld [vmem:[#allocation2 + $0xfd0] sm:$0xff]
    %v5741 = vld [vmem:[#allocation2 + $0xfd8] sm:$0xff]
    %v5742 = vld [vmem:[#allocation2 + $0x1010] sm:$0xff]
    %v5743 = vld [vmem:[#allocation2 + $0x1018] sm:$0xff]
    %v5744 = vld [vmem:[#allocation2 + $0x1050] sm:$0xff]
    %v5745 = vld [vmem:[#allocation2 + $0x1058] sm:$0xff]
    %v5746 = vld [vmem:[#allocation2 + $0x1090] sm:$0xff]
    %v5747 = vld [vmem:[#allocation2 + $0x1098] sm:$0xff]
    %v5748 = vld [vmem:[#allocation2 + $0x10d0] sm:$0xff]
    %v5749 = vld [vmem:[#allocation2 + $0x10d8] sm:$0xff]
    %v5750 = vld [vmem:[#allocation2 + $0x1110] sm:$0xff]
    %v5751 = vld [vmem:[#allocation2 + $0x1118] sm:$0xff]
    %v5752 = vld [vmem:[#allocation2 + $0x1150] sm:$0xff]
    %v5753 = vld [vmem:[#allocation2 + $0x1158] sm:$0xff]
    %v5754 = vld [vmem:[#allocation2 + $0x1190] sm:$0xff]
    %v5755 = vld [vmem:[#allocation2 + $0x1198] sm:$0xff]
    %v5756 = vld [vmem:[#allocation2 + $0x11d0] sm:$0xff]
    %v5757 = vld [vmem:[#allocation2 + $0x11d8] sm:$0xff]
    %v5758 = vld [vmem:[#allocation2 + $0x1210] sm:$0xff]
    %v5759 = vld [vmem:[#allocation2 + $0x1218] sm:$0xff]
    %v5760 = vld [vmem:[#allocation2 + $0x1250] sm:$0xff]
    %v5761 = vld [vmem:[#allocation2 + $0x1258] sm:$0xff]
    %v5762 = vld [vmem:[#allocation2 + $0x1290] sm:$0xff]
    %v5763 = vld [vmem:[#allocation2 + $0x1298] sm:$0xff]
    %v5764 = vld [vmem:[#allocation2 + $0x12d0] sm:$0xff]
    %v5765 = vld [vmem:[#allocation2 + $0x12d8] sm:$0xff]
    %v5766 = vld [vmem:[#allocation2 + $0x1310] sm:$0xff]
    %v5767 = vld [vmem:[#allocation2 + $0x1318] sm:$0xff]
    %v5768 = vld [vmem:[#allocation2 + $0x1350] sm:$0xff]
    %v5769 = vld [vmem:[#allocation2 + $0x1358] sm:$0xff]
    %v5770 = vld [vmem:[#allocation2 + $0x1390] sm:$0xff]
    %v5771 = vld [vmem:[#allocation2 + $0x1398] sm:$0xff]
    %v5772 = vld [vmem:[#allocation2 + $0x13d0] sm:$0xff]
    %v5773 = vld [vmem:[#allocation2 + $0x13d8] sm:$0xff]
    %v5774 = vld [vmem:[#allocation2 + $0x1410] sm:$0xff]
    %v5775 = vld [vmem:[#allocation2 + $0x1418] sm:$0xff]
    %v5776 = vld [vmem:[#allocation2 + $0x1450] sm:$0xff]
    %v5777 = vld [vmem:[#allocation2 + $0x1458] sm:$0xff]
    %v5778 = vld [vmem:[#allocation2 + $0x1490] sm:$0xff]
    %v5779 = vld [vmem:[#allocation2 + $0x1498] sm:$0xff]
    %v5780 = vld [vmem:[#allocation2 + $0x14d0] sm:$0xff]
    %v5781 = vld [vmem:[#allocation2 + $0x14d8] sm:$0xff]
    %v5782 = vld [vmem:[#allocation2 + $0x1510] sm:$0xff]
    %v5783 = vld [vmem:[#allocation2 + $0x1518] sm:$0xff]
    %v5784 = vld [vmem:[#allocation2 + $0x1550] sm:$0xff]
    %v5785 = vld [vmem:[#allocation2 + $0x1558] sm:$0xff]
    %v5786 = vld [vmem:[#allocation2 + $0x1590] sm:$0xff]
    %v5787 = vld [vmem:[#allocation2 + $0x1598] sm:$0xff]
    %v5788 = vld [vmem:[#allocation2 + $0x15d0] sm:$0xff]
    %v5789 = vld [vmem:[#allocation2 + $0x15d8] sm:$0xff]
    %v5790 = vld [vmem:[#allocation2 + $0x1610] sm:$0xff]
    %v5791 = vld [vmem:[#allocation2 + $0x1618] sm:$0xff]
    %v5792 = vld [vmem:[#allocation2 + $0x1650] sm:$0xff]
    %v5793 = vld [vmem:[#allocation2 + $0x1658] sm:$0xff]
    %v5794 = vld [vmem:[#allocation2 + $0x1690] sm:$0xff]
    %v5795 = vld [vmem:[#allocation2 + $0x1698] sm:$0xff]
    %v5796 = vld [vmem:[#allocation2 + $0x16d0] sm:$0xff]
    %v5797 = vld [vmem:[#allocation2 + $0x16d8] sm:$0xff]
    %v5798 = vld [vmem:[#allocation2 + $0x1710] sm:$0xff]
    %v5799 = vld [vmem:[#allocation2 + $0x1718] sm:$0xff]
    %v5800 = vld [vmem:[#allocation2 + $0x1750] sm:$0xff]
    %v5801 = vld [vmem:[#allocation2 + $0x1758] sm:$0xff]
    %v5802 = vld [vmem:[#allocation2 + $0x1790] sm:$0xff]
    %v5803 = vld [vmem:[#allocation2 + $0x1798] sm:$0xff]
    %v5804 = vld [vmem:[#allocation2 + $0x17d0] sm:$0xff]
    %v5805 = vld [vmem:[#allocation2 + $0x17d8] sm:$0xff]
    %v5806 = vld [vmem:[#allocation2 + $0x1810] sm:$0xff]
    %v5807 = vld [vmem:[#allocation2 + $0x1818] sm:$0xff]
    %v5808 = vld [vmem:[#allocation2 + $0x1850] sm:$0xff]
    %v5809 = vld [vmem:[#allocation2 + $0x1858] sm:$0xff]
    %v5810 = vld [vmem:[#allocation2 + $0x1890] sm:$0xff]
    %v5811 = vld [vmem:[#allocation2 + $0x1898] sm:$0xff]
    %v5812 = vld [vmem:[#allocation2 + $0x18d0] sm:$0xff]
    %v5813 = vld [vmem:[#allocation2 + $0x18d8] sm:$0xff]
    %v5814 = vld [vmem:[#allocation2 + $0x1910] sm:$0xff]
    %v5815 = vld [vmem:[#allocation2 + $0x1918] sm:$0xff]
    %v5816 = vld [vmem:[#allocation2 + $0x1950] sm:$0xff]
    %v5817 = vld [vmem:[#allocation2 + $0x1958] sm:$0xff]
    %v5818 = vld [vmem:[#allocation2 + $0x1990] sm:$0xff]
    %v5819 = vld [vmem:[#allocation2 + $0x1998] sm:$0xff]
    %v5820 = vld [vmem:[#allocation2 + $0x19d0] sm:$0xff]
    %v5821 = vld [vmem:[#allocation2 + $0x19d8] sm:$0xff]
    %v5822 = vld [vmem:[#allocation2 + $0x1a10] sm:$0xff]
    %v5823 = vld [vmem:[#allocation2 + $0x1a18] sm:$0xff]
    %v5824 = vld [vmem:[#allocation2 + $0x1a50] sm:$0xff]
    %v5825 = vld [vmem:[#allocation2 + $0x1a58] sm:$0xff]
    %v5826 = vld [vmem:[#allocation2 + $0x1a90] sm:$0xff]
    %v5827 = vld [vmem:[#allocation2 + $0x1a98] sm:$0xff]
    %v5828 = vld [vmem:[#allocation2 + $0x1ad0] sm:$0xff]
    %v5829 = vld [vmem:[#allocation2 + $0x1ad8] sm:$0xff]
    %v5830 = vld [vmem:[#allocation2 + $0x1b10] sm:$0xff]
    %v5831 = vld [vmem:[#allocation2 + $0x1b18] sm:$0xff]
    %v5832 = vld [vmem:[#allocation2 + $0x1b50] sm:$0xff]
    %v5833 = vld [vmem:[#allocation2 + $0x1b58] sm:$0xff]
    %v5834 = vld [vmem:[#allocation2 + $0x1b90] sm:$0xff]
    %v5835 = vld [vmem:[#allocation2 + $0x1b98] sm:$0xff]
    %v5836 = vld [vmem:[#allocation2 + $0x1bd0] sm:$0xff]
    %v5837 = vld [vmem:[#allocation2 + $0x1bd8] sm:$0xff]
    %v5838 = vld [vmem:[#allocation2 + $0x1c10] sm:$0xff]
    %v5839 = vld [vmem:[#allocation2 + $0x1c18] sm:$0xff]
    %v5840 = vld [vmem:[#allocation2 + $0x1c50] sm:$0xff]
    %v5841 = vld [vmem:[#allocation2 + $0x1c58] sm:$0xff]
    %v5842 = vld [vmem:[#allocation2 + $0x1c90] sm:$0xff]
    %v5843 = vld [vmem:[#allocation2 + $0x1c98] sm:$0xff]
    %v5844 = vld [vmem:[#allocation2 + $0x1cd0] sm:$0xff]
    %v5845 = vld [vmem:[#allocation2 + $0x1cd8] sm:$0xff]
    %v5846 = vld [vmem:[#allocation2 + $0x1d10] sm:$0xff]
    %v5847 = vld [vmem:[#allocation2 + $0x1d18] sm:$0xff]
    %v5848 = vld [vmem:[#allocation2 + $0x1d50] sm:$0xff]
    %v5849 = vld [vmem:[#allocation2 + $0x1d58] sm:$0xff]
    %v5850 = vld [vmem:[#allocation2 + $0x1d90] sm:$0xff]
    %v5851 = vld [vmem:[#allocation2 + $0x1d98] sm:$0xff]
    %v5852 = vld [vmem:[#allocation2 + $0x1dd0] sm:$0xff]
    %v5853 = vld [vmem:[#allocation2 + $0x1dd8] sm:$0xff]
    %v5854 = vld [vmem:[#allocation2 + $0x1e10] sm:$0xff]
    %v5855 = vld [vmem:[#allocation2 + $0x1e18] sm:$0xff]
    %v5856 = vld [vmem:[#allocation2 + $0x1e50] sm:$0xff]
    %v5857 = vld [vmem:[#allocation2 + $0x1e58] sm:$0xff]
    %v5858 = vld [vmem:[#allocation2 + $0x1e90] sm:$0xff]
    %v5859 = vld [vmem:[#allocation2 + $0x1e98] sm:$0xff]
    %v5860 = vld [vmem:[#allocation2 + $0x1ed0] sm:$0xff]
    %v5861 = vld [vmem:[#allocation2 + $0x1ed8] sm:$0xff]
    %v5862 = vld [vmem:[#allocation2 + $0x1f10] sm:$0xff]
    %v5863 = vld [vmem:[#allocation2 + $0x1f18] sm:$0xff]
    %v5864 = vld [vmem:[#allocation2 + $0x1f50] sm:$0xff]
    %v5865 = vld [vmem:[#allocation2 + $0x1f58] sm:$0xff]
    %v5866 = vld [vmem:[#allocation2 + $0x1f90] sm:$0xff]
    %v5867 = vld [vmem:[#allocation2 + $0x1f98] sm:$0xff]
    %v5868 = vld [vmem:[#allocation2 + $0x1fd0] sm:$0xff]
    %v5869 = vld [vmem:[#allocation2 + $0x1fd8] sm:$0xff]
    %v5870 = vld [vmem:[#allocation9 + $0x4] sm:$0xf]
    %v5872 = vlaneseq
    %v5873 = vshrl.u32 %v5872, 7
    %v5874 = vsub.s32 0, %v5873
    %v5875 = vrot.slane %v5870, %v5874
    %v5876 = vlaneseq
    %v5877 = vshrl.u32 %v5876, 7
    %v5878 = vsub.s32 1, %v5877
    %v5879 = vrot.slane %v5870, %v5878
    %v5880 = vlaneseq
    %v5881 = vshrl.u32 %v5880, 7
    %v5882 = vsub.s32 2, %v5881
    %v5883 = vrot.slane %v5870, %v5882
    %v5884 = vlaneseq
    %v5885 = vshrl.u32 %v5884, 7
    %v5886 = vsub.s32 3, %v5885
    %v5887 = vrot.slane %v5870, %v5886
    %v6148 = vunpack.c.l.b16 %v5614
    %v6149 = vunpack.c.h.b16 %v5614
    %v6150 = vunpack.c.l.b16 %v5615
    %v6151 = vunpack.c.h.b16 %v5615
    %v6152 = vunpack.c.l.b16 %v5616
    %v6153 = vunpack.c.h.b16 %v5616
    %v6154 = vunpack.c.l.b16 %v5617
    %v6155 = vunpack.c.h.b16 %v5617
    %v6156 = vunpack.c.l.b16 %v5618
    %v6157 = vunpack.c.h.b16 %v5618
    %v6158 = vunpack.c.l.b16 %v5619
    %v6159 = vunpack.c.h.b16 %v5619
    %v6160 = vunpack.c.l.b16 %v5620
    %v6161 = vunpack.c.h.b16 %v5620
    %v6162 = vunpack.c.l.b16 %v5621
    %v6163 = vunpack.c.h.b16 %v5621
    %v6164 = vunpack.c.l.b16 %v5622
    %v6165 = vunpack.c.h.b16 %v5622
    %v6166 = vunpack.c.l.b16 %v5623
    %v6167 = vunpack.c.h.b16 %v5623
    %v6168 = vunpack.c.l.b16 %v5624
    %v6169 = vunpack.c.h.b16 %v5624
    %v6170 = vunpack.c.l.b16 %v5625
    %v6171 = vunpack.c.h.b16 %v5625
    %v6172 = vunpack.c.l.b16 %v5626
    %v6173 = vunpack.c.h.b16 %v5626
    %v6174 = vunpack.c.l.b16 %v5627
    %v6175 = vunpack.c.h.b16 %v5627
    %v6176 = vunpack.c.l.b16 %v5628
    %v6177 = vunpack.c.h.b16 %v5628
    %v6178 = vunpack.c.l.b16 %v5629
    %v6179 = vunpack.c.h.b16 %v5629
    %v6180 = vunpack.c.l.b16 %v5630
    %v6181 = vunpack.c.h.b16 %v5630
    %v6182 = vunpack.c.l.b16 %v5631
    %v6183 = vunpack.c.h.b16 %v5631
    %v6184 = vunpack.c.l.b16 %v5632
    %v6185 = vunpack.c.h.b16 %v5632
    %v6186 = vunpack.c.l.b16 %v5633
    %v6187 = vunpack.c.h.b16 %v5633
    %v6188 = vunpack.c.l.b16 %v5634
    %v6189 = vunpack.c.h.b16 %v5634
    %v6190 = vunpack.c.l.b16 %v5635
    %v6191 = vunpack.c.h.b16 %v5635
    %v6192 = vunpack.c.l.b16 %v5636
    %v6193 = vunpack.c.h.b16 %v5636
    %v6194 = vunpack.c.l.b16 %v5637
    %v6195 = vunpack.c.h.b16 %v5637
    %v6196 = vunpack.c.l.b16 %v5638
    %v6197 = vunpack.c.h.b16 %v5638
    %v6198 = vunpack.c.l.b16 %v5639
    %v6199 = vunpack.c.h.b16 %v5639
    %v6200 = vunpack.c.l.b16 %v5640
    %v6201 = vunpack.c.h.b16 %v5640
    %v6202 = vunpack.c.l.b16 %v5641
    %v6203 = vunpack.c.h.b16 %v5641
    %v6204 = vunpack.c.l.b16 %v5642
    %v6205 = vunpack.c.h.b16 %v5642
    %v6206 = vunpack.c.l.b16 %v5643
    %v6207 = vunpack.c.h.b16 %v5643
    %v6208 = vunpack.c.l.b16 %v5644
    %v6209 = vunpack.c.h.b16 %v5644
    %v6210 = vunpack.c.l.b16 %v5645
    %v6211 = vunpack.c.h.b16 %v5645
    %v6212 = vunpack.c.l.b16 %v5646
    %v6213 = vunpack.c.h.b16 %v5646
    %v6214 = vunpack.c.l.b16 %v5647
    %v6215 = vunpack.c.h.b16 %v5647
    %v6216 = vunpack.c.l.b16 %v5648
    %v6217 = vunpack.c.h.b16 %v5648
    %v6218 = vunpack.c.l.b16 %v5649
    %v6219 = vunpack.c.h.b16 %v5649
    %v6220 = vunpack.c.l.b16 %v5650
    %v6221 = vunpack.c.h.b16 %v5650
    %v6222 = vunpack.c.l.b16 %v5651
    %v6223 = vunpack.c.h.b16 %v5651
    %v6224 = vunpack.c.l.b16 %v5652
    %v6225 = vunpack.c.h.b16 %v5652
    %v6226 = vunpack.c.l.b16 %v5653
    %v6227 = vunpack.c.h.b16 %v5653
    %v6228 = vunpack.c.l.b16 %v5654
    %v6229 = vunpack.c.h.b16 %v5654
    %v6230 = vunpack.c.l.b16 %v5655
    %v6231 = vunpack.c.h.b16 %v5655
    %v6232 = vunpack.c.l.b16 %v5656
    %v6233 = vunpack.c.h.b16 %v5656
    %v6234 = vunpack.c.l.b16 %v5657
    %v6235 = vunpack.c.h.b16 %v5657
    %v6236 = vunpack.c.l.b16 %v5658
    %v6237 = vunpack.c.h.b16 %v5658
    %v6238 = vunpack.c.l.b16 %v5659
    %v6239 = vunpack.c.h.b16 %v5659
    %v6240 = vunpack.c.l.b16 %v5660
    %v6241 = vunpack.c.h.b16 %v5660
    %v6242 = vunpack.c.l.b16 %v5661
    %v6243 = vunpack.c.h.b16 %v5661
    %v6244 = vunpack.c.l.b16 %v5662
    %v6245 = vunpack.c.h.b16 %v5662
    %v6246 = vunpack.c.l.b16 %v5663
    %v6247 = vunpack.c.h.b16 %v5663
    %v6248 = vunpack.c.l.b16 %v5664
    %v6249 = vunpack.c.h.b16 %v5664
    %v6250 = vunpack.c.l.b16 %v5665
    %v6251 = vunpack.c.h.b16 %v5665
    %v6252 = vunpack.c.l.b16 %v5666
    %v6253 = vunpack.c.h.b16 %v5666
    %v6254 = vunpack.c.l.b16 %v5667
    %v6255 = vunpack.c.h.b16 %v5667
    %v6256 = vunpack.c.l.b16 %v5668
    %v6257 = vunpack.c.h.b16 %v5668
    %v6258 = vunpack.c.l.b16 %v5669
    %v6259 = vunpack.c.h.b16 %v5669
    %v6260 = vunpack.c.l.b16 %v5670
    %v6261 = vunpack.c.h.b16 %v5670
    %v6262 = vunpack.c.l.b16 %v5671
    %v6263 = vunpack.c.h.b16 %v5671
    %v6264 = vunpack.c.l.b16 %v5672
    %v6265 = vunpack.c.h.b16 %v5672
    %v6266 = vunpack.c.l.b16 %v5673
    %v6267 = vunpack.c.h.b16 %v5673
    %v6268 = vunpack.c.l.b16 %v5674
    %v6269 = vunpack.c.h.b16 %v5674
    %v6270 = vunpack.c.l.b16 %v5675
    %v6271 = vunpack.c.h.b16 %v5675
    %v6272 = vunpack.c.l.b16 %v5676
    %v6273 = vunpack.c.h.b16 %v5676
    %v6274 = vunpack.c.l.b16 %v5677
    %v6275 = vunpack.c.h.b16 %v5677
    %v6276 = vunpack.c.l.b16 %v5678
    %v6277 = vunpack.c.h.b16 %v5678
    %v6278 = vunpack.c.l.b16 %v5679
    %v6279 = vunpack.c.h.b16 %v5679
    %v6280 = vunpack.c.l.b16 %v5680
    %v6281 = vunpack.c.h.b16 %v5680
    %v6282 = vunpack.c.l.b16 %v5681
    %v6283 = vunpack.c.h.b16 %v5681
    %v6284 = vunpack.c.l.b16 %v5682
    %v6285 = vunpack.c.h.b16 %v5682
    %v6286 = vunpack.c.l.b16 %v5683
    %v6287 = vunpack.c.h.b16 %v5683
    %v6288 = vunpack.c.l.b16 %v5684
    %v6289 = vunpack.c.h.b16 %v5684
    %v6290 = vunpack.c.l.b16 %v5685
    %v6291 = vunpack.c.h.b16 %v5685
    %v6292 = vunpack.c.l.b16 %v5686
    %v6293 = vunpack.c.h.b16 %v5686
    %v6294 = vunpack.c.l.b16 %v5687
    %v6295 = vunpack.c.h.b16 %v5687
    %v6296 = vunpack.c.l.b16 %v5688
    %v6297 = vunpack.c.h.b16 %v5688
    %v6298 = vunpack.c.l.b16 %v5689
    %v6299 = vunpack.c.h.b16 %v5689
    %v6300 = vunpack.c.l.b16 %v5690
    %v6301 = vunpack.c.h.b16 %v5690
    %v6302 = vunpack.c.l.b16 %v5691
    %v6303 = vunpack.c.h.b16 %v5691
    %v6304 = vunpack.c.l.b16 %v5692
    %v6305 = vunpack.c.h.b16 %v5692
    %v6306 = vunpack.c.l.b16 %v5693
    %v6307 = vunpack.c.h.b16 %v5693
    %v6308 = vunpack.c.l.b16 %v5694
    %v6309 = vunpack.c.h.b16 %v5694
    %v6310 = vunpack.c.l.b16 %v5695
    %v6311 = vunpack.c.h.b16 %v5695
    %v6312 = vunpack.c.l.b16 %v5696
    %v6313 = vunpack.c.h.b16 %v5696
    %v6314 = vunpack.c.l.b16 %v5697
    %v6315 = vunpack.c.h.b16 %v5697
    %v6316 = vunpack.c.l.b16 %v5698
    %v6317 = vunpack.c.h.b16 %v5698
    %v6318 = vunpack.c.l.b16 %v5699
    %v6319 = vunpack.c.h.b16 %v5699
    %v6320 = vunpack.c.l.b16 %v5700
    %v6321 = vunpack.c.h.b16 %v5700
    %v6322 = vunpack.c.l.b16 %v5701
    %v6323 = vunpack.c.h.b16 %v5701
    %v6324 = vunpack.c.l.b16 %v5702
    %v6325 = vunpack.c.h.b16 %v5702
    %v6326 = vunpack.c.l.b16 %v5703
    %v6327 = vunpack.c.h.b16 %v5703
    %v6328 = vunpack.c.l.b16 %v5704
    %v6329 = vunpack.c.h.b16 %v5704
    %v6330 = vunpack.c.l.b16 %v5705
    %v6331 = vunpack.c.h.b16 %v5705
    %v6332 = vunpack.c.l.b16 %v5706
    %v6333 = vunpack.c.h.b16 %v5706
    %v6334 = vunpack.c.l.b16 %v5707
    %v6335 = vunpack.c.h.b16 %v5707
    %v6336 = vunpack.c.l.b16 %v5708
    %v6337 = vunpack.c.h.b16 %v5708
    %v6338 = vunpack.c.l.b16 %v5709
    %v6339 = vunpack.c.h.b16 %v5709
    %v6340 = vunpack.c.l.b16 %v5710
    %v6341 = vunpack.c.h.b16 %v5710
    %v6342 = vunpack.c.l.b16 %v5711
    %v6343 = vunpack.c.h.b16 %v5711
    %v6344 = vunpack.c.l.b16 %v5712
    %v6345 = vunpack.c.h.b16 %v5712
    %v6346 = vunpack.c.l.b16 %v5713
    %v6347 = vunpack.c.h.b16 %v5713
    %v6348 = vunpack.c.l.b16 %v5714
    %v6349 = vunpack.c.h.b16 %v5714
    %v6350 = vunpack.c.l.b16 %v5715
    %v6351 = vunpack.c.h.b16 %v5715
    %v6352 = vunpack.c.l.b16 %v5716
    %v6353 = vunpack.c.h.b16 %v5716
    %v6354 = vunpack.c.l.b16 %v5717
    %v6355 = vunpack.c.h.b16 %v5717
    %v6356 = vunpack.c.l.b16 %v5718
    %v6357 = vunpack.c.h.b16 %v5718
    %v6358 = vunpack.c.l.b16 %v5719
    %v6359 = vunpack.c.h.b16 %v5719
    %v6360 = vunpack.c.l.b16 %v5720
    %v6361 = vunpack.c.h.b16 %v5720
    %v6362 = vunpack.c.l.b16 %v5721
    %v6363 = vunpack.c.h.b16 %v5721
    %v6364 = vunpack.c.l.b16 %v5722
    %v6365 = vunpack.c.h.b16 %v5722
    %v6366 = vunpack.c.l.b16 %v5723
    %v6367 = vunpack.c.h.b16 %v5723
    %v6368 = vunpack.c.l.b16 %v5724
    %v6369 = vunpack.c.h.b16 %v5724
    %v6370 = vunpack.c.l.b16 %v5725
    %v6371 = vunpack.c.h.b16 %v5725
    %v6372 = vunpack.c.l.b16 %v5726
    %v6373 = vunpack.c.h.b16 %v5726
    %v6374 = vunpack.c.l.b16 %v5727
    %v6375 = vunpack.c.h.b16 %v5727
    %v6376 = vunpack.c.l.b16 %v5728
    %v6377 = vunpack.c.h.b16 %v5728
    %v6378 = vunpack.c.l.b16 %v5729
    %v6379 = vunpack.c.h.b16 %v5729
    %v6380 = vunpack.c.l.b16 %v5730
    %v6381 = vunpack.c.h.b16 %v5730
    %v6382 = vunpack.c.l.b16 %v5731
    %v6383 = vunpack.c.h.b16 %v5731
    %v6384 = vunpack.c.l.b16 %v5732
    %v6385 = vunpack.c.h.b16 %v5732
    %v6386 = vunpack.c.l.b16 %v5733
    %v6387 = vunpack.c.h.b16 %v5733
    %v6388 = vunpack.c.l.b16 %v5734
    %v6389 = vunpack.c.h.b16 %v5734
    %v6390 = vunpack.c.l.b16 %v5735
    %v6391 = vunpack.c.h.b16 %v5735
    %v6392 = vunpack.c.l.b16 %v5736
    %v6393 = vunpack.c.h.b16 %v5736
    %v6394 = vunpack.c.l.b16 %v5737
    %v6395 = vunpack.c.h.b16 %v5737
    %v6396 = vunpack.c.l.b16 %v5738
    %v6397 = vunpack.c.h.b16 %v5738
    %v6398 = vunpack.c.l.b16 %v5739
    %v6399 = vunpack.c.h.b16 %v5739
    %v6400 = vunpack.c.l.b16 %v5740
    %v6401 = vunpack.c.h.b16 %v5740
    %v6402 = vunpack.c.l.b16 %v5741
    %v6403 = vunpack.c.h.b16 %v5741
    %v6404 = vunpack.c.l.b16 %v5742
    %v6405 = vunpack.c.h.b16 %v5742
    %v6406 = vunpack.c.l.b16 %v5743
    %v6407 = vunpack.c.h.b16 %v5743
    %v6408 = vunpack.c.l.b16 %v5744
    %v6409 = vunpack.c.h.b16 %v5744
    %v6410 = vunpack.c.l.b16 %v5745
    %v6411 = vunpack.c.h.b16 %v5745
    %v6412 = vunpack.c.l.b16 %v5746
    %v6413 = vunpack.c.h.b16 %v5746
    %v6414 = vunpack.c.l.b16 %v5747
    %v6415 = vunpack.c.h.b16 %v5747
    %v6416 = vunpack.c.l.b16 %v5748
    %v6417 = vunpack.c.h.b16 %v5748
    %v6418 = vunpack.c.l.b16 %v5749
    %v6419 = vunpack.c.h.b16 %v5749
    %v6420 = vunpack.c.l.b16 %v5750
    %v6421 = vunpack.c.h.b16 %v5750
    %v6422 = vunpack.c.l.b16 %v5751
    %v6423 = vunpack.c.h.b16 %v5751
    %v6424 = vunpack.c.l.b16 %v5752
    %v6425 = vunpack.c.h.b16 %v5752
    %v6426 = vunpack.c.l.b16 %v5753
    %v6427 = vunpack.c.h.b16 %v5753
    %v6428 = vunpack.c.l.b16 %v5754
    %v6429 = vunpack.c.h.b16 %v5754
    %v6430 = vunpack.c.l.b16 %v5755
    %v6431 = vunpack.c.h.b16 %v5755
    %v6432 = vunpack.c.l.b16 %v5756
    %v6433 = vunpack.c.h.b16 %v5756
    %v6434 = vunpack.c.l.b16 %v5757
    %v6435 = vunpack.c.h.b16 %v5757
    %v6436 = vunpack.c.l.b16 %v5758
    %v6437 = vunpack.c.h.b16 %v5758
    %v6438 = vunpack.c.l.b16 %v5759
    %v6439 = vunpack.c.h.b16 %v5759
    %v6440 = vunpack.c.l.b16 %v5760
    %v6441 = vunpack.c.h.b16 %v5760
    %v6442 = vunpack.c.l.b16 %v5761
    %v6443 = vunpack.c.h.b16 %v5761
    %v6444 = vunpack.c.l.b16 %v5762
    %v6445 = vunpack.c.h.b16 %v5762
    %v6446 = vunpack.c.l.b16 %v5763
    %v6447 = vunpack.c.h.b16 %v5763
    %v6448 = vunpack.c.l.b16 %v5764
    %v6449 = vunpack.c.h.b16 %v5764
    %v6450 = vunpack.c.l.b16 %v5765
    %v6451 = vunpack.c.h.b16 %v5765
    %v6452 = vunpack.c.l.b16 %v5766
    %v6453 = vunpack.c.h.b16 %v5766
    %v6454 = vunpack.c.l.b16 %v5767
    %v6455 = vunpack.c.h.b16 %v5767
    %v6456 = vunpack.c.l.b16 %v5768
    %v6457 = vunpack.c.h.b16 %v5768
    %v6458 = vunpack.c.l.b16 %v5769
    %v6459 = vunpack.c.h.b16 %v5769
    %v6460 = vunpack.c.l.b16 %v5770
    %v6461 = vunpack.c.h.b16 %v5770
    %v6462 = vunpack.c.l.b16 %v5771
    %v6463 = vunpack.c.h.b16 %v5771
    %v6464 = vunpack.c.l.b16 %v5772
    %v6465 = vunpack.c.h.b16 %v5772
    %v6466 = vunpack.c.l.b16 %v5773
    %v6467 = vunpack.c.h.b16 %v5773
    %v6468 = vunpack.c.l.b16 %v5774
    %v6469 = vunpack.c.h.b16 %v5774
    %v6470 = vunpack.c.l.b16 %v5775
    %v6471 = vunpack.c.h.b16 %v5775
    %v6472 = vunpack.c.l.b16 %v5776
    %v6473 = vunpack.c.h.b16 %v5776
    %v6474 = vunpack.c.l.b16 %v5777
    %v6475 = vunpack.c.h.b16 %v5777
    %v6476 = vunpack.c.l.b16 %v5778
    %v6477 = vunpack.c.h.b16 %v5778
    %v6478 = vunpack.c.l.b16 %v5779
    %v6479 = vunpack.c.h.b16 %v5779
    %v6480 = vunpack.c.l.b16 %v5780
    %v6481 = vunpack.c.h.b16 %v5780
    %v6482 = vunpack.c.l.b16 %v5781
    %v6483 = vunpack.c.h.b16 %v5781
    %v6484 = vunpack.c.l.b16 %v5782
    %v6485 = vunpack.c.h.b16 %v5782
    %v6486 = vunpack.c.l.b16 %v5783
    %v6487 = vunpack.c.h.b16 %v5783
    %v6488 = vunpack.c.l.b16 %v5784
    %v6489 = vunpack.c.h.b16 %v5784
    %v6490 = vunpack.c.l.b16 %v5785
    %v6491 = vunpack.c.h.b16 %v5785
    %v6492 = vunpack.c.l.b16 %v5786
    %v6493 = vunpack.c.h.b16 %v5786
    %v6494 = vunpack.c.l.b16 %v5787
    %v6495 = vunpack.c.h.b16 %v5787
    %v6496 = vunpack.c.l.b16 %v5788
    %v6497 = vunpack.c.h.b16 %v5788
    %v6498 = vunpack.c.l.b16 %v5789
    %v6499 = vunpack.c.h.b16 %v5789
    %v6500 = vunpack.c.l.b16 %v5790
    %v6501 = vunpack.c.h.b16 %v5790
    %v6502 = vunpack.c.l.b16 %v5791
    %v6503 = vunpack.c.h.b16 %v5791
    %v6504 = vunpack.c.l.b16 %v5792
    %v6505 = vunpack.c.h.b16 %v5792
    %v6506 = vunpack.c.l.b16 %v5793
    %v6507 = vunpack.c.h.b16 %v5793
    %v6508 = vunpack.c.l.b16 %v5794
    %v6509 = vunpack.c.h.b16 %v5794
    %v6510 = vunpack.c.l.b16 %v5795
    %v6511 = vunpack.c.h.b16 %v5795
    %v6512 = vunpack.c.l.b16 %v5796
    %v6513 = vunpack.c.h.b16 %v5796
    %v6514 = vunpack.c.l.b16 %v5797
    %v6515 = vunpack.c.h.b16 %v5797
    %v6516 = vunpack.c.l.b16 %v5798
    %v6517 = vunpack.c.h.b16 %v5798
    %v6518 = vunpack.c.l.b16 %v5799
    %v6519 = vunpack.c.h.b16 %v5799
    %v6520 = vunpack.c.l.b16 %v5800
    %v6521 = vunpack.c.h.b16 %v5800
    %v6522 = vunpack.c.l.b16 %v5801
    %v6523 = vunpack.c.h.b16 %v5801
    %v6524 = vunpack.c.l.b16 %v5802
    %v6525 = vunpack.c.h.b16 %v5802
    %v6526 = vunpack.c.l.b16 %v5803
    %v6527 = vunpack.c.h.b16 %v5803
    %v6528 = vunpack.c.l.b16 %v5804
    %v6529 = vunpack.c.h.b16 %v5804
    %v6530 = vunpack.c.l.b16 %v5805
    %v6531 = vunpack.c.h.b16 %v5805
    %v6532 = vunpack.c.l.b16 %v5806
    %v6533 = vunpack.c.h.b16 %v5806
    %v6534 = vunpack.c.l.b16 %v5807
    %v6535 = vunpack.c.h.b16 %v5807
    %v6536 = vunpack.c.l.b16 %v5808
    %v6537 = vunpack.c.h.b16 %v5808
    %v6538 = vunpack.c.l.b16 %v5809
    %v6539 = vunpack.c.h.b16 %v5809
    %v6540 = vunpack.c.l.b16 %v5810
    %v6541 = vunpack.c.h.b16 %v5810
    %v6542 = vunpack.c.l.b16 %v5811
    %v6543 = vunpack.c.h.b16 %v5811
    %v6544 = vunpack.c.l.b16 %v5812
    %v6545 = vunpack.c.h.b16 %v5812
    %v6546 = vunpack.c.l.b16 %v5813
    %v6547 = vunpack.c.h.b16 %v5813
    %v6548 = vunpack.c.l.b16 %v5814
    %v6549 = vunpack.c.h.b16 %v5814
    %v6550 = vunpack.c.l.b16 %v5815
    %v6551 = vunpack.c.h.b16 %v5815
    %v6552 = vunpack.c.l.b16 %v5816
    %v6553 = vunpack.c.h.b16 %v5816
    %v6554 = vunpack.c.l.b16 %v5817
    %v6555 = vunpack.c.h.b16 %v5817
    %v6556 = vunpack.c.l.b16 %v5818
    %v6557 = vunpack.c.h.b16 %v5818
    %v6558 = vunpack.c.l.b16 %v5819
    %v6559 = vunpack.c.h.b16 %v5819
    %v6560 = vunpack.c.l.b16 %v5820
    %v6561 = vunpack.c.h.b16 %v5820
    %v6562 = vunpack.c.l.b16 %v5821
    %v6563 = vunpack.c.h.b16 %v5821
    %v6564 = vunpack.c.l.b16 %v5822
    %v6565 = vunpack.c.h.b16 %v5822
    %v6566 = vunpack.c.l.b16 %v5823
    %v6567 = vunpack.c.h.b16 %v5823
    %v6568 = vunpack.c.l.b16 %v5824
    %v6569 = vunpack.c.h.b16 %v5824
    %v6570 = vunpack.c.l.b16 %v5825
    %v6571 = vunpack.c.h.b16 %v5825
    %v6572 = vunpack.c.l.b16 %v5826
    %v6573 = vunpack.c.h.b16 %v5826
    %v6574 = vunpack.c.l.b16 %v5827
    %v6575 = vunpack.c.h.b16 %v5827
    %v6576 = vunpack.c.l.b16 %v5828
    %v6577 = vunpack.c.h.b16 %v5828
    %v6578 = vunpack.c.l.b16 %v5829
    %v6579 = vunpack.c.h.b16 %v5829
    %v6580 = vunpack.c.l.b16 %v5830
    %v6581 = vunpack.c.h.b16 %v5830
    %v6582 = vunpack.c.l.b16 %v5831
    %v6583 = vunpack.c.h.b16 %v5831
    %v6584 = vunpack.c.l.b16 %v5832
    %v6585 = vunpack.c.h.b16 %v5832
    %v6586 = vunpack.c.l.b16 %v5833
    %v6587 = vunpack.c.h.b16 %v5833
    %v6588 = vunpack.c.l.b16 %v5834
    %v6589 = vunpack.c.h.b16 %v5834
    %v6590 = vunpack.c.l.b16 %v5835
    %v6591 = vunpack.c.h.b16 %v5835
    %v6592 = vunpack.c.l.b16 %v5836
    %v6593 = vunpack.c.h.b16 %v5836
    %v6594 = vunpack.c.l.b16 %v5837
    %v6595 = vunpack.c.h.b16 %v5837
    %v6596 = vunpack.c.l.b16 %v5838
    %v6597 = vunpack.c.h.b16 %v5838
    %v6598 = vunpack.c.l.b16 %v5839
    %v6599 = vunpack.c.h.b16 %v5839
    %v6600 = vunpack.c.l.b16 %v5840
    %v6601 = vunpack.c.h.b16 %v5840
    %v6602 = vunpack.c.l.b16 %v5841
    %v6603 = vunpack.c.h.b16 %v5841
    %v6604 = vunpack.c.l.b16 %v5842
    %v6605 = vunpack.c.h.b16 %v5842
    %v6606 = vunpack.c.l.b16 %v5843
    %v6607 = vunpack.c.h.b16 %v5843
    %v6608 = vunpack.c.l.b16 %v5844
    %v6609 = vunpack.c.h.b16 %v5844
    %v6610 = vunpack.c.l.b16 %v5845
    %v6611 = vunpack.c.h.b16 %v5845
    %v6612 = vunpack.c.l.b16 %v5846
    %v6613 = vunpack.c.h.b16 %v5846
    %v6614 = vunpack.c.l.b16 %v5847
    %v6615 = vunpack.c.h.b16 %v5847
    %v6616 = vunpack.c.l.b16 %v5848
    %v6617 = vunpack.c.h.b16 %v5848
    %v6618 = vunpack.c.l.b16 %v5849
    %v6619 = vunpack.c.h.b16 %v5849
    %v6620 = vunpack.c.l.b16 %v5850
    %v6621 = vunpack.c.h.b16 %v5850
    %v6622 = vunpack.c.l.b16 %v5851
    %v6623 = vunpack.c.h.b16 %v5851
    %v6624 = vunpack.c.l.b16 %v5852
    %v6625 = vunpack.c.h.b16 %v5852
    %v6626 = vunpack.c.l.b16 %v5853
    %v6627 = vunpack.c.h.b16 %v5853
    %v6628 = vunpack.c.l.b16 %v5854
    %v6629 = vunpack.c.h.b16 %v5854
    %v6630 = vunpack.c.l.b16 %v5855
    %v6631 = vunpack.c.h.b16 %v5855
    %v6632 = vunpack.c.l.b16 %v5856
    %v6633 = vunpack.c.h.b16 %v5856
    %v6634 = vunpack.c.l.b16 %v5857
    %v6635 = vunpack.c.h.b16 %v5857
    %v6636 = vunpack.c.l.b16 %v5858
    %v6637 = vunpack.c.h.b16 %v5858
    %v6638 = vunpack.c.l.b16 %v5859
    %v6639 = vunpack.c.h.b16 %v5859
    %v6640 = vunpack.c.l.b16 %v5860
    %v6641 = vunpack.c.h.b16 %v5860
    %v6642 = vunpack.c.l.b16 %v5861
    %v6643 = vunpack.c.h.b16 %v5861
    %v6644 = vunpack.c.l.b16 %v5862
    %v6645 = vunpack.c.h.b16 %v5862
    %v6646 = vunpack.c.l.b16 %v5863
    %v6647 = vunpack.c.h.b16 %v5863
    %v6648 = vunpack.c.l.b16 %v5864
    %v6649 = vunpack.c.h.b16 %v5864
    %v6650 = vunpack.c.l.b16 %v5865
    %v6651 = vunpack.c.h.b16 %v5865
    %v6652 = vunpack.c.l.b16 %v5866
    %v6653 = vunpack.c.h.b16 %v5866
    %v6654 = vunpack.c.l.b16 %v5867
    %v6655 = vunpack.c.h.b16 %v5867
    %v6656 = vunpack.c.l.b16 %v5868
    %v6657 = vunpack.c.h.b16 %v5868
    %v6658 = vunpack.c.l.b16 %v5869
    %v6659 = vunpack.c.h.b16 %v5869
    %v6660 = vpack.c.b16 %v6152, %v6148
    %v6661 = vpack.c.b16 %v6153, %v6149
    %v6662 = vpack.c.b16 %v6154, %v6150
    %v6663 = vpack.c.b16 %v6155, %v6151
    %v6664 = vpack.c.b16 %v6160, %v6156
    %v6665 = vpack.c.b16 %v6161, %v6157
    %v6666 = vpack.c.b16 %v6162, %v6158
    %v6667 = vpack.c.b16 %v6163, %v6159
    %v6668 = vpack.c.b16 %v6168, %v6164
    %v6669 = vpack.c.b16 %v6169, %v6165
    %v6670 = vpack.c.b16 %v6170, %v6166
    %v6671 = vpack.c.b16 %v6171, %v6167
    %v6672 = vpack.c.b16 %v6176, %v6172
    %v6673 = vpack.c.b16 %v6177, %v6173
    %v6674 = vpack.c.b16 %v6178, %v6174
    %v6675 = vpack.c.b16 %v6179, %v6175
    %v6676 = vpack.c.b16 %v6184, %v6180
    %v6677 = vpack.c.b16 %v6185, %v6181
    %v6678 = vpack.c.b16 %v6186, %v6182
    %v6679 = vpack.c.b16 %v6187, %v6183
    %v6680 = vpack.c.b16 %v6192, %v6188
    %v6681 = vpack.c.b16 %v6193, %v6189
    %v6682 = vpack.c.b16 %v6194, %v6190
    %v6683 = vpack.c.b16 %v6195, %v6191
    %v6684 = vpack.c.b16 %v6200, %v6196
    %v6685 = vpack.c.b16 %v6201, %v6197
    %v6686 = vpack.c.b16 %v6202, %v6198
    %v6687 = vpack.c.b16 %v6203, %v6199
    %v6688 = vpack.c.b16 %v6208, %v6204
    %v6689 = vpack.c.b16 %v6209, %v6205
    %v6690 = vpack.c.b16 %v6210, %v6206
    %v6691 = vpack.c.b16 %v6211, %v6207
    %v6692 = vpack.c.b16 %v6216, %v6212
    %v6693 = vpack.c.b16 %v6217, %v6213
    %v6694 = vpack.c.b16 %v6218, %v6214
    %v6695 = vpack.c.b16 %v6219, %v6215
    %v6696 = vpack.c.b16 %v6224, %v6220
    %v6697 = vpack.c.b16 %v6225, %v6221
    %v6698 = vpack.c.b16 %v6226, %v6222
    %v6699 = vpack.c.b16 %v6227, %v6223
    %v6700 = vpack.c.b16 %v6232, %v6228
    %v6701 = vpack.c.b16 %v6233, %v6229
    %v6702 = vpack.c.b16 %v6234, %v6230
    %v6703 = vpack.c.b16 %v6235, %v6231
    %v6704 = vpack.c.b16 %v6240, %v6236
    %v6705 = vpack.c.b16 %v6241, %v6237
    %v6706 = vpack.c.b16 %v6242, %v6238
    %v6707 = vpack.c.b16 %v6243, %v6239
    %v6708 = vpack.c.b16 %v6248, %v6244
    %v6709 = vpack.c.b16 %v6249, %v6245
    %v6710 = vpack.c.b16 %v6250, %v6246
    %v6711 = vpack.c.b16 %v6251, %v6247
    %v6712 = vpack.c.b16 %v6256, %v6252
    %v6713 = vpack.c.b16 %v6257, %v6253
    %v6714 = vpack.c.b16 %v6258, %v6254
    %v6715 = vpack.c.b16 %v6259, %v6255
    %v6716 = vpack.c.b16 %v6264, %v6260
    %v6717 = vpack.c.b16 %v6265, %v6261
    %v6718 = vpack.c.b16 %v6266, %v6262
    %v6719 = vpack.c.b16 %v6267, %v6263
    %v6720 = vpack.c.b16 %v6272, %v6268
    %v6721 = vpack.c.b16 %v6273, %v6269
    %v6722 = vpack.c.b16 %v6274, %v6270
    %v6723 = vpack.c.b16 %v6275, %v6271
    %v6724 = vpack.c.b16 %v6280, %v6276
    %v6725 = vpack.c.b16 %v6281, %v6277
    %v6726 = vpack.c.b16 %v6282, %v6278
    %v6727 = vpack.c.b16 %v6283, %v6279
    %v6728 = vpack.c.b16 %v6288, %v6284
    %v6729 = vpack.c.b16 %v6289, %v6285
    %v6730 = vpack.c.b16 %v6290, %v6286
    %v6731 = vpack.c.b16 %v6291, %v6287
    %v6732 = vpack.c.b16 %v6296, %v6292
    %v6733 = vpack.c.b16 %v6297, %v6293
    %v6734 = vpack.c.b16 %v6298, %v6294
    %v6735 = vpack.c.b16 %v6299, %v6295
    %v6736 = vpack.c.b16 %v6304, %v6300
    %v6737 = vpack.c.b16 %v6305, %v6301
    %v6738 = vpack.c.b16 %v6306, %v6302
    %v6739 = vpack.c.b16 %v6307, %v6303
    %v6740 = vpack.c.b16 %v6312, %v6308
    %v6741 = vpack.c.b16 %v6313, %v6309
    %v6742 = vpack.c.b16 %v6314, %v6310
    %v6743 = vpack.c.b16 %v6315, %v6311
    %v6744 = vpack.c.b16 %v6320, %v6316
    %v6745 = vpack.c.b16 %v6321, %v6317
    %v6746 = vpack.c.b16 %v6322, %v6318
    %v6747 = vpack.c.b16 %v6323, %v6319
    %v6748 = vpack.c.b16 %v6328, %v6324
    %v6749 = vpack.c.b16 %v6329, %v6325
    %v6750 = vpack.c.b16 %v6330, %v6326
    %v6751 = vpack.c.b16 %v6331, %v6327
    %v6752 = vpack.c.b16 %v6336, %v6332
    %v6753 = vpack.c.b16 %v6337, %v6333
    %v6754 = vpack.c.b16 %v6338, %v6334
    %v6755 = vpack.c.b16 %v6339, %v6335
    %v6756 = vpack.c.b16 %v6344, %v6340
    %v6757 = vpack.c.b16 %v6345, %v6341
    %v6758 = vpack.c.b16 %v6346, %v6342
    %v6759 = vpack.c.b16 %v6347, %v6343
    %v6760 = vpack.c.b16 %v6352, %v6348
    %v6761 = vpack.c.b16 %v6353, %v6349
    %v6762 = vpack.c.b16 %v6354, %v6350
    %v6763 = vpack.c.b16 %v6355, %v6351
    %v6764 = vpack.c.b16 %v6360, %v6356
    %v6765 = vpack.c.b16 %v6361, %v6357
    %v6766 = vpack.c.b16 %v6362, %v6358
    %v6767 = vpack.c.b16 %v6363, %v6359
    %v6768 = vpack.c.b16 %v6368, %v6364
    %v6769 = vpack.c.b16 %v6369, %v6365
    %v6770 = vpack.c.b16 %v6370, %v6366
    %v6771 = vpack.c.b16 %v6371, %v6367
    %v6772 = vpack.c.b16 %v6376, %v6372
    %v6773 = vpack.c.b16 %v6377, %v6373
    %v6774 = vpack.c.b16 %v6378, %v6374
    %v6775 = vpack.c.b16 %v6379, %v6375
    %v6776 = vpack.c.b16 %v6384, %v6380
    %v6777 = vpack.c.b16 %v6385, %v6381
    %v6778 = vpack.c.b16 %v6386, %v6382
    %v6779 = vpack.c.b16 %v6387, %v6383
    %v6780 = vpack.c.b16 %v6392, %v6388
    %v6781 = vpack.c.b16 %v6393, %v6389
    %v6782 = vpack.c.b16 %v6394, %v6390
    %v6783 = vpack.c.b16 %v6395, %v6391
    %v6784 = vpack.c.b16 %v6400, %v6396
    %v6785 = vpack.c.b16 %v6401, %v6397
    %v6786 = vpack.c.b16 %v6402, %v6398
    %v6787 = vpack.c.b16 %v6403, %v6399
    %v6788 = vpack.c.b16 %v6408, %v6404
    %v6789 = vpack.c.b16 %v6409, %v6405
    %v6790 = vpack.c.b16 %v6410, %v6406
    %v6791 = vpack.c.b16 %v6411, %v6407
    %v6792 = vpack.c.b16 %v6416, %v6412
    %v6793 = vpack.c.b16 %v6417, %v6413
    %v6794 = vpack.c.b16 %v6418, %v6414
    %v6795 = vpack.c.b16 %v6419, %v6415
    %v6796 = vpack.c.b16 %v6424, %v6420
    %v6797 = vpack.c.b16 %v6425, %v6421
    %v6798 = vpack.c.b16 %v6426, %v6422
    %v6799 = vpack.c.b16 %v6427, %v6423
    %v6800 = vpack.c.b16 %v6432, %v6428
    %v6801 = vpack.c.b16 %v6433, %v6429
    %v6802 = vpack.c.b16 %v6434, %v6430
    %v6803 = vpack.c.b16 %v6435, %v6431
    %v6804 = vpack.c.b16 %v6440, %v6436
    %v6805 = vpack.c.b16 %v6441, %v6437
    %v6806 = vpack.c.b16 %v6442, %v6438
    %v6807 = vpack.c.b16 %v6443, %v6439
    %v6808 = vpack.c.b16 %v6448, %v6444
    %v6809 = vpack.c.b16 %v6449, %v6445
    %v6810 = vpack.c.b16 %v6450, %v6446
    %v6811 = vpack.c.b16 %v6451, %v6447
    %v6812 = vpack.c.b16 %v6456, %v6452
    %v6813 = vpack.c.b16 %v6457, %v6453
    %v6814 = vpack.c.b16 %v6458, %v6454
    %v6815 = vpack.c.b16 %v6459, %v6455
    %v6816 = vpack.c.b16 %v6464, %v6460
    %v6817 = vpack.c.b16 %v6465, %v6461
    %v6818 = vpack.c.b16 %v6466, %v6462
    %v6819 = vpack.c.b16 %v6467, %v6463
    %v6820 = vpack.c.b16 %v6472, %v6468
    %v6821 = vpack.c.b16 %v6473, %v6469
    %v6822 = vpack.c.b16 %v6474, %v6470
    %v6823 = vpack.c.b16 %v6475, %v6471
    %v6824 = vpack.c.b16 %v6480, %v6476
    %v6825 = vpack.c.b16 %v6481, %v6477
    %v6826 = vpack.c.b16 %v6482, %v6478
    %v6827 = vpack.c.b16 %v6483, %v6479
    %v6828 = vpack.c.b16 %v6488, %v6484
    %v6829 = vpack.c.b16 %v6489, %v6485
    %v6830 = vpack.c.b16 %v6490, %v6486
    %v6831 = vpack.c.b16 %v6491, %v6487
    %v6832 = vpack.c.b16 %v6496, %v6492
    %v6833 = vpack.c.b16 %v6497, %v6493
    %v6834 = vpack.c.b16 %v6498, %v6494
    %v6835 = vpack.c.b16 %v6499, %v6495
    %v6836 = vpack.c.b16 %v6504, %v6500
    %v6837 = vpack.c.b16 %v6505, %v6501
    %v6838 = vpack.c.b16 %v6506, %v6502
    %v6839 = vpack.c.b16 %v6507, %v6503
    %v6840 = vpack.c.b16 %v6512, %v6508
    %v6841 = vpack.c.b16 %v6513, %v6509
    %v6842 = vpack.c.b16 %v6514, %v6510
    %v6843 = vpack.c.b16 %v6515, %v6511
    %v6844 = vpack.c.b16 %v6520, %v6516
    %v6845 = vpack.c.b16 %v6521, %v6517
    %v6846 = vpack.c.b16 %v6522, %v6518
    %v6847 = vpack.c.b16 %v6523, %v6519
    %v6848 = vpack.c.b16 %v6528, %v6524
    %v6849 = vpack.c.b16 %v6529, %v6525
    %v6850 = vpack.c.b16 %v6530, %v6526
    %v6851 = vpack.c.b16 %v6531, %v6527
    %v6852 = vpack.c.b16 %v6536, %v6532
    %v6853 = vpack.c.b16 %v6537, %v6533
    %v6854 = vpack.c.b16 %v6538, %v6534
    %v6855 = vpack.c.b16 %v6539, %v6535
    %v6856 = vpack.c.b16 %v6544, %v6540
    %v6857 = vpack.c.b16 %v6545, %v6541
    %v6858 = vpack.c.b16 %v6546, %v6542
    %v6859 = vpack.c.b16 %v6547, %v6543
    %v6860 = vpack.c.b16 %v6552, %v6548
    %v6861 = vpack.c.b16 %v6553, %v6549
    %v6862 = vpack.c.b16 %v6554, %v6550
    %v6863 = vpack.c.b16 %v6555, %v6551
    %v6864 = vpack.c.b16 %v6560, %v6556
    %v6865 = vpack.c.b16 %v6561, %v6557
    %v6866 = vpack.c.b16 %v6562, %v6558
    %v6867 = vpack.c.b16 %v6563, %v6559
    %v6868 = vpack.c.b16 %v6568, %v6564
    %v6869 = vpack.c.b16 %v6569, %v6565
    %v6870 = vpack.c.b16 %v6570, %v6566
    %v6871 = vpack.c.b16 %v6571, %v6567
    %v6872 = vpack.c.b16 %v6576, %v6572
    %v6873 = vpack.c.b16 %v6577, %v6573
    %v6874 = vpack.c.b16 %v6578, %v6574
    %v6875 = vpack.c.b16 %v6579, %v6575
    %v6876 = vpack.c.b16 %v6584, %v6580
    %v6877 = vpack.c.b16 %v6585, %v6581
    %v6878 = vpack.c.b16 %v6586, %v6582
    %v6879 = vpack.c.b16 %v6587, %v6583
    %v6880 = vpack.c.b16 %v6592, %v6588
    %v6881 = vpack.c.b16 %v6593, %v6589
    %v6882 = vpack.c.b16 %v6594, %v6590
    %v6883 = vpack.c.b16 %v6595, %v6591
    %v6884 = vpack.c.b16 %v6600, %v6596
    %v6885 = vpack.c.b16 %v6601, %v6597
    %v6886 = vpack.c.b16 %v6602, %v6598
    %v6887 = vpack.c.b16 %v6603, %v6599
    %v6888 = vpack.c.b16 %v6608, %v6604
    %v6889 = vpack.c.b16 %v6609, %v6605
    %v6890 = vpack.c.b16 %v6610, %v6606
    %v6891 = vpack.c.b16 %v6611, %v6607
    %v6892 = vpack.c.b16 %v6616, %v6612
    %v6893 = vpack.c.b16 %v6617, %v6613
    %v6894 = vpack.c.b16 %v6618, %v6614
    %v6895 = vpack.c.b16 %v6619, %v6615
    %v6896 = vpack.c.b16 %v6624, %v6620
    %v6897 = vpack.c.b16 %v6625, %v6621
    %v6898 = vpack.c.b16 %v6626, %v6622
    %v6899 = vpack.c.b16 %v6627, %v6623
    %v6900 = vpack.c.b16 %v6632, %v6628
    %v6901 = vpack.c.b16 %v6633, %v6629
    %v6902 = vpack.c.b16 %v6634, %v6630
    %v6903 = vpack.c.b16 %v6635, %v6631
    %v6904 = vpack.c.b16 %v6640, %v6636
    %v6905 = vpack.c.b16 %v6641, %v6637
    %v6906 = vpack.c.b16 %v6642, %v6638
    %v6907 = vpack.c.b16 %v6643, %v6639
    %v6908 = vpack.c.b16 %v6648, %v6644
    %v6909 = vpack.c.b16 %v6649, %v6645
    %v6910 = vpack.c.b16 %v6650, %v6646
    %v6911 = vpack.c.b16 %v6651, %v6647
    %v6912 = vpack.c.b16 %v6656, %v6652
    %v6913 = vpack.c.b16 %v6657, %v6653
    %v6914 = vpack.c.b16 %v6658, %v6654
    %v6915 = vpack.c.b16 %v6659, %v6655
    %7172 = vmatprep.subr.bf16.mxu0 %v6689
    %7173 = vmatpush1.bf16.msra.mxu0 %v6688
    %7174 = vmatprep.subr.bf16.mxu0 %v6685
    %7175 = vmatpush1.bf16.msra.mxu0 %v6684
    %7176 = vmatprep.subr.bf16.mxu0 %v6681
    %7177 = vmatpush1.bf16.msra.mxu0 %v6680
    %7178 = vmatprep.subr.bf16.mxu0 %v6677
    %7179 = vmatpush1.bf16.msra.mxu0 %v6676
    %7180 = vmatprep.subr.bf16.mxu0 %v6673
    %7181 = vmatpush1.bf16.msra.mxu0 %v6672
    %7182 = vmatprep.subr.bf16.mxu0 %v6669
    %7183 = vmatpush1.bf16.msra.mxu0 %v6668
    %7184 = vmatprep.subr.bf16.mxu0 %v6665
    %7185 = vmatpush1.bf16.msra.mxu0 %v6664
    %7186 = vmatprep.subr.bf16.mxu0 %v6661
    %7187 = vmatpush1.bf16.msra.mxu0 %v6660
    %7188 = vmatprep.subr.bf16.mxu0 %v6721
    %7189 = vmatpush2.bf16.msra.mxu0 %v6720
    %7190 = vmatprep.subr.bf16.mxu0 %v6717
    %7191 = vmatpush2.bf16.msra.mxu0 %v6716
    %7192 = vmatprep.subr.bf16.mxu0 %v6713
    %7193 = vmatpush2.bf16.msra.mxu0 %v6712
    %7194 = vmatprep.subr.bf16.mxu0 %v6709
    %7195 = vmatpush2.bf16.msra.mxu0 %v6708
    %7196 = vmatprep.subr.bf16.mxu0 %v6705
    %7197 = vmatpush2.bf16.msra.mxu0 %v6704
    %7198 = vmatprep.subr.bf16.mxu0 %v6701
    %7199 = vmatpush2.bf16.msra.mxu0 %v6700
    %7200 = vmatprep.subr.bf16.mxu0 %v6697
    %7201 = vmatpush2.bf16.msra.mxu0 %v6696
    %7202 = vmatprep.subr.bf16.mxu0 %v6693
    %7203 = vmatpush2.bf16.msra.mxu0 %v6692
    %7204 = vmatprep.mubr.bf16.mxu0 %v3617
    %7205 = vmatmul.mubr.bf16.gmra.mxu0 %v3616
    %v7206 = vpop.f32.mrf.mxu0
    %v7207 = vadd.f32 %v5875, %v7206
    %v7208 = vpop.f32.mrf.mxu0
    %v7209 = vadd.f32 %v5879, %v7208
    %v7210 = vpop.f32.mrf.mxu0
    %v7211 = vadd.f32 %v5875, %v7210
    %v7212 = vpop.f32.mrf.mxu0
    %v7213 = vadd.f32 %v5879, %v7212
    %7214 = vdwg.mxu0
    %7215 = vmatprep.subr.bf16.mxu0 %v6753
    %7216 = vmatpush1.bf16.msra.mxu0 %v6752
    %7217 = vmatprep.subr.bf16.mxu0 %v6749
    %7218 = vmatpush1.bf16.msra.mxu0 %v6748
    %7219 = vmatprep.subr.bf16.mxu0 %v6745
    %7220 = vmatpush1.bf16.msra.mxu0 %v6744
    %7221 = vmatprep.subr.bf16.mxu0 %v6741
    %7222 = vmatpush1.bf16.msra.mxu0 %v6740
    %7223 = vmatprep.subr.bf16.mxu0 %v6737
    %7224 = vmatpush1.bf16.msra.mxu0 %v6736
    %7225 = vmatprep.subr.bf16.mxu0 %v6733
    %7226 = vmatpush1.bf16.msra.mxu0 %v6732
    %7227 = vmatprep.subr.bf16.mxu0 %v6729
    %7228 = vmatpush1.bf16.msra.mxu0 %v6728
    %7229 = vmatprep.subr.bf16.mxu0 %v6725
    %7230 = vmatpush1.bf16.msra.mxu0 %v6724
    %7231 = vmatprep.subr.bf16.mxu0 %v6785
    %7232 = vmatpush2.bf16.msra.mxu0 %v6784
    %7233 = vmatprep.subr.bf16.mxu0 %v6781
    %7234 = vmatpush2.bf16.msra.mxu0 %v6780
    %7235 = vmatprep.subr.bf16.mxu0 %v6777
    %7236 = vmatpush2.bf16.msra.mxu0 %v6776
    %7237 = vmatprep.subr.bf16.mxu0 %v6773
    %7238 = vmatpush2.bf16.msra.mxu0 %v6772
    %7239 = vmatprep.subr.bf16.mxu0 %v6769
    %7240 = vmatpush2.bf16.msra.mxu0 %v6768
    %7241 = vmatprep.subr.bf16.mxu0 %v6765
    %7242 = vmatpush2.bf16.msra.mxu0 %v6764
    %7243 = vmatprep.subr.bf16.mxu0 %v6761
    %7244 = vmatpush2.bf16.msra.mxu0 %v6760
    %7245 = vmatprep.subr.bf16.mxu0 %v6757
    %7246 = vmatpush2.bf16.msra.mxu0 %v6756
    %7247 = vmatprep.mubr.bf16.mxu0 %v3619
    %7248 = vmatmul.mubr.bf16.gmra.mxu0 %v3618
    %v7249 = vpop.f32.mrf.mxu0
    %v7250 = vadd.f32 %v7207, %v7249
    %v7251 = vpop.f32.mrf.mxu0
    %v7252 = vadd.f32 %v7209, %v7251
    %v7253 = vpop.f32.mrf.mxu0
    %v7254 = vadd.f32 %v7211, %v7253
    %v7255 = vpop.f32.mrf.mxu0
    %v7256 = vadd.f32 %v7213, %v7255
    %7257 = vdwg.mxu0
    %7258 = vmatprep.subr.bf16.mxu0 %v6817
    %7259 = vmatpush1.bf16.msra.mxu0 %v6816
    %7260 = vmatprep.subr.bf16.mxu0 %v6813
    %7261 = vmatpush1.bf16.msra.mxu0 %v6812
    %7262 = vmatprep.subr.bf16.mxu0 %v6809
    %7263 = vmatpush1.bf16.msra.mxu0 %v6808
    %7264 = vmatprep.subr.bf16.mxu0 %v6805
    %7265 = vmatpush1.bf16.msra.mxu0 %v6804
    %7266 = vmatprep.subr.bf16.mxu0 %v6801
    %7267 = vmatpush1.bf16.msra.mxu0 %v6800
    %7268 = vmatprep.subr.bf16.mxu0 %v6797
    %7269 = vmatpush1.bf16.msra.mxu0 %v6796
    %7270 = vmatprep.subr.bf16.mxu0 %v6793
    %7271 = vmatpush1.bf16.msra.mxu0 %v6792
    %7272 = vmatprep.subr.bf16.mxu0 %v6789
    %7273 = vmatpush1.bf16.msra.mxu0 %v6788
    %7274 = vmatprep.subr.bf16.mxu0 %v6849
    %7275 = vmatpush2.bf16.msra.mxu0 %v6848
    %7276 = vmatprep.subr.bf16.mxu0 %v6845
    %7277 = vmatpush2.bf16.msra.mxu0 %v6844
    %7278 = vmatprep.subr.bf16.mxu0 %v6841
    %7279 = vmatpush2.bf16.msra.mxu0 %v6840
    %7280 = vmatprep.subr.bf16.mxu0 %v6837
    %7281 = vmatpush2.bf16.msra.mxu0 %v6836
    %7282 = vmatprep.subr.bf16.mxu0 %v6833
    %7283 = vmatpush2.bf16.msra.mxu0 %v6832
    %7284 = vmatprep.subr.bf16.mxu0 %v6829
    %7285 = vmatpush2.bf16.msra.mxu0 %v6828
    %7286 = vmatprep.subr.bf16.mxu0 %v6825
    %7287 = vmatpush2.bf16.msra.mxu0 %v6824
    %7288 = vmatprep.subr.bf16.mxu0 %v6821
    %7289 = vmatpush2.bf16.msra.mxu0 %v6820
    %7290 = vmatprep.mubr.bf16.mxu0 %v3621
    %7291 = vmatmul.mubr.bf16.gmra.mxu0 %v3620
    %v7292 = vpop.f32.mrf.mxu0
    %v7293 = vadd.f32 %v7250, %v7292
    %v7294 = vpop.f32.mrf.mxu0
    %v7295 = vadd.f32 %v7252, %v7294
    %v7296 = vpop.f32.mrf.mxu0
    %v7297 = vadd.f32 %v7254, %v7296
    %v7298 = vpop.f32.mrf.mxu0
    %v7299 = vadd.f32 %v7256, %v7298
    %7300 = vdwg.mxu0
    %7301 = vmatprep.subr.bf16.mxu0 %v6881
    %7302 = vmatpush1.bf16.msra.mxu0 %v6880
    %7303 = vmatprep.subr.bf16.mxu0 %v6877
    %7304 = vmatpush1.bf16.msra.mxu0 %v6876
    %7305 = vmatprep.subr.bf16.mxu0 %v6873
    %7306 = vmatpush1.bf16.msra.mxu0 %v6872
    %7307 = vmatprep.subr.bf16.mxu0 %v6869
    %7308 = vmatpush1.bf16.msra.mxu0 %v6868
    %7309 = vmatprep.subr.bf16.mxu0 %v6865
    %7310 = vmatpush1.bf16.msra.mxu0 %v6864
    %7311 = vmatprep.subr.bf16.mxu0 %v6861
    %7312 = vmatpush1.bf16.msra.mxu0 %v6860
    %7313 = vmatprep.subr.bf16.mxu0 %v6857
    %7314 = vmatpush1.bf16.msra.mxu0 %v6856
    %7315 = vmatprep.subr.bf16.mxu0 %v6853
    %7316 = vmatpush1.bf16.msra.mxu0 %v6852
    %7317 = vmatprep.subr.bf16.mxu0 %v6913
    %7318 = vmatpush2.bf16.msra.mxu0 %v6912
    %7319 = vmatprep.subr.bf16.mxu0 %v6909
    %7320 = vmatpush2.bf16.msra.mxu0 %v6908
    %7321 = vmatprep.subr.bf16.mxu0 %v6905
    %7322 = vmatpush2.bf16.msra.mxu0 %v6904
    %7323 = vmatprep.subr.bf16.mxu0 %v6901
    %7324 = vmatpush2.bf16.msra.mxu0 %v6900
    %7325 = vmatprep.subr.bf16.mxu0 %v6897
    %7326 = vmatpush2.bf16.msra.mxu0 %v6896
    %7327 = vmatprep.subr.bf16.mxu0 %v6893
    %7328 = vmatpush2.bf16.msra.mxu0 %v6892
    %7329 = vmatprep.subr.bf16.mxu0 %v6889
    %7330 = vmatpush2.bf16.msra.mxu0 %v6888
    %7331 = vmatprep.subr.bf16.mxu0 %v6885
    %7332 = vmatpush2.bf16.msra.mxu0 %v6884
    %7333 = vmatprep.mubr.bf16.mxu0 %v3623
    %7334 = vmatmul.mubr.bf16.gmra.mxu0 %v3622
    %v7335 = vpop.f32.mrf.mxu0
    %v7336 = vadd.f32 %v7293, %v7335
    %v7337 = vpop.f32.mrf.mxu0
    %v7338 = vadd.f32 %v7295, %v7337
    %v7339 = vpop.f32.mrf.mxu0
    %v7340 = vadd.f32 %v7297, %v7339
    %v7341 = vpop.f32.mrf.mxu0
    %v7342 = vadd.f32 %v7299, %v7341
    %7343 = vdwg.mxu0
    %7344 = vmatprep.subr.bf16.mxu0 %v6691
    %7345 = vmatpush1.bf16.msra.mxu0 %v6690
    %7346 = vmatprep.subr.bf16.mxu0 %v6687
    %7347 = vmatpush1.bf16.msra.mxu0 %v6686
    %7348 = vmatprep.subr.bf16.mxu0 %v6683
    %7349 = vmatpush1.bf16.msra.mxu0 %v6682
    %7350 = vmatprep.subr.bf16.mxu0 %v6679
    %7351 = vmatpush1.bf16.msra.mxu0 %v6678
    %7352 = vmatprep.subr.bf16.mxu0 %v6675
    %7353 = vmatpush1.bf16.msra.mxu0 %v6674
    %7354 = vmatprep.subr.bf16.mxu0 %v6671
    %7355 = vmatpush1.bf16.msra.mxu0 %v6670
    %7356 = vmatprep.subr.bf16.mxu0 %v6667
    %7357 = vmatpush1.bf16.msra.mxu0 %v6666
    %7358 = vmatprep.subr.bf16.mxu0 %v6663
    %7359 = vmatpush1.bf16.msra.mxu0 %v6662
    %7360 = vmatprep.subr.bf16.mxu0 %v6723
    %7361 = vmatpush2.bf16.msra.mxu0 %v6722
    %7362 = vmatprep.subr.bf16.mxu0 %v6719
    %7363 = vmatpush2.bf16.msra.mxu0 %v6718
    %7364 = vmatprep.subr.bf16.mxu0 %v6715
    %7365 = vmatpush2.bf16.msra.mxu0 %v6714
    %7366 = vmatprep.subr.bf16.mxu0 %v6711
    %7367 = vmatpush2.bf16.msra.mxu0 %v6710
    %7368 = vmatprep.subr.bf16.mxu0 %v6707
    %7369 = vmatpush2.bf16.msra.mxu0 %v6706
    %7370 = vmatprep.subr.bf16.mxu0 %v6703
    %7371 = vmatpush2.bf16.msra.mxu0 %v6702
    %7372 = vmatprep.subr.bf16.mxu0 %v6699
    %7373 = vmatpush2.bf16.msra.mxu0 %v6698
    %7374 = vmatprep.subr.bf16.mxu0 %v6695
    %7375 = vmatpush2.bf16.msra.mxu0 %v6694
    %7376 = vmatprep.mubr.bf16.mxu0 %v3617
    %7377 = vmatmul.mubr.bf16.gmra.mxu0 %v3616
    %v7378 = vpop.f32.mrf.mxu0
    %v7379 = vadd.f32 %v5883, %v7378
    %v7380 = vpop.f32.mrf.mxu0
    %v7381 = vadd.f32 %v5887, %v7380
    %v7382 = vpop.f32.mrf.mxu0
    %v7383 = vadd.f32 %v5883, %v7382
    %v7384 = vpop.f32.mrf.mxu0
    %v7385 = vadd.f32 %v5887, %v7384
    %7386 = vdwg.mxu0
    %7387 = vmatprep.subr.bf16.mxu0 %v6755
    %7388 = vmatpush1.bf16.msra.mxu0 %v6754
    %7389 = vmatprep.subr.bf16.mxu0 %v6751
    %7390 = vmatpush1.bf16.msra.mxu0 %v6750
    %7391 = vmatprep.subr.bf16.mxu0 %v6747
    %7392 = vmatpush1.bf16.msra.mxu0 %v6746
    %7393 = vmatprep.subr.bf16.mxu0 %v6743
    %7394 = vmatpush1.bf16.msra.mxu0 %v6742
    %7395 = vmatprep.subr.bf16.mxu0 %v6739
    %7396 = vmatpush1.bf16.msra.mxu0 %v6738
    %7397 = vmatprep.subr.bf16.mxu0 %v6735
    %7398 = vmatpush1.bf16.msra.mxu0 %v6734
    %7399 = vmatprep.subr.bf16.mxu0 %v6731
    %7400 = vmatpush1.bf16.msra.mxu0 %v6730
    %7401 = vmatprep.subr.bf16.mxu0 %v6727
    %7402 = vmatpush1.bf16.msra.mxu0 %v6726
    %7403 = vmatprep.subr.bf16.mxu0 %v6787
    %7404 = vmatpush2.bf16.msra.mxu0 %v6786
    %7405 = vmatprep.subr.bf16.mxu0 %v6783
    %7406 = vmatpush2.bf16.msra.mxu0 %v6782
    %7407 = vmatprep.subr.bf16.mxu0 %v6779
    %7408 = vmatpush2.bf16.msra.mxu0 %v6778
    %7409 = vmatprep.subr.bf16.mxu0 %v6775
    %7410 = vmatpush2.bf16.msra.mxu0 %v6774
    %7411 = vmatprep.subr.bf16.mxu0 %v6771
    %7412 = vmatpush2.bf16.msra.mxu0 %v6770
    %7413 = vmatprep.subr.bf16.mxu0 %v6767
    %7414 = vmatpush2.bf16.msra.mxu0 %v6766
    %7415 = vmatprep.subr.bf16.mxu0 %v6763
    %7416 = vmatpush2.bf16.msra.mxu0 %v6762
    %7417 = vmatprep.subr.bf16.mxu0 %v6759
    %7418 = vmatpush2.bf16.msra.mxu0 %v6758
    %7419 = vmatprep.mubr.bf16.mxu0 %v3619
    %7420 = vmatmul.mubr.bf16.gmra.mxu0 %v3618
    %v7421 = vpop.f32.mrf.mxu0
    %v7422 = vadd.f32 %v7379, %v7421
    %v7423 = vpop.f32.mrf.mxu0
    %v7424 = vadd.f32 %v7381, %v7423
    %v7425 = vpop.f32.mrf.mxu0
    %v7426 = vadd.f32 %v7383, %v7425
    %v7427 = vpop.f32.mrf.mxu0
    %v7428 = vadd.f32 %v7385, %v7427
    %7429 = vdwg.mxu0
    %7430 = vmatprep.subr.bf16.mxu0 %v6819
    %7431 = vmatpush1.bf16.msra.mxu0 %v6818
    %7432 = vmatprep.subr.bf16.mxu0 %v6815
    %7433 = vmatpush1.bf16.msra.mxu0 %v6814
    %7434 = vmatprep.subr.bf16.mxu0 %v6811
    %7435 = vmatpush1.bf16.msra.mxu0 %v6810
    %7436 = vmatprep.subr.bf16.mxu0 %v6807
    %7437 = vmatpush1.bf16.msra.mxu0 %v6806
    %7438 = vmatprep.subr.bf16.mxu0 %v6803
    %7439 = vmatpush1.bf16.msra.mxu0 %v6802
    %7440 = vmatprep.subr.bf16.mxu0 %v6799
    %7441 = vmatpush1.bf16.msra.mxu0 %v6798
    %7442 = vmatprep.subr.bf16.mxu0 %v6795
    %7443 = vmatpush1.bf16.msra.mxu0 %v6794
    %7444 = vmatprep.subr.bf16.mxu0 %v6791
    %7445 = vmatpush1.bf16.msra.mxu0 %v6790
    %7446 = vmatprep.subr.bf16.mxu0 %v6851
    %7447 = vmatpush2.bf16.msra.mxu0 %v6850
    %7448 = vmatprep.subr.bf16.mxu0 %v6847
    %7449 = vmatpush2.bf16.msra.mxu0 %v6846
    %7450 = vmatprep.subr.bf16.mxu0 %v6843
    %7451 = vmatpush2.bf16.msra.mxu0 %v6842
    %7452 = vmatprep.subr.bf16.mxu0 %v6839
    %7453 = vmatpush2.bf16.msra.mxu0 %v6838
    %7454 = vmatprep.subr.bf16.mxu0 %v6835
    %7455 = vmatpush2.bf16.msra.mxu0 %v6834
    %7456 = vmatprep.subr.bf16.mxu0 %v6831
    %7457 = vmatpush2.bf16.msra.mxu0 %v6830
    %7458 = vmatprep.subr.bf16.mxu0 %v6827
    %7459 = vmatpush2.bf16.msra.mxu0 %v6826
    %7460 = vmatprep.subr.bf16.mxu0 %v6823
    %7461 = vmatpush2.bf16.msra.mxu0 %v6822
    %7462 = vmatprep.mubr.bf16.mxu0 %v3621
    %7463 = vmatmul.mubr.bf16.gmra.mxu0 %v3620
    %v7464 = vpop.f32.mrf.mxu0
    %v7465 = vadd.f32 %v7422, %v7464
    %v7466 = vpop.f32.mrf.mxu0
    %v7467 = vadd.f32 %v7424, %v7466
    %v7468 = vpop.f32.mrf.mxu0
    %v7469 = vadd.f32 %v7426, %v7468
    %v7470 = vpop.f32.mrf.mxu0
    %v7471 = vadd.f32 %v7428, %v7470
    %7472 = vdwg.mxu0
    %7473 = vmatprep.subr.bf16.mxu0 %v6883
    %7474 = vmatpush1.bf16.msra.mxu0 %v6882
    %7475 = vmatprep.subr.bf16.mxu0 %v6879
    %7476 = vmatpush1.bf16.msra.mxu0 %v6878
    %7477 = vmatprep.subr.bf16.mxu0 %v6875
    %7478 = vmatpush1.bf16.msra.mxu0 %v6874
    %7479 = vmatprep.subr.bf16.mxu0 %v6871
    %7480 = vmatpush1.bf16.msra.mxu0 %v6870
    %7481 = vmatprep.subr.bf16.mxu0 %v6867
    %7482 = vmatpush1.bf16.msra.mxu0 %v6866
    %7483 = vmatprep.subr.bf16.mxu0 %v6863
    %7484 = vmatpush1.bf16.msra.mxu0 %v6862
    %7485 = vmatprep.subr.bf16.mxu0 %v6859
    %7486 = vmatpush1.bf16.msra.mxu0 %v6858
    %7487 = vmatprep.subr.bf16.mxu0 %v6855
    %7488 = vmatpush1.bf16.msra.mxu0 %v6854
    %7489 = vmatprep.subr.bf16.mxu0 %v6915
    %7490 = vmatpush2.bf16.msra.mxu0 %v6914
    %7491 = vmatprep.subr.bf16.mxu0 %v6911
    %7492 = vmatpush2.bf16.msra.mxu0 %v6910
    %7493 = vmatprep.subr.bf16.mxu0 %v6907
    %7494 = vmatpush2.bf16.msra.mxu0 %v6906
    %7495 = vmatprep.subr.bf16.mxu0 %v6903
    %7496 = vmatpush2.bf16.msra.mxu0 %v6902
    %7497 = vmatprep.subr.bf16.mxu0 %v6899
    %7498 = vmatpush2.bf16.msra.mxu0 %v6898
    %7499 = vmatprep.subr.bf16.mxu0 %v6895
    %7500 = vmatpush2.bf16.msra.mxu0 %v6894
    %7501 = vmatprep.subr.bf16.mxu0 %v6891
    %7502 = vmatpush2.bf16.msra.mxu0 %v6890
    %7503 = vmatprep.subr.bf16.mxu0 %v6887
    %7504 = vmatpush2.bf16.msra.mxu0 %v6886
    %7505 = vmatprep.mubr.bf16.mxu0 %v3623
    %7506 = vmatmul.mubr.bf16.gmra.mxu0 %v3622
    %v7507 = vpop.f32.mrf.mxu0
    %v7508 = vadd.f32 %v7465, %v7507
    %v7509 = vpop.f32.mrf.mxu0
    %v7510 = vadd.f32 %v7467, %v7509
    %v7511 = vpop.f32.mrf.mxu0
    %v7512 = vadd.f32 %v7469, %v7511
    %v7513 = vpop.f32.mrf.mxu0
    %v7514 = vadd.f32 %v7471, %v7513
    %7515 = vdwg.mxu0
    %v7516 = vmax.f32 %v7336, 0.0
    %v7517 = vmax.f32 %v7338, 0.0
    %v7518 = vmax.f32 %v7508, 0.0
    %v7519 = vmax.f32 %v7510, 0.0
    %v7520 = vmax.f32 %v7340, 0.0
    %v7521 = vmax.f32 %v7342, 0.0
    %v7522 = vmax.f32 %v7512, 0.0
    %v7523 = vmax.f32 %v7514, 0.0
    %v7524 = vpack.c.bf16 %v7520, %v7516
    %v7525 = vpack.c.bf16 %v7521, %v7517
    %v7526 = vpack.c.bf16 %v7522, %v7518
    %v7527 = vpack.c.bf16 %v7523, %v7519
    %v7528 = vld [vmem:[#allocation3 + $0x100] sm:$0xf]
    %v7529 = vld [vmem:[#allocation3 + $0x104] sm:$0xf]
    %v7530 = vld [vmem:[#allocation3 + $0x108] sm:$0xf]
    %v7531 = vld [vmem:[#allocation3 + $0x10c] sm:$0xf]
    %v7532 = vld [vmem:[#allocation3 + $0x110] sm:$0xf]
    %v7533 = vld [vmem:[#allocation3 + $0x114] sm:$0xf]
    %v7534 = vld [vmem:[#allocation3 + $0x118] sm:$0xf]
    %v7535 = vld [vmem:[#allocation3 + $0x11c] sm:$0xf]
    %v7536 = vld [vmem:[#allocation3 + $0x120] sm:$0xf]
    %v7537 = vld [vmem:[#allocation3 + $0x124] sm:$0xf]
    %v7538 = vld [vmem:[#allocation3 + $0x128] sm:$0xf]
    %v7539 = vld [vmem:[#allocation3 + $0x12c] sm:$0xf]
    %v7540 = vld [vmem:[#allocation3 + $0x130] sm:$0xf]
    %v7541 = vld [vmem:[#allocation3 + $0x134] sm:$0xf]
    %v7542 = vld [vmem:[#allocation3 + $0x138] sm:$0xf]
    %v7543 = vld [vmem:[#allocation3 + $0x13c] sm:$0xf]
    %v7544 = vld [vmem:[#allocation3 + $0x140] sm:$0xf]
    %v7545 = vld [vmem:[#allocation3 + $0x144] sm:$0xf]
    %v7546 = vld [vmem:[#allocation3 + $0x148] sm:$0xf]
    %v7547 = vld [vmem:[#allocation3 + $0x14c] sm:$0xf]
    %v7548 = vld [vmem:[#allocation3 + $0x150] sm:$0xf]
    %v7549 = vld [vmem:[#allocation3 + $0x154] sm:$0xf]
    %v7550 = vld [vmem:[#allocation3 + $0x158] sm:$0xf]
    %v7551 = vld [vmem:[#allocation3 + $0x15c] sm:$0xf]
    %v7552 = vld [vmem:[#allocation3 + $0x160] sm:$0xf]
    %v7553 = vld [vmem:[#allocation3 + $0x164] sm:$0xf]
    %v7554 = vld [vmem:[#allocation3 + $0x168] sm:$0xf]
    %v7555 = vld [vmem:[#allocation3 + $0x16c] sm:$0xf]
    %v7556 = vld [vmem:[#allocation3 + $0x170] sm:$0xf]
    %v7557 = vld [vmem:[#allocation3 + $0x174] sm:$0xf]
    %v7558 = vld [vmem:[#allocation3 + $0x178] sm:$0xf]
    %v7559 = vld [vmem:[#allocation3 + $0x17c] sm:$0xf]
    %v7560 = vld [vmem:[#allocation3 + $0x180] sm:$0xf]
    %v7561 = vld [vmem:[#allocation3 + $0x184] sm:$0xf]
    %v7562 = vld [vmem:[#allocation3 + $0x188] sm:$0xf]
    %v7563 = vld [vmem:[#allocation3 + $0x18c] sm:$0xf]
    %v7564 = vld [vmem:[#allocation3 + $0x190] sm:$0xf]
    %v7565 = vld [vmem:[#allocation3 + $0x194] sm:$0xf]
    %v7566 = vld [vmem:[#allocation3 + $0x198] sm:$0xf]
    %v7567 = vld [vmem:[#allocation3 + $0x19c] sm:$0xf]
    %v7568 = vld [vmem:[#allocation3 + $0x1a0] sm:$0xf]
    %v7569 = vld [vmem:[#allocation3 + $0x1a4] sm:$0xf]
    %v7570 = vld [vmem:[#allocation3 + $0x1a8] sm:$0xf]
    %v7571 = vld [vmem:[#allocation3 + $0x1ac] sm:$0xf]
    %v7572 = vld [vmem:[#allocation3 + $0x1b0] sm:$0xf]
    %v7573 = vld [vmem:[#allocation3 + $0x1b4] sm:$0xf]
    %v7574 = vld [vmem:[#allocation3 + $0x1b8] sm:$0xf]
    %v7575 = vld [vmem:[#allocation3 + $0x1bc] sm:$0xf]
    %v7576 = vld [vmem:[#allocation3 + $0x1c0] sm:$0xf]
    %v7577 = vld [vmem:[#allocation3 + $0x1c4] sm:$0xf]
    %v7578 = vld [vmem:[#allocation3 + $0x1c8] sm:$0xf]
    %v7579 = vld [vmem:[#allocation3 + $0x1cc] sm:$0xf]
    %v7580 = vld [vmem:[#allocation3 + $0x1d0] sm:$0xf]
    %v7581 = vld [vmem:[#allocation3 + $0x1d4] sm:$0xf]
    %v7582 = vld [vmem:[#allocation3 + $0x1d8] sm:$0xf]
    %v7583 = vld [vmem:[#allocation3 + $0x1dc] sm:$0xf]
    %v7584 = vld [vmem:[#allocation3 + $0x1e0] sm:$0xf]
    %v7585 = vld [vmem:[#allocation3 + $0x1e4] sm:$0xf]
    %v7586 = vld [vmem:[#allocation3 + $0x1e8] sm:$0xf]
    %v7587 = vld [vmem:[#allocation3 + $0x1ec] sm:$0xf]
    %v7588 = vld [vmem:[#allocation3 + $0x1f0] sm:$0xf]
    %v7589 = vld [vmem:[#allocation3 + $0x1f4] sm:$0xf]
    %v7590 = vld [vmem:[#allocation3 + $0x1f8] sm:$0xf]
    %v7591 = vld [vmem:[#allocation3 + $0x1fc] sm:$0xf]
    %v7656 = vunpack.c.l.b16 %v7528
    %v7657 = vunpack.c.l.b16 %v7529
    %v7658 = vunpack.c.l.b16 %v7530
    %v7659 = vunpack.c.l.b16 %v7531
    %v7660 = vunpack.c.l.b16 %v7532
    %v7661 = vunpack.c.l.b16 %v7533
    %v7662 = vunpack.c.l.b16 %v7534
    %v7663 = vunpack.c.l.b16 %v7535
    %v7664 = vunpack.c.l.b16 %v7536
    %v7665 = vunpack.c.l.b16 %v7537
    %v7666 = vunpack.c.l.b16 %v7538
    %v7667 = vunpack.c.l.b16 %v7539
    %v7668 = vunpack.c.l.b16 %v7540
    %v7669 = vunpack.c.l.b16 %v7541
    %v7670 = vunpack.c.l.b16 %v7542
    %v7671 = vunpack.c.l.b16 %v7543
    %v7672 = vunpack.c.l.b16 %v7544
    %v7673 = vunpack.c.l.b16 %v7545
    %v7674 = vunpack.c.l.b16 %v7546
    %v7675 = vunpack.c.l.b16 %v7547
    %v7676 = vunpack.c.l.b16 %v7548
    %v7677 = vunpack.c.l.b16 %v7549
    %v7678 = vunpack.c.l.b16 %v7550
    %v7679 = vunpack.c.l.b16 %v7551
    %v7680 = vunpack.c.l.b16 %v7552
    %v7681 = vunpack.c.l.b16 %v7553
    %v7682 = vunpack.c.l.b16 %v7554
    %v7683 = vunpack.c.l.b16 %v7555
    %v7684 = vunpack.c.l.b16 %v7556
    %v7685 = vunpack.c.l.b16 %v7557
    %v7686 = vunpack.c.l.b16 %v7558
    %v7687 = vunpack.c.l.b16 %v7559
    %v7688 = vunpack.c.l.b16 %v7560
    %v7689 = vunpack.c.l.b16 %v7561
    %v7690 = vunpack.c.l.b16 %v7562
    %v7691 = vunpack.c.l.b16 %v7563
    %v7692 = vunpack.c.l.b16 %v7564
    %v7693 = vunpack.c.l.b16 %v7565
    %v7694 = vunpack.c.l.b16 %v7566
    %v7695 = vunpack.c.l.b16 %v7567
    %v7696 = vunpack.c.l.b16 %v7568
    %v7697 = vunpack.c.l.b16 %v7569
    %v7698 = vunpack.c.l.b16 %v7570
    %v7699 = vunpack.c.l.b16 %v7571
    %v7700 = vunpack.c.l.b16 %v7572
    %v7701 = vunpack.c.l.b16 %v7573
    %v7702 = vunpack.c.l.b16 %v7574
    %v7703 = vunpack.c.l.b16 %v7575
    %v7704 = vunpack.c.l.b16 %v7576
    %v7705 = vunpack.c.l.b16 %v7577
    %v7706 = vunpack.c.l.b16 %v7578
    %v7707 = vunpack.c.l.b16 %v7579
    %v7708 = vunpack.c.l.b16 %v7580
    %v7709 = vunpack.c.l.b16 %v7581
    %v7710 = vunpack.c.l.b16 %v7582
    %v7711 = vunpack.c.l.b16 %v7583
    %v7712 = vunpack.c.l.b16 %v7584
    %v7713 = vunpack.c.l.b16 %v7585
    %v7714 = vunpack.c.l.b16 %v7586
    %v7715 = vunpack.c.l.b16 %v7587
    %v7716 = vunpack.c.l.b16 %v7588
    %v7717 = vunpack.c.l.b16 %v7589
    %v7718 = vunpack.c.l.b16 %v7590
    %v7719 = vunpack.c.l.b16 %v7591
    %v7720 = vpack.c.b16 %v7657, %v7656
    %v7721 = vpack.c.b16 %v7659, %v7658
    %v7722 = vpack.c.b16 %v7661, %v7660
    %v7723 = vpack.c.b16 %v7663, %v7662
    %v7724 = vpack.c.b16 %v7665, %v7664
    %v7725 = vpack.c.b16 %v7667, %v7666
    %v7726 = vpack.c.b16 %v7669, %v7668
    %v7727 = vpack.c.b16 %v7671, %v7670
    %v7728 = vpack.c.b16 %v7673, %v7672
    %v7729 = vpack.c.b16 %v7675, %v7674
    %v7730 = vpack.c.b16 %v7677, %v7676
    %v7731 = vpack.c.b16 %v7679, %v7678
    %v7732 = vpack.c.b16 %v7681, %v7680
    %v7733 = vpack.c.b16 %v7683, %v7682
    %v7734 = vpack.c.b16 %v7685, %v7684
    %v7735 = vpack.c.b16 %v7687, %v7686
    %v7736 = vpack.c.b16 %v7689, %v7688
    %v7737 = vpack.c.b16 %v7691, %v7690
    %v7738 = vpack.c.b16 %v7693, %v7692
    %v7739 = vpack.c.b16 %v7695, %v7694
    %v7740 = vpack.c.b16 %v7697, %v7696
    %v7741 = vpack.c.b16 %v7699, %v7698
    %v7742 = vpack.c.b16 %v7701, %v7700
    %v7743 = vpack.c.b16 %v7703, %v7702
    %v7744 = vpack.c.b16 %v7705, %v7704
    %v7745 = vpack.c.b16 %v7707, %v7706
    %v7746 = vpack.c.b16 %v7709, %v7708
    %v7747 = vpack.c.b16 %v7711, %v7710
    %v7748 = vpack.c.b16 %v7713, %v7712
    %v7749 = vpack.c.b16 %v7715, %v7714
    %v7750 = vpack.c.b16 %v7717, %v7716
    %v7751 = vpack.c.b16 %v7719, %v7718
    %7784 = vmatprep.subr.bf16.mxu0 0
    %7785 = vmatpush1.bf16.msra.mxu0 %v7727
    %7786 = vmatprep.subr.bf16.mxu0 0
    %7787 = vmatpush1.bf16.msra.mxu0 %v7726
    %7788 = vmatprep.subr.bf16.mxu0 0
    %7789 = vmatpush1.bf16.msra.mxu0 %v7725
    %7790 = vmatprep.subr.bf16.mxu0 0
    %7791 = vmatpush1.bf16.msra.mxu0 %v7724
    %7792 = vmatprep.subr.bf16.mxu0 0
    %7793 = vmatpush1.bf16.msra.mxu0 %v7723
    %7794 = vmatprep.subr.bf16.mxu0 0
    %7795 = vmatpush1.bf16.msra.mxu0 %v7722
    %7796 = vmatprep.subr.bf16.mxu0 0
    %7797 = vmatpush1.bf16.msra.mxu0 %v7721
    %7798 = vmatprep.subr.bf16.mxu0 0
    %7799 = vmatpush1.bf16.msra.mxu0 %v7720
    %7800 = vmatprep.subr.bf16.mxu0 0
    %7801 = vmatpush2.bf16.msra.mxu0 %v7735
    %7802 = vmatprep.subr.bf16.mxu0 0
    %7803 = vmatpush2.bf16.msra.mxu0 %v7734
    %7804 = vmatprep.subr.bf16.mxu0 0
    %7805 = vmatpush2.bf16.msra.mxu0 %v7733
    %7806 = vmatprep.subr.bf16.mxu0 0
    %7807 = vmatpush2.bf16.msra.mxu0 %v7732
    %7808 = vmatprep.subr.bf16.mxu0 0
    %7809 = vmatpush2.bf16.msra.mxu0 %v7731
    %7810 = vmatprep.subr.bf16.mxu0 0
    %7811 = vmatpush2.bf16.msra.mxu0 %v7730
    %7812 = vmatprep.subr.bf16.mxu0 0
    %7813 = vmatpush2.bf16.msra.mxu0 %v7729
    %7814 = vmatprep.subr.bf16.mxu0 0
    %7815 = vmatpush2.bf16.msra.mxu0 %v7728
    %7816 = vmatprep.mubr.bf16.mxu0 %v7525
    %7817 = vmatmul.mubr.bf16.gmra.mxu0 %v7524
    %v7818 = vpop.f32.mrf.mxu0
    %v7819 = vadd.f32 0.0, %v7818
    %v7820 = vpop.f32.mrf.mxu0
    %v7821 = vpop.f32.mrf.mxu0
    %v7822 = vadd.f32 0.0, %v7821
    %v7823 = vpop.f32.mrf.mxu0
    %7824 = vdwg.mxu0
    %7825 = vmatprep.subr.bf16.mxu0 0
    %7826 = vmatpush1.bf16.msra.mxu0 %v7743
    %7827 = vmatprep.subr.bf16.mxu0 0
    %7828 = vmatpush1.bf16.msra.mxu0 %v7742
    %7829 = vmatprep.subr.bf16.mxu0 0
    %7830 = vmatpush1.bf16.msra.mxu0 %v7741
    %7831 = vmatprep.subr.bf16.mxu0 0
    %7832 = vmatpush1.bf16.msra.mxu0 %v7740
    %7833 = vmatprep.subr.bf16.mxu0 0
    %7834 = vmatpush1.bf16.msra.mxu0 %v7739
    %7835 = vmatprep.subr.bf16.mxu0 0
    %7836 = vmatpush1.bf16.msra.mxu0 %v7738
    %7837 = vmatprep.subr.bf16.mxu0 0
    %7838 = vmatpush1.bf16.msra.mxu0 %v7737
    %7839 = vmatprep.subr.bf16.mxu0 0
    %7840 = vmatpush1.bf16.msra.mxu0 %v7736
    %7841 = vmatprep.subr.bf16.mxu0 0
    %7842 = vmatpush2.bf16.msra.mxu0 %v7751
    %7843 = vmatprep.subr.bf16.mxu0 0
    %7844 = vmatpush2.bf16.msra.mxu0 %v7750
    %7845 = vmatprep.subr.bf16.mxu0 0
    %7846 = vmatpush2.bf16.msra.mxu0 %v7749
    %7847 = vmatprep.subr.bf16.mxu0 0
    %7848 = vmatpush2.bf16.msra.mxu0 %v7748
    %7849 = vmatprep.subr.bf16.mxu0 0
    %7850 = vmatpush2.bf16.msra.mxu0 %v7747
    %7851 = vmatprep.subr.bf16.mxu0 0
    %7852 = vmatpush2.bf16.msra.mxu0 %v7746
    %7853 = vmatprep.subr.bf16.mxu0 0
    %7854 = vmatpush2.bf16.msra.mxu0 %v7745
    %7855 = vmatprep.subr.bf16.mxu0 0
    %7856 = vmatpush2.bf16.msra.mxu0 %v7744
    %7857 = vmatprep.mubr.bf16.mxu0 %v7527
    %7858 = vmatmul.mubr.bf16.gmra.mxu0 %v7526
    %v7859 = vpop.f32.mrf.mxu0
    %v7860 = vadd.f32 %v7819, %v7859
    %v7861 = vpop.f32.mrf.mxu0
    %v7862 = vpop.f32.mrf.mxu0
    %v7863 = vadd.f32 %v7822, %v7862
    %v7864 = vpop.f32.mrf.mxu0
    %7865 = vdwg.mxu0
    %v7930 = vunpack.c.l.b16 %v5550
    %v7931 = vunpack.c.l.b16 %v5551
    %v7932 = vunpack.c.l.b16 %v5552
    %v7933 = vunpack.c.l.b16 %v5553
    %v7934 = vunpack.c.l.b16 %v5554
    %v7935 = vunpack.c.l.b16 %v5555
    %v7936 = vunpack.c.l.b16 %v5556
    %v7937 = vunpack.c.l.b16 %v5557
    %v7938 = vunpack.c.l.b16 %v5558
    %v7939 = vunpack.c.l.b16 %v5559
    %v7940 = vunpack.c.l.b16 %v5560
    %v7941 = vunpack.c.l.b16 %v5561
    %v7942 = vunpack.c.l.b16 %v5562
    %v7943 = vunpack.c.l.b16 %v5563
    %v7944 = vunpack.c.l.b16 %v5564
    %v7945 = vunpack.c.l.b16 %v5565
    %v7946 = vunpack.c.l.b16 %v5566
    %v7947 = vunpack.c.l.b16 %v5567
    %v7948 = vunpack.c.l.b16 %v5568
    %v7949 = vunpack.c.l.b16 %v5569
    %v7950 = vunpack.c.l.b16 %v5570
    %v7951 = vunpack.c.l.b16 %v5571
    %v7952 = vunpack.c.l.b16 %v5572
    %v7953 = vunpack.c.l.b16 %v5573
    %v7954 = vunpack.c.l.b16 %v5574
    %v7955 = vunpack.c.l.b16 %v5575
    %v7956 = vunpack.c.l.b16 %v5576
    %v7957 = vunpack.c.l.b16 %v5577
    %v7958 = vunpack.c.l.b16 %v5578
    %v7959 = vunpack.c.l.b16 %v5579
    %v7960 = vunpack.c.l.b16 %v5580
    %v7961 = vunpack.c.l.b16 %v5581
    %v7962 = vunpack.c.l.b16 %v5582
    %v7963 = vunpack.c.l.b16 %v5583
    %v7964 = vunpack.c.l.b16 %v5584
    %v7965 = vunpack.c.l.b16 %v5585
    %v7966 = vunpack.c.l.b16 %v5586
    %v7967 = vunpack.c.l.b16 %v5587
    %v7968 = vunpack.c.l.b16 %v5588
    %v7969 = vunpack.c.l.b16 %v5589
    %v7970 = vunpack.c.l.b16 %v5590
    %v7971 = vunpack.c.l.b16 %v5591
    %v7972 = vunpack.c.l.b16 %v5592
    %v7973 = vunpack.c.l.b16 %v5593
    %v7974 = vunpack.c.l.b16 %v5594
    %v7975 = vunpack.c.l.b16 %v5595
    %v7976 = vunpack.c.l.b16 %v5596
    %v7977 = vunpack.c.l.b16 %v5597
    %v7978 = vunpack.c.l.b16 %v5598
    %v7979 = vunpack.c.l.b16 %v5599
    %v7980 = vunpack.c.l.b16 %v5600
    %v7981 = vunpack.c.l.b16 %v5601
    %v7982 = vunpack.c.l.b16 %v5602
    %v7983 = vunpack.c.l.b16 %v5603
    %v7984 = vunpack.c.l.b16 %v5604
    %v7985 = vunpack.c.l.b16 %v5605
    %v7986 = vunpack.c.l.b16 %v5606
    %v7987 = vunpack.c.l.b16 %v5607
    %v7988 = vunpack.c.l.b16 %v5608
    %v7989 = vunpack.c.l.b16 %v5609
    %v7990 = vunpack.c.l.b16 %v5610
    %v7991 = vunpack.c.l.b16 %v5611
    %v7992 = vunpack.c.l.b16 %v5612
    %v7993 = vunpack.c.l.b16 %v5613
    %v7994 = vpack.c.b16 %v7931, %v7930
    %v7995 = vpack.c.b16 %v7933, %v7932
    %v7996 = vpack.c.b16 %v7935, %v7934
    %v7997 = vpack.c.b16 %v7937, %v7936
    %v7998 = vpack.c.b16 %v7939, %v7938
    %v7999 = vpack.c.b16 %v7941, %v7940
    %v8000 = vpack.c.b16 %v7943, %v7942
    %v8001 = vpack.c.b16 %v7945, %v7944
    %v8002 = vpack.c.b16 %v7947, %v7946
    %v8003 = vpack.c.b16 %v7949, %v7948
    %v8004 = vpack.c.b16 %v7951, %v7950
    %v8005 = vpack.c.b16 %v7953, %v7952
    %v8006 = vpack.c.b16 %v7955, %v7954
    %v8007 = vpack.c.b16 %v7957, %v7956
    %v8008 = vpack.c.b16 %v7959, %v7958
    %v8009 = vpack.c.b16 %v7961, %v7960
    %v8010 = vpack.c.b16 %v7963, %v7962
    %v8011 = vpack.c.b16 %v7965, %v7964
    %v8012 = vpack.c.b16 %v7967, %v7966
    %v8013 = vpack.c.b16 %v7969, %v7968
    %v8014 = vpack.c.b16 %v7971, %v7970
    %v8015 = vpack.c.b16 %v7973, %v7972
    %v8016 = vpack.c.b16 %v7975, %v7974
    %v8017 = vpack.c.b16 %v7977, %v7976
    %v8018 = vpack.c.b16 %v7979, %v7978
    %v8019 = vpack.c.b16 %v7981, %v7980
    %v8020 = vpack.c.b16 %v7983, %v7982
    %v8021 = vpack.c.b16 %v7985, %v7984
    %v8022 = vpack.c.b16 %v7987, %v7986
    %v8023 = vpack.c.b16 %v7989, %v7988
    %v8024 = vpack.c.b16 %v7991, %v7990
    %v8025 = vpack.c.b16 %v7993, %v7992
    %8058 = vmatprep.subr.bf16.mxu0 0
    %8059 = vmatpush1.bf16.msra.mxu0 %v8001
    %8060 = vmatprep.subr.bf16.mxu0 0
    %8061 = vmatpush1.bf16.msra.mxu0 %v8000
    %8062 = vmatprep.subr.bf16.mxu0 0
    %8063 = vmatpush1.bf16.msra.mxu0 %v7999
    %8064 = vmatprep.subr.bf16.mxu0 0
    %8065 = vmatpush1.bf16.msra.mxu0 %v7998
    %8066 = vmatprep.subr.bf16.mxu0 0
    %8067 = vmatpush1.bf16.msra.mxu0 %v7997
    %8068 = vmatprep.subr.bf16.mxu0 0
    %8069 = vmatpush1.bf16.msra.mxu0 %v7996
    %8070 = vmatprep.subr.bf16.mxu0 0
    %8071 = vmatpush1.bf16.msra.mxu0 %v7995
    %8072 = vmatprep.subr.bf16.mxu0 0
    %8073 = vmatpush1.bf16.msra.mxu0 %v7994
    %8074 = vmatprep.subr.bf16.mxu0 0
    %8075 = vmatpush2.bf16.msra.mxu0 %v8009
    %8076 = vmatprep.subr.bf16.mxu0 0
    %8077 = vmatpush2.bf16.msra.mxu0 %v8008
    %8078 = vmatprep.subr.bf16.mxu0 0
    %8079 = vmatpush2.bf16.msra.mxu0 %v8007
    %8080 = vmatprep.subr.bf16.mxu0 0
    %8081 = vmatpush2.bf16.msra.mxu0 %v8006
    %8082 = vmatprep.subr.bf16.mxu0 0
    %8083 = vmatpush2.bf16.msra.mxu0 %v8005
    %8084 = vmatprep.subr.bf16.mxu0 0
    %8085 = vmatpush2.bf16.msra.mxu0 %v8004
    %8086 = vmatprep.subr.bf16.mxu0 0
    %8087 = vmatpush2.bf16.msra.mxu0 %v8003
    %8088 = vmatprep.subr.bf16.mxu0 0
    %8089 = vmatpush2.bf16.msra.mxu0 %v8002
    %8090 = vmatprep.mubr.bf16.mxu0 %v5547
    %8091 = vmatmul.mubr.bf16.gmra.mxu0 %v5546
    %v8092 = vpop.f32.mrf.mxu0
    %v8093 = vadd.f32 %v7860, %v8092
    %v8094 = vpop.f32.mrf.mxu0
    %v8095 = vpop.f32.mrf.mxu0
    %v8096 = vadd.f32 %v7863, %v8095
    %v8097 = vpop.f32.mrf.mxu0
    %8098 = vdwg.mxu0
    %8099 = vmatprep.subr.bf16.mxu0 0
    %8100 = vmatpush1.bf16.msra.mxu0 %v8017
    %8101 = vmatprep.subr.bf16.mxu0 0
    %8102 = vmatpush1.bf16.msra.mxu0 %v8016
    %8103 = vmatprep.subr.bf16.mxu0 0
    %8104 = vmatpush1.bf16.msra.mxu0 %v8015
    %8105 = vmatprep.subr.bf16.mxu0 0
    %8106 = vmatpush1.bf16.msra.mxu0 %v8014
    %8107 = vmatprep.subr.bf16.mxu0 0
    %8108 = vmatpush1.bf16.msra.mxu0 %v8013
    %8109 = vmatprep.subr.bf16.mxu0 0
    %8110 = vmatpush1.bf16.msra.mxu0 %v8012
    %8111 = vmatprep.subr.bf16.mxu0 0
    %8112 = vmatpush1.bf16.msra.mxu0 %v8011
    %8113 = vmatprep.subr.bf16.mxu0 0
    %8114 = vmatpush1.bf16.msra.mxu0 %v8010
    %8115 = vmatprep.subr.bf16.mxu0 0
    %8116 = vmatpush2.bf16.msra.mxu0 %v8025
    %8117 = vmatprep.subr.bf16.mxu0 0
    %8118 = vmatpush2.bf16.msra.mxu0 %v8024
    %8119 = vmatprep.subr.bf16.mxu0 0
    %8120 = vmatpush2.bf16.msra.mxu0 %v8023
    %8121 = vmatprep.subr.bf16.mxu0 0
    %8122 = vmatpush2.bf16.msra.mxu0 %v8022
    %8123 = vmatprep.subr.bf16.mxu0 0
    %8124 = vmatpush2.bf16.msra.mxu0 %v8021
    %8125 = vmatprep.subr.bf16.mxu0 0
    %8126 = vmatpush2.bf16.msra.mxu0 %v8020
    %8127 = vmatprep.subr.bf16.mxu0 0
    %8128 = vmatpush2.bf16.msra.mxu0 %v8019
    %8129 = vmatprep.subr.bf16.mxu0 0
    %8130 = vmatpush2.bf16.msra.mxu0 %v8018
    %8131 = vmatprep.mubr.bf16.mxu0 %v5549
    %8132 = vmatmul.mubr.bf16.gmra.mxu0 %v5548
    %v8133 = vpop.f32.mrf.mxu0
    %v8134 = vadd.f32 %v8093, %v8133
    %v8135 = vpop.f32.mrf.mxu0
    %v8136 = vpop.f32.mrf.mxu0
    %v8137 = vadd.f32 %v8096, %v8136
    %v8138 = vpop.f32.mrf.mxu0
    %8139 = vdwg.mxu0
    %v8140 = vld [vmem:[#allocation2 + $0x20] sm:$0xff]
    %v8141 = vld [vmem:[#allocation2 + $0x28] sm:$0xff]
    %v8142 = vld [vmem:[#allocation2 + $0x60] sm:$0xff]
    %v8143 = vld [vmem:[#allocation2 + $0x68] sm:$0xff]
    %v8144 = vld [vmem:[#allocation2 + $0xa0] sm:$0xff]
    %v8145 = vld [vmem:[#allocation2 + $0xa8] sm:$0xff]
    %v8146 = vld [vmem:[#allocation2 + $0xe0] sm:$0xff]
    %v8147 = vld [vmem:[#allocation2 + $0xe8] sm:$0xff]
    %v8148 = vld [vmem:[#allocation2 + $0x120] sm:$0xff]
    %v8149 = vld [vmem:[#allocation2 + $0x128] sm:$0xff]
    %v8150 = vld [vmem:[#allocation2 + $0x160] sm:$0xff]
    %v8151 = vld [vmem:[#allocation2 + $0x168] sm:$0xff]
    %v8152 = vld [vmem:[#allocation2 + $0x1a0] sm:$0xff]
    %v8153 = vld [vmem:[#allocation2 + $0x1a8] sm:$0xff]
    %v8154 = vld [vmem:[#allocation2 + $0x1e0] sm:$0xff]
    %v8155 = vld [vmem:[#allocation2 + $0x1e8] sm:$0xff]
    %v8156 = vld [vmem:[#allocation2 + $0x220] sm:$0xff]
    %v8157 = vld [vmem:[#allocation2 + $0x228] sm:$0xff]
    %v8158 = vld [vmem:[#allocation2 + $0x260] sm:$0xff]
    %v8159 = vld [vmem:[#allocation2 + $0x268] sm:$0xff]
    %v8160 = vld [vmem:[#allocation2 + $0x2a0] sm:$0xff]
    %v8161 = vld [vmem:[#allocation2 + $0x2a8] sm:$0xff]
    %v8162 = vld [vmem:[#allocation2 + $0x2e0] sm:$0xff]
    %v8163 = vld [vmem:[#allocation2 + $0x2e8] sm:$0xff]
    %v8164 = vld [vmem:[#allocation2 + $0x320] sm:$0xff]
    %v8165 = vld [vmem:[#allocation2 + $0x328] sm:$0xff]
    %v8166 = vld [vmem:[#allocation2 + $0x360] sm:$0xff]
    %v8167 = vld [vmem:[#allocation2 + $0x368] sm:$0xff]
    %v8168 = vld [vmem:[#allocation2 + $0x3a0] sm:$0xff]
    %v8169 = vld [vmem:[#allocation2 + $0x3a8] sm:$0xff]
    %v8170 = vld [vmem:[#allocation2 + $0x3e0] sm:$0xff]
    %v8171 = vld [vmem:[#allocation2 + $0x3e8] sm:$0xff]
    %v8172 = vld [vmem:[#allocation2 + $0x420] sm:$0xff]
    %v8173 = vld [vmem:[#allocation2 + $0x428] sm:$0xff]
    %v8174 = vld [vmem:[#allocation2 + $0x460] sm:$0xff]
    %v8175 = vld [vmem:[#allocation2 + $0x468] sm:$0xff]
    %v8176 = vld [vmem:[#allocation2 + $0x4a0] sm:$0xff]
    %v8177 = vld [vmem:[#allocation2 + $0x4a8] sm:$0xff]
    %v8178 = vld [vmem:[#allocation2 + $0x4e0] sm:$0xff]
    %v8179 = vld [vmem:[#allocation2 + $0x4e8] sm:$0xff]
    %v8180 = vld [vmem:[#allocation2 + $0x520] sm:$0xff]
    %v8181 = vld [vmem:[#allocation2 + $0x528] sm:$0xff]
    %v8182 = vld [vmem:[#allocation2 + $0x560] sm:$0xff]
    %v8183 = vld [vmem:[#allocation2 + $0x568] sm:$0xff]
    %v8184 = vld [vmem:[#allocation2 + $0x5a0] sm:$0xff]
    %v8185 = vld [vmem:[#allocation2 + $0x5a8] sm:$0xff]
    %v8186 = vld [vmem:[#allocation2 + $0x5e0] sm:$0xff]
    %v8187 = vld [vmem:[#allocation2 + $0x5e8] sm:$0xff]
    %v8188 = vld [vmem:[#allocation2 + $0x620] sm:$0xff]
    %v8189 = vld [vmem:[#allocation2 + $0x628] sm:$0xff]
    %v8190 = vld [vmem:[#allocation2 + $0x660] sm:$0xff]
    %v8191 = vld [vmem:[#allocation2 + $0x668] sm:$0xff]
    %v8192 = vld [vmem:[#allocation2 + $0x6a0] sm:$0xff]
    %v8193 = vld [vmem:[#allocation2 + $0x6a8] sm:$0xff]
    %v8194 = vld [vmem:[#allocation2 + $0x6e0] sm:$0xff]
    %v8195 = vld [vmem:[#allocation2 + $0x6e8] sm:$0xff]
    %v8196 = vld [vmem:[#allocation2 + $0x720] sm:$0xff]
    %v8197 = vld [vmem:[#allocation2 + $0x728] sm:$0xff]
    %v8198 = vld [vmem:[#allocation2 + $0x760] sm:$0xff]
    %v8199 = vld [vmem:[#allocation2 + $0x768] sm:$0xff]
    %v8200 = vld [vmem:[#allocation2 + $0x7a0] sm:$0xff]
    %v8201 = vld [vmem:[#allocation2 + $0x7a8] sm:$0xff]
    %v8202 = vld [vmem:[#allocation2 + $0x7e0] sm:$0xff]
    %v8203 = vld [vmem:[#allocation2 + $0x7e8] sm:$0xff]
    %v8204 = vld [vmem:[#allocation2 + $0x820] sm:$0xff]
    %v8205 = vld [vmem:[#allocation2 + $0x828] sm:$0xff]
    %v8206 = vld [vmem:[#allocation2 + $0x860] sm:$0xff]
    %v8207 = vld [vmem:[#allocation2 + $0x868] sm:$0xff]
    %v8208 = vld [vmem:[#allocation2 + $0x8a0] sm:$0xff]
    %v8209 = vld [vmem:[#allocation2 + $0x8a8] sm:$0xff]
    %v8210 = vld [vmem:[#allocation2 + $0x8e0] sm:$0xff]
    %v8211 = vld [vmem:[#allocation2 + $0x8e8] sm:$0xff]
    %v8212 = vld [vmem:[#allocation2 + $0x920] sm:$0xff]
    %v8213 = vld [vmem:[#allocation2 + $0x928] sm:$0xff]
    %v8214 = vld [vmem:[#allocation2 + $0x960] sm:$0xff]
    %v8215 = vld [vmem:[#allocation2 + $0x968] sm:$0xff]
    %v8216 = vld [vmem:[#allocation2 + $0x9a0] sm:$0xff]
    %v8217 = vld [vmem:[#allocation2 + $0x9a8] sm:$0xff]
    %v8218 = vld [vmem:[#allocation2 + $0x9e0] sm:$0xff]
    %v8219 = vld [vmem:[#allocation2 + $0x9e8] sm:$0xff]
    %v8220 = vld [vmem:[#allocation2 + $0xa20] sm:$0xff]
    %v8221 = vld [vmem:[#allocation2 + $0xa28] sm:$0xff]
    %v8222 = vld [vmem:[#allocation2 + $0xa60] sm:$0xff]
    %v8223 = vld [vmem:[#allocation2 + $0xa68] sm:$0xff]
    %v8224 = vld [vmem:[#allocation2 + $0xaa0] sm:$0xff]
    %v8225 = vld [vmem:[#allocation2 + $0xaa8] sm:$0xff]
    %v8226 = vld [vmem:[#allocation2 + $0xae0] sm:$0xff]
    %v8227 = vld [vmem:[#allocation2 + $0xae8] sm:$0xff]
    %v8228 = vld [vmem:[#allocation2 + $0xb20] sm:$0xff]
    %v8229 = vld [vmem:[#allocation2 + $0xb28] sm:$0xff]
    %v8230 = vld [vmem:[#allocation2 + $0xb60] sm:$0xff]
    %v8231 = vld [vmem:[#allocation2 + $0xb68] sm:$0xff]
    %v8232 = vld [vmem:[#allocation2 + $0xba0] sm:$0xff]
    %v8233 = vld [vmem:[#allocation2 + $0xba8] sm:$0xff]
    %v8234 = vld [vmem:[#allocation2 + $0xbe0] sm:$0xff]
    %v8235 = vld [vmem:[#allocation2 + $0xbe8] sm:$0xff]
    %v8236 = vld [vmem:[#allocation2 + $0xc20] sm:$0xff]
    %v8237 = vld [vmem:[#allocation2 + $0xc28] sm:$0xff]
    %v8238 = vld [vmem:[#allocation2 + $0xc60] sm:$0xff]
    %v8239 = vld [vmem:[#allocation2 + $0xc68] sm:$0xff]
    %v8240 = vld [vmem:[#allocation2 + $0xca0] sm:$0xff]
    %v8241 = vld [vmem:[#allocation2 + $0xca8] sm:$0xff]
    %v8242 = vld [vmem:[#allocation2 + $0xce0] sm:$0xff]
    %v8243 = vld [vmem:[#allocation2 + $0xce8] sm:$0xff]
    %v8244 = vld [vmem:[#allocation2 + $0xd20] sm:$0xff]
    %v8245 = vld [vmem:[#allocation2 + $0xd28] sm:$0xff]
    %v8246 = vld [vmem:[#allocation2 + $0xd60] sm:$0xff]
    %v8247 = vld [vmem:[#allocation2 + $0xd68] sm:$0xff]
    %v8248 = vld [vmem:[#allocation2 + $0xda0] sm:$0xff]
    %v8249 = vld [vmem:[#allocation2 + $0xda8] sm:$0xff]
    %v8250 = vld [vmem:[#allocation2 + $0xde0] sm:$0xff]
    %v8251 = vld [vmem:[#allocation2 + $0xde8] sm:$0xff]
    %v8252 = vld [vmem:[#allocation2 + $0xe20] sm:$0xff]
    %v8253 = vld [vmem:[#allocation2 + $0xe28] sm:$0xff]
    %v8254 = vld [vmem:[#allocation2 + $0xe60] sm:$0xff]
    %v8255 = vld [vmem:[#allocation2 + $0xe68] sm:$0xff]
    %v8256 = vld [vmem:[#allocation2 + $0xea0] sm:$0xff]
    %v8257 = vld [vmem:[#allocation2 + $0xea8] sm:$0xff]
    %v8258 = vld [vmem:[#allocation2 + $0xee0] sm:$0xff]
    %v8259 = vld [vmem:[#allocation2 + $0xee8] sm:$0xff]
    %v8260 = vld [vmem:[#allocation2 + $0xf20] sm:$0xff]
    %v8261 = vld [vmem:[#allocation2 + $0xf28] sm:$0xff]
    %v8262 = vld [vmem:[#allocation2 + $0xf60] sm:$0xff]
    %v8263 = vld [vmem:[#allocation2 + $0xf68] sm:$0xff]
    %v8264 = vld [vmem:[#allocation2 + $0xfa0] sm:$0xff]
    %v8265 = vld [vmem:[#allocation2 + $0xfa8] sm:$0xff]
    %v8266 = vld [vmem:[#allocation2 + $0xfe0] sm:$0xff]
    %v8267 = vld [vmem:[#allocation2 + $0xfe8] sm:$0xff]
    %v8268 = vld [vmem:[#allocation2 + $0x1020] sm:$0xff]
    %v8269 = vld [vmem:[#allocation2 + $0x1028] sm:$0xff]
    %v8270 = vld [vmem:[#allocation2 + $0x1060] sm:$0xff]
    %v8271 = vld [vmem:[#allocation2 + $0x1068] sm:$0xff]
    %v8272 = vld [vmem:[#allocation2 + $0x10a0] sm:$0xff]
    %v8273 = vld [vmem:[#allocation2 + $0x10a8] sm:$0xff]
    %v8274 = vld [vmem:[#allocation2 + $0x10e0] sm:$0xff]
    %v8275 = vld [vmem:[#allocation2 + $0x10e8] sm:$0xff]
    %v8276 = vld [vmem:[#allocation2 + $0x1120] sm:$0xff]
    %v8277 = vld [vmem:[#allocation2 + $0x1128] sm:$0xff]
    %v8278 = vld [vmem:[#allocation2 + $0x1160] sm:$0xff]
    %v8279 = vld [vmem:[#allocation2 + $0x1168] sm:$0xff]
    %v8280 = vld [vmem:[#allocation2 + $0x11a0] sm:$0xff]
    %v8281 = vld [vmem:[#allocation2 + $0x11a8] sm:$0xff]
    %v8282 = vld [vmem:[#allocation2 + $0x11e0] sm:$0xff]
    %v8283 = vld [vmem:[#allocation2 + $0x11e8] sm:$0xff]
    %v8284 = vld [vmem:[#allocation2 + $0x1220] sm:$0xff]
    %v8285 = vld [vmem:[#allocation2 + $0x1228] sm:$0xff]
    %v8286 = vld [vmem:[#allocation2 + $0x1260] sm:$0xff]
    %v8287 = vld [vmem:[#allocation2 + $0x1268] sm:$0xff]
    %v8288 = vld [vmem:[#allocation2 + $0x12a0] sm:$0xff]
    %v8289 = vld [vmem:[#allocation2 + $0x12a8] sm:$0xff]
    %v8290 = vld [vmem:[#allocation2 + $0x12e0] sm:$0xff]
    %v8291 = vld [vmem:[#allocation2 + $0x12e8] sm:$0xff]
    %v8292 = vld [vmem:[#allocation2 + $0x1320] sm:$0xff]
    %v8293 = vld [vmem:[#allocation2 + $0x1328] sm:$0xff]
    %v8294 = vld [vmem:[#allocation2 + $0x1360] sm:$0xff]
    %v8295 = vld [vmem:[#allocation2 + $0x1368] sm:$0xff]
    %v8296 = vld [vmem:[#allocation2 + $0x13a0] sm:$0xff]
    %v8297 = vld [vmem:[#allocation2 + $0x13a8] sm:$0xff]
    %v8298 = vld [vmem:[#allocation2 + $0x13e0] sm:$0xff]
    %v8299 = vld [vmem:[#allocation2 + $0x13e8] sm:$0xff]
    %v8300 = vld [vmem:[#allocation2 + $0x1420] sm:$0xff]
    %v8301 = vld [vmem:[#allocation2 + $0x1428] sm:$0xff]
    %v8302 = vld [vmem:[#allocation2 + $0x1460] sm:$0xff]
    %v8303 = vld [vmem:[#allocation2 + $0x1468] sm:$0xff]
    %v8304 = vld [vmem:[#allocation2 + $0x14a0] sm:$0xff]
    %v8305 = vld [vmem:[#allocation2 + $0x14a8] sm:$0xff]
    %v8306 = vld [vmem:[#allocation2 + $0x14e0] sm:$0xff]
    %v8307 = vld [vmem:[#allocation2 + $0x14e8] sm:$0xff]
    %v8308 = vld [vmem:[#allocation2 + $0x1520] sm:$0xff]
    %v8309 = vld [vmem:[#allocation2 + $0x1528] sm:$0xff]
    %v8310 = vld [vmem:[#allocation2 + $0x1560] sm:$0xff]
    %v8311 = vld [vmem:[#allocation2 + $0x1568] sm:$0xff]
    %v8312 = vld [vmem:[#allocation2 + $0x15a0] sm:$0xff]
    %v8313 = vld [vmem:[#allocation2 + $0x15a8] sm:$0xff]
    %v8314 = vld [vmem:[#allocation2 + $0x15e0] sm:$0xff]
    %v8315 = vld [vmem:[#allocation2 + $0x15e8] sm:$0xff]
    %v8316 = vld [vmem:[#allocation2 + $0x1620] sm:$0xff]
    %v8317 = vld [vmem:[#allocation2 + $0x1628] sm:$0xff]
    %v8318 = vld [vmem:[#allocation2 + $0x1660] sm:$0xff]
    %v8319 = vld [vmem:[#allocation2 + $0x1668] sm:$0xff]
    %v8320 = vld [vmem:[#allocation2 + $0x16a0] sm:$0xff]
    %v8321 = vld [vmem:[#allocation2 + $0x16a8] sm:$0xff]
    %v8322 = vld [vmem:[#allocation2 + $0x16e0] sm:$0xff]
    %v8323 = vld [vmem:[#allocation2 + $0x16e8] sm:$0xff]
    %v8324 = vld [vmem:[#allocation2 + $0x1720] sm:$0xff]
    %v8325 = vld [vmem:[#allocation2 + $0x1728] sm:$0xff]
    %v8326 = vld [vmem:[#allocation2 + $0x1760] sm:$0xff]
    %v8327 = vld [vmem:[#allocation2 + $0x1768] sm:$0xff]
    %v8328 = vld [vmem:[#allocation2 + $0x17a0] sm:$0xff]
    %v8329 = vld [vmem:[#allocation2 + $0x17a8] sm:$0xff]
    %v8330 = vld [vmem:[#allocation2 + $0x17e0] sm:$0xff]
    %v8331 = vld [vmem:[#allocation2 + $0x17e8] sm:$0xff]
    %v8332 = vld [vmem:[#allocation2 + $0x1820] sm:$0xff]
    %v8333 = vld [vmem:[#allocation2 + $0x1828] sm:$0xff]
    %v8334 = vld [vmem:[#allocation2 + $0x1860] sm:$0xff]
    %v8335 = vld [vmem:[#allocation2 + $0x1868] sm:$0xff]
    %v8336 = vld [vmem:[#allocation2 + $0x18a0] sm:$0xff]
    %v8337 = vld [vmem:[#allocation2 + $0x18a8] sm:$0xff]
    %v8338 = vld [vmem:[#allocation2 + $0x18e0] sm:$0xff]
    %v8339 = vld [vmem:[#allocation2 + $0x18e8] sm:$0xff]
    %v8340 = vld [vmem:[#allocation2 + $0x1920] sm:$0xff]
    %v8341 = vld [vmem:[#allocation2 + $0x1928] sm:$0xff]
    %v8342 = vld [vmem:[#allocation2 + $0x1960] sm:$0xff]
    %v8343 = vld [vmem:[#allocation2 + $0x1968] sm:$0xff]
    %v8344 = vld [vmem:[#allocation2 + $0x19a0] sm:$0xff]
    %v8345 = vld [vmem:[#allocation2 + $0x19a8] sm:$0xff]
    %v8346 = vld [vmem:[#allocation2 + $0x19e0] sm:$0xff]
    %v8347 = vld [vmem:[#allocation2 + $0x19e8] sm:$0xff]
    %v8348 = vld [vmem:[#allocation2 + $0x1a20] sm:$0xff]
    %v8349 = vld [vmem:[#allocation2 + $0x1a28] sm:$0xff]
    %v8350 = vld [vmem:[#allocation2 + $0x1a60] sm:$0xff]
    %v8351 = vld [vmem:[#allocation2 + $0x1a68] sm:$0xff]
    %v8352 = vld [vmem:[#allocation2 + $0x1aa0] sm:$0xff]
    %v8353 = vld [vmem:[#allocation2 + $0x1aa8] sm:$0xff]
    %v8354 = vld [vmem:[#allocation2 + $0x1ae0] sm:$0xff]
    %v8355 = vld [vmem:[#allocation2 + $0x1ae8] sm:$0xff]
    %v8356 = vld [vmem:[#allocation2 + $0x1b20] sm:$0xff]
    %v8357 = vld [vmem:[#allocation2 + $0x1b28] sm:$0xff]
    %v8358 = vld [vmem:[#allocation2 + $0x1b60] sm:$0xff]
    %v8359 = vld [vmem:[#allocation2 + $0x1b68] sm:$0xff]
    %v8360 = vld [vmem:[#allocation2 + $0x1ba0] sm:$0xff]
    %v8361 = vld [vmem:[#allocation2 + $0x1ba8] sm:$0xff]
    %v8362 = vld [vmem:[#allocation2 + $0x1be0] sm:$0xff]
    %v8363 = vld [vmem:[#allocation2 + $0x1be8] sm:$0xff]
    %v8364 = vld [vmem:[#allocation2 + $0x1c20] sm:$0xff]
    %v8365 = vld [vmem:[#allocation2 + $0x1c28] sm:$0xff]
    %v8366 = vld [vmem:[#allocation2 + $0x1c60] sm:$0xff]
    %v8367 = vld [vmem:[#allocation2 + $0x1c68] sm:$0xff]
    %v8368 = vld [vmem:[#allocation2 + $0x1ca0] sm:$0xff]
    %v8369 = vld [vmem:[#allocation2 + $0x1ca8] sm:$0xff]
    %v8370 = vld [vmem:[#allocation2 + $0x1ce0] sm:$0xff]
    %v8371 = vld [vmem:[#allocation2 + $0x1ce8] sm:$0xff]
    %v8372 = vld [vmem:[#allocation2 + $0x1d20] sm:$0xff]
    %v8373 = vld [vmem:[#allocation2 + $0x1d28] sm:$0xff]
    %v8374 = vld [vmem:[#allocation2 + $0x1d60] sm:$0xff]
    %v8375 = vld [vmem:[#allocation2 + $0x1d68] sm:$0xff]
    %v8376 = vld [vmem:[#allocation2 + $0x1da0] sm:$0xff]
    %v8377 = vld [vmem:[#allocation2 + $0x1da8] sm:$0xff]
    %v8378 = vld [vmem:[#allocation2 + $0x1de0] sm:$0xff]
    %v8379 = vld [vmem:[#allocation2 + $0x1de8] sm:$0xff]
    %v8380 = vld [vmem:[#allocation2 + $0x1e20] sm:$0xff]
    %v8381 = vld [vmem:[#allocation2 + $0x1e28] sm:$0xff]
    %v8382 = vld [vmem:[#allocation2 + $0x1e60] sm:$0xff]
    %v8383 = vld [vmem:[#allocation2 + $0x1e68] sm:$0xff]
    %v8384 = vld [vmem:[#allocation2 + $0x1ea0] sm:$0xff]
    %v8385 = vld [vmem:[#allocation2 + $0x1ea8] sm:$0xff]
    %v8386 = vld [vmem:[#allocation2 + $0x1ee0] sm:$0xff]
    %v8387 = vld [vmem:[#allocation2 + $0x1ee8] sm:$0xff]
    %v8388 = vld [vmem:[#allocation2 + $0x1f20] sm:$0xff]
    %v8389 = vld [vmem:[#allocation2 + $0x1f28] sm:$0xff]
    %v8390 = vld [vmem:[#allocation2 + $0x1f60] sm:$0xff]
    %v8391 = vld [vmem:[#allocation2 + $0x1f68] sm:$0xff]
    %v8392 = vld [vmem:[#allocation2 + $0x1fa0] sm:$0xff]
    %v8393 = vld [vmem:[#allocation2 + $0x1fa8] sm:$0xff]
    %v8394 = vld [vmem:[#allocation2 + $0x1fe0] sm:$0xff]
    %v8395 = vld [vmem:[#allocation2 + $0x1fe8] sm:$0xff]
    %v8396 = vld [vmem:[#allocation9 + $0x8] sm:$0xf]
    %v8398 = vlaneseq
    %v8399 = vshrl.u32 %v8398, 7
    %v8400 = vsub.s32 0, %v8399
    %v8401 = vrot.slane %v8396, %v8400
    %v8402 = vlaneseq
    %v8403 = vshrl.u32 %v8402, 7
    %v8404 = vsub.s32 1, %v8403
    %v8405 = vrot.slane %v8396, %v8404
    %v8406 = vlaneseq
    %v8407 = vshrl.u32 %v8406, 7
    %v8408 = vsub.s32 2, %v8407
    %v8409 = vrot.slane %v8396, %v8408
    %v8410 = vlaneseq
    %v8411 = vshrl.u32 %v8410, 7
    %v8412 = vsub.s32 3, %v8411
    %v8413 = vrot.slane %v8396, %v8412
    %v8674 = vunpack.c.l.b16 %v8140
    %v8675 = vunpack.c.h.b16 %v8140
    %v8676 = vunpack.c.l.b16 %v8141
    %v8677 = vunpack.c.h.b16 %v8141
    %v8678 = vunpack.c.l.b16 %v8142
    %v8679 = vunpack.c.h.b16 %v8142
    %v8680 = vunpack.c.l.b16 %v8143
    %v8681 = vunpack.c.h.b16 %v8143
    %v8682 = vunpack.c.l.b16 %v8144
    %v8683 = vunpack.c.h.b16 %v8144
    %v8684 = vunpack.c.l.b16 %v8145
    %v8685 = vunpack.c.h.b16 %v8145
    %v8686 = vunpack.c.l.b16 %v8146
    %v8687 = vunpack.c.h.b16 %v8146
    %v8688 = vunpack.c.l.b16 %v8147
    %v8689 = vunpack.c.h.b16 %v8147
    %v8690 = vunpack.c.l.b16 %v8148
    %v8691 = vunpack.c.h.b16 %v8148
    %v8692 = vunpack.c.l.b16 %v8149
    %v8693 = vunpack.c.h.b16 %v8149
    %v8694 = vunpack.c.l.b16 %v8150
    %v8695 = vunpack.c.h.b16 %v8150
    %v8696 = vunpack.c.l.b16 %v8151
    %v8697 = vunpack.c.h.b16 %v8151
    %v8698 = vunpack.c.l.b16 %v8152
    %v8699 = vunpack.c.h.b16 %v8152
    %v8700 = vunpack.c.l.b16 %v8153
    %v8701 = vunpack.c.h.b16 %v8153
    %v8702 = vunpack.c.l.b16 %v8154
    %v8703 = vunpack.c.h.b16 %v8154
    %v8704 = vunpack.c.l.b16 %v8155
    %v8705 = vunpack.c.h.b16 %v8155
    %v8706 = vunpack.c.l.b16 %v8156
    %v8707 = vunpack.c.h.b16 %v8156
    %v8708 = vunpack.c.l.b16 %v8157
    %v8709 = vunpack.c.h.b16 %v8157
    %v8710 = vunpack.c.l.b16 %v8158
    %v8711 = vunpack.c.h.b16 %v8158
    %v8712 = vunpack.c.l.b16 %v8159
    %v8713 = vunpack.c.h.b16 %v8159
    %v8714 = vunpack.c.l.b16 %v8160
    %v8715 = vunpack.c.h.b16 %v8160
    %v8716 = vunpack.c.l.b16 %v8161
    %v8717 = vunpack.c.h.b16 %v8161
    %v8718 = vunpack.c.l.b16 %v8162
    %v8719 = vunpack.c.h.b16 %v8162
    %v8720 = vunpack.c.l.b16 %v8163
    %v8721 = vunpack.c.h.b16 %v8163
    %v8722 = vunpack.c.l.b16 %v8164
    %v8723 = vunpack.c.h.b16 %v8164
    %v8724 = vunpack.c.l.b16 %v8165
    %v8725 = vunpack.c.h.b16 %v8165
    %v8726 = vunpack.c.l.b16 %v8166
    %v8727 = vunpack.c.h.b16 %v8166
    %v8728 = vunpack.c.l.b16 %v8167
    %v8729 = vunpack.c.h.b16 %v8167
    %v8730 = vunpack.c.l.b16 %v8168
    %v8731 = vunpack.c.h.b16 %v8168
    %v8732 = vunpack.c.l.b16 %v8169
    %v8733 = vunpack.c.h.b16 %v8169
    %v8734 = vunpack.c.l.b16 %v8170
    %v8735 = vunpack.c.h.b16 %v8170
    %v8736 = vunpack.c.l.b16 %v8171
    %v8737 = vunpack.c.h.b16 %v8171
    %v8738 = vunpack.c.l.b16 %v8172
    %v8739 = vunpack.c.h.b16 %v8172
    %v8740 = vunpack.c.l.b16 %v8173
    %v8741 = vunpack.c.h.b16 %v8173
    %v8742 = vunpack.c.l.b16 %v8174
    %v8743 = vunpack.c.h.b16 %v8174
    %v8744 = vunpack.c.l.b16 %v8175
    %v8745 = vunpack.c.h.b16 %v8175
    %v8746 = vunpack.c.l.b16 %v8176
    %v8747 = vunpack.c.h.b16 %v8176
    %v8748 = vunpack.c.l.b16 %v8177
    %v8749 = vunpack.c.h.b16 %v8177
    %v8750 = vunpack.c.l.b16 %v8178
    %v8751 = vunpack.c.h.b16 %v8178
    %v8752 = vunpack.c.l.b16 %v8179
    %v8753 = vunpack.c.h.b16 %v8179
    %v8754 = vunpack.c.l.b16 %v8180
    %v8755 = vunpack.c.h.b16 %v8180
    %v8756 = vunpack.c.l.b16 %v8181
    %v8757 = vunpack.c.h.b16 %v8181
    %v8758 = vunpack.c.l.b16 %v8182
    %v8759 = vunpack.c.h.b16 %v8182
    %v8760 = vunpack.c.l.b16 %v8183
    %v8761 = vunpack.c.h.b16 %v8183
    %v8762 = vunpack.c.l.b16 %v8184
    %v8763 = vunpack.c.h.b16 %v8184
    %v8764 = vunpack.c.l.b16 %v8185
    %v8765 = vunpack.c.h.b16 %v8185
    %v8766 = vunpack.c.l.b16 %v8186
    %v8767 = vunpack.c.h.b16 %v8186
    %v8768 = vunpack.c.l.b16 %v8187
    %v8769 = vunpack.c.h.b16 %v8187
    %v8770 = vunpack.c.l.b16 %v8188
    %v8771 = vunpack.c.h.b16 %v8188
    %v8772 = vunpack.c.l.b16 %v8189
    %v8773 = vunpack.c.h.b16 %v8189
    %v8774 = vunpack.c.l.b16 %v8190
    %v8775 = vunpack.c.h.b16 %v8190
    %v8776 = vunpack.c.l.b16 %v8191
    %v8777 = vunpack.c.h.b16 %v8191
    %v8778 = vunpack.c.l.b16 %v8192
    %v8779 = vunpack.c.h.b16 %v8192
    %v8780 = vunpack.c.l.b16 %v8193
    %v8781 = vunpack.c.h.b16 %v8193
    %v8782 = vunpack.c.l.b16 %v8194
    %v8783 = vunpack.c.h.b16 %v8194
    %v8784 = vunpack.c.l.b16 %v8195
    %v8785 = vunpack.c.h.b16 %v8195
    %v8786 = vunpack.c.l.b16 %v8196
    %v8787 = vunpack.c.h.b16 %v8196
    %v8788 = vunpack.c.l.b16 %v8197
    %v8789 = vunpack.c.h.b16 %v8197
    %v8790 = vunpack.c.l.b16 %v8198
    %v8791 = vunpack.c.h.b16 %v8198
    %v8792 = vunpack.c.l.b16 %v8199
    %v8793 = vunpack.c.h.b16 %v8199
    %v8794 = vunpack.c.l.b16 %v8200
    %v8795 = vunpack.c.h.b16 %v8200
    %v8796 = vunpack.c.l.b16 %v8201
    %v8797 = vunpack.c.h.b16 %v8201
    %v8798 = vunpack.c.l.b16 %v8202
    %v8799 = vunpack.c.h.b16 %v8202
    %v8800 = vunpack.c.l.b16 %v8203
    %v8801 = vunpack.c.h.b16 %v8203
    %v8802 = vunpack.c.l.b16 %v8204
    %v8803 = vunpack.c.h.b16 %v8204
    %v8804 = vunpack.c.l.b16 %v8205
    %v8805 = vunpack.c.h.b16 %v8205
    %v8806 = vunpack.c.l.b16 %v8206
    %v8807 = vunpack.c.h.b16 %v8206
    %v8808 = vunpack.c.l.b16 %v8207
    %v8809 = vunpack.c.h.b16 %v8207
    %v8810 = vunpack.c.l.b16 %v8208
    %v8811 = vunpack.c.h.b16 %v8208
    %v8812 = vunpack.c.l.b16 %v8209
    %v8813 = vunpack.c.h.b16 %v8209
    %v8814 = vunpack.c.l.b16 %v8210
    %v8815 = vunpack.c.h.b16 %v8210
    %v8816 = vunpack.c.l.b16 %v8211
    %v8817 = vunpack.c.h.b16 %v8211
    %v8818 = vunpack.c.l.b16 %v8212
    %v8819 = vunpack.c.h.b16 %v8212
    %v8820 = vunpack.c.l.b16 %v8213
    %v8821 = vunpack.c.h.b16 %v8213
    %v8822 = vunpack.c.l.b16 %v8214
    %v8823 = vunpack.c.h.b16 %v8214
    %v8824 = vunpack.c.l.b16 %v8215
    %v8825 = vunpack.c.h.b16 %v8215
    %v8826 = vunpack.c.l.b16 %v8216
    %v8827 = vunpack.c.h.b16 %v8216
    %v8828 = vunpack.c.l.b16 %v8217
    %v8829 = vunpack.c.h.b16 %v8217
    %v8830 = vunpack.c.l.b16 %v8218
    %v8831 = vunpack.c.h.b16 %v8218
    %v8832 = vunpack.c.l.b16 %v8219
    %v8833 = vunpack.c.h.b16 %v8219
    %v8834 = vunpack.c.l.b16 %v8220
    %v8835 = vunpack.c.h.b16 %v8220
    %v8836 = vunpack.c.l.b16 %v8221
    %v8837 = vunpack.c.h.b16 %v8221
    %v8838 = vunpack.c.l.b16 %v8222
    %v8839 = vunpack.c.h.b16 %v8222
    %v8840 = vunpack.c.l.b16 %v8223
    %v8841 = vunpack.c.h.b16 %v8223
    %v8842 = vunpack.c.l.b16 %v8224
    %v8843 = vunpack.c.h.b16 %v8224
    %v8844 = vunpack.c.l.b16 %v8225
    %v8845 = vunpack.c.h.b16 %v8225
    %v8846 = vunpack.c.l.b16 %v8226
    %v8847 = vunpack.c.h.b16 %v8226
    %v8848 = vunpack.c.l.b16 %v8227
    %v8849 = vunpack.c.h.b16 %v8227
    %v8850 = vunpack.c.l.b16 %v8228
    %v8851 = vunpack.c.h.b16 %v8228
    %v8852 = vunpack.c.l.b16 %v8229
    %v8853 = vunpack.c.h.b16 %v8229
    %v8854 = vunpack.c.l.b16 %v8230
    %v8855 = vunpack.c.h.b16 %v8230
    %v8856 = vunpack.c.l.b16 %v8231
    %v8857 = vunpack.c.h.b16 %v8231
    %v8858 = vunpack.c.l.b16 %v8232
    %v8859 = vunpack.c.h.b16 %v8232
    %v8860 = vunpack.c.l.b16 %v8233
    %v8861 = vunpack.c.h.b16 %v8233
    %v8862 = vunpack.c.l.b16 %v8234
    %v8863 = vunpack.c.h.b16 %v8234
    %v8864 = vunpack.c.l.b16 %v8235
    %v8865 = vunpack.c.h.b16 %v8235
    %v8866 = vunpack.c.l.b16 %v8236
    %v8867 = vunpack.c.h.b16 %v8236
    %v8868 = vunpack.c.l.b16 %v8237
    %v8869 = vunpack.c.h.b16 %v8237
    %v8870 = vunpack.c.l.b16 %v8238
    %v8871 = vunpack.c.h.b16 %v8238
    %v8872 = vunpack.c.l.b16 %v8239
    %v8873 = vunpack.c.h.b16 %v8239
    %v8874 = vunpack.c.l.b16 %v8240
    %v8875 = vunpack.c.h.b16 %v8240
    %v8876 = vunpack.c.l.b16 %v8241
    %v8877 = vunpack.c.h.b16 %v8241
    %v8878 = vunpack.c.l.b16 %v8242
    %v8879 = vunpack.c.h.b16 %v8242
    %v8880 = vunpack.c.l.b16 %v8243
    %v8881 = vunpack.c.h.b16 %v8243
    %v8882 = vunpack.c.l.b16 %v8244
    %v8883 = vunpack.c.h.b16 %v8244
    %v8884 = vunpack.c.l.b16 %v8245
    %v8885 = vunpack.c.h.b16 %v8245
    %v8886 = vunpack.c.l.b16 %v8246
    %v8887 = vunpack.c.h.b16 %v8246
    %v8888 = vunpack.c.l.b16 %v8247
    %v8889 = vunpack.c.h.b16 %v8247
    %v8890 = vunpack.c.l.b16 %v8248
    %v8891 = vunpack.c.h.b16 %v8248
    %v8892 = vunpack.c.l.b16 %v8249
    %v8893 = vunpack.c.h.b16 %v8249
    %v8894 = vunpack.c.l.b16 %v8250
    %v8895 = vunpack.c.h.b16 %v8250
    %v8896 = vunpack.c.l.b16 %v8251
    %v8897 = vunpack.c.h.b16 %v8251
    %v8898 = vunpack.c.l.b16 %v8252
    %v8899 = vunpack.c.h.b16 %v8252
    %v8900 = vunpack.c.l.b16 %v8253
    %v8901 = vunpack.c.h.b16 %v8253
    %v8902 = vunpack.c.l.b16 %v8254
    %v8903 = vunpack.c.h.b16 %v8254
    %v8904 = vunpack.c.l.b16 %v8255
    %v8905 = vunpack.c.h.b16 %v8255
    %v8906 = vunpack.c.l.b16 %v8256
    %v8907 = vunpack.c.h.b16 %v8256
    %v8908 = vunpack.c.l.b16 %v8257
    %v8909 = vunpack.c.h.b16 %v8257
    %v8910 = vunpack.c.l.b16 %v8258
    %v8911 = vunpack.c.h.b16 %v8258
    %v8912 = vunpack.c.l.b16 %v8259
    %v8913 = vunpack.c.h.b16 %v8259
    %v8914 = vunpack.c.l.b16 %v8260
    %v8915 = vunpack.c.h.b16 %v8260
    %v8916 = vunpack.c.l.b16 %v8261
    %v8917 = vunpack.c.h.b16 %v8261
    %v8918 = vunpack.c.l.b16 %v8262
    %v8919 = vunpack.c.h.b16 %v8262
    %v8920 = vunpack.c.l.b16 %v8263
    %v8921 = vunpack.c.h.b16 %v8263
    %v8922 = vunpack.c.l.b16 %v8264
    %v8923 = vunpack.c.h.b16 %v8264
    %v8924 = vunpack.c.l.b16 %v8265
    %v8925 = vunpack.c.h.b16 %v8265
    %v8926 = vunpack.c.l.b16 %v8266
    %v8927 = vunpack.c.h.b16 %v8266
    %v8928 = vunpack.c.l.b16 %v8267
    %v8929 = vunpack.c.h.b16 %v8267
    %v8930 = vunpack.c.l.b16 %v8268
    %v8931 = vunpack.c.h.b16 %v8268
    %v8932 = vunpack.c.l.b16 %v8269
    %v8933 = vunpack.c.h.b16 %v8269
    %v8934 = vunpack.c.l.b16 %v8270
    %v8935 = vunpack.c.h.b16 %v8270
    %v8936 = vunpack.c.l.b16 %v8271
    %v8937 = vunpack.c.h.b16 %v8271
    %v8938 = vunpack.c.l.b16 %v8272
    %v8939 = vunpack.c.h.b16 %v8272
    %v8940 = vunpack.c.l.b16 %v8273
    %v8941 = vunpack.c.h.b16 %v8273
    %v8942 = vunpack.c.l.b16 %v8274
    %v8943 = vunpack.c.h.b16 %v8274
    %v8944 = vunpack.c.l.b16 %v8275
    %v8945 = vunpack.c.h.b16 %v8275
    %v8946 = vunpack.c.l.b16 %v8276
    %v8947 = vunpack.c.h.b16 %v8276
    %v8948 = vunpack.c.l.b16 %v8277
    %v8949 = vunpack.c.h.b16 %v8277
    %v8950 = vunpack.c.l.b16 %v8278
    %v8951 = vunpack.c.h.b16 %v8278
    %v8952 = vunpack.c.l.b16 %v8279
    %v8953 = vunpack.c.h.b16 %v8279
    %v8954 = vunpack.c.l.b16 %v8280
    %v8955 = vunpack.c.h.b16 %v8280
    %v8956 = vunpack.c.l.b16 %v8281
    %v8957 = vunpack.c.h.b16 %v8281
    %v8958 = vunpack.c.l.b16 %v8282
    %v8959 = vunpack.c.h.b16 %v8282
    %v8960 = vunpack.c.l.b16 %v8283
    %v8961 = vunpack.c.h.b16 %v8283
    %v8962 = vunpack.c.l.b16 %v8284
    %v8963 = vunpack.c.h.b16 %v8284
    %v8964 = vunpack.c.l.b16 %v8285
    %v8965 = vunpack.c.h.b16 %v8285
    %v8966 = vunpack.c.l.b16 %v8286
    %v8967 = vunpack.c.h.b16 %v8286
    %v8968 = vunpack.c.l.b16 %v8287
    %v8969 = vunpack.c.h.b16 %v8287
    %v8970 = vunpack.c.l.b16 %v8288
    %v8971 = vunpack.c.h.b16 %v8288
    %v8972 = vunpack.c.l.b16 %v8289
    %v8973 = vunpack.c.h.b16 %v8289
    %v8974 = vunpack.c.l.b16 %v8290
    %v8975 = vunpack.c.h.b16 %v8290
    %v8976 = vunpack.c.l.b16 %v8291
    %v8977 = vunpack.c.h.b16 %v8291
    %v8978 = vunpack.c.l.b16 %v8292
    %v8979 = vunpack.c.h.b16 %v8292
    %v8980 = vunpack.c.l.b16 %v8293
    %v8981 = vunpack.c.h.b16 %v8293
    %v8982 = vunpack.c.l.b16 %v8294
    %v8983 = vunpack.c.h.b16 %v8294
    %v8984 = vunpack.c.l.b16 %v8295
    %v8985 = vunpack.c.h.b16 %v8295
    %v8986 = vunpack.c.l.b16 %v8296
    %v8987 = vunpack.c.h.b16 %v8296
    %v8988 = vunpack.c.l.b16 %v8297
    %v8989 = vunpack.c.h.b16 %v8297
    %v8990 = vunpack.c.l.b16 %v8298
    %v8991 = vunpack.c.h.b16 %v8298
    %v8992 = vunpack.c.l.b16 %v8299
    %v8993 = vunpack.c.h.b16 %v8299
    %v8994 = vunpack.c.l.b16 %v8300
    %v8995 = vunpack.c.h.b16 %v8300
    %v8996 = vunpack.c.l.b16 %v8301
    %v8997 = vunpack.c.h.b16 %v8301
    %v8998 = vunpack.c.l.b16 %v8302
    %v8999 = vunpack.c.h.b16 %v8302
    %v9000 = vunpack.c.l.b16 %v8303
    %v9001 = vunpack.c.h.b16 %v8303
    %v9002 = vunpack.c.l.b16 %v8304
    %v9003 = vunpack.c.h.b16 %v8304
    %v9004 = vunpack.c.l.b16 %v8305
    %v9005 = vunpack.c.h.b16 %v8305
    %v9006 = vunpack.c.l.b16 %v8306
    %v9007 = vunpack.c.h.b16 %v8306
    %v9008 = vunpack.c.l.b16 %v8307
    %v9009 = vunpack.c.h.b16 %v8307
    %v9010 = vunpack.c.l.b16 %v8308
    %v9011 = vunpack.c.h.b16 %v8308
    %v9012 = vunpack.c.l.b16 %v8309
    %v9013 = vunpack.c.h.b16 %v8309
    %v9014 = vunpack.c.l.b16 %v8310
    %v9015 = vunpack.c.h.b16 %v8310
    %v9016 = vunpack.c.l.b16 %v8311
    %v9017 = vunpack.c.h.b16 %v8311
    %v9018 = vunpack.c.l.b16 %v8312
    %v9019 = vunpack.c.h.b16 %v8312
    %v9020 = vunpack.c.l.b16 %v8313
    %v9021 = vunpack.c.h.b16 %v8313
    %v9022 = vunpack.c.l.b16 %v8314
    %v9023 = vunpack.c.h.b16 %v8314
    %v9024 = vunpack.c.l.b16 %v8315
    %v9025 = vunpack.c.h.b16 %v8315
    %v9026 = vunpack.c.l.b16 %v8316
    %v9027 = vunpack.c.h.b16 %v8316
    %v9028 = vunpack.c.l.b16 %v8317
    %v9029 = vunpack.c.h.b16 %v8317
    %v9030 = vunpack.c.l.b16 %v8318
    %v9031 = vunpack.c.h.b16 %v8318
    %v9032 = vunpack.c.l.b16 %v8319
    %v9033 = vunpack.c.h.b16 %v8319
    %v9034 = vunpack.c.l.b16 %v8320
    %v9035 = vunpack.c.h.b16 %v8320
    %v9036 = vunpack.c.l.b16 %v8321
    %v9037 = vunpack.c.h.b16 %v8321
    %v9038 = vunpack.c.l.b16 %v8322
    %v9039 = vunpack.c.h.b16 %v8322
    %v9040 = vunpack.c.l.b16 %v8323
    %v9041 = vunpack.c.h.b16 %v8323
    %v9042 = vunpack.c.l.b16 %v8324
    %v9043 = vunpack.c.h.b16 %v8324
    %v9044 = vunpack.c.l.b16 %v8325
    %v9045 = vunpack.c.h.b16 %v8325
    %v9046 = vunpack.c.l.b16 %v8326
    %v9047 = vunpack.c.h.b16 %v8326
    %v9048 = vunpack.c.l.b16 %v8327
    %v9049 = vunpack.c.h.b16 %v8327
    %v9050 = vunpack.c.l.b16 %v8328
    %v9051 = vunpack.c.h.b16 %v8328
    %v9052 = vunpack.c.l.b16 %v8329
    %v9053 = vunpack.c.h.b16 %v8329
    %v9054 = vunpack.c.l.b16 %v8330
    %v9055 = vunpack.c.h.b16 %v8330
    %v9056 = vunpack.c.l.b16 %v8331
    %v9057 = vunpack.c.h.b16 %v8331
    %v9058 = vunpack.c.l.b16 %v8332
    %v9059 = vunpack.c.h.b16 %v8332
    %v9060 = vunpack.c.l.b16 %v8333
    %v9061 = vunpack.c.h.b16 %v8333
    %v9062 = vunpack.c.l.b16 %v8334
    %v9063 = vunpack.c.h.b16 %v8334
    %v9064 = vunpack.c.l.b16 %v8335
    %v9065 = vunpack.c.h.b16 %v8335
    %v9066 = vunpack.c.l.b16 %v8336
    %v9067 = vunpack.c.h.b16 %v8336
    %v9068 = vunpack.c.l.b16 %v8337
    %v9069 = vunpack.c.h.b16 %v8337
    %v9070 = vunpack.c.l.b16 %v8338
    %v9071 = vunpack.c.h.b16 %v8338
    %v9072 = vunpack.c.l.b16 %v8339
    %v9073 = vunpack.c.h.b16 %v8339
    %v9074 = vunpack.c.l.b16 %v8340
    %v9075 = vunpack.c.h.b16 %v8340
    %v9076 = vunpack.c.l.b16 %v8341
    %v9077 = vunpack.c.h.b16 %v8341
    %v9078 = vunpack.c.l.b16 %v8342
    %v9079 = vunpack.c.h.b16 %v8342
    %v9080 = vunpack.c.l.b16 %v8343
    %v9081 = vunpack.c.h.b16 %v8343
    %v9082 = vunpack.c.l.b16 %v8344
    %v9083 = vunpack.c.h.b16 %v8344
    %v9084 = vunpack.c.l.b16 %v8345
    %v9085 = vunpack.c.h.b16 %v8345
    %v9086 = vunpack.c.l.b16 %v8346
    %v9087 = vunpack.c.h.b16 %v8346
    %v9088 = vunpack.c.l.b16 %v8347
    %v9089 = vunpack.c.h.b16 %v8347
    %v9090 = vunpack.c.l.b16 %v8348
    %v9091 = vunpack.c.h.b16 %v8348
    %v9092 = vunpack.c.l.b16 %v8349
    %v9093 = vunpack.c.h.b16 %v8349
    %v9094 = vunpack.c.l.b16 %v8350
    %v9095 = vunpack.c.h.b16 %v8350
    %v9096 = vunpack.c.l.b16 %v8351
    %v9097 = vunpack.c.h.b16 %v8351
    %v9098 = vunpack.c.l.b16 %v8352
    %v9099 = vunpack.c.h.b16 %v8352
    %v9100 = vunpack.c.l.b16 %v8353
    %v9101 = vunpack.c.h.b16 %v8353
    %v9102 = vunpack.c.l.b16 %v8354
    %v9103 = vunpack.c.h.b16 %v8354
    %v9104 = vunpack.c.l.b16 %v8355
    %v9105 = vunpack.c.h.b16 %v8355
    %v9106 = vunpack.c.l.b16 %v8356
    %v9107 = vunpack.c.h.b16 %v8356
    %v9108 = vunpack.c.l.b16 %v8357
    %v9109 = vunpack.c.h.b16 %v8357
    %v9110 = vunpack.c.l.b16 %v8358
    %v9111 = vunpack.c.h.b16 %v8358
    %v9112 = vunpack.c.l.b16 %v8359
    %v9113 = vunpack.c.h.b16 %v8359
    %v9114 = vunpack.c.l.b16 %v8360
    %v9115 = vunpack.c.h.b16 %v8360
    %v9116 = vunpack.c.l.b16 %v8361
    %v9117 = vunpack.c.h.b16 %v8361
    %v9118 = vunpack.c.l.b16 %v8362
    %v9119 = vunpack.c.h.b16 %v8362
    %v9120 = vunpack.c.l.b16 %v8363
    %v9121 = vunpack.c.h.b16 %v8363
    %v9122 = vunpack.c.l.b16 %v8364
    %v9123 = vunpack.c.h.b16 %v8364
    %v9124 = vunpack.c.l.b16 %v8365
    %v9125 = vunpack.c.h.b16 %v8365
    %v9126 = vunpack.c.l.b16 %v8366
    %v9127 = vunpack.c.h.b16 %v8366
    %v9128 = vunpack.c.l.b16 %v8367
    %v9129 = vunpack.c.h.b16 %v8367
    %v9130 = vunpack.c.l.b16 %v8368
    %v9131 = vunpack.c.h.b16 %v8368
    %v9132 = vunpack.c.l.b16 %v8369
    %v9133 = vunpack.c.h.b16 %v8369
    %v9134 = vunpack.c.l.b16 %v8370
    %v9135 = vunpack.c.h.b16 %v8370
    %v9136 = vunpack.c.l.b16 %v8371
    %v9137 = vunpack.c.h.b16 %v8371
    %v9138 = vunpack.c.l.b16 %v8372
    %v9139 = vunpack.c.h.b16 %v8372
    %v9140 = vunpack.c.l.b16 %v8373
    %v9141 = vunpack.c.h.b16 %v8373
    %v9142 = vunpack.c.l.b16 %v8374
    %v9143 = vunpack.c.h.b16 %v8374
    %v9144 = vunpack.c.l.b16 %v8375
    %v9145 = vunpack.c.h.b16 %v8375
    %v9146 = vunpack.c.l.b16 %v8376
    %v9147 = vunpack.c.h.b16 %v8376
    %v9148 = vunpack.c.l.b16 %v8377
    %v9149 = vunpack.c.h.b16 %v8377
    %v9150 = vunpack.c.l.b16 %v8378
    %v9151 = vunpack.c.h.b16 %v8378
    %v9152 = vunpack.c.l.b16 %v8379
    %v9153 = vunpack.c.h.b16 %v8379
    %v9154 = vunpack.c.l.b16 %v8380
    %v9155 = vunpack.c.h.b16 %v8380
    %v9156 = vunpack.c.l.b16 %v8381
    %v9157 = vunpack.c.h.b16 %v8381
    %v9158 = vunpack.c.l.b16 %v8382
    %v9159 = vunpack.c.h.b16 %v8382
    %v9160 = vunpack.c.l.b16 %v8383
    %v9161 = vunpack.c.h.b16 %v8383
    %v9162 = vunpack.c.l.b16 %v8384
    %v9163 = vunpack.c.h.b16 %v8384
    %v9164 = vunpack.c.l.b16 %v8385
    %v9165 = vunpack.c.h.b16 %v8385
    %v9166 = vunpack.c.l.b16 %v8386
    %v9167 = vunpack.c.h.b16 %v8386
    %v9168 = vunpack.c.l.b16 %v8387
    %v9169 = vunpack.c.h.b16 %v8387
    %v9170 = vunpack.c.l.b16 %v8388
    %v9171 = vunpack.c.h.b16 %v8388
    %v9172 = vunpack.c.l.b16 %v8389
    %v9173 = vunpack.c.h.b16 %v8389
    %v9174 = vunpack.c.l.b16 %v8390
    %v9175 = vunpack.c.h.b16 %v8390
    %v9176 = vunpack.c.l.b16 %v8391
    %v9177 = vunpack.c.h.b16 %v8391
    %v9178 = vunpack.c.l.b16 %v8392
    %v9179 = vunpack.c.h.b16 %v8392
    %v9180 = vunpack.c.l.b16 %v8393
    %v9181 = vunpack.c.h.b16 %v8393
    %v9182 = vunpack.c.l.b16 %v8394
    %v9183 = vunpack.c.h.b16 %v8394
    %v9184 = vunpack.c.l.b16 %v8395
    %v9185 = vunpack.c.h.b16 %v8395
    %v9186 = vpack.c.b16 %v8678, %v8674
    %v9187 = vpack.c.b16 %v8679, %v8675
    %v9188 = vpack.c.b16 %v8680, %v8676
    %v9189 = vpack.c.b16 %v8681, %v8677
    %v9190 = vpack.c.b16 %v8686, %v8682
    %v9191 = vpack.c.b16 %v8687, %v8683
    %v9192 = vpack.c.b16 %v8688, %v8684
    %v9193 = vpack.c.b16 %v8689, %v8685
    %v9194 = vpack.c.b16 %v8694, %v8690
    %v9195 = vpack.c.b16 %v8695, %v8691
    %v9196 = vpack.c.b16 %v8696, %v8692
    %v9197 = vpack.c.b16 %v8697, %v8693
    %v9198 = vpack.c.b16 %v8702, %v8698
    %v9199 = vpack.c.b16 %v8703, %v8699
    %v9200 = vpack.c.b16 %v8704, %v8700
    %v9201 = vpack.c.b16 %v8705, %v8701
    %v9202 = vpack.c.b16 %v8710, %v8706
    %v9203 = vpack.c.b16 %v8711, %v8707
    %v9204 = vpack.c.b16 %v8712, %v8708
    %v9205 = vpack.c.b16 %v8713, %v8709
    %v9206 = vpack.c.b16 %v8718, %v8714
    %v9207 = vpack.c.b16 %v8719, %v8715
    %v9208 = vpack.c.b16 %v8720, %v8716
    %v9209 = vpack.c.b16 %v8721, %v8717
    %v9210 = vpack.c.b16 %v8726, %v8722
    %v9211 = vpack.c.b16 %v8727, %v8723
    %v9212 = vpack.c.b16 %v8728, %v8724
    %v9213 = vpack.c.b16 %v8729, %v8725
    %v9214 = vpack.c.b16 %v8734, %v8730
    %v9215 = vpack.c.b16 %v8735, %v8731
    %v9216 = vpack.c.b16 %v8736, %v8732
    %v9217 = vpack.c.b16 %v8737, %v8733
    %v9218 = vpack.c.b16 %v8742, %v8738
    %v9219 = vpack.c.b16 %v8743, %v8739
    %v9220 = vpack.c.b16 %v8744, %v8740
    %v9221 = vpack.c.b16 %v8745, %v8741
    %v9222 = vpack.c.b16 %v8750, %v8746
    %v9223 = vpack.c.b16 %v8751, %v8747
    %v9224 = vpack.c.b16 %v8752, %v8748
    %v9225 = vpack.c.b16 %v8753, %v8749
    %v9226 = vpack.c.b16 %v8758, %v8754
    %v9227 = vpack.c.b16 %v8759, %v8755
    %v9228 = vpack.c.b16 %v8760, %v8756
    %v9229 = vpack.c.b16 %v8761, %v8757
    %v9230 = vpack.c.b16 %v8766, %v8762
    %v9231 = vpack.c.b16 %v8767, %v8763
    %v9232 = vpack.c.b16 %v8768, %v8764
    %v9233 = vpack.c.b16 %v8769, %v8765
    %v9234 = vpack.c.b16 %v8774, %v8770
    %v9235 = vpack.c.b16 %v8775, %v8771
    %v9236 = vpack.c.b16 %v8776, %v8772
    %v9237 = vpack.c.b16 %v8777, %v8773
    %v9238 = vpack.c.b16 %v8782, %v8778
    %v9239 = vpack.c.b16 %v8783, %v8779
    %v9240 = vpack.c.b16 %v8784, %v8780
    %v9241 = vpack.c.b16 %v8785, %v8781
    %v9242 = vpack.c.b16 %v8790, %v8786
    %v9243 = vpack.c.b16 %v8791, %v8787
    %v9244 = vpack.c.b16 %v8792, %v8788
    %v9245 = vpack.c.b16 %v8793, %v8789
    %v9246 = vpack.c.b16 %v8798, %v8794
    %v9247 = vpack.c.b16 %v8799, %v8795
    %v9248 = vpack.c.b16 %v8800, %v8796
    %v9249 = vpack.c.b16 %v8801, %v8797
    %v9250 = vpack.c.b16 %v8806, %v8802
    %v9251 = vpack.c.b16 %v8807, %v8803
    %v9252 = vpack.c.b16 %v8808, %v8804
    %v9253 = vpack.c.b16 %v8809, %v8805
    %v9254 = vpack.c.b16 %v8814, %v8810
    %v9255 = vpack.c.b16 %v8815, %v8811
    %v9256 = vpack.c.b16 %v8816, %v8812
    %v9257 = vpack.c.b16 %v8817, %v8813
    %v9258 = vpack.c.b16 %v8822, %v8818
    %v9259 = vpack.c.b16 %v8823, %v8819
    %v9260 = vpack.c.b16 %v8824, %v8820
    %v9261 = vpack.c.b16 %v8825, %v8821
    %v9262 = vpack.c.b16 %v8830, %v8826
    %v9263 = vpack.c.b16 %v8831, %v8827
    %v9264 = vpack.c.b16 %v8832, %v8828
    %v9265 = vpack.c.b16 %v8833, %v8829
    %v9266 = vpack.c.b16 %v8838, %v8834
    %v9267 = vpack.c.b16 %v8839, %v8835
    %v9268 = vpack.c.b16 %v8840, %v8836
    %v9269 = vpack.c.b16 %v8841, %v8837
    %v9270 = vpack.c.b16 %v8846, %v8842
    %v9271 = vpack.c.b16 %v8847, %v8843
    %v9272 = vpack.c.b16 %v8848, %v8844
    %v9273 = vpack.c.b16 %v8849, %v8845
    %v9274 = vpack.c.b16 %v8854, %v8850
    %v9275 = vpack.c.b16 %v8855, %v8851
    %v9276 = vpack.c.b16 %v8856, %v8852
    %v9277 = vpack.c.b16 %v8857, %v8853
    %v9278 = vpack.c.b16 %v8862, %v8858
    %v9279 = vpack.c.b16 %v8863, %v8859
    %v9280 = vpack.c.b16 %v8864, %v8860
    %v9281 = vpack.c.b16 %v8865, %v8861
    %v9282 = vpack.c.b16 %v8870, %v8866
    %v9283 = vpack.c.b16 %v8871, %v8867
    %v9284 = vpack.c.b16 %v8872, %v8868
    %v9285 = vpack.c.b16 %v8873, %v8869
    %v9286 = vpack.c.b16 %v8878, %v8874
    %v9287 = vpack.c.b16 %v8879, %v8875
    %v9288 = vpack.c.b16 %v8880, %v8876
    %v9289 = vpack.c.b16 %v8881, %v8877
    %v9290 = vpack.c.b16 %v8886, %v8882
    %v9291 = vpack.c.b16 %v8887, %v8883
    %v9292 = vpack.c.b16 %v8888, %v8884
    %v9293 = vpack.c.b16 %v8889, %v8885
    %v9294 = vpack.c.b16 %v8894, %v8890
    %v9295 = vpack.c.b16 %v8895, %v8891
    %v9296 = vpack.c.b16 %v8896, %v8892
    %v9297 = vpack.c.b16 %v8897, %v8893
    %v9298 = vpack.c.b16 %v8902, %v8898
    %v9299 = vpack.c.b16 %v8903, %v8899
    %v9300 = vpack.c.b16 %v8904, %v8900
    %v9301 = vpack.c.b16 %v8905, %v8901
    %v9302 = vpack.c.b16 %v8910, %v8906
    %v9303 = vpack.c.b16 %v8911, %v8907
    %v9304 = vpack.c.b16 %v8912, %v8908
    %v9305 = vpack.c.b16 %v8913, %v8909
    %v9306 = vpack.c.b16 %v8918, %v8914
    %v9307 = vpack.c.b16 %v8919, %v8915
    %v9308 = vpack.c.b16 %v8920, %v8916
    %v9309 = vpack.c.b16 %v8921, %v8917
    %v9310 = vpack.c.b16 %v8926, %v8922
    %v9311 = vpack.c.b16 %v8927, %v8923
    %v9312 = vpack.c.b16 %v8928, %v8924
    %v9313 = vpack.c.b16 %v8929, %v8925
    %v9314 = vpack.c.b16 %v8934, %v8930
    %v9315 = vpack.c.b16 %v8935, %v8931
    %v9316 = vpack.c.b16 %v8936, %v8932
    %v9317 = vpack.c.b16 %v8937, %v8933
    %v9318 = vpack.c.b16 %v8942, %v8938
    %v9319 = vpack.c.b16 %v8943, %v8939
    %v9320 = vpack.c.b16 %v8944, %v8940
    %v9321 = vpack.c.b16 %v8945, %v8941
    %v9322 = vpack.c.b16 %v8950, %v8946
    %v9323 = vpack.c.b16 %v8951, %v8947
    %v9324 = vpack.c.b16 %v8952, %v8948
    %v9325 = vpack.c.b16 %v8953, %v8949
    %v9326 = vpack.c.b16 %v8958, %v8954
    %v9327 = vpack.c.b16 %v8959, %v8955
    %v9328 = vpack.c.b16 %v8960, %v8956
    %v9329 = vpack.c.b16 %v8961, %v8957
    %v9330 = vpack.c.b16 %v8966, %v8962
    %v9331 = vpack.c.b16 %v8967, %v8963
    %v9332 = vpack.c.b16 %v8968, %v8964
    %v9333 = vpack.c.b16 %v8969, %v8965
    %v9334 = vpack.c.b16 %v8974, %v8970
    %v9335 = vpack.c.b16 %v8975, %v8971
    %v9336 = vpack.c.b16 %v8976, %v8972
    %v9337 = vpack.c.b16 %v8977, %v8973
    %v9338 = vpack.c.b16 %v8982, %v8978
    %v9339 = vpack.c.b16 %v8983, %v8979
    %v9340 = vpack.c.b16 %v8984, %v8980
    %v9341 = vpack.c.b16 %v8985, %v8981
    %v9342 = vpack.c.b16 %v8990, %v8986
    %v9343 = vpack.c.b16 %v8991, %v8987
    %v9344 = vpack.c.b16 %v8992, %v8988
    %v9345 = vpack.c.b16 %v8993, %v8989
    %v9346 = vpack.c.b16 %v8998, %v8994
    %v9347 = vpack.c.b16 %v8999, %v8995
    %v9348 = vpack.c.b16 %v9000, %v8996
    %v9349 = vpack.c.b16 %v9001, %v8997
    %v9350 = vpack.c.b16 %v9006, %v9002
    %v9351 = vpack.c.b16 %v9007, %v9003
    %v9352 = vpack.c.b16 %v9008, %v9004
    %v9353 = vpack.c.b16 %v9009, %v9005
    %v9354 = vpack.c.b16 %v9014, %v9010
    %v9355 = vpack.c.b16 %v9015, %v9011
    %v9356 = vpack.c.b16 %v9016, %v9012
    %v9357 = vpack.c.b16 %v9017, %v9013
    %v9358 = vpack.c.b16 %v9022, %v9018
    %v9359 = vpack.c.b16 %v9023, %v9019
    %v9360 = vpack.c.b16 %v9024, %v9020
    %v9361 = vpack.c.b16 %v9025, %v9021
    %v9362 = vpack.c.b16 %v9030, %v9026
    %v9363 = vpack.c.b16 %v9031, %v9027
    %v9364 = vpack.c.b16 %v9032, %v9028
    %v9365 = vpack.c.b16 %v9033, %v9029
    %v9366 = vpack.c.b16 %v9038, %v9034
    %v9367 = vpack.c.b16 %v9039, %v9035
    %v9368 = vpack.c.b16 %v9040, %v9036
    %v9369 = vpack.c.b16 %v9041, %v9037
    %v9370 = vpack.c.b16 %v9046, %v9042
    %v9371 = vpack.c.b16 %v9047, %v9043
    %v9372 = vpack.c.b16 %v9048, %v9044
    %v9373 = vpack.c.b16 %v9049, %v9045
    %v9374 = vpack.c.b16 %v9054, %v9050
    %v9375 = vpack.c.b16 %v9055, %v9051
    %v9376 = vpack.c.b16 %v9056, %v9052
    %v9377 = vpack.c.b16 %v9057, %v9053
    %v9378 = vpack.c.b16 %v9062, %v9058
    %v9379 = vpack.c.b16 %v9063, %v9059
    %v9380 = vpack.c.b16 %v9064, %v9060
    %v9381 = vpack.c.b16 %v9065, %v9061
    %v9382 = vpack.c.b16 %v9070, %v9066
    %v9383 = vpack.c.b16 %v9071, %v9067
    %v9384 = vpack.c.b16 %v9072, %v9068
    %v9385 = vpack.c.b16 %v9073, %v9069
    %v9386 = vpack.c.b16 %v9078, %v9074
    %v9387 = vpack.c.b16 %v9079, %v9075
    %v9388 = vpack.c.b16 %v9080, %v9076
    %v9389 = vpack.c.b16 %v9081, %v9077
    %v9390 = vpack.c.b16 %v9086, %v9082
    %v9391 = vpack.c.b16 %v9087, %v9083
    %v9392 = vpack.c.b16 %v9088, %v9084
    %v9393 = vpack.c.b16 %v9089, %v9085
    %v9394 = vpack.c.b16 %v9094, %v9090
    %v9395 = vpack.c.b16 %v9095, %v9091
    %v9396 = vpack.c.b16 %v9096, %v9092
    %v9397 = vpack.c.b16 %v9097, %v9093
    %v9398 = vpack.c.b16 %v9102, %v9098
    %v9399 = vpack.c.b16 %v9103, %v9099
    %v9400 = vpack.c.b16 %v9104, %v9100
    %v9401 = vpack.c.b16 %v9105, %v9101
    %v9402 = vpack.c.b16 %v9110, %v9106
    %v9403 = vpack.c.b16 %v9111, %v9107
    %v9404 = vpack.c.b16 %v9112, %v9108
    %v9405 = vpack.c.b16 %v9113, %v9109
    %v9406 = vpack.c.b16 %v9118, %v9114
    %v9407 = vpack.c.b16 %v9119, %v9115
    %v9408 = vpack.c.b16 %v9120, %v9116
    %v9409 = vpack.c.b16 %v9121, %v9117
    %v9410 = vpack.c.b16 %v9126, %v9122
    %v9411 = vpack.c.b16 %v9127, %v9123
    %v9412 = vpack.c.b16 %v9128, %v9124
    %v9413 = vpack.c.b16 %v9129, %v9125
    %v9414 = vpack.c.b16 %v9134, %v9130
    %v9415 = vpack.c.b16 %v9135, %v9131
    %v9416 = vpack.c.b16 %v9136, %v9132
    %v9417 = vpack.c.b16 %v9137, %v9133
    %v9418 = vpack.c.b16 %v9142, %v9138
    %v9419 = vpack.c.b16 %v9143, %v9139
    %v9420 = vpack.c.b16 %v9144, %v9140
    %v9421 = vpack.c.b16 %v9145, %v9141
    %v9422 = vpack.c.b16 %v9150, %v9146
    %v9423 = vpack.c.b16 %v9151, %v9147
    %v9424 = vpack.c.b16 %v9152, %v9148
    %v9425 = vpack.c.b16 %v9153, %v9149
    %v9426 = vpack.c.b16 %v9158, %v9154
    %v9427 = vpack.c.b16 %v9159, %v9155
    %v9428 = vpack.c.b16 %v9160, %v9156
    %v9429 = vpack.c.b16 %v9161, %v9157
    %v9430 = vpack.c.b16 %v9166, %v9162
    %v9431 = vpack.c.b16 %v9167, %v9163
    %v9432 = vpack.c.b16 %v9168, %v9164
    %v9433 = vpack.c.b16 %v9169, %v9165
    %v9434 = vpack.c.b16 %v9174, %v9170
    %v9435 = vpack.c.b16 %v9175, %v9171
    %v9436 = vpack.c.b16 %v9176, %v9172
    %v9437 = vpack.c.b16 %v9177, %v9173
    %v9438 = vpack.c.b16 %v9182, %v9178
    %v9439 = vpack.c.b16 %v9183, %v9179
    %v9440 = vpack.c.b16 %v9184, %v9180
    %v9441 = vpack.c.b16 %v9185, %v9181
    %9698 = vmatprep.subr.bf16.mxu0 %v9215
    %9699 = vmatpush1.bf16.msra.mxu0 %v9214
    %9700 = vmatprep.subr.bf16.mxu0 %v9211
    %9701 = vmatpush1.bf16.msra.mxu0 %v9210
    %9702 = vmatprep.subr.bf16.mxu0 %v9207
    %9703 = vmatpush1.bf16.msra.mxu0 %v9206
    %9704 = vmatprep.subr.bf16.mxu0 %v9203
    %9705 = vmatpush1.bf16.msra.mxu0 %v9202
    %9706 = vmatprep.subr.bf16.mxu0 %v9199
    %9707 = vmatpush1.bf16.msra.mxu0 %v9198
    %9708 = vmatprep.subr.bf16.mxu0 %v9195
    %9709 = vmatpush1.bf16.msra.mxu0 %v9194
    %9710 = vmatprep.subr.bf16.mxu0 %v9191
    %9711 = vmatpush1.bf16.msra.mxu0 %v9190
    %9712 = vmatprep.subr.bf16.mxu0 %v9187
    %9713 = vmatpush1.bf16.msra.mxu0 %v9186
    %9714 = vmatprep.subr.bf16.mxu0 %v9247
    %9715 = vmatpush2.bf16.msra.mxu0 %v9246
    %9716 = vmatprep.subr.bf16.mxu0 %v9243
    %9717 = vmatpush2.bf16.msra.mxu0 %v9242
    %9718 = vmatprep.subr.bf16.mxu0 %v9239
    %9719 = vmatpush2.bf16.msra.mxu0 %v9238
    %9720 = vmatprep.subr.bf16.mxu0 %v9235
    %9721 = vmatpush2.bf16.msra.mxu0 %v9234
    %9722 = vmatprep.subr.bf16.mxu0 %v9231
    %9723 = vmatpush2.bf16.msra.mxu0 %v9230
    %9724 = vmatprep.subr.bf16.mxu0 %v9227
    %9725 = vmatpush2.bf16.msra.mxu0 %v9226
    %9726 = vmatprep.subr.bf16.mxu0 %v9223
    %9727 = vmatpush2.bf16.msra.mxu0 %v9222
    %9728 = vmatprep.subr.bf16.mxu0 %v9219
    %9729 = vmatpush2.bf16.msra.mxu0 %v9218
    %9730 = vmatprep.mubr.bf16.mxu0 %v3617
    %9731 = vmatmul.mubr.bf16.gmra.mxu0 %v3616
    %v9732 = vpop.f32.mrf.mxu0
    %v9733 = vadd.f32 %v8401, %v9732
    %v9734 = vpop.f32.mrf.mxu0
    %v9735 = vadd.f32 %v8405, %v9734
    %v9736 = vpop.f32.mrf.mxu0
    %v9737 = vadd.f32 %v8401, %v9736
    %v9738 = vpop.f32.mrf.mxu0
    %v9739 = vadd.f32 %v8405, %v9738
    %9740 = vdwg.mxu0
    %9741 = vmatprep.subr.bf16.mxu0 %v9279
    %9742 = vmatpush1.bf16.msra.mxu0 %v9278
    %9743 = vmatprep.subr.bf16.mxu0 %v9275
    %9744 = vmatpush1.bf16.msra.mxu0 %v9274
    %9745 = vmatprep.subr.bf16.mxu0 %v9271
    %9746 = vmatpush1.bf16.msra.mxu0 %v9270
    %9747 = vmatprep.subr.bf16.mxu0 %v9267
    %9748 = vmatpush1.bf16.msra.mxu0 %v9266
    %9749 = vmatprep.subr.bf16.mxu0 %v9263
    %9750 = vmatpush1.bf16.msra.mxu0 %v9262
    %9751 = vmatprep.subr.bf16.mxu0 %v9259
    %9752 = vmatpush1.bf16.msra.mxu0 %v9258
    %9753 = vmatprep.subr.bf16.mxu0 %v9255
    %9754 = vmatpush1.bf16.msra.mxu0 %v9254
    %9755 = vmatprep.subr.bf16.mxu0 %v9251
    %9756 = vmatpush1.bf16.msra.mxu0 %v9250
    %9757 = vmatprep.subr.bf16.mxu0 %v9311
    %9758 = vmatpush2.bf16.msra.mxu0 %v9310
    %9759 = vmatprep.subr.bf16.mxu0 %v9307
    %9760 = vmatpush2.bf16.msra.mxu0 %v9306
    %9761 = vmatprep.subr.bf16.mxu0 %v9303
    %9762 = vmatpush2.bf16.msra.mxu0 %v9302
    %9763 = vmatprep.subr.bf16.mxu0 %v9299
    %9764 = vmatpush2.bf16.msra.mxu0 %v9298
    %9765 = vmatprep.subr.bf16.mxu0 %v9295
    %9766 = vmatpush2.bf16.msra.mxu0 %v9294
    %9767 = vmatprep.subr.bf16.mxu0 %v9291
    %9768 = vmatpush2.bf16.msra.mxu0 %v9290
    %9769 = vmatprep.subr.bf16.mxu0 %v9287
    %9770 = vmatpush2.bf16.msra.mxu0 %v9286
    %9771 = vmatprep.subr.bf16.mxu0 %v9283
    %9772 = vmatpush2.bf16.msra.mxu0 %v9282
    %9773 = vmatprep.mubr.bf16.mxu0 %v3619
    %9774 = vmatmul.mubr.bf16.gmra.mxu0 %v3618
    %v9775 = vpop.f32.mrf.mxu0
    %v9776 = vadd.f32 %v9733, %v9775
    %v9777 = vpop.f32.mrf.mxu0
    %v9778 = vadd.f32 %v9735, %v9777
    %v9779 = vpop.f32.mrf.mxu0
    %v9780 = vadd.f32 %v9737, %v9779
    %v9781 = vpop.f32.mrf.mxu0
    %v9782 = vadd.f32 %v9739, %v9781
    %9783 = vdwg.mxu0
    %9784 = vmatprep.subr.bf16.mxu0 %v9343
    %9785 = vmatpush1.bf16.msra.mxu0 %v9342
    %9786 = vmatprep.subr.bf16.mxu0 %v9339
    %9787 = vmatpush1.bf16.msra.mxu0 %v9338
    %9788 = vmatprep.subr.bf16.mxu0 %v9335
    %9789 = vmatpush1.bf16.msra.mxu0 %v9334
    %9790 = vmatprep.subr.bf16.mxu0 %v9331
    %9791 = vmatpush1.bf16.msra.mxu0 %v9330
    %9792 = vmatprep.subr.bf16.mxu0 %v9327
    %9793 = vmatpush1.bf16.msra.mxu0 %v9326
    %9794 = vmatprep.subr.bf16.mxu0 %v9323
    %9795 = vmatpush1.bf16.msra.mxu0 %v9322
    %9796 = vmatprep.subr.bf16.mxu0 %v9319
    %9797 = vmatpush1.bf16.msra.mxu0 %v9318
    %9798 = vmatprep.subr.bf16.mxu0 %v9315
    %9799 = vmatpush1.bf16.msra.mxu0 %v9314
    %9800 = vmatprep.subr.bf16.mxu0 %v9375
    %9801 = vmatpush2.bf16.msra.mxu0 %v9374
    %9802 = vmatprep.subr.bf16.mxu0 %v9371
    %9803 = vmatpush2.bf16.msra.mxu0 %v9370
    %9804 = vmatprep.subr.bf16.mxu0 %v9367
    %9805 = vmatpush2.bf16.msra.mxu0 %v9366
    %9806 = vmatprep.subr.bf16.mxu0 %v9363
    %9807 = vmatpush2.bf16.msra.mxu0 %v9362
    %9808 = vmatprep.subr.bf16.mxu0 %v9359
    %9809 = vmatpush2.bf16.msra.mxu0 %v9358
    %9810 = vmatprep.subr.bf16.mxu0 %v9355
    %9811 = vmatpush2.bf16.msra.mxu0 %v9354
    %9812 = vmatprep.subr.bf16.mxu0 %v9351
    %9813 = vmatpush2.bf16.msra.mxu0 %v9350
    %9814 = vmatprep.subr.bf16.mxu0 %v9347
    %9815 = vmatpush2.bf16.msra.mxu0 %v9346
    %9816 = vmatprep.mubr.bf16.mxu0 %v3621
    %9817 = vmatmul.mubr.bf16.gmra.mxu0 %v3620
    %v9818 = vpop.f32.mrf.mxu0
    %v9819 = vadd.f32 %v9776, %v9818
    %v9820 = vpop.f32.mrf.mxu0
    %v9821 = vadd.f32 %v9778, %v9820
    %v9822 = vpop.f32.mrf.mxu0
    %v9823 = vadd.f32 %v9780, %v9822
    %v9824 = vpop.f32.mrf.mxu0
    %v9825 = vadd.f32 %v9782, %v9824
    %9826 = vdwg.mxu0
    %9827 = vmatprep.subr.bf16.mxu0 %v9407
    %9828 = vmatpush1.bf16.msra.mxu0 %v9406
    %9829 = vmatprep.subr.bf16.mxu0 %v9403
    %9830 = vmatpush1.bf16.msra.mxu0 %v9402
    %9831 = vmatprep.subr.bf16.mxu0 %v9399
    %9832 = vmatpush1.bf16.msra.mxu0 %v9398
    %9833 = vmatprep.subr.bf16.mxu0 %v9395
    %9834 = vmatpush1.bf16.msra.mxu0 %v9394
    %9835 = vmatprep.subr.bf16.mxu0 %v9391
    %9836 = vmatpush1.bf16.msra.mxu0 %v9390
    %9837 = vmatprep.subr.bf16.mxu0 %v9387
    %9838 = vmatpush1.bf16.msra.mxu0 %v9386
    %9839 = vmatprep.subr.bf16.mxu0 %v9383
    %9840 = vmatpush1.bf16.msra.mxu0 %v9382
    %9841 = vmatprep.subr.bf16.mxu0 %v9379
    %9842 = vmatpush1.bf16.msra.mxu0 %v9378
    %9843 = vmatprep.subr.bf16.mxu0 %v9439
    %9844 = vmatpush2.bf16.msra.mxu0 %v9438
    %9845 = vmatprep.subr.bf16.mxu0 %v9435
    %9846 = vmatpush2.bf16.msra.mxu0 %v9434
    %9847 = vmatprep.subr.bf16.mxu0 %v9431
    %9848 = vmatpush2.bf16.msra.mxu0 %v9430
    %9849 = vmatprep.subr.bf16.mxu0 %v9427
    %9850 = vmatpush2.bf16.msra.mxu0 %v9426
    %9851 = vmatprep.subr.bf16.mxu0 %v9423
    %9852 = vmatpush2.bf16.msra.mxu0 %v9422
    %9853 = vmatprep.subr.bf16.mxu0 %v9419
    %9854 = vmatpush2.bf16.msra.mxu0 %v9418
    %9855 = vmatprep.subr.bf16.mxu0 %v9415
    %9856 = vmatpush2.bf16.msra.mxu0 %v9414
    %9857 = vmatprep.subr.bf16.mxu0 %v9411
    %9858 = vmatpush2.bf16.msra.mxu0 %v9410
    %9859 = vmatprep.mubr.bf16.mxu0 %v3623
    %9860 = vmatmul.mubr.bf16.gmra.mxu0 %v3622
    %v9861 = vpop.f32.mrf.mxu0
    %v9862 = vadd.f32 %v9819, %v9861
    %v9863 = vpop.f32.mrf.mxu0
    %v9864 = vadd.f32 %v9821, %v9863
    %v9865 = vpop.f32.mrf.mxu0
    %v9866 = vadd.f32 %v9823, %v9865
    %v9867 = vpop.f32.mrf.mxu0
    %v9868 = vadd.f32 %v9825, %v9867
    %9869 = vdwg.mxu0
    %9870 = vmatprep.subr.bf16.mxu0 %v9217
    %9871 = vmatpush1.bf16.msra.mxu0 %v9216
    %9872 = vmatprep.subr.bf16.mxu0 %v9213
    %9873 = vmatpush1.bf16.msra.mxu0 %v9212
    %9874 = vmatprep.subr.bf16.mxu0 %v9209
    %9875 = vmatpush1.bf16.msra.mxu0 %v9208
    %9876 = vmatprep.subr.bf16.mxu0 %v9205
    %9877 = vmatpush1.bf16.msra.mxu0 %v9204
    %9878 = vmatprep.subr.bf16.mxu0 %v9201
    %9879 = vmatpush1.bf16.msra.mxu0 %v9200
    %9880 = vmatprep.subr.bf16.mxu0 %v9197
    %9881 = vmatpush1.bf16.msra.mxu0 %v9196
    %9882 = vmatprep.subr.bf16.mxu0 %v9193
    %9883 = vmatpush1.bf16.msra.mxu0 %v9192
    %9884 = vmatprep.subr.bf16.mxu0 %v9189
    %9885 = vmatpush1.bf16.msra.mxu0 %v9188
    %9886 = vmatprep.subr.bf16.mxu0 %v9249
    %9887 = vmatpush2.bf16.msra.mxu0 %v9248
    %9888 = vmatprep.subr.bf16.mxu0 %v9245
    %9889 = vmatpush2.bf16.msra.mxu0 %v9244
    %9890 = vmatprep.subr.bf16.mxu0 %v9241
    %9891 = vmatpush2.bf16.msra.mxu0 %v9240
    %9892 = vmatprep.subr.bf16.mxu0 %v9237
    %9893 = vmatpush2.bf16.msra.mxu0 %v9236
    %9894 = vmatprep.subr.bf16.mxu0 %v9233
    %9895 = vmatpush2.bf16.msra.mxu0 %v9232
    %9896 = vmatprep.subr.bf16.mxu0 %v9229
    %9897 = vmatpush2.bf16.msra.mxu0 %v9228
    %9898 = vmatprep.subr.bf16.mxu0 %v9225
    %9899 = vmatpush2.bf16.msra.mxu0 %v9224
    %9900 = vmatprep.subr.bf16.mxu0 %v9221
    %9901 = vmatpush2.bf16.msra.mxu0 %v9220
    %9902 = vmatprep.mubr.bf16.mxu0 %v3617
    %9903 = vmatmul.mubr.bf16.gmra.mxu0 %v3616
    %v9904 = vpop.f32.mrf.mxu0
    %v9905 = vadd.f32 %v8409, %v9904
    %v9906 = vpop.f32.mrf.mxu0
    %v9907 = vadd.f32 %v8413, %v9906
    %v9908 = vpop.f32.mrf.mxu0
    %v9909 = vadd.f32 %v8409, %v9908
    %v9910 = vpop.f32.mrf.mxu0
    %v9911 = vadd.f32 %v8413, %v9910
    %9912 = vdwg.mxu0
    %9913 = vmatprep.subr.bf16.mxu0 %v9281
    %9914 = vmatpush1.bf16.msra.mxu0 %v9280
    %9915 = vmatprep.subr.bf16.mxu0 %v9277
    %9916 = vmatpush1.bf16.msra.mxu0 %v9276
    %9917 = vmatprep.subr.bf16.mxu0 %v9273
    %9918 = vmatpush1.bf16.msra.mxu0 %v9272
    %9919 = vmatprep.subr.bf16.mxu0 %v9269
    %9920 = vmatpush1.bf16.msra.mxu0 %v9268
    %9921 = vmatprep.subr.bf16.mxu0 %v9265
    %9922 = vmatpush1.bf16.msra.mxu0 %v9264
    %9923 = vmatprep.subr.bf16.mxu0 %v9261
    %9924 = vmatpush1.bf16.msra.mxu0 %v9260
    %9925 = vmatprep.subr.bf16.mxu0 %v9257
    %9926 = vmatpush1.bf16.msra.mxu0 %v9256
    %9927 = vmatprep.subr.bf16.mxu0 %v9253
    %9928 = vmatpush1.bf16.msra.mxu0 %v9252
    %9929 = vmatprep.subr.bf16.mxu0 %v9313
    %9930 = vmatpush2.bf16.msra.mxu0 %v9312
    %9931 = vmatprep.subr.bf16.mxu0 %v9309
    %9932 = vmatpush2.bf16.msra.mxu0 %v9308
    %9933 = vmatprep.subr.bf16.mxu0 %v9305
    %9934 = vmatpush2.bf16.msra.mxu0 %v9304
    %9935 = vmatprep.subr.bf16.mxu0 %v9301
    %9936 = vmatpush2.bf16.msra.mxu0 %v9300
    %9937 = vmatprep.subr.bf16.mxu0 %v9297
    %9938 = vmatpush2.bf16.msra.mxu0 %v9296
    %9939 = vmatprep.subr.bf16.mxu0 %v9293
    %9940 = vmatpush2.bf16.msra.mxu0 %v9292
    %9941 = vmatprep.subr.bf16.mxu0 %v9289
    %9942 = vmatpush2.bf16.msra.mxu0 %v9288
    %9943 = vmatprep.subr.bf16.mxu0 %v9285
    %9944 = vmatpush2.bf16.msra.mxu0 %v9284
    %9945 = vmatprep.mubr.bf16.mxu0 %v3619
    %9946 = vmatmul.mubr.bf16.gmra.mxu0 %v3618
    %v9947 = vpop.f32.mrf.mxu0
    %v9948 = vadd.f32 %v9905, %v9947
    %v9949 = vpop.f32.mrf.mxu0
    %v9950 = vadd.f32 %v9907, %v9949
    %v9951 = vpop.f32.mrf.mxu0
    %v9952 = vadd.f32 %v9909, %v9951
    %v9953 = vpop.f32.mrf.mxu0
    %v9954 = vadd.f32 %v9911, %v9953
    %9955 = vdwg.mxu0
    %9956 = vmatprep.subr.bf16.mxu0 %v9345
    %9957 = vmatpush1.bf16.msra.mxu0 %v9344
    %9958 = vmatprep.subr.bf16.mxu0 %v9341
    %9959 = vmatpush1.bf16.msra.mxu0 %v9340
    %9960 = vmatprep.subr.bf16.mxu0 %v9337
    %9961 = vmatpush1.bf16.msra.mxu0 %v9336
    %9962 = vmatprep.subr.bf16.mxu0 %v9333
    %9963 = vmatpush1.bf16.msra.mxu0 %v9332
    %9964 = vmatprep.subr.bf16.mxu0 %v9329
    %9965 = vmatpush1.bf16.msra.mxu0 %v9328
    %9966 = vmatprep.subr.bf16.mxu0 %v9325
    %9967 = vmatpush1.bf16.msra.mxu0 %v9324
    %9968 = vmatprep.subr.bf16.mxu0 %v9321
    %9969 = vmatpush1.bf16.msra.mxu0 %v9320
    %9970 = vmatprep.subr.bf16.mxu0 %v9317
    %9971 = vmatpush1.bf16.msra.mxu0 %v9316
    %9972 = vmatprep.subr.bf16.mxu0 %v9377
    %9973 = vmatpush2.bf16.msra.mxu0 %v9376
    %9974 = vmatprep.subr.bf16.mxu0 %v9373
    %9975 = vmatpush2.bf16.msra.mxu0 %v9372
    %9976 = vmatprep.subr.bf16.mxu0 %v9369
    %9977 = vmatpush2.bf16.msra.mxu0 %v9368
    %9978 = vmatprep.subr.bf16.mxu0 %v9365
    %9979 = vmatpush2.bf16.msra.mxu0 %v9364
    %9980 = vmatprep.subr.bf16.mxu0 %v9361
    %9981 = vmatpush2.bf16.msra.mxu0 %v9360
    %9982 = vmatprep.subr.bf16.mxu0 %v9357
    %9983 = vmatpush2.bf16.msra.mxu0 %v9356
    %9984 = vmatprep.subr.bf16.mxu0 %v9353
    %9985 = vmatpush2.bf16.msra.mxu0 %v9352
    %9986 = vmatprep.subr.bf16.mxu0 %v9349
    %9987 = vmatpush2.bf16.msra.mxu0 %v9348
    %9988 = vmatprep.mubr.bf16.mxu0 %v3621
    %9989 = vmatmul.mubr.bf16.gmra.mxu0 %v3620
    %v9990 = vpop.f32.mrf.mxu0
    %v9991 = vadd.f32 %v9948, %v9990
    %v9992 = vpop.f32.mrf.mxu0
    %v9993 = vadd.f32 %v9950, %v9992
    %v9994 = vpop.f32.mrf.mxu0
    %v9995 = vadd.f32 %v9952, %v9994
    %v9996 = vpop.f32.mrf.mxu0
    %v9997 = vadd.f32 %v9954, %v9996
    %9998 = vdwg.mxu0
    %9999 = vmatprep.subr.bf16.mxu0 %v9409
    %10000 = vmatpush1.bf16.msra.mxu0 %v9408
    %10001 = vmatprep.subr.bf16.mxu0 %v9405
    %10002 = vmatpush1.bf16.msra.mxu0 %v9404
    %10003 = vmatprep.subr.bf16.mxu0 %v9401
    %10004 = vmatpush1.bf16.msra.mxu0 %v9400
    %10005 = vmatprep.subr.bf16.mxu0 %v9397
    %10006 = vmatpush1.bf16.msra.mxu0 %v9396
    %10007 = vmatprep.subr.bf16.mxu0 %v9393
    %10008 = vmatpush1.bf16.msra.mxu0 %v9392
    %10009 = vmatprep.subr.bf16.mxu0 %v9389
    %10010 = vmatpush1.bf16.msra.mxu0 %v9388
    %10011 = vmatprep.subr.bf16.mxu0 %v9385
    %10012 = vmatpush1.bf16.msra.mxu0 %v9384
    %10013 = vmatprep.subr.bf16.mxu0 %v9381
    %10014 = vmatpush1.bf16.msra.mxu0 %v9380
    %10015 = vmatprep.subr.bf16.mxu0 %v9441
    %10016 = vmatpush2.bf16.msra.mxu0 %v9440
    %10017 = vmatprep.subr.bf16.mxu0 %v9437
    %10018 = vmatpush2.bf16.msra.mxu0 %v9436
    %10019 = vmatprep.subr.bf16.mxu0 %v9433
    %10020 = vmatpush2.bf16.msra.mxu0 %v9432
    %10021 = vmatprep.subr.bf16.mxu0 %v9429
    %10022 = vmatpush2.bf16.msra.mxu0 %v9428
    %10023 = vmatprep.subr.bf16.mxu0 %v9425
    %10024 = vmatpush2.bf16.msra.mxu0 %v9424
    %10025 = vmatprep.subr.bf16.mxu0 %v9421
    %10026 = vmatpush2.bf16.msra.mxu0 %v9420
    %10027 = vmatprep.subr.bf16.mxu0 %v9417
    %10028 = vmatpush2.bf16.msra.mxu0 %v9416
    %10029 = vmatprep.subr.bf16.mxu0 %v9413
    %10030 = vmatpush2.bf16.msra.mxu0 %v9412
    %10031 = vmatprep.mubr.bf16.mxu0 %v3623
    %10032 = vmatmul.mubr.bf16.gmra.mxu0 %v3622
    %v10033 = vpop.f32.mrf.mxu0
    %v10034 = vadd.f32 %v9991, %v10033
    %v10035 = vpop.f32.mrf.mxu0
    %v10036 = vadd.f32 %v9993, %v10035
    %v10037 = vpop.f32.mrf.mxu0
    %v10038 = vadd.f32 %v9995, %v10037
    %v10039 = vpop.f32.mrf.mxu0
    %v10040 = vadd.f32 %v9997, %v10039
    %10041 = vdwg.mxu0
    %v10042 = vmax.f32 %v9862, 0.0
    %v10043 = vmax.f32 %v9864, 0.0
    %v10044 = vmax.f32 %v10034, 0.0
    %v10045 = vmax.f32 %v10036, 0.0
    %v10046 = vmax.f32 %v9866, 0.0
    %v10047 = vmax.f32 %v9868, 0.0
    %v10048 = vmax.f32 %v10038, 0.0
    %v10049 = vmax.f32 %v10040, 0.0
    %v10050 = vpack.c.bf16 %v10046, %v10042
    %v10051 = vpack.c.bf16 %v10047, %v10043
    %v10052 = vpack.c.bf16 %v10048, %v10044
    %v10053 = vpack.c.bf16 %v10049, %v10045
    %v10054 = vld [vmem:[#allocation3 + $0x200] sm:$0xf]
    %v10055 = vld [vmem:[#allocation3 + $0x204] sm:$0xf]
    %v10056 = vld [vmem:[#allocation3 + $0x208] sm:$0xf]
    %v10057 = vld [vmem:[#allocation3 + $0x20c] sm:$0xf]
    %v10058 = vld [vmem:[#allocation3 + $0x210] sm:$0xf]
    %v10059 = vld [vmem:[#allocation3 + $0x214] sm:$0xf]
    %v10060 = vld [vmem:[#allocation3 + $0x218] sm:$0xf]
    %v10061 = vld [vmem:[#allocation3 + $0x21c] sm:$0xf]
    %v10062 = vld [vmem:[#allocation3 + $0x220] sm:$0xf]
    %v10063 = vld [vmem:[#allocation3 + $0x224] sm:$0xf]
    %v10064 = vld [vmem:[#allocation3 + $0x228] sm:$0xf]
    %v10065 = vld [vmem:[#allocation3 + $0x22c] sm:$0xf]
    %v10066 = vld [vmem:[#allocation3 + $0x230] sm:$0xf]
    %v10067 = vld [vmem:[#allocation3 + $0x234] sm:$0xf]
    %v10068 = vld [vmem:[#allocation3 + $0x238] sm:$0xf]
    %v10069 = vld [vmem:[#allocation3 + $0x23c] sm:$0xf]
    %v10070 = vld [vmem:[#allocation3 + $0x240] sm:$0xf]
    %v10071 = vld [vmem:[#allocation3 + $0x244] sm:$0xf]
    %v10072 = vld [vmem:[#allocation3 + $0x248] sm:$0xf]
    %v10073 = vld [vmem:[#allocation3 + $0x24c] sm:$0xf]
    %v10074 = vld [vmem:[#allocation3 + $0x250] sm:$0xf]
    %v10075 = vld [vmem:[#allocation3 + $0x254] sm:$0xf]
    %v10076 = vld [vmem:[#allocation3 + $0x258] sm:$0xf]
    %v10077 = vld [vmem:[#allocation3 + $0x25c] sm:$0xf]
    %v10078 = vld [vmem:[#allocation3 + $0x260] sm:$0xf]
    %v10079 = vld [vmem:[#allocation3 + $0x264] sm:$0xf]
    %v10080 = vld [vmem:[#allocation3 + $0x268] sm:$0xf]
    %v10081 = vld [vmem:[#allocation3 + $0x26c] sm:$0xf]
    %v10082 = vld [vmem:[#allocation3 + $0x270] sm:$0xf]
    %v10083 = vld [vmem:[#allocation3 + $0x274] sm:$0xf]
    %v10084 = vld [vmem:[#allocation3 + $0x278] sm:$0xf]
    %v10085 = vld [vmem:[#allocation3 + $0x27c] sm:$0xf]
    %v10086 = vld [vmem:[#allocation3 + $0x280] sm:$0xf]
    %v10087 = vld [vmem:[#allocation3 + $0x284] sm:$0xf]
    %v10088 = vld [vmem:[#allocation3 + $0x288] sm:$0xf]
    %v10089 = vld [vmem:[#allocation3 + $0x28c] sm:$0xf]
    %v10090 = vld [vmem:[#allocation3 + $0x290] sm:$0xf]
    %v10091 = vld [vmem:[#allocation3 + $0x294] sm:$0xf]
    %v10092 = vld [vmem:[#allocation3 + $0x298] sm:$0xf]
    %v10093 = vld [vmem:[#allocation3 + $0x29c] sm:$0xf]
    %v10094 = vld [vmem:[#allocation3 + $0x2a0] sm:$0xf]
    %v10095 = vld [vmem:[#allocation3 + $0x2a4] sm:$0xf]
    %v10096 = vld [vmem:[#allocation3 + $0x2a8] sm:$0xf]
    %v10097 = vld [vmem:[#allocation3 + $0x2ac] sm:$0xf]
    %v10098 = vld [vmem:[#allocation3 + $0x2b0] sm:$0xf]
    %v10099 = vld [vmem:[#allocation3 + $0x2b4] sm:$0xf]
    %v10100 = vld [vmem:[#allocation3 + $0x2b8] sm:$0xf]
    %v10101 = vld [vmem:[#allocation3 + $0x2bc] sm:$0xf]
    %v10102 = vld [vmem:[#allocation3 + $0x2c0] sm:$0xf]
    %v10103 = vld [vmem:[#allocation3 + $0x2c4] sm:$0xf]
    %v10104 = vld [vmem:[#allocation3 + $0x2c8] sm:$0xf]
    %v10105 = vld [vmem:[#allocation3 + $0x2cc] sm:$0xf]
    %v10106 = vld [vmem:[#allocation3 + $0x2d0] sm:$0xf]
    %v10107 = vld [vmem:[#allocation3 + $0x2d4] sm:$0xf]
    %v10108 = vld [vmem:[#allocation3 + $0x2d8] sm:$0xf]
    %v10109 = vld [vmem:[#allocation3 + $0x2dc] sm:$0xf]
    %v10110 = vld [vmem:[#allocation3 + $0x2e0] sm:$0xf]
    %v10111 = vld [vmem:[#allocation3 + $0x2e4] sm:$0xf]
    %v10112 = vld [vmem:[#allocation3 + $0x2e8] sm:$0xf]
    %v10113 = vld [vmem:[#allocation3 + $0x2ec] sm:$0xf]
    %v10114 = vld [vmem:[#allocation3 + $0x2f0] sm:$0xf]
    %v10115 = vld [vmem:[#allocation3 + $0x2f4] sm:$0xf]
    %v10116 = vld [vmem:[#allocation3 + $0x2f8] sm:$0xf]
    %v10117 = vld [vmem:[#allocation3 + $0x2fc] sm:$0xf]
    %v10182 = vunpack.c.l.b16 %v10054
    %v10183 = vunpack.c.l.b16 %v10055
    %v10184 = vunpack.c.l.b16 %v10056
    %v10185 = vunpack.c.l.b16 %v10057
    %v10186 = vunpack.c.l.b16 %v10058
    %v10187 = vunpack.c.l.b16 %v10059
    %v10188 = vunpack.c.l.b16 %v10060
    %v10189 = vunpack.c.l.b16 %v10061
    %v10190 = vunpack.c.l.b16 %v10062
    %v10191 = vunpack.c.l.b16 %v10063
    %v10192 = vunpack.c.l.b16 %v10064
    %v10193 = vunpack.c.l.b16 %v10065
    %v10194 = vunpack.c.l.b16 %v10066
    %v10195 = vunpack.c.l.b16 %v10067
    %v10196 = vunpack.c.l.b16 %v10068
    %v10197 = vunpack.c.l.b16 %v10069
    %v10198 = vunpack.c.l.b16 %v10070
    %v10199 = vunpack.c.l.b16 %v10071
    %v10200 = vunpack.c.l.b16 %v10072
    %v10201 = vunpack.c.l.b16 %v10073
    %v10202 = vunpack.c.l.b16 %v10074
    %v10203 = vunpack.c.l.b16 %v10075
    %v10204 = vunpack.c.l.b16 %v10076
    %v10205 = vunpack.c.l.b16 %v10077
    %v10206 = vunpack.c.l.b16 %v10078
    %v10207 = vunpack.c.l.b16 %v10079
    %v10208 = vunpack.c.l.b16 %v10080
    %v10209 = vunpack.c.l.b16 %v10081
    %v10210 = vunpack.c.l.b16 %v10082
    %v10211 = vunpack.c.l.b16 %v10083
    %v10212 = vunpack.c.l.b16 %v10084
    %v10213 = vunpack.c.l.b16 %v10085
    %v10214 = vunpack.c.l.b16 %v10086
    %v10215 = vunpack.c.l.b16 %v10087
    %v10216 = vunpack.c.l.b16 %v10088
    %v10217 = vunpack.c.l.b16 %v10089
    %v10218 = vunpack.c.l.b16 %v10090
    %v10219 = vunpack.c.l.b16 %v10091
    %v10220 = vunpack.c.l.b16 %v10092
    %v10221 = vunpack.c.l.b16 %v10093
    %v10222 = vunpack.c.l.b16 %v10094
    %v10223 = vunpack.c.l.b16 %v10095
    %v10224 = vunpack.c.l.b16 %v10096
    %v10225 = vunpack.c.l.b16 %v10097
    %v10226 = vunpack.c.l.b16 %v10098
    %v10227 = vunpack.c.l.b16 %v10099
    %v10228 = vunpack.c.l.b16 %v10100
    %v10229 = vunpack.c.l.b16 %v10101
    %v10230 = vunpack.c.l.b16 %v10102
    %v10231 = vunpack.c.l.b16 %v10103
    %v10232 = vunpack.c.l.b16 %v10104
    %v10233 = vunpack.c.l.b16 %v10105
    %v10234 = vunpack.c.l.b16 %v10106
    %v10235 = vunpack.c.l.b16 %v10107
    %v10236 = vunpack.c.l.b16 %v10108
    %v10237 = vunpack.c.l.b16 %v10109
    %v10238 = vunpack.c.l.b16 %v10110
    %v10239 = vunpack.c.l.b16 %v10111
    %v10240 = vunpack.c.l.b16 %v10112
    %v10241 = vunpack.c.l.b16 %v10113
    %v10242 = vunpack.c.l.b16 %v10114
    %v10243 = vunpack.c.l.b16 %v10115
    %v10244 = vunpack.c.l.b16 %v10116
    %v10245 = vunpack.c.l.b16 %v10117
    %v10246 = vpack.c.b16 %v10183, %v10182
    %v10247 = vpack.c.b16 %v10185, %v10184
    %v10248 = vpack.c.b16 %v10187, %v10186
    %v10249 = vpack.c.b16 %v10189, %v10188
    %v10250 = vpack.c.b16 %v10191, %v10190
    %v10251 = vpack.c.b16 %v10193, %v10192
    %v10252 = vpack.c.b16 %v10195, %v10194
    %v10253 = vpack.c.b16 %v10197, %v10196
    %v10254 = vpack.c.b16 %v10199, %v10198
    %v10255 = vpack.c.b16 %v10201, %v10200
    %v10256 = vpack.c.b16 %v10203, %v10202
    %v10257 = vpack.c.b16 %v10205, %v10204
    %v10258 = vpack.c.b16 %v10207, %v10206
    %v10259 = vpack.c.b16 %v10209, %v10208
    %v10260 = vpack.c.b16 %v10211, %v10210
    %v10261 = vpack.c.b16 %v10213, %v10212
    %v10262 = vpack.c.b16 %v10215, %v10214
    %v10263 = vpack.c.b16 %v10217, %v10216
    %v10264 = vpack.c.b16 %v10219, %v10218
    %v10265 = vpack.c.b16 %v10221, %v10220
    %v10266 = vpack.c.b16 %v10223, %v10222
    %v10267 = vpack.c.b16 %v10225, %v10224
    %v10268 = vpack.c.b16 %v10227, %v10226
    %v10269 = vpack.c.b16 %v10229, %v10228
    %v10270 = vpack.c.b16 %v10231, %v10230
    %v10271 = vpack.c.b16 %v10233, %v10232
    %v10272 = vpack.c.b16 %v10235, %v10234
    %v10273 = vpack.c.b16 %v10237, %v10236
    %v10274 = vpack.c.b16 %v10239, %v10238
    %v10275 = vpack.c.b16 %v10241, %v10240
    %v10276 = vpack.c.b16 %v10243, %v10242
    %v10277 = vpack.c.b16 %v10245, %v10244
    %10310 = vmatprep.subr.bf16.mxu0 0
    %10311 = vmatpush1.bf16.msra.mxu0 %v10253
    %10312 = vmatprep.subr.bf16.mxu0 0
    %10313 = vmatpush1.bf16.msra.mxu0 %v10252
    %10314 = vmatprep.subr.bf16.mxu0 0
    %10315 = vmatpush1.bf16.msra.mxu0 %v10251
    %10316 = vmatprep.subr.bf16.mxu0 0
    %10317 = vmatpush1.bf16.msra.mxu0 %v10250
    %10318 = vmatprep.subr.bf16.mxu0 0
    %10319 = vmatpush1.bf16.msra.mxu0 %v10249
    %10320 = vmatprep.subr.bf16.mxu0 0
    %10321 = vmatpush1.bf16.msra.mxu0 %v10248
    %10322 = vmatprep.subr.bf16.mxu0 0
    %10323 = vmatpush1.bf16.msra.mxu0 %v10247
    %10324 = vmatprep.subr.bf16.mxu0 0
    %10325 = vmatpush1.bf16.msra.mxu0 %v10246
    %10326 = vmatprep.subr.bf16.mxu0 0
    %10327 = vmatpush2.bf16.msra.mxu0 %v10261
    %10328 = vmatprep.subr.bf16.mxu0 0
    %10329 = vmatpush2.bf16.msra.mxu0 %v10260
    %10330 = vmatprep.subr.bf16.mxu0 0
    %10331 = vmatpush2.bf16.msra.mxu0 %v10259
    %10332 = vmatprep.subr.bf16.mxu0 0
    %10333 = vmatpush2.bf16.msra.mxu0 %v10258
    %10334 = vmatprep.subr.bf16.mxu0 0
    %10335 = vmatpush2.bf16.msra.mxu0 %v10257
    %10336 = vmatprep.subr.bf16.mxu0 0
    %10337 = vmatpush2.bf16.msra.mxu0 %v10256
    %10338 = vmatprep.subr.bf16.mxu0 0
    %10339 = vmatpush2.bf16.msra.mxu0 %v10255
    %10340 = vmatprep.subr.bf16.mxu0 0
    %10341 = vmatpush2.bf16.msra.mxu0 %v10254
    %10342 = vmatprep.mubr.bf16.mxu0 %v10051
    %10343 = vmatmul.mubr.bf16.gmra.mxu0 %v10050
    %v10344 = vpop.f32.mrf.mxu0
    %v10345 = vadd.f32 0.0, %v10344
    %v10346 = vpop.f32.mrf.mxu0
    %v10347 = vpop.f32.mrf.mxu0
    %v10348 = vadd.f32 0.0, %v10347
    %v10349 = vpop.f32.mrf.mxu0
    %10350 = vdwg.mxu0
    %10351 = vmatprep.subr.bf16.mxu0 0
    %10352 = vmatpush1.bf16.msra.mxu0 %v10269
    %10353 = vmatprep.subr.bf16.mxu0 0
    %10354 = vmatpush1.bf16.msra.mxu0 %v10268
    %10355 = vmatprep.subr.bf16.mxu0 0
    %10356 = vmatpush1.bf16.msra.mxu0 %v10267
    %10357 = vmatprep.subr.bf16.mxu0 0
    %10358 = vmatpush1.bf16.msra.mxu0 %v10266
    %10359 = vmatprep.subr.bf16.mxu0 0
    %10360 = vmatpush1.bf16.msra.mxu0 %v10265
    %10361 = vmatprep.subr.bf16.mxu0 0
    %10362 = vmatpush1.bf16.msra.mxu0 %v10264
    %10363 = vmatprep.subr.bf16.mxu0 0
    %10364 = vmatpush1.bf16.msra.mxu0 %v10263
    %10365 = vmatprep.subr.bf16.mxu0 0
    %10366 = vmatpush1.bf16.msra.mxu0 %v10262
    %10367 = vmatprep.subr.bf16.mxu0 0
    %10368 = vmatpush2.bf16.msra.mxu0 %v10277
    %10369 = vmatprep.subr.bf16.mxu0 0
    %10370 = vmatpush2.bf16.msra.mxu0 %v10276
    %10371 = vmatprep.subr.bf16.mxu0 0
    %10372 = vmatpush2.bf16.msra.mxu0 %v10275
    %10373 = vmatprep.subr.bf16.mxu0 0
    %10374 = vmatpush2.bf16.msra.mxu0 %v10274
    %10375 = vmatprep.subr.bf16.mxu0 0
    %10376 = vmatpush2.bf16.msra.mxu0 %v10273
    %10377 = vmatprep.subr.bf16.mxu0 0
    %10378 = vmatpush2.bf16.msra.mxu0 %v10272
    %10379 = vmatprep.subr.bf16.mxu0 0
    %10380 = vmatpush2.bf16.msra.mxu0 %v10271
    %10381 = vmatprep.subr.bf16.mxu0 0
    %10382 = vmatpush2.bf16.msra.mxu0 %v10270
    %10383 = vmatprep.mubr.bf16.mxu0 %v10053
    %10384 = vmatmul.mubr.bf16.gmra.mxu0 %v10052
    %v10385 = vpop.f32.mrf.mxu0
    %v10386 = vadd.f32 %v10345, %v10385
    %v10387 = vpop.f32.mrf.mxu0
    %v10388 = vpop.f32.mrf.mxu0
    %v10389 = vadd.f32 %v10348, %v10388
    %v10390 = vpop.f32.mrf.mxu0
    %10391 = vdwg.mxu0
    %v10392 = vadd.f32 %v8134, %v10386
    %v10393 = vadd.f32 %v8137, %v10389
    %v10394 = vld [vmem:[#allocation2 + $0x30] sm:$0xff]
    %v10395 = vld [vmem:[#allocation2 + $0x38] sm:$0xff]
    %v10396 = vld [vmem:[#allocation2 + $0x70] sm:$0xff]
    %v10397 = vld [vmem:[#allocation2 + $0x78] sm:$0xff]
    %v10398 = vld [vmem:[#allocation2 + $0xb0] sm:$0xff]
    %v10399 = vld [vmem:[#allocation2 + $0xb8] sm:$0xff]
    %v10400 = vld [vmem:[#allocation2 + $0xf0] sm:$0xff]
    %v10401 = vld [vmem:[#allocation2 + $0xf8] sm:$0xff]
    %v10402 = vld [vmem:[#allocation2 + $0x130] sm:$0xff]
    %v10403 = vld [vmem:[#allocation2 + $0x138] sm:$0xff]
    %v10404 = vld [vmem:[#allocation2 + $0x170] sm:$0xff]
    %v10405 = vld [vmem:[#allocation2 + $0x178] sm:$0xff]
    %v10406 = vld [vmem:[#allocation2 + $0x1b0] sm:$0xff]
    %v10407 = vld [vmem:[#allocation2 + $0x1b8] sm:$0xff]
    %v10408 = vld [vmem:[#allocation2 + $0x1f0] sm:$0xff]
    %v10409 = vld [vmem:[#allocation2 + $0x1f8] sm:$0xff]
    %v10410 = vld [vmem:[#allocation2 + $0x230] sm:$0xff]
    %v10411 = vld [vmem:[#allocation2 + $0x238] sm:$0xff]
    %v10412 = vld [vmem:[#allocation2 + $0x270] sm:$0xff]
    %v10413 = vld [vmem:[#allocation2 + $0x278] sm:$0xff]
    %v10414 = vld [vmem:[#allocation2 + $0x2b0] sm:$0xff]
    %v10415 = vld [vmem:[#allocation2 + $0x2b8] sm:$0xff]
    %v10416 = vld [vmem:[#allocation2 + $0x2f0] sm:$0xff]
    %v10417 = vld [vmem:[#allocation2 + $0x2f8] sm:$0xff]
    %v10418 = vld [vmem:[#allocation2 + $0x330] sm:$0xff]
    %v10419 = vld [vmem:[#allocation2 + $0x338] sm:$0xff]
    %v10420 = vld [vmem:[#allocation2 + $0x370] sm:$0xff]
    %v10421 = vld [vmem:[#allocation2 + $0x378] sm:$0xff]
    %v10422 = vld [vmem:[#allocation2 + $0x3b0] sm:$0xff]
    %v10423 = vld [vmem:[#allocation2 + $0x3b8] sm:$0xff]
    %v10424 = vld [vmem:[#allocation2 + $0x3f0] sm:$0xff]
    %v10425 = vld [vmem:[#allocation2 + $0x3f8] sm:$0xff]
    %v10426 = vld [vmem:[#allocation2 + $0x430] sm:$0xff]
    %v10427 = vld [vmem:[#allocation2 + $0x438] sm:$0xff]
    %v10428 = vld [vmem:[#allocation2 + $0x470] sm:$0xff]
    %v10429 = vld [vmem:[#allocation2 + $0x478] sm:$0xff]
    %v10430 = vld [vmem:[#allocation2 + $0x4b0] sm:$0xff]
    %v10431 = vld [vmem:[#allocation2 + $0x4b8] sm:$0xff]
    %v10432 = vld [vmem:[#allocation2 + $0x4f0] sm:$0xff]
    %v10433 = vld [vmem:[#allocation2 + $0x4f8] sm:$0xff]
    %v10434 = vld [vmem:[#allocation2 + $0x530] sm:$0xff]
    %v10435 = vld [vmem:[#allocation2 + $0x538] sm:$0xff]
    %v10436 = vld [vmem:[#allocation2 + $0x570] sm:$0xff]
    %v10437 = vld [vmem:[#allocation2 + $0x578] sm:$0xff]
    %v10438 = vld [vmem:[#allocation2 + $0x5b0] sm:$0xff]
    %v10439 = vld [vmem:[#allocation2 + $0x5b8] sm:$0xff]
    %v10440 = vld [vmem:[#allocation2 + $0x5f0] sm:$0xff]
    %v10441 = vld [vmem:[#allocation2 + $0x5f8] sm:$0xff]
    %v10442 = vld [vmem:[#allocation2 + $0x630] sm:$0xff]
    %v10443 = vld [vmem:[#allocation2 + $0x638] sm:$0xff]
    %v10444 = vld [vmem:[#allocation2 + $0x670] sm:$0xff]
    %v10445 = vld [vmem:[#allocation2 + $0x678] sm:$0xff]
    %v10446 = vld [vmem:[#allocation2 + $0x6b0] sm:$0xff]
    %v10447 = vld [vmem:[#allocation2 + $0x6b8] sm:$0xff]
    %v10448 = vld [vmem:[#allocation2 + $0x6f0] sm:$0xff]
    %v10449 = vld [vmem:[#allocation2 + $0x6f8] sm:$0xff]
    %v10450 = vld [vmem:[#allocation2 + $0x730] sm:$0xff]
    %v10451 = vld [vmem:[#allocation2 + $0x738] sm:$0xff]
    %v10452 = vld [vmem:[#allocation2 + $0x770] sm:$0xff]
    %v10453 = vld [vmem:[#allocation2 + $0x778] sm:$0xff]
    %v10454 = vld [vmem:[#allocation2 + $0x7b0] sm:$0xff]
    %v10455 = vld [vmem:[#allocation2 + $0x7b8] sm:$0xff]
    %v10456 = vld [vmem:[#allocation2 + $0x7f0] sm:$0xff]
    %v10457 = vld [vmem:[#allocation2 + $0x7f8] sm:$0xff]
    %v10458 = vld [vmem:[#allocation2 + $0x830] sm:$0xff]
    %v10459 = vld [vmem:[#allocation2 + $0x838] sm:$0xff]
    %v10460 = vld [vmem:[#allocation2 + $0x870] sm:$0xff]
    %v10461 = vld [vmem:[#allocation2 + $0x878] sm:$0xff]
    %v10462 = vld [vmem:[#allocation2 + $0x8b0] sm:$0xff]
    %v10463 = vld [vmem:[#allocation2 + $0x8b8] sm:$0xff]
    %v10464 = vld [vmem:[#allocation2 + $0x8f0] sm:$0xff]
    %v10465 = vld [vmem:[#allocation2 + $0x8f8] sm:$0xff]
    %v10466 = vld [vmem:[#allocation2 + $0x930] sm:$0xff]
    %v10467 = vld [vmem:[#allocation2 + $0x938] sm:$0xff]
    %v10468 = vld [vmem:[#allocation2 + $0x970] sm:$0xff]
    %v10469 = vld [vmem:[#allocation2 + $0x978] sm:$0xff]
    %v10470 = vld [vmem:[#allocation2 + $0x9b0] sm:$0xff]
    %v10471 = vld [vmem:[#allocation2 + $0x9b8] sm:$0xff]
    %v10472 = vld [vmem:[#allocation2 + $0x9f0] sm:$0xff]
    %v10473 = vld [vmem:[#allocation2 + $0x9f8] sm:$0xff]
    %v10474 = vld [vmem:[#allocation2 + $0xa30] sm:$0xff]
    %v10475 = vld [vmem:[#allocation2 + $0xa38] sm:$0xff]
    %v10476 = vld [vmem:[#allocation2 + $0xa70] sm:$0xff]
    %v10477 = vld [vmem:[#allocation2 + $0xa78] sm:$0xff]
    %v10478 = vld [vmem:[#allocation2 + $0xab0] sm:$0xff]
    %v10479 = vld [vmem:[#allocation2 + $0xab8] sm:$0xff]
    %v10480 = vld [vmem:[#allocation2 + $0xaf0] sm:$0xff]
    %v10481 = vld [vmem:[#allocation2 + $0xaf8] sm:$0xff]
    %v10482 = vld [vmem:[#allocation2 + $0xb30] sm:$0xff]
    %v10483 = vld [vmem:[#allocation2 + $0xb38] sm:$0xff]
    %v10484 = vld [vmem:[#allocation2 + $0xb70] sm:$0xff]
    %v10485 = vld [vmem:[#allocation2 + $0xb78] sm:$0xff]
    %v10486 = vld [vmem:[#allocation2 + $0xbb0] sm:$0xff]
    %v10487 = vld [vmem:[#allocation2 + $0xbb8] sm:$0xff]
    %v10488 = vld [vmem:[#allocation2 + $0xbf0] sm:$0xff]
    %v10489 = vld [vmem:[#allocation2 + $0xbf8] sm:$0xff]
    %v10490 = vld [vmem:[#allocation2 + $0xc30] sm:$0xff]
    %v10491 = vld [vmem:[#allocation2 + $0xc38] sm:$0xff]
    %v10492 = vld [vmem:[#allocation2 + $0xc70] sm:$0xff]
    %v10493 = vld [vmem:[#allocation2 + $0xc78] sm:$0xff]
    %v10494 = vld [vmem:[#allocation2 + $0xcb0] sm:$0xff]
    %v10495 = vld [vmem:[#allocation2 + $0xcb8] sm:$0xff]
    %v10496 = vld [vmem:[#allocation2 + $0xcf0] sm:$0xff]
    %v10497 = vld [vmem:[#allocation2 + $0xcf8] sm:$0xff]
    %v10498 = vld [vmem:[#allocation2 + $0xd30] sm:$0xff]
    %v10499 = vld [vmem:[#allocation2 + $0xd38] sm:$0xff]
    %v10500 = vld [vmem:[#allocation2 + $0xd70] sm:$0xff]
    %v10501 = vld [vmem:[#allocation2 + $0xd78] sm:$0xff]
    %v10502 = vld [vmem:[#allocation2 + $0xdb0] sm:$0xff]
    %v10503 = vld [vmem:[#allocation2 + $0xdb8] sm:$0xff]
    %v10504 = vld [vmem:[#allocation2 + $0xdf0] sm:$0xff]
    %v10505 = vld [vmem:[#allocation2 + $0xdf8] sm:$0xff]
    %v10506 = vld [vmem:[#allocation2 + $0xe30] sm:$0xff]
    %v10507 = vld [vmem:[#allocation2 + $0xe38] sm:$0xff]
    %v10508 = vld [vmem:[#allocation2 + $0xe70] sm:$0xff]
    %v10509 = vld [vmem:[#allocation2 + $0xe78] sm:$0xff]
    %v10510 = vld [vmem:[#allocation2 + $0xeb0] sm:$0xff]
    %v10511 = vld [vmem:[#allocation2 + $0xeb8] sm:$0xff]
    %v10512 = vld [vmem:[#allocation2 + $0xef0] sm:$0xff]
    %v10513 = vld [vmem:[#allocation2 + $0xef8] sm:$0xff]
    %v10514 = vld [vmem:[#allocation2 + $0xf30] sm:$0xff]
    %v10515 = vld [vmem:[#allocation2 + $0xf38] sm:$0xff]
    %v10516 = vld [vmem:[#allocation2 + $0xf70] sm:$0xff]
    %v10517 = vld [vmem:[#allocation2 + $0xf78] sm:$0xff]
    %v10518 = vld [vmem:[#allocation2 + $0xfb0] sm:$0xff]
    %v10519 = vld [vmem:[#allocation2 + $0xfb8] sm:$0xff]
    %v10520 = vld [vmem:[#allocation2 + $0xff0] sm:$0xff]
    %v10521 = vld [vmem:[#allocation2 + $0xff8] sm:$0xff]
    %v10522 = vld [vmem:[#allocation2 + $0x1030] sm:$0xff]
    %v10523 = vld [vmem:[#allocation2 + $0x1038] sm:$0xff]
    %v10524 = vld [vmem:[#allocation2 + $0x1070] sm:$0xff]
    %v10525 = vld [vmem:[#allocation2 + $0x1078] sm:$0xff]
    %v10526 = vld [vmem:[#allocation2 + $0x10b0] sm:$0xff]
    %v10527 = vld [vmem:[#allocation2 + $0x10b8] sm:$0xff]
    %v10528 = vld [vmem:[#allocation2 + $0x10f0] sm:$0xff]
    %v10529 = vld [vmem:[#allocation2 + $0x10f8] sm:$0xff]
    %v10530 = vld [vmem:[#allocation2 + $0x1130] sm:$0xff]
    %v10531 = vld [vmem:[#allocation2 + $0x1138] sm:$0xff]
    %v10532 = vld [vmem:[#allocation2 + $0x1170] sm:$0xff]
    %v10533 = vld [vmem:[#allocation2 + $0x1178] sm:$0xff]
    %v10534 = vld [vmem:[#allocation2 + $0x11b0] sm:$0xff]
    %v10535 = vld [vmem:[#allocation2 + $0x11b8] sm:$0xff]
    %v10536 = vld [vmem:[#allocation2 + $0x11f0] sm:$0xff]
    %v10537 = vld [vmem:[#allocation2 + $0x11f8] sm:$0xff]
    %v10538 = vld [vmem:[#allocation2 + $0x1230] sm:$0xff]
    %v10539 = vld [vmem:[#allocation2 + $0x1238] sm:$0xff]
    %v10540 = vld [vmem:[#allocation2 + $0x1270] sm:$0xff]
    %v10541 = vld [vmem:[#allocation2 + $0x1278] sm:$0xff]
    %v10542 = vld [vmem:[#allocation2 + $0x12b0] sm:$0xff]
    %v10543 = vld [vmem:[#allocation2 + $0x12b8] sm:$0xff]
    %v10544 = vld [vmem:[#allocation2 + $0x12f0] sm:$0xff]
    %v10545 = vld [vmem:[#allocation2 + $0x12f8] sm:$0xff]
    %v10546 = vld [vmem:[#allocation2 + $0x1330] sm:$0xff]
    %v10547 = vld [vmem:[#allocation2 + $0x1338] sm:$0xff]
    %v10548 = vld [vmem:[#allocation2 + $0x1370] sm:$0xff]
    %v10549 = vld [vmem:[#allocation2 + $0x1378] sm:$0xff]
    %v10550 = vld [vmem:[#allocation2 + $0x13b0] sm:$0xff]
    %v10551 = vld [vmem:[#allocation2 + $0x13b8] sm:$0xff]
    %v10552 = vld [vmem:[#allocation2 + $0x13f0] sm:$0xff]
    %v10553 = vld [vmem:[#allocation2 + $0x13f8] sm:$0xff]
    %v10554 = vld [vmem:[#allocation2 + $0x1430] sm:$0xff]
    %v10555 = vld [vmem:[#allocation2 + $0x1438] sm:$0xff]
    %v10556 = vld [vmem:[#allocation2 + $0x1470] sm:$0xff]
    %v10557 = vld [vmem:[#allocation2 + $0x1478] sm:$0xff]
    %v10558 = vld [vmem:[#allocation2 + $0x14b0] sm:$0xff]
    %v10559 = vld [vmem:[#allocation2 + $0x14b8] sm:$0xff]
    %v10560 = vld [vmem:[#allocation2 + $0x14f0] sm:$0xff]
    %v10561 = vld [vmem:[#allocation2 + $0x14f8] sm:$0xff]
    %v10562 = vld [vmem:[#allocation2 + $0x1530] sm:$0xff]
    %v10563 = vld [vmem:[#allocation2 + $0x1538] sm:$0xff]
    %v10564 = vld [vmem:[#allocation2 + $0x1570] sm:$0xff]
    %v10565 = vld [vmem:[#allocation2 + $0x1578] sm:$0xff]
    %v10566 = vld [vmem:[#allocation2 + $0x15b0] sm:$0xff]
    %v10567 = vld [vmem:[#allocation2 + $0x15b8] sm:$0xff]
    %v10568 = vld [vmem:[#allocation2 + $0x15f0] sm:$0xff]
    %v10569 = vld [vmem:[#allocation2 + $0x15f8] sm:$0xff]
    %v10570 = vld [vmem:[#allocation2 + $0x1630] sm:$0xff]
    %v10571 = vld [vmem:[#allocation2 + $0x1638] sm:$0xff]
    %v10572 = vld [vmem:[#allocation2 + $0x1670] sm:$0xff]
    %v10573 = vld [vmem:[#allocation2 + $0x1678] sm:$0xff]
    %v10574 = vld [vmem:[#allocation2 + $0x16b0] sm:$0xff]
    %v10575 = vld [vmem:[#allocation2 + $0x16b8] sm:$0xff]
    %v10576 = vld [vmem:[#allocation2 + $0x16f0] sm:$0xff]
    %v10577 = vld [vmem:[#allocation2 + $0x16f8] sm:$0xff]
    %v10578 = vld [vmem:[#allocation2 + $0x1730] sm:$0xff]
    %v10579 = vld [vmem:[#allocation2 + $0x1738] sm:$0xff]
    %v10580 = vld [vmem:[#allocation2 + $0x1770] sm:$0xff]
    %v10581 = vld [vmem:[#allocation2 + $0x1778] sm:$0xff]
    %v10582 = vld [vmem:[#allocation2 + $0x17b0] sm:$0xff]
    %v10583 = vld [vmem:[#allocation2 + $0x17b8] sm:$0xff]
    %v10584 = vld [vmem:[#allocation2 + $0x17f0] sm:$0xff]
    %v10585 = vld [vmem:[#allocation2 + $0x17f8] sm:$0xff]
    %v10586 = vld [vmem:[#allocation2 + $0x1830] sm:$0xff]
    %v10587 = vld [vmem:[#allocation2 + $0x1838] sm:$0xff]
    %v10588 = vld [vmem:[#allocation2 + $0x1870] sm:$0xff]
    %v10589 = vld [vmem:[#allocation2 + $0x1878] sm:$0xff]
    %v10590 = vld [vmem:[#allocation2 + $0x18b0] sm:$0xff]
    %v10591 = vld [vmem:[#allocation2 + $0x18b8] sm:$0xff]
    %v10592 = vld [vmem:[#allocation2 + $0x18f0] sm:$0xff]
    %v10593 = vld [vmem:[#allocation2 + $0x18f8] sm:$0xff]
    %v10594 = vld [vmem:[#allocation2 + $0x1930] sm:$0xff]
    %v10595 = vld [vmem:[#allocation2 + $0x1938] sm:$0xff]
    %v10596 = vld [vmem:[#allocation2 + $0x1970] sm:$0xff]
    %v10597 = vld [vmem:[#allocation2 + $0x1978] sm:$0xff]
    %v10598 = vld [vmem:[#allocation2 + $0x19b0] sm:$0xff]
    %v10599 = vld [vmem:[#allocation2 + $0x19b8] sm:$0xff]
    %v10600 = vld [vmem:[#allocation2 + $0x19f0] sm:$0xff]
    %v10601 = vld [vmem:[#allocation2 + $0x19f8] sm:$0xff]
    %v10602 = vld [vmem:[#allocation2 + $0x1a30] sm:$0xff]
    %v10603 = vld [vmem:[#allocation2 + $0x1a38] sm:$0xff]
    %v10604 = vld [vmem:[#allocation2 + $0x1a70] sm:$0xff]
    %v10605 = vld [vmem:[#allocation2 + $0x1a78] sm:$0xff]
    %v10606 = vld [vmem:[#allocation2 + $0x1ab0] sm:$0xff]
    %v10607 = vld [vmem:[#allocation2 + $0x1ab8] sm:$0xff]
    %v10608 = vld [vmem:[#allocation2 + $0x1af0] sm:$0xff]
    %v10609 = vld [vmem:[#allocation2 + $0x1af8] sm:$0xff]
    %v10610 = vld [vmem:[#allocation2 + $0x1b30] sm:$0xff]
    %v10611 = vld [vmem:[#allocation2 + $0x1b38] sm:$0xff]
    %v10612 = vld [vmem:[#allocation2 + $0x1b70] sm:$0xff]
    %v10613 = vld [vmem:[#allocation2 + $0x1b78] sm:$0xff]
    %v10614 = vld [vmem:[#allocation2 + $0x1bb0] sm:$0xff]
    %v10615 = vld [vmem:[#allocation2 + $0x1bb8] sm:$0xff]
    %v10616 = vld [vmem:[#allocation2 + $0x1bf0] sm:$0xff]
    %v10617 = vld [vmem:[#allocation2 + $0x1bf8] sm:$0xff]
    %v10618 = vld [vmem:[#allocation2 + $0x1c30] sm:$0xff]
    %v10619 = vld [vmem:[#allocation2 + $0x1c38] sm:$0xff]
    %v10620 = vld [vmem:[#allocation2 + $0x1c70] sm:$0xff]
    %v10621 = vld [vmem:[#allocation2 + $0x1c78] sm:$0xff]
    %v10622 = vld [vmem:[#allocation2 + $0x1cb0] sm:$0xff]
    %v10623 = vld [vmem:[#allocation2 + $0x1cb8] sm:$0xff]
    %v10624 = vld [vmem:[#allocation2 + $0x1cf0] sm:$0xff]
    %v10625 = vld [vmem:[#allocation2 + $0x1cf8] sm:$0xff]
    %v10626 = vld [vmem:[#allocation2 + $0x1d30] sm:$0xff]
    %v10627 = vld [vmem:[#allocation2 + $0x1d38] sm:$0xff]
    %v10628 = vld [vmem:[#allocation2 + $0x1d70] sm:$0xff]
    %v10629 = vld [vmem:[#allocation2 + $0x1d78] sm:$0xff]
    %v10630 = vld [vmem:[#allocation2 + $0x1db0] sm:$0xff]
    %v10631 = vld [vmem:[#allocation2 + $0x1db8] sm:$0xff]
    %v10632 = vld [vmem:[#allocation2 + $0x1df0] sm:$0xff]
    %v10633 = vld [vmem:[#allocation2 + $0x1df8] sm:$0xff]
    %v10634 = vld [vmem:[#allocation2 + $0x1e30] sm:$0xff]
    %v10635 = vld [vmem:[#allocation2 + $0x1e38] sm:$0xff]
    %v10636 = vld [vmem:[#allocation2 + $0x1e70] sm:$0xff]
    %v10637 = vld [vmem:[#allocation2 + $0x1e78] sm:$0xff]
    %v10638 = vld [vmem:[#allocation2 + $0x1eb0] sm:$0xff]
    %v10639 = vld [vmem:[#allocation2 + $0x1eb8] sm:$0xff]
    %v10640 = vld [vmem:[#allocation2 + $0x1ef0] sm:$0xff]
    %v10641 = vld [vmem:[#allocation2 + $0x1ef8] sm:$0xff]
    %v10642 = vld [vmem:[#allocation2 + $0x1f30] sm:$0xff]
    %v10643 = vld [vmem:[#allocation2 + $0x1f38] sm:$0xff]
    %v10644 = vld [vmem:[#allocation2 + $0x1f70] sm:$0xff]
    %v10645 = vld [vmem:[#allocation2 + $0x1f78] sm:$0xff]
    %v10646 = vld [vmem:[#allocation2 + $0x1fb0] sm:$0xff]
    %v10647 = vld [vmem:[#allocation2 + $0x1fb8] sm:$0xff]
    %v10648 = vld [vmem:[#allocation2 + $0x1ff0] sm:$0xff]
    %v10649 = vld [vmem:[#allocation2 + $0x1ff8] sm:$0xff]
    %v10650 = vld [vmem:[#allocation9 + $0xc] sm:$0xf]
    %v10652 = vlaneseq
    %v10653 = vshrl.u32 %v10652, 7
    %v10654 = vsub.s32 0, %v10653
    %v10655 = vrot.slane %v10650, %v10654
    %v10656 = vlaneseq
    %v10657 = vshrl.u32 %v10656, 7
    %v10658 = vsub.s32 1, %v10657
    %v10659 = vrot.slane %v10650, %v10658
    %v10660 = vlaneseq
    %v10661 = vshrl.u32 %v10660, 7
    %v10662 = vsub.s32 2, %v10661
    %v10663 = vrot.slane %v10650, %v10662
    %v10664 = vlaneseq
    %v10665 = vshrl.u32 %v10664, 7
    %v10666 = vsub.s32 3, %v10665
    %v10667 = vrot.slane %v10650, %v10666
    %v10928 = vunpack.c.l.b16 %v10394
    %v10929 = vunpack.c.h.b16 %v10394
    %v10930 = vunpack.c.l.b16 %v10395
    %v10931 = vunpack.c.h.b16 %v10395
    %v10932 = vunpack.c.l.b16 %v10396
    %v10933 = vunpack.c.h.b16 %v10396
    %v10934 = vunpack.c.l.b16 %v10397
    %v10935 = vunpack.c.h.b16 %v10397
    %v10936 = vunpack.c.l.b16 %v10398
    %v10937 = vunpack.c.h.b16 %v10398
    %v10938 = vunpack.c.l.b16 %v10399
    %v10939 = vunpack.c.h.b16 %v10399
    %v10940 = vunpack.c.l.b16 %v10400
    %v10941 = vunpack.c.h.b16 %v10400
    %v10942 = vunpack.c.l.b16 %v10401
    %v10943 = vunpack.c.h.b16 %v10401
    %v10944 = vunpack.c.l.b16 %v10402
    %v10945 = vunpack.c.h.b16 %v10402
    %v10946 = vunpack.c.l.b16 %v10403
    %v10947 = vunpack.c.h.b16 %v10403
    %v10948 = vunpack.c.l.b16 %v10404
    %v10949 = vunpack.c.h.b16 %v10404
    %v10950 = vunpack.c.l.b16 %v10405
    %v10951 = vunpack.c.h.b16 %v10405
    %v10952 = vunpack.c.l.b16 %v10406
    %v10953 = vunpack.c.h.b16 %v10406
    %v10954 = vunpack.c.l.b16 %v10407
    %v10955 = vunpack.c.h.b16 %v10407
    %v10956 = vunpack.c.l.b16 %v10408
    %v10957 = vunpack.c.h.b16 %v10408
    %v10958 = vunpack.c.l.b16 %v10409
    %v10959 = vunpack.c.h.b16 %v10409
    %v10960 = vunpack.c.l.b16 %v10410
    %v10961 = vunpack.c.h.b16 %v10410
    %v10962 = vunpack.c.l.b16 %v10411
    %v10963 = vunpack.c.h.b16 %v10411
    %v10964 = vunpack.c.l.b16 %v10412
    %v10965 = vunpack.c.h.b16 %v10412
    %v10966 = vunpack.c.l.b16 %v10413
    %v10967 = vunpack.c.h.b16 %v10413
    %v10968 = vunpack.c.l.b16 %v10414
    %v10969 = vunpack.c.h.b16 %v10414
    %v10970 = vunpack.c.l.b16 %v10415
    %v10971 = vunpack.c.h.b16 %v10415
    %v10972 = vunpack.c.l.b16 %v10416
    %v10973 = vunpack.c.h.b16 %v10416
    %v10974 = vunpack.c.l.b16 %v10417
    %v10975 = vunpack.c.h.b16 %v10417
    %v10976 = vunpack.c.l.b16 %v10418
    %v10977 = vunpack.c.h.b16 %v10418
    %v10978 = vunpack.c.l.b16 %v10419
    %v10979 = vunpack.c.h.b16 %v10419
    %v10980 = vunpack.c.l.b16 %v10420
    %v10981 = vunpack.c.h.b16 %v10420
    %v10982 = vunpack.c.l.b16 %v10421
    %v10983 = vunpack.c.h.b16 %v10421
    %v10984 = vunpack.c.l.b16 %v10422
    %v10985 = vunpack.c.h.b16 %v10422
    %v10986 = vunpack.c.l.b16 %v10423
    %v10987 = vunpack.c.h.b16 %v10423
    %v10988 = vunpack.c.l.b16 %v10424
    %v10989 = vunpack.c.h.b16 %v10424
    %v10990 = vunpack.c.l.b16 %v10425
    %v10991 = vunpack.c.h.b16 %v10425
    %v10992 = vunpack.c.l.b16 %v10426
    %v10993 = vunpack.c.h.b16 %v10426
    %v10994 = vunpack.c.l.b16 %v10427
    %v10995 = vunpack.c.h.b16 %v10427
    %v10996 = vunpack.c.l.b16 %v10428
    %v10997 = vunpack.c.h.b16 %v10428
    %v10998 = vunpack.c.l.b16 %v10429
    %v10999 = vunpack.c.h.b16 %v10429
    %v11000 = vunpack.c.l.b16 %v10430
    %v11001 = vunpack.c.h.b16 %v10430
    %v11002 = vunpack.c.l.b16 %v10431
    %v11003 = vunpack.c.h.b16 %v10431
    %v11004 = vunpack.c.l.b16 %v10432
    %v11005 = vunpack.c.h.b16 %v10432
    %v11006 = vunpack.c.l.b16 %v10433
    %v11007 = vunpack.c.h.b16 %v10433
    %v11008 = vunpack.c.l.b16 %v10434
    %v11009 = vunpack.c.h.b16 %v10434
    %v11010 = vunpack.c.l.b16 %v10435
    %v11011 = vunpack.c.h.b16 %v10435
    %v11012 = vunpack.c.l.b16 %v10436
    %v11013 = vunpack.c.h.b16 %v10436
    %v11014 = vunpack.c.l.b16 %v10437
    %v11015 = vunpack.c.h.b16 %v10437
    %v11016 = vunpack.c.l.b16 %v10438
    %v11017 = vunpack.c.h.b16 %v10438
    %v11018 = vunpack.c.l.b16 %v10439
    %v11019 = vunpack.c.h.b16 %v10439
    %v11020 = vunpack.c.l.b16 %v10440
    %v11021 = vunpack.c.h.b16 %v10440
    %v11022 = vunpack.c.l.b16 %v10441
    %v11023 = vunpack.c.h.b16 %v10441
    %v11024 = vunpack.c.l.b16 %v10442
    %v11025 = vunpack.c.h.b16 %v10442
    %v11026 = vunpack.c.l.b16 %v10443
    %v11027 = vunpack.c.h.b16 %v10443
    %v11028 = vunpack.c.l.b16 %v10444
    %v11029 = vunpack.c.h.b16 %v10444
    %v11030 = vunpack.c.l.b16 %v10445
    %v11031 = vunpack.c.h.b16 %v10445
    %v11032 = vunpack.c.l.b16 %v10446
    %v11033 = vunpack.c.h.b16 %v10446
    %v11034 = vunpack.c.l.b16 %v10447
    %v11035 = vunpack.c.h.b16 %v10447
    %v11036 = vunpack.c.l.b16 %v10448
    %v11037 = vunpack.c.h.b16 %v10448
    %v11038 = vunpack.c.l.b16 %v10449
    %v11039 = vunpack.c.h.b16 %v10449
    %v11040 = vunpack.c.l.b16 %v10450
    %v11041 = vunpack.c.h.b16 %v10450
    %v11042 = vunpack.c.l.b16 %v10451
    %v11043 = vunpack.c.h.b16 %v10451
    %v11044 = vunpack.c.l.b16 %v10452
    %v11045 = vunpack.c.h.b16 %v10452
    %v11046 = vunpack.c.l.b16 %v10453
    %v11047 = vunpack.c.h.b16 %v10453
    %v11048 = vunpack.c.l.b16 %v10454
    %v11049 = vunpack.c.h.b16 %v10454
    %v11050 = vunpack.c.l.b16 %v10455
    %v11051 = vunpack.c.h.b16 %v10455
    %v11052 = vunpack.c.l.b16 %v10456
    %v11053 = vunpack.c.h.b16 %v10456
    %v11054 = vunpack.c.l.b16 %v10457
    %v11055 = vunpack.c.h.b16 %v10457
    %v11056 = vunpack.c.l.b16 %v10458
    %v11057 = vunpack.c.h.b16 %v10458
    %v11058 = vunpack.c.l.b16 %v10459
    %v11059 = vunpack.c.h.b16 %v10459
    %v11060 = vunpack.c.l.b16 %v10460
    %v11061 = vunpack.c.h.b16 %v10460
    %v11062 = vunpack.c.l.b16 %v10461
    %v11063 = vunpack.c.h.b16 %v10461
    %v11064 = vunpack.c.l.b16 %v10462
    %v11065 = vunpack.c.h.b16 %v10462
    %v11066 = vunpack.c.l.b16 %v10463
    %v11067 = vunpack.c.h.b16 %v10463
    %v11068 = vunpack.c.l.b16 %v10464
    %v11069 = vunpack.c.h.b16 %v10464
    %v11070 = vunpack.c.l.b16 %v10465
    %v11071 = vunpack.c.h.b16 %v10465
    %v11072 = vunpack.c.l.b16 %v10466
    %v11073 = vunpack.c.h.b16 %v10466
    %v11074 = vunpack.c.l.b16 %v10467
    %v11075 = vunpack.c.h.b16 %v10467
    %v11076 = vunpack.c.l.b16 %v10468
    %v11077 = vunpack.c.h.b16 %v10468
    %v11078 = vunpack.c.l.b16 %v10469
    %v11079 = vunpack.c.h.b16 %v10469
    %v11080 = vunpack.c.l.b16 %v10470
    %v11081 = vunpack.c.h.b16 %v10470
    %v11082 = vunpack.c.l.b16 %v10471
    %v11083 = vunpack.c.h.b16 %v10471
    %v11084 = vunpack.c.l.b16 %v10472
    %v11085 = vunpack.c.h.b16 %v10472
    %v11086 = vunpack.c.l.b16 %v10473
    %v11087 = vunpack.c.h.b16 %v10473
    %v11088 = vunpack.c.l.b16 %v10474
    %v11089 = vunpack.c.h.b16 %v10474
    %v11090 = vunpack.c.l.b16 %v10475
    %v11091 = vunpack.c.h.b16 %v10475
    %v11092 = vunpack.c.l.b16 %v10476
    %v11093 = vunpack.c.h.b16 %v10476
    %v11094 = vunpack.c.l.b16 %v10477
    %v11095 = vunpack.c.h.b16 %v10477
    %v11096 = vunpack.c.l.b16 %v10478
    %v11097 = vunpack.c.h.b16 %v10478
    %v11098 = vunpack.c.l.b16 %v10479
    %v11099 = vunpack.c.h.b16 %v10479
    %v11100 = vunpack.c.l.b16 %v10480
    %v11101 = vunpack.c.h.b16 %v10480
    %v11102 = vunpack.c.l.b16 %v10481
    %v11103 = vunpack.c.h.b16 %v10481
    %v11104 = vunpack.c.l.b16 %v10482
    %v11105 = vunpack.c.h.b16 %v10482
    %v11106 = vunpack.c.l.b16 %v10483
    %v11107 = vunpack.c.h.b16 %v10483
    %v11108 = vunpack.c.l.b16 %v10484
    %v11109 = vunpack.c.h.b16 %v10484
    %v11110 = vunpack.c.l.b16 %v10485
    %v11111 = vunpack.c.h.b16 %v10485
    %v11112 = vunpack.c.l.b16 %v10486
    %v11113 = vunpack.c.h.b16 %v10486
    %v11114 = vunpack.c.l.b16 %v10487
    %v11115 = vunpack.c.h.b16 %v10487
    %v11116 = vunpack.c.l.b16 %v10488
    %v11117 = vunpack.c.h.b16 %v10488
    %v11118 = vunpack.c.l.b16 %v10489
    %v11119 = vunpack.c.h.b16 %v10489
    %v11120 = vunpack.c.l.b16 %v10490
    %v11121 = vunpack.c.h.b16 %v10490
    %v11122 = vunpack.c.l.b16 %v10491
    %v11123 = vunpack.c.h.b16 %v10491
    %v11124 = vunpack.c.l.b16 %v10492
    %v11125 = vunpack.c.h.b16 %v10492
    %v11126 = vunpack.c.l.b16 %v10493
    %v11127 = vunpack.c.h.b16 %v10493
    %v11128 = vunpack.c.l.b16 %v10494
    %v11129 = vunpack.c.h.b16 %v10494
    %v11130 = vunpack.c.l.b16 %v10495
    %v11131 = vunpack.c.h.b16 %v10495
    %v11132 = vunpack.c.l.b16 %v10496
    %v11133 = vunpack.c.h.b16 %v10496
    %v11134 = vunpack.c.l.b16 %v10497
    %v11135 = vunpack.c.h.b16 %v10497
    %v11136 = vunpack.c.l.b16 %v10498
    %v11137 = vunpack.c.h.b16 %v10498
    %v11138 = vunpack.c.l.b16 %v10499
    %v11139 = vunpack.c.h.b16 %v10499
    %v11140 = vunpack.c.l.b16 %v10500
    %v11141 = vunpack.c.h.b16 %v10500
    %v11142 = vunpack.c.l.b16 %v10501
    %v11143 = vunpack.c.h.b16 %v10501
    %v11144 = vunpack.c.l.b16 %v10502
    %v11145 = vunpack.c.h.b16 %v10502
    %v11146 = vunpack.c.l.b16 %v10503
    %v11147 = vunpack.c.h.b16 %v10503
    %v11148 = vunpack.c.l.b16 %v10504
    %v11149 = vunpack.c.h.b16 %v10504
    %v11150 = vunpack.c.l.b16 %v10505
    %v11151 = vunpack.c.h.b16 %v10505
    %v11152 = vunpack.c.l.b16 %v10506
    %v11153 = vunpack.c.h.b16 %v10506
    %v11154 = vunpack.c.l.b16 %v10507
    %v11155 = vunpack.c.h.b16 %v10507
    %v11156 = vunpack.c.l.b16 %v10508
    %v11157 = vunpack.c.h.b16 %v10508
    %v11158 = vunpack.c.l.b16 %v10509
    %v11159 = vunpack.c.h.b16 %v10509
    %v11160 = vunpack.c.l.b16 %v10510
    %v11161 = vunpack.c.h.b16 %v10510
    %v11162 = vunpack.c.l.b16 %v10511
    %v11163 = vunpack.c.h.b16 %v10511
    %v11164 = vunpack.c.l.b16 %v10512
    %v11165 = vunpack.c.h.b16 %v10512
    %v11166 = vunpack.c.l.b16 %v10513
    %v11167 = vunpack.c.h.b16 %v10513
    %v11168 = vunpack.c.l.b16 %v10514
    %v11169 = vunpack.c.h.b16 %v10514
    %v11170 = vunpack.c.l.b16 %v10515
    %v11171 = vunpack.c.h.b16 %v10515
    %v11172 = vunpack.c.l.b16 %v10516
    %v11173 = vunpack.c.h.b16 %v10516
    %v11174 = vunpack.c.l.b16 %v10517
    %v11175 = vunpack.c.h.b16 %v10517
    %v11176 = vunpack.c.l.b16 %v10518
    %v11177 = vunpack.c.h.b16 %v10518
    %v11178 = vunpack.c.l.b16 %v10519
    %v11179 = vunpack.c.h.b16 %v10519
    %v11180 = vunpack.c.l.b16 %v10520
    %v11181 = vunpack.c.h.b16 %v10520
    %v11182 = vunpack.c.l.b16 %v10521
    %v11183 = vunpack.c.h.b16 %v10521
    %v11184 = vunpack.c.l.b16 %v10522
    %v11185 = vunpack.c.h.b16 %v10522
    %v11186 = vunpack.c.l.b16 %v10523
    %v11187 = vunpack.c.h.b16 %v10523
    %v11188 = vunpack.c.l.b16 %v10524
    %v11189 = vunpack.c.h.b16 %v10524
    %v11190 = vunpack.c.l.b16 %v10525
    %v11191 = vunpack.c.h.b16 %v10525
    %v11192 = vunpack.c.l.b16 %v10526
    %v11193 = vunpack.c.h.b16 %v10526
    %v11194 = vunpack.c.l.b16 %v10527
    %v11195 = vunpack.c.h.b16 %v10527
    %v11196 = vunpack.c.l.b16 %v10528
    %v11197 = vunpack.c.h.b16 %v10528
    %v11198 = vunpack.c.l.b16 %v10529
    %v11199 = vunpack.c.h.b16 %v10529
    %v11200 = vunpack.c.l.b16 %v10530
    %v11201 = vunpack.c.h.b16 %v10530
    %v11202 = vunpack.c.l.b16 %v10531
    %v11203 = vunpack.c.h.b16 %v10531
    %v11204 = vunpack.c.l.b16 %v10532
    %v11205 = vunpack.c.h.b16 %v10532
    %v11206 = vunpack.c.l.b16 %v10533
    %v11207 = vunpack.c.h.b16 %v10533
    %v11208 = vunpack.c.l.b16 %v10534
    %v11209 = vunpack.c.h.b16 %v10534
    %v11210 = vunpack.c.l.b16 %v10535
    %v11211 = vunpack.c.h.b16 %v10535
    %v11212 = vunpack.c.l.b16 %v10536
    %v11213 = vunpack.c.h.b16 %v10536
    %v11214 = vunpack.c.l.b16 %v10537
    %v11215 = vunpack.c.h.b16 %v10537
    %v11216 = vunpack.c.l.b16 %v10538
    %v11217 = vunpack.c.h.b16 %v10538
    %v11218 = vunpack.c.l.b16 %v10539
    %v11219 = vunpack.c.h.b16 %v10539
    %v11220 = vunpack.c.l.b16 %v10540
    %v11221 = vunpack.c.h.b16 %v10540
    %v11222 = vunpack.c.l.b16 %v10541
    %v11223 = vunpack.c.h.b16 %v10541
    %v11224 = vunpack.c.l.b16 %v10542
    %v11225 = vunpack.c.h.b16 %v10542
    %v11226 = vunpack.c.l.b16 %v10543
    %v11227 = vunpack.c.h.b16 %v10543
    %v11228 = vunpack.c.l.b16 %v10544
    %v11229 = vunpack.c.h.b16 %v10544
    %v11230 = vunpack.c.l.b16 %v10545
    %v11231 = vunpack.c.h.b16 %v10545
    %v11232 = vunpack.c.l.b16 %v10546
    %v11233 = vunpack.c.h.b16 %v10546
    %v11234 = vunpack.c.l.b16 %v10547
    %v11235 = vunpack.c.h.b16 %v10547
    %v11236 = vunpack.c.l.b16 %v10548
    %v11237 = vunpack.c.h.b16 %v10548
    %v11238 = vunpack.c.l.b16 %v10549
    %v11239 = vunpack.c.h.b16 %v10549
    %v11240 = vunpack.c.l.b16 %v10550
    %v11241 = vunpack.c.h.b16 %v10550
    %v11242 = vunpack.c.l.b16 %v10551
    %v11243 = vunpack.c.h.b16 %v10551
    %v11244 = vunpack.c.l.b16 %v10552
    %v11245 = vunpack.c.h.b16 %v10552
    %v11246 = vunpack.c.l.b16 %v10553
    %v11247 = vunpack.c.h.b16 %v10553
    %v11248 = vunpack.c.l.b16 %v10554
    %v11249 = vunpack.c.h.b16 %v10554
    %v11250 = vunpack.c.l.b16 %v10555
    %v11251 = vunpack.c.h.b16 %v10555
    %v11252 = vunpack.c.l.b16 %v10556
    %v11253 = vunpack.c.h.b16 %v10556
    %v11254 = vunpack.c.l.b16 %v10557
    %v11255 = vunpack.c.h.b16 %v10557
    %v11256 = vunpack.c.l.b16 %v10558
    %v11257 = vunpack.c.h.b16 %v10558
    %v11258 = vunpack.c.l.b16 %v10559
    %v11259 = vunpack.c.h.b16 %v10559
    %v11260 = vunpack.c.l.b16 %v10560
    %v11261 = vunpack.c.h.b16 %v10560
    %v11262 = vunpack.c.l.b16 %v10561
    %v11263 = vunpack.c.h.b16 %v10561
    %v11264 = vunpack.c.l.b16 %v10562
    %v11265 = vunpack.c.h.b16 %v10562
    %v11266 = vunpack.c.l.b16 %v10563
    %v11267 = vunpack.c.h.b16 %v10563
    %v11268 = vunpack.c.l.b16 %v10564
    %v11269 = vunpack.c.h.b16 %v10564
    %v11270 = vunpack.c.l.b16 %v10565
    %v11271 = vunpack.c.h.b16 %v10565
    %v11272 = vunpack.c.l.b16 %v10566
    %v11273 = vunpack.c.h.b16 %v10566
    %v11274 = vunpack.c.l.b16 %v10567
    %v11275 = vunpack.c.h.b16 %v10567
    %v11276 = vunpack.c.l.b16 %v10568
    %v11277 = vunpack.c.h.b16 %v10568
    %v11278 = vunpack.c.l.b16 %v10569
    %v11279 = vunpack.c.h.b16 %v10569
    %v11280 = vunpack.c.l.b16 %v10570
    %v11281 = vunpack.c.h.b16 %v10570
    %v11282 = vunpack.c.l.b16 %v10571
    %v11283 = vunpack.c.h.b16 %v10571
    %v11284 = vunpack.c.l.b16 %v10572
    %v11285 = vunpack.c.h.b16 %v10572
    %v11286 = vunpack.c.l.b16 %v10573
    %v11287 = vunpack.c.h.b16 %v10573
    %v11288 = vunpack.c.l.b16 %v10574
    %v11289 = vunpack.c.h.b16 %v10574
    %v11290 = vunpack.c.l.b16 %v10575
    %v11291 = vunpack.c.h.b16 %v10575
    %v11292 = vunpack.c.l.b16 %v10576
    %v11293 = vunpack.c.h.b16 %v10576
    %v11294 = vunpack.c.l.b16 %v10577
    %v11295 = vunpack.c.h.b16 %v10577
    %v11296 = vunpack.c.l.b16 %v10578
    %v11297 = vunpack.c.h.b16 %v10578
    %v11298 = vunpack.c.l.b16 %v10579
    %v11299 = vunpack.c.h.b16 %v10579
    %v11300 = vunpack.c.l.b16 %v10580
    %v11301 = vunpack.c.h.b16 %v10580
    %v11302 = vunpack.c.l.b16 %v10581
    %v11303 = vunpack.c.h.b16 %v10581
    %v11304 = vunpack.c.l.b16 %v10582
    %v11305 = vunpack.c.h.b16 %v10582
    %v11306 = vunpack.c.l.b16 %v10583
    %v11307 = vunpack.c.h.b16 %v10583
    %v11308 = vunpack.c.l.b16 %v10584
    %v11309 = vunpack.c.h.b16 %v10584
    %v11310 = vunpack.c.l.b16 %v10585
    %v11311 = vunpack.c.h.b16 %v10585
    %v11312 = vunpack.c.l.b16 %v10586
    %v11313 = vunpack.c.h.b16 %v10586
    %v11314 = vunpack.c.l.b16 %v10587
    %v11315 = vunpack.c.h.b16 %v10587
    %v11316 = vunpack.c.l.b16 %v10588
    %v11317 = vunpack.c.h.b16 %v10588
    %v11318 = vunpack.c.l.b16 %v10589
    %v11319 = vunpack.c.h.b16 %v10589
    %v11320 = vunpack.c.l.b16 %v10590
    %v11321 = vunpack.c.h.b16 %v10590
    %v11322 = vunpack.c.l.b16 %v10591
    %v11323 = vunpack.c.h.b16 %v10591
    %v11324 = vunpack.c.l.b16 %v10592
    %v11325 = vunpack.c.h.b16 %v10592
    %v11326 = vunpack.c.l.b16 %v10593
    %v11327 = vunpack.c.h.b16 %v10593
    %v11328 = vunpack.c.l.b16 %v10594
    %v11329 = vunpack.c.h.b16 %v10594
    %v11330 = vunpack.c.l.b16 %v10595
    %v11331 = vunpack.c.h.b16 %v10595
    %v11332 = vunpack.c.l.b16 %v10596
    %v11333 = vunpack.c.h.b16 %v10596
    %v11334 = vunpack.c.l.b16 %v10597
    %v11335 = vunpack.c.h.b16 %v10597
    %v11336 = vunpack.c.l.b16 %v10598
    %v11337 = vunpack.c.h.b16 %v10598
    %v11338 = vunpack.c.l.b16 %v10599
    %v11339 = vunpack.c.h.b16 %v10599
    %v11340 = vunpack.c.l.b16 %v10600
    %v11341 = vunpack.c.h.b16 %v10600
    %v11342 = vunpack.c.l.b16 %v10601
    %v11343 = vunpack.c.h.b16 %v10601
    %v11344 = vunpack.c.l.b16 %v10602
    %v11345 = vunpack.c.h.b16 %v10602
    %v11346 = vunpack.c.l.b16 %v10603
    %v11347 = vunpack.c.h.b16 %v10603
    %v11348 = vunpack.c.l.b16 %v10604
    %v11349 = vunpack.c.h.b16 %v10604
    %v11350 = vunpack.c.l.b16 %v10605
    %v11351 = vunpack.c.h.b16 %v10605
    %v11352 = vunpack.c.l.b16 %v10606
    %v11353 = vunpack.c.h.b16 %v10606
    %v11354 = vunpack.c.l.b16 %v10607
    %v11355 = vunpack.c.h.b16 %v10607
    %v11356 = vunpack.c.l.b16 %v10608
    %v11357 = vunpack.c.h.b16 %v10608
    %v11358 = vunpack.c.l.b16 %v10609
    %v11359 = vunpack.c.h.b16 %v10609
    %v11360 = vunpack.c.l.b16 %v10610
    %v11361 = vunpack.c.h.b16 %v10610
    %v11362 = vunpack.c.l.b16 %v10611
    %v11363 = vunpack.c.h.b16 %v10611
    %v11364 = vunpack.c.l.b16 %v10612
    %v11365 = vunpack.c.h.b16 %v10612
    %v11366 = vunpack.c.l.b16 %v10613
    %v11367 = vunpack.c.h.b16 %v10613
    %v11368 = vunpack.c.l.b16 %v10614
    %v11369 = vunpack.c.h.b16 %v10614
    %v11370 = vunpack.c.l.b16 %v10615
    %v11371 = vunpack.c.h.b16 %v10615
    %v11372 = vunpack.c.l.b16 %v10616
    %v11373 = vunpack.c.h.b16 %v10616
    %v11374 = vunpack.c.l.b16 %v10617
    %v11375 = vunpack.c.h.b16 %v10617
    %v11376 = vunpack.c.l.b16 %v10618
    %v11377 = vunpack.c.h.b16 %v10618
    %v11378 = vunpack.c.l.b16 %v10619
    %v11379 = vunpack.c.h.b16 %v10619
    %v11380 = vunpack.c.l.b16 %v10620
    %v11381 = vunpack.c.h.b16 %v10620
    %v11382 = vunpack.c.l.b16 %v10621
    %v11383 = vunpack.c.h.b16 %v10621
    %v11384 = vunpack.c.l.b16 %v10622
    %v11385 = vunpack.c.h.b16 %v10622
    %v11386 = vunpack.c.l.b16 %v10623
    %v11387 = vunpack.c.h.b16 %v10623
    %v11388 = vunpack.c.l.b16 %v10624
    %v11389 = vunpack.c.h.b16 %v10624
    %v11390 = vunpack.c.l.b16 %v10625
    %v11391 = vunpack.c.h.b16 %v10625
    %v11392 = vunpack.c.l.b16 %v10626
    %v11393 = vunpack.c.h.b16 %v10626
    %v11394 = vunpack.c.l.b16 %v10627
    %v11395 = vunpack.c.h.b16 %v10627
    %v11396 = vunpack.c.l.b16 %v10628
    %v11397 = vunpack.c.h.b16 %v10628
    %v11398 = vunpack.c.l.b16 %v10629
    %v11399 = vunpack.c.h.b16 %v10629
    %v11400 = vunpack.c.l.b16 %v10630
    %v11401 = vunpack.c.h.b16 %v10630
    %v11402 = vunpack.c.l.b16 %v10631
    %v11403 = vunpack.c.h.b16 %v10631
    %v11404 = vunpack.c.l.b16 %v10632
    %v11405 = vunpack.c.h.b16 %v10632
    %v11406 = vunpack.c.l.b16 %v10633
    %v11407 = vunpack.c.h.b16 %v10633
    %v11408 = vunpack.c.l.b16 %v10634
    %v11409 = vunpack.c.h.b16 %v10634
    %v11410 = vunpack.c.l.b16 %v10635
    %v11411 = vunpack.c.h.b16 %v10635
    %v11412 = vunpack.c.l.b16 %v10636
    %v11413 = vunpack.c.h.b16 %v10636
    %v11414 = vunpack.c.l.b16 %v10637
    %v11415 = vunpack.c.h.b16 %v10637
    %v11416 = vunpack.c.l.b16 %v10638
    %v11417 = vunpack.c.h.b16 %v10638
    %v11418 = vunpack.c.l.b16 %v10639
    %v11419 = vunpack.c.h.b16 %v10639
    %v11420 = vunpack.c.l.b16 %v10640
    %v11421 = vunpack.c.h.b16 %v10640
    %v11422 = vunpack.c.l.b16 %v10641
    %v11423 = vunpack.c.h.b16 %v10641
    %v11424 = vunpack.c.l.b16 %v10642
    %v11425 = vunpack.c.h.b16 %v10642
    %v11426 = vunpack.c.l.b16 %v10643
    %v11427 = vunpack.c.h.b16 %v10643
    %v11428 = vunpack.c.l.b16 %v10644
    %v11429 = vunpack.c.h.b16 %v10644
    %v11430 = vunpack.c.l.b16 %v10645
    %v11431 = vunpack.c.h.b16 %v10645
    %v11432 = vunpack.c.l.b16 %v10646
    %v11433 = vunpack.c.h.b16 %v10646
    %v11434 = vunpack.c.l.b16 %v10647
    %v11435 = vunpack.c.h.b16 %v10647
    %v11436 = vunpack.c.l.b16 %v10648
    %v11437 = vunpack.c.h.b16 %v10648
    %v11438 = vunpack.c.l.b16 %v10649
    %v11439 = vunpack.c.h.b16 %v10649
    %v11440 = vpack.c.b16 %v10932, %v10928
    %v11441 = vpack.c.b16 %v10933, %v10929
    %v11442 = vpack.c.b16 %v10934, %v10930
    %v11443 = vpack.c.b16 %v10935, %v10931
    %v11444 = vpack.c.b16 %v10940, %v10936
    %v11445 = vpack.c.b16 %v10941, %v10937
    %v11446 = vpack.c.b16 %v10942, %v10938
    %v11447 = vpack.c.b16 %v10943, %v10939
    %v11448 = vpack.c.b16 %v10948, %v10944
    %v11449 = vpack.c.b16 %v10949, %v10945
    %v11450 = vpack.c.b16 %v10950, %v10946
    %v11451 = vpack.c.b16 %v10951, %v10947
    %v11452 = vpack.c.b16 %v10956, %v10952
    %v11453 = vpack.c.b16 %v10957, %v10953
    %v11454 = vpack.c.b16 %v10958, %v10954
    %v11455 = vpack.c.b16 %v10959, %v10955
    %v11456 = vpack.c.b16 %v10964, %v10960
    %v11457 = vpack.c.b16 %v10965, %v10961
    %v11458 = vpack.c.b16 %v10966, %v10962
    %v11459 = vpack.c.b16 %v10967, %v10963
    %v11460 = vpack.c.b16 %v10972, %v10968
    %v11461 = vpack.c.b16 %v10973, %v10969
    %v11462 = vpack.c.b16 %v10974, %v10970
    %v11463 = vpack.c.b16 %v10975, %v10971
    %v11464 = vpack.c.b16 %v10980, %v10976
    %v11465 = vpack.c.b16 %v10981, %v10977
    %v11466 = vpack.c.b16 %v10982, %v10978
    %v11467 = vpack.c.b16 %v10983, %v10979
    %v11468 = vpack.c.b16 %v10988, %v10984
    %v11469 = vpack.c.b16 %v10989, %v10985
    %v11470 = vpack.c.b16 %v10990, %v10986
    %v11471 = vpack.c.b16 %v10991, %v10987
    %v11472 = vpack.c.b16 %v10996, %v10992
    %v11473 = vpack.c.b16 %v10997, %v10993
    %v11474 = vpack.c.b16 %v10998, %v10994
    %v11475 = vpack.c.b16 %v10999, %v10995
    %v11476 = vpack.c.b16 %v11004, %v11000
    %v11477 = vpack.c.b16 %v11005, %v11001
    %v11478 = vpack.c.b16 %v11006, %v11002
    %v11479 = vpack.c.b16 %v11007, %v11003
    %v11480 = vpack.c.b16 %v11012, %v11008
    %v11481 = vpack.c.b16 %v11013, %v11009
    %v11482 = vpack.c.b16 %v11014, %v11010
    %v11483 = vpack.c.b16 %v11015, %v11011
    %v11484 = vpack.c.b16 %v11020, %v11016
    %v11485 = vpack.c.b16 %v11021, %v11017
    %v11486 = vpack.c.b16 %v11022, %v11018
    %v11487 = vpack.c.b16 %v11023, %v11019
    %v11488 = vpack.c.b16 %v11028, %v11024
    %v11489 = vpack.c.b16 %v11029, %v11025
    %v11490 = vpack.c.b16 %v11030, %v11026
    %v11491 = vpack.c.b16 %v11031, %v11027
    %v11492 = vpack.c.b16 %v11036, %v11032
    %v11493 = vpack.c.b16 %v11037, %v11033
    %v11494 = vpack.c.b16 %v11038, %v11034
    %v11495 = vpack.c.b16 %v11039, %v11035
    %v11496 = vpack.c.b16 %v11044, %v11040
    %v11497 = vpack.c.b16 %v11045, %v11041
    %v11498 = vpack.c.b16 %v11046, %v11042
    %v11499 = vpack.c.b16 %v11047, %v11043
    %v11500 = vpack.c.b16 %v11052, %v11048
    %v11501 = vpack.c.b16 %v11053, %v11049
    %v11502 = vpack.c.b16 %v11054, %v11050
    %v11503 = vpack.c.b16 %v11055, %v11051
    %v11504 = vpack.c.b16 %v11060, %v11056
    %v11505 = vpack.c.b16 %v11061, %v11057
    %v11506 = vpack.c.b16 %v11062, %v11058
    %v11507 = vpack.c.b16 %v11063, %v11059
    %v11508 = vpack.c.b16 %v11068, %v11064
    %v11509 = vpack.c.b16 %v11069, %v11065
    %v11510 = vpack.c.b16 %v11070, %v11066
    %v11511 = vpack.c.b16 %v11071, %v11067
    %v11512 = vpack.c.b16 %v11076, %v11072
    %v11513 = vpack.c.b16 %v11077, %v11073
    %v11514 = vpack.c.b16 %v11078, %v11074
    %v11515 = vpack.c.b16 %v11079, %v11075
    %v11516 = vpack.c.b16 %v11084, %v11080
    %v11517 = vpack.c.b16 %v11085, %v11081
    %v11518 = vpack.c.b16 %v11086, %v11082
    %v11519 = vpack.c.b16 %v11087, %v11083
    %v11520 = vpack.c.b16 %v11092, %v11088
    %v11521 = vpack.c.b16 %v11093, %v11089
    %v11522 = vpack.c.b16 %v11094, %v11090
    %v11523 = vpack.c.b16 %v11095, %v11091
    %v11524 = vpack.c.b16 %v11100, %v11096
    %v11525 = vpack.c.b16 %v11101, %v11097
    %v11526 = vpack.c.b16 %v11102, %v11098
    %v11527 = vpack.c.b16 %v11103, %v11099
    %v11528 = vpack.c.b16 %v11108, %v11104
    %v11529 = vpack.c.b16 %v11109, %v11105
    %v11530 = vpack.c.b16 %v11110, %v11106
    %v11531 = vpack.c.b16 %v11111, %v11107
    %v11532 = vpack.c.b16 %v11116, %v11112
    %v11533 = vpack.c.b16 %v11117, %v11113
    %v11534 = vpack.c.b16 %v11118, %v11114
    %v11535 = vpack.c.b16 %v11119, %v11115
    %v11536 = vpack.c.b16 %v11124, %v11120
    %v11537 = vpack.c.b16 %v11125, %v11121
    %v11538 = vpack.c.b16 %v11126, %v11122
    %v11539 = vpack.c.b16 %v11127, %v11123
    %v11540 = vpack.c.b16 %v11132, %v11128
    %v11541 = vpack.c.b16 %v11133, %v11129
    %v11542 = vpack.c.b16 %v11134, %v11130
    %v11543 = vpack.c.b16 %v11135, %v11131
    %v11544 = vpack.c.b16 %v11140, %v11136
    %v11545 = vpack.c.b16 %v11141, %v11137
    %v11546 = vpack.c.b16 %v11142, %v11138
    %v11547 = vpack.c.b16 %v11143, %v11139
    %v11548 = vpack.c.b16 %v11148, %v11144
    %v11549 = vpack.c.b16 %v11149, %v11145
    %v11550 = vpack.c.b16 %v11150, %v11146
    %v11551 = vpack.c.b16 %v11151, %v11147
    %v11552 = vpack.c.b16 %v11156, %v11152
    %v11553 = vpack.c.b16 %v11157, %v11153
    %v11554 = vpack.c.b16 %v11158, %v11154
    %v11555 = vpack.c.b16 %v11159, %v11155
    %v11556 = vpack.c.b16 %v11164, %v11160
    %v11557 = vpack.c.b16 %v11165, %v11161
    %v11558 = vpack.c.b16 %v11166, %v11162
    %v11559 = vpack.c.b16 %v11167, %v11163
    %v11560 = vpack.c.b16 %v11172, %v11168
    %v11561 = vpack.c.b16 %v11173, %v11169
    %v11562 = vpack.c.b16 %v11174, %v11170
    %v11563 = vpack.c.b16 %v11175, %v11171
    %v11564 = vpack.c.b16 %v11180, %v11176
    %v11565 = vpack.c.b16 %v11181, %v11177
    %v11566 = vpack.c.b16 %v11182, %v11178
    %v11567 = vpack.c.b16 %v11183, %v11179
    %v11568 = vpack.c.b16 %v11188, %v11184
    %v11569 = vpack.c.b16 %v11189, %v11185
    %v11570 = vpack.c.b16 %v11190, %v11186
    %v11571 = vpack.c.b16 %v11191, %v11187
    %v11572 = vpack.c.b16 %v11196, %v11192
    %v11573 = vpack.c.b16 %v11197, %v11193
    %v11574 = vpack.c.b16 %v11198, %v11194
    %v11575 = vpack.c.b16 %v11199, %v11195
    %v11576 = vpack.c.b16 %v11204, %v11200
    %v11577 = vpack.c.b16 %v11205, %v11201
    %v11578 = vpack.c.b16 %v11206, %v11202
    %v11579 = vpack.c.b16 %v11207, %v11203
    %v11580 = vpack.c.b16 %v11212, %v11208
    %v11581 = vpack.c.b16 %v11213, %v11209
    %v11582 = vpack.c.b16 %v11214, %v11210
    %v11583 = vpack.c.b16 %v11215, %v11211
    %v11584 = vpack.c.b16 %v11220, %v11216
    %v11585 = vpack.c.b16 %v11221, %v11217
    %v11586 = vpack.c.b16 %v11222, %v11218
    %v11587 = vpack.c.b16 %v11223, %v11219
    %v11588 = vpack.c.b16 %v11228, %v11224
    %v11589 = vpack.c.b16 %v11229, %v11225
    %v11590 = vpack.c.b16 %v11230, %v11226
    %v11591 = vpack.c.b16 %v11231, %v11227
    %v11592 = vpack.c.b16 %v11236, %v11232
    %v11593 = vpack.c.b16 %v11237, %v11233
    %v11594 = vpack.c.b16 %v11238, %v11234
    %v11595 = vpack.c.b16 %v11239, %v11235
    %v11596 = vpack.c.b16 %v11244, %v11240
    %v11597 = vpack.c.b16 %v11245, %v11241
    %v11598 = vpack.c.b16 %v11246, %v11242
    %v11599 = vpack.c.b16 %v11247, %v11243
    %v11600 = vpack.c.b16 %v11252, %v11248
    %v11601 = vpack.c.b16 %v11253, %v11249
    %v11602 = vpack.c.b16 %v11254, %v11250
    %v11603 = vpack.c.b16 %v11255, %v11251
    %v11604 = vpack.c.b16 %v11260, %v11256
    %v11605 = vpack.c.b16 %v11261, %v11257
    %v11606 = vpack.c.b16 %v11262, %v11258
    %v11607 = vpack.c.b16 %v11263, %v11259
    %v11608 = vpack.c.b16 %v11268, %v11264
    %v11609 = vpack.c.b16 %v11269, %v11265
    %v11610 = vpack.c.b16 %v11270, %v11266
    %v11611 = vpack.c.b16 %v11271, %v11267
    %v11612 = vpack.c.b16 %v11276, %v11272
    %v11613 = vpack.c.b16 %v11277, %v11273
    %v11614 = vpack.c.b16 %v11278, %v11274
    %v11615 = vpack.c.b16 %v11279, %v11275
    %v11616 = vpack.c.b16 %v11284, %v11280
    %v11617 = vpack.c.b16 %v11285, %v11281
    %v11618 = vpack.c.b16 %v11286, %v11282
    %v11619 = vpack.c.b16 %v11287, %v11283
    %v11620 = vpack.c.b16 %v11292, %v11288
    %v11621 = vpack.c.b16 %v11293, %v11289
    %v11622 = vpack.c.b16 %v11294, %v11290
    %v11623 = vpack.c.b16 %v11295, %v11291
    %v11624 = vpack.c.b16 %v11300, %v11296
    %v11625 = vpack.c.b16 %v11301, %v11297
    %v11626 = vpack.c.b16 %v11302, %v11298
    %v11627 = vpack.c.b16 %v11303, %v11299
    %v11628 = vpack.c.b16 %v11308, %v11304
    %v11629 = vpack.c.b16 %v11309, %v11305
    %v11630 = vpack.c.b16 %v11310, %v11306
    %v11631 = vpack.c.b16 %v11311, %v11307
    %v11632 = vpack.c.b16 %v11316, %v11312
    %v11633 = vpack.c.b16 %v11317, %v11313
    %v11634 = vpack.c.b16 %v11318, %v11314
    %v11635 = vpack.c.b16 %v11319, %v11315
    %v11636 = vpack.c.b16 %v11324, %v11320
    %v11637 = vpack.c.b16 %v11325, %v11321
    %v11638 = vpack.c.b16 %v11326, %v11322
    %v11639 = vpack.c.b16 %v11327, %v11323
    %v11640 = vpack.c.b16 %v11332, %v11328
    %v11641 = vpack.c.b16 %v11333, %v11329
    %v11642 = vpack.c.b16 %v11334, %v11330
    %v11643 = vpack.c.b16 %v11335, %v11331
    %v11644 = vpack.c.b16 %v11340, %v11336
    %v11645 = vpack.c.b16 %v11341, %v11337
    %v11646 = vpack.c.b16 %v11342, %v11338
    %v11647 = vpack.c.b16 %v11343, %v11339
    %v11648 = vpack.c.b16 %v11348, %v11344
    %v11649 = vpack.c.b16 %v11349, %v11345
    %v11650 = vpack.c.b16 %v11350, %v11346
    %v11651 = vpack.c.b16 %v11351, %v11347
    %v11652 = vpack.c.b16 %v11356, %v11352
    %v11653 = vpack.c.b16 %v11357, %v11353
    %v11654 = vpack.c.b16 %v11358, %v11354
    %v11655 = vpack.c.b16 %v11359, %v11355
    %v11656 = vpack.c.b16 %v11364, %v11360
    %v11657 = vpack.c.b16 %v11365, %v11361
    %v11658 = vpack.c.b16 %v11366, %v11362
    %v11659 = vpack.c.b16 %v11367, %v11363
    %v11660 = vpack.c.b16 %v11372, %v11368
    %v11661 = vpack.c.b16 %v11373, %v11369
    %v11662 = vpack.c.b16 %v11374, %v11370
    %v11663 = vpack.c.b16 %v11375, %v11371
    %v11664 = vpack.c.b16 %v11380, %v11376
    %v11665 = vpack.c.b16 %v11381, %v11377
    %v11666 = vpack.c.b16 %v11382, %v11378
    %v11667 = vpack.c.b16 %v11383, %v11379
    %v11668 = vpack.c.b16 %v11388, %v11384
    %v11669 = vpack.c.b16 %v11389, %v11385
    %v11670 = vpack.c.b16 %v11390, %v11386
    %v11671 = vpack.c.b16 %v11391, %v11387
    %v11672 = vpack.c.b16 %v11396, %v11392
    %v11673 = vpack.c.b16 %v11397, %v11393
    %v11674 = vpack.c.b16 %v11398, %v11394
    %v11675 = vpack.c.b16 %v11399, %v11395
    %v11676 = vpack.c.b16 %v11404, %v11400
    %v11677 = vpack.c.b16 %v11405, %v11401
    %v11678 = vpack.c.b16 %v11406, %v11402
    %v11679 = vpack.c.b16 %v11407, %v11403
    %v11680 = vpack.c.b16 %v11412, %v11408
    %v11681 = vpack.c.b16 %v11413, %v11409
    %v11682 = vpack.c.b16 %v11414, %v11410
    %v11683 = vpack.c.b16 %v11415, %v11411
    %v11684 = vpack.c.b16 %v11420, %v11416
    %v11685 = vpack.c.b16 %v11421, %v11417
    %v11686 = vpack.c.b16 %v11422, %v11418
    %v11687 = vpack.c.b16 %v11423, %v11419
    %v11688 = vpack.c.b16 %v11428, %v11424
    %v11689 = vpack.c.b16 %v11429, %v11425
    %v11690 = vpack.c.b16 %v11430, %v11426
    %v11691 = vpack.c.b16 %v11431, %v11427
    %v11692 = vpack.c.b16 %v11436, %v11432
    %v11693 = vpack.c.b16 %v11437, %v11433
    %v11694 = vpack.c.b16 %v11438, %v11434
    %v11695 = vpack.c.b16 %v11439, %v11435
    %11952 = vmatprep.subr.bf16.mxu0 %v11469
    %11953 = vmatpush1.bf16.msra.mxu0 %v11468
    %11954 = vmatprep.subr.bf16.mxu0 %v11465
    %11955 = vmatpush1.bf16.msra.mxu0 %v11464
    %11956 = vmatprep.subr.bf16.mxu0 %v11461
    %11957 = vmatpush1.bf16.msra.mxu0 %v11460
    %11958 = vmatprep.subr.bf16.mxu0 %v11457
    %11959 = vmatpush1.bf16.msra.mxu0 %v11456
    %11960 = vmatprep.subr.bf16.mxu0 %v11453
    %11961 = vmatpush1.bf16.msra.mxu0 %v11452
    %11962 = vmatprep.subr.bf16.mxu0 %v11449
    %11963 = vmatpush1.bf16.msra.mxu0 %v11448
    %11964 = vmatprep.subr.bf16.mxu0 %v11445
    %11965 = vmatpush1.bf16.msra.mxu0 %v11444
    %11966 = vmatprep.subr.bf16.mxu0 %v11441
    %11967 = vmatpush1.bf16.msra.mxu0 %v11440
    %11968 = vmatprep.subr.bf16.mxu0 %v11501
    %11969 = vmatpush2.bf16.msra.mxu0 %v11500
    %11970 = vmatprep.subr.bf16.mxu0 %v11497
    %11971 = vmatpush2.bf16.msra.mxu0 %v11496
    %11972 = vmatprep.subr.bf16.mxu0 %v11493
    %11973 = vmatpush2.bf16.msra.mxu0 %v11492
    %11974 = vmatprep.subr.bf16.mxu0 %v11489
    %11975 = vmatpush2.bf16.msra.mxu0 %v11488
    %11976 = vmatprep.subr.bf16.mxu0 %v11485
    %11977 = vmatpush2.bf16.msra.mxu0 %v11484
    %11978 = vmatprep.subr.bf16.mxu0 %v11481
    %11979 = vmatpush2.bf16.msra.mxu0 %v11480
    %11980 = vmatprep.subr.bf16.mxu0 %v11477
    %11981 = vmatpush2.bf16.msra.mxu0 %v11476
    %11982 = vmatprep.subr.bf16.mxu0 %v11473
    %11983 = vmatpush2.bf16.msra.mxu0 %v11472
    %11984 = vmatprep.mubr.bf16.mxu0 %v3617
    %11985 = vmatmul.mubr.bf16.gmra.mxu0 %v3616
    %v11986 = vpop.f32.mrf.mxu0
    %v11987 = vadd.f32 %v10655, %v11986
    %v11988 = vpop.f32.mrf.mxu0
    %v11989 = vadd.f32 %v10659, %v11988
    %v11990 = vpop.f32.mrf.mxu0
    %v11991 = vadd.f32 %v10655, %v11990
    %v11992 = vpop.f32.mrf.mxu0
    %v11993 = vadd.f32 %v10659, %v11992
    %11994 = vdwg.mxu0
    %11995 = vmatprep.subr.bf16.mxu0 %v11533
    %11996 = vmatpush1.bf16.msra.mxu0 %v11532
    %11997 = vmatprep.subr.bf16.mxu0 %v11529
    %11998 = vmatpush1.bf16.msra.mxu0 %v11528
    %11999 = vmatprep.subr.bf16.mxu0 %v11525
    %12000 = vmatpush1.bf16.msra.mxu0 %v11524
    %12001 = vmatprep.subr.bf16.mxu0 %v11521
    %12002 = vmatpush1.bf16.msra.mxu0 %v11520
    %12003 = vmatprep.subr.bf16.mxu0 %v11517
    %12004 = vmatpush1.bf16.msra.mxu0 %v11516
    %12005 = vmatprep.subr.bf16.mxu0 %v11513
    %12006 = vmatpush1.bf16.msra.mxu0 %v11512
    %12007 = vmatprep.subr.bf16.mxu0 %v11509
    %12008 = vmatpush1.bf16.msra.mxu0 %v11508
    %12009 = vmatprep.subr.bf16.mxu0 %v11505
    %12010 = vmatpush1.bf16.msra.mxu0 %v11504
    %12011 = vmatprep.subr.bf16.mxu0 %v11565
    %12012 = vmatpush2.bf16.msra.mxu0 %v11564
    %12013 = vmatprep.subr.bf16.mxu0 %v11561
    %12014 = vmatpush2.bf16.msra.mxu0 %v11560
    %12015 = vmatprep.subr.bf16.mxu0 %v11557
    %12016 = vmatpush2.bf16.msra.mxu0 %v11556
    %12017 = vmatprep.subr.bf16.mxu0 %v11553
    %12018 = vmatpush2.bf16.msra.mxu0 %v11552
    %12019 = vmatprep.subr.bf16.mxu0 %v11549
    %12020 = vmatpush2.bf16.msra.mxu0 %v11548
    %12021 = vmatprep.subr.bf16.mxu0 %v11545
    %12022 = vmatpush2.bf16.msra.mxu0 %v11544
    %12023 = vmatprep.subr.bf16.mxu0 %v11541
    %12024 = vmatpush2.bf16.msra.mxu0 %v11540
    %12025 = vmatprep.subr.bf16.mxu0 %v11537
    %12026 = vmatpush2.bf16.msra.mxu0 %v11536
    %12027 = vmatprep.mubr.bf16.mxu0 %v3619
    %12028 = vmatmul.mubr.bf16.gmra.mxu0 %v3618
    %v12029 = vpop.f32.mrf.mxu0
    %v12030 = vadd.f32 %v11987, %v12029
    %v12031 = vpop.f32.mrf.mxu0
    %v12032 = vadd.f32 %v11989, %v12031
    %v12033 = vpop.f32.mrf.mxu0
    %v12034 = vadd.f32 %v11991, %v12033
    %v12035 = vpop.f32.mrf.mxu0
    %v12036 = vadd.f32 %v11993, %v12035
    %12037 = vdwg.mxu0
    %12038 = vmatprep.subr.bf16.mxu0 %v11597
    %12039 = vmatpush1.bf16.msra.mxu0 %v11596
    %12040 = vmatprep.subr.bf16.mxu0 %v11593
    %12041 = vmatpush1.bf16.msra.mxu0 %v11592
    %12042 = vmatprep.subr.bf16.mxu0 %v11589
    %12043 = vmatpush1.bf16.msra.mxu0 %v11588
    %12044 = vmatprep.subr.bf16.mxu0 %v11585
    %12045 = vmatpush1.bf16.msra.mxu0 %v11584
    %12046 = vmatprep.subr.bf16.mxu0 %v11581
    %12047 = vmatpush1.bf16.msra.mxu0 %v11580
    %12048 = vmatprep.subr.bf16.mxu0 %v11577
    %12049 = vmatpush1.bf16.msra.mxu0 %v11576
    %12050 = vmatprep.subr.bf16.mxu0 %v11573
    %12051 = vmatpush1.bf16.msra.mxu0 %v11572
    %12052 = vmatprep.subr.bf16.mxu0 %v11569
    %12053 = vmatpush1.bf16.msra.mxu0 %v11568
    %12054 = vmatprep.subr.bf16.mxu0 %v11629
    %12055 = vmatpush2.bf16.msra.mxu0 %v11628
    %12056 = vmatprep.subr.bf16.mxu0 %v11625
    %12057 = vmatpush2.bf16.msra.mxu0 %v11624
    %12058 = vmatprep.subr.bf16.mxu0 %v11621
    %12059 = vmatpush2.bf16.msra.mxu0 %v11620
    %12060 = vmatprep.subr.bf16.mxu0 %v11617
    %12061 = vmatpush2.bf16.msra.mxu0 %v11616
    %12062 = vmatprep.subr.bf16.mxu0 %v11613
    %12063 = vmatpush2.bf16.msra.mxu0 %v11612
    %12064 = vmatprep.subr.bf16.mxu0 %v11609
    %12065 = vmatpush2.bf16.msra.mxu0 %v11608
    %12066 = vmatprep.subr.bf16.mxu0 %v11605
    %12067 = vmatpush2.bf16.msra.mxu0 %v11604
    %12068 = vmatprep.subr.bf16.mxu0 %v11601
    %12069 = vmatpush2.bf16.msra.mxu0 %v11600
    %12070 = vmatprep.mubr.bf16.mxu0 %v3621
    %12071 = vmatmul.mubr.bf16.gmra.mxu0 %v3620
    %v12072 = vpop.f32.mrf.mxu0
    %v12073 = vadd.f32 %v12030, %v12072
    %v12074 = vpop.f32.mrf.mxu0
    %v12075 = vadd.f32 %v12032, %v12074
    %v12076 = vpop.f32.mrf.mxu0
    %v12077 = vadd.f32 %v12034, %v12076
    %v12078 = vpop.f32.mrf.mxu0
    %v12079 = vadd.f32 %v12036, %v12078
    %12080 = vdwg.mxu0
    %12081 = vmatprep.subr.bf16.mxu0 %v11661
    %12082 = vmatpush1.bf16.msra.mxu0 %v11660
    %12083 = vmatprep.subr.bf16.mxu0 %v11657
    %12084 = vmatpush1.bf16.msra.mxu0 %v11656
    %12085 = vmatprep.subr.bf16.mxu0 %v11653
    %12086 = vmatpush1.bf16.msra.mxu0 %v11652
    %12087 = vmatprep.subr.bf16.mxu0 %v11649
    %12088 = vmatpush1.bf16.msra.mxu0 %v11648
    %12089 = vmatprep.subr.bf16.mxu0 %v11645
    %12090 = vmatpush1.bf16.msra.mxu0 %v11644
    %12091 = vmatprep.subr.bf16.mxu0 %v11641
    %12092 = vmatpush1.bf16.msra.mxu0 %v11640
    %12093 = vmatprep.subr.bf16.mxu0 %v11637
    %12094 = vmatpush1.bf16.msra.mxu0 %v11636
    %12095 = vmatprep.subr.bf16.mxu0 %v11633
    %12096 = vmatpush1.bf16.msra.mxu0 %v11632
    %12097 = vmatprep.subr.bf16.mxu0 %v11693
    %12098 = vmatpush2.bf16.msra.mxu0 %v11692
    %12099 = vmatprep.subr.bf16.mxu0 %v11689
    %12100 = vmatpush2.bf16.msra.mxu0 %v11688
    %12101 = vmatprep.subr.bf16.mxu0 %v11685
    %12102 = vmatpush2.bf16.msra.mxu0 %v11684
    %12103 = vmatprep.subr.bf16.mxu0 %v11681
    %12104 = vmatpush2.bf16.msra.mxu0 %v11680
    %12105 = vmatprep.subr.bf16.mxu0 %v11677
    %12106 = vmatpush2.bf16.msra.mxu0 %v11676
    %12107 = vmatprep.subr.bf16.mxu0 %v11673
    %12108 = vmatpush2.bf16.msra.mxu0 %v11672
    %12109 = vmatprep.subr.bf16.mxu0 %v11669
    %12110 = vmatpush2.bf16.msra.mxu0 %v11668
    %12111 = vmatprep.subr.bf16.mxu0 %v11665
    %12112 = vmatpush2.bf16.msra.mxu0 %v11664
    %12113 = vmatprep.mubr.bf16.mxu0 %v3623
    %12114 = vmatmul.mubr.bf16.gmra.mxu0 %v3622
    %v12115 = vpop.f32.mrf.mxu0
    %v12116 = vadd.f32 %v12073, %v12115
    %v12117 = vpop.f32.mrf.mxu0
    %v12118 = vadd.f32 %v12075, %v12117
    %v12119 = vpop.f32.mrf.mxu0
    %v12120 = vadd.f32 %v12077, %v12119
    %v12121 = vpop.f32.mrf.mxu0
    %v12122 = vadd.f32 %v12079, %v12121
    %12123 = vdwg.mxu0
    %12124 = vmatprep.subr.bf16.mxu0 %v11471
    %12125 = vmatpush1.bf16.msra.mxu0 %v11470
    %12126 = vmatprep.subr.bf16.mxu0 %v11467
    %12127 = vmatpush1.bf16.msra.mxu0 %v11466
    %12128 = vmatprep.subr.bf16.mxu0 %v11463
    %12129 = vmatpush1.bf16.msra.mxu0 %v11462
    %12130 = vmatprep.subr.bf16.mxu0 %v11459
    %12131 = vmatpush1.bf16.msra.mxu0 %v11458
    %12132 = vmatprep.subr.bf16.mxu0 %v11455
    %12133 = vmatpush1.bf16.msra.mxu0 %v11454
    %12134 = vmatprep.subr.bf16.mxu0 %v11451
    %12135 = vmatpush1.bf16.msra.mxu0 %v11450
    %12136 = vmatprep.subr.bf16.mxu0 %v11447
    %12137 = vmatpush1.bf16.msra.mxu0 %v11446
    %12138 = vmatprep.subr.bf16.mxu0 %v11443
    %12139 = vmatpush1.bf16.msra.mxu0 %v11442
    %12140 = vmatprep.subr.bf16.mxu0 %v11503
    %12141 = vmatpush2.bf16.msra.mxu0 %v11502
    %12142 = vmatprep.subr.bf16.mxu0 %v11499
    %12143 = vmatpush2.bf16.msra.mxu0 %v11498
    %12144 = vmatprep.subr.bf16.mxu0 %v11495
    %12145 = vmatpush2.bf16.msra.mxu0 %v11494
    %12146 = vmatprep.subr.bf16.mxu0 %v11491
    %12147 = vmatpush2.bf16.msra.mxu0 %v11490
    %12148 = vmatprep.subr.bf16.mxu0 %v11487
    %12149 = vmatpush2.bf16.msra.mxu0 %v11486
    %12150 = vmatprep.subr.bf16.mxu0 %v11483
    %12151 = vmatpush2.bf16.msra.mxu0 %v11482
    %12152 = vmatprep.subr.bf16.mxu0 %v11479
    %12153 = vmatpush2.bf16.msra.mxu0 %v11478
    %12154 = vmatprep.subr.bf16.mxu0 %v11475
    %12155 = vmatpush2.bf16.msra.mxu0 %v11474
    %12156 = vmatprep.mubr.bf16.mxu0 %v3617
    %12157 = vmatmul.mubr.bf16.gmra.mxu0 %v3616
    %v12158 = vpop.f32.mrf.mxu0
    %v12159 = vadd.f32 %v10663, %v12158
    %v12160 = vpop.f32.mrf.mxu0
    %v12161 = vadd.f32 %v10667, %v12160
    %v12162 = vpop.f32.mrf.mxu0
    %v12163 = vadd.f32 %v10663, %v12162
    %v12164 = vpop.f32.mrf.mxu0
    %v12165 = vadd.f32 %v10667, %v12164
    %12166 = vdwg.mxu0
    %12167 = vmatprep.subr.bf16.mxu0 %v11535
    %12168 = vmatpush1.bf16.msra.mxu0 %v11534
    %12169 = vmatprep.subr.bf16.mxu0 %v11531
    %12170 = vmatpush1.bf16.msra.mxu0 %v11530
    %12171 = vmatprep.subr.bf16.mxu0 %v11527
    %12172 = vmatpush1.bf16.msra.mxu0 %v11526
    %12173 = vmatprep.subr.bf16.mxu0 %v11523
    %12174 = vmatpush1.bf16.msra.mxu0 %v11522
    %12175 = vmatprep.subr.bf16.mxu0 %v11519
    %12176 = vmatpush1.bf16.msra.mxu0 %v11518
    %12177 = vmatprep.subr.bf16.mxu0 %v11515
    %12178 = vmatpush1.bf16.msra.mxu0 %v11514
    %12179 = vmatprep.subr.bf16.mxu0 %v11511
    %12180 = vmatpush1.bf16.msra.mxu0 %v11510
    %12181 = vmatprep.subr.bf16.mxu0 %v11507
    %12182 = vmatpush1.bf16.msra.mxu0 %v11506
    %12183 = vmatprep.subr.bf16.mxu0 %v11567
    %12184 = vmatpush2.bf16.msra.mxu0 %v11566
    %12185 = vmatprep.subr.bf16.mxu0 %v11563
    %12186 = vmatpush2.bf16.msra.mxu0 %v11562
    %12187 = vmatprep.subr.bf16.mxu0 %v11559
    %12188 = vmatpush2.bf16.msra.mxu0 %v11558
    %12189 = vmatprep.subr.bf16.mxu0 %v11555
    %12190 = vmatpush2.bf16.msra.mxu0 %v11554
    %12191 = vmatprep.subr.bf16.mxu0 %v11551
    %12192 = vmatpush2.bf16.msra.mxu0 %v11550
    %12193 = vmatprep.subr.bf16.mxu0 %v11547
    %12194 = vmatpush2.bf16.msra.mxu0 %v11546
    %12195 = vmatprep.subr.bf16.mxu0 %v11543
    %12196 = vmatpush2.bf16.msra.mxu0 %v11542
    %12197 = vmatprep.subr.bf16.mxu0 %v11539
    %12198 = vmatpush2.bf16.msra.mxu0 %v11538
    %12199 = vmatprep.mubr.bf16.mxu0 %v3619
    %12200 = vmatmul.mubr.bf16.gmra.mxu0 %v3618
    %v12201 = vpop.f32.mrf.mxu0
    %v12202 = vadd.f32 %v12159, %v12201
    %v12203 = vpop.f32.mrf.mxu0
    %v12204 = vadd.f32 %v12161, %v12203
    %v12205 = vpop.f32.mrf.mxu0
    %v12206 = vadd.f32 %v12163, %v12205
    %v12207 = vpop.f32.mrf.mxu0
    %v12208 = vadd.f32 %v12165, %v12207
    %12209 = vdwg.mxu0
    %12210 = vmatprep.subr.bf16.mxu0 %v11599
    %12211 = vmatpush1.bf16.msra.mxu0 %v11598
    %12212 = vmatprep.subr.bf16.mxu0 %v11595
    %12213 = vmatpush1.bf16.msra.mxu0 %v11594
    %12214 = vmatprep.subr.bf16.mxu0 %v11591
    %12215 = vmatpush1.bf16.msra.mxu0 %v11590
    %12216 = vmatprep.subr.bf16.mxu0 %v11587
    %12217 = vmatpush1.bf16.msra.mxu0 %v11586
    %12218 = vmatprep.subr.bf16.mxu0 %v11583
    %12219 = vmatpush1.bf16.msra.mxu0 %v11582
    %12220 = vmatprep.subr.bf16.mxu0 %v11579
    %12221 = vmatpush1.bf16.msra.mxu0 %v11578
    %12222 = vmatprep.subr.bf16.mxu0 %v11575
    %12223 = vmatpush1.bf16.msra.mxu0 %v11574
    %12224 = vmatprep.subr.bf16.mxu0 %v11571
    %12225 = vmatpush1.bf16.msra.mxu0 %v11570
    %12226 = vmatprep.subr.bf16.mxu0 %v11631
    %12227 = vmatpush2.bf16.msra.mxu0 %v11630
    %12228 = vmatprep.subr.bf16.mxu0 %v11627
    %12229 = vmatpush2.bf16.msra.mxu0 %v11626
    %12230 = vmatprep.subr.bf16.mxu0 %v11623
    %12231 = vmatpush2.bf16.msra.mxu0 %v11622
    %12232 = vmatprep.subr.bf16.mxu0 %v11619
    %12233 = vmatpush2.bf16.msra.mxu0 %v11618
    %12234 = vmatprep.subr.bf16.mxu0 %v11615
    %12235 = vmatpush2.bf16.msra.mxu0 %v11614
    %12236 = vmatprep.subr.bf16.mxu0 %v11611
    %12237 = vmatpush2.bf16.msra.mxu0 %v11610
    %12238 = vmatprep.subr.bf16.mxu0 %v11607
    %12239 = vmatpush2.bf16.msra.mxu0 %v11606
    %12240 = vmatprep.subr.bf16.mxu0 %v11603
    %12241 = vmatpush2.bf16.msra.mxu0 %v11602
    %12242 = vmatprep.mubr.bf16.mxu0 %v3621
    %12243 = vmatmul.mubr.bf16.gmra.mxu0 %v3620
    %v12244 = vpop.f32.mrf.mxu0
    %v12245 = vadd.f32 %v12202, %v12244
    %v12246 = vpop.f32.mrf.mxu0
    %v12247 = vadd.f32 %v12204, %v12246
    %v12248 = vpop.f32.mrf.mxu0
    %v12249 = vadd.f32 %v12206, %v12248
    %v12250 = vpop.f32.mrf.mxu0
    %v12251 = vadd.f32 %v12208, %v12250
    %12252 = vdwg.mxu0
    %12253 = vmatprep.subr.bf16.mxu0 %v11663
    %12254 = vmatpush1.bf16.msra.mxu0 %v11662
    %12255 = vmatprep.subr.bf16.mxu0 %v11659
    %12256 = vmatpush1.bf16.msra.mxu0 %v11658
    %12257 = vmatprep.subr.bf16.mxu0 %v11655
    %12258 = vmatpush1.bf16.msra.mxu0 %v11654
    %12259 = vmatprep.subr.bf16.mxu0 %v11651
    %12260 = vmatpush1.bf16.msra.mxu0 %v11650
    %12261 = vmatprep.subr.bf16.mxu0 %v11647
    %12262 = vmatpush1.bf16.msra.mxu0 %v11646
    %12263 = vmatprep.subr.bf16.mxu0 %v11643
    %12264 = vmatpush1.bf16.msra.mxu0 %v11642
    %12265 = vmatprep.subr.bf16.mxu0 %v11639
    %12266 = vmatpush1.bf16.msra.mxu0 %v11638
    %12267 = vmatprep.subr.bf16.mxu0 %v11635
    %12268 = vmatpush1.bf16.msra.mxu0 %v11634
    %12269 = vmatprep.subr.bf16.mxu0 %v11695
    %12270 = vmatpush2.bf16.msra.mxu0 %v11694
    %12271 = vmatprep.subr.bf16.mxu0 %v11691
    %12272 = vmatpush2.bf16.msra.mxu0 %v11690
    %12273 = vmatprep.subr.bf16.mxu0 %v11687
    %12274 = vmatpush2.bf16.msra.mxu0 %v11686
    %12275 = vmatprep.subr.bf16.mxu0 %v11683
    %12276 = vmatpush2.bf16.msra.mxu0 %v11682
    %12277 = vmatprep.subr.bf16.mxu0 %v11679
    %12278 = vmatpush2.bf16.msra.mxu0 %v11678
    %12279 = vmatprep.subr.bf16.mxu0 %v11675
    %12280 = vmatpush2.bf16.msra.mxu0 %v11674
    %12281 = vmatprep.subr.bf16.mxu0 %v11671
    %12282 = vmatpush2.bf16.msra.mxu0 %v11670
    %12283 = vmatprep.subr.bf16.mxu0 %v11667
    %12284 = vmatpush2.bf16.msra.mxu0 %v11666
    %12285 = vmatprep.mubr.bf16.mxu0 %v3623
    %12286 = vmatmul.mubr.bf16.gmra.mxu0 %v3622
    %v12287 = vpop.f32.mrf.mxu0
    %v12288 = vadd.f32 %v12245, %v12287
    %v12289 = vpop.f32.mrf.mxu0
    %v12290 = vadd.f32 %v12247, %v12289
    %v12291 = vpop.f32.mrf.mxu0
    %v12292 = vadd.f32 %v12249, %v12291
    %v12293 = vpop.f32.mrf.mxu0
    %v12294 = vadd.f32 %v12251, %v12293
    %12295 = vdwg.mxu0
    %v12296 = vmax.f32 %v12116, 0.0
    %v12297 = vmax.f32 %v12118, 0.0
    %v12298 = vmax.f32 %v12288, 0.0
    %v12299 = vmax.f32 %v12290, 0.0
    %v12300 = vmax.f32 %v12120, 0.0
    %v12301 = vmax.f32 %v12122, 0.0
    %v12302 = vmax.f32 %v12292, 0.0
    %v12303 = vmax.f32 %v12294, 0.0
    %v12304 = vpack.c.bf16 %v12300, %v12296
    %v12305 = vpack.c.bf16 %v12301, %v12297
    %v12306 = vpack.c.bf16 %v12302, %v12298
    %v12307 = vpack.c.bf16 %v12303, %v12299
    %v12308 = vld [vmem:[#allocation3 + $0x300] sm:$0xf]
    %v12309 = vld [vmem:[#allocation3 + $0x304] sm:$0xf]
    %v12310 = vld [vmem:[#allocation3 + $0x308] sm:$0xf]
    %v12311 = vld [vmem:[#allocation3 + $0x30c] sm:$0xf]
    %v12312 = vld [vmem:[#allocation3 + $0x310] sm:$0xf]
    %v12313 = vld [vmem:[#allocation3 + $0x314] sm:$0xf]
    %v12314 = vld [vmem:[#allocation3 + $0x318] sm:$0xf]
    %v12315 = vld [vmem:[#allocation3 + $0x31c] sm:$0xf]
    %v12316 = vld [vmem:[#allocation3 + $0x320] sm:$0xf]
    %v12317 = vld [vmem:[#allocation3 + $0x324] sm:$0xf]
    %v12318 = vld [vmem:[#allocation3 + $0x328] sm:$0xf]
    %v12319 = vld [vmem:[#allocation3 + $0x32c] sm:$0xf]
    %v12320 = vld [vmem:[#allocation3 + $0x330] sm:$0xf]
    %v12321 = vld [vmem:[#allocation3 + $0x334] sm:$0xf]
    %v12322 = vld [vmem:[#allocation3 + $0x338] sm:$0xf]
    %v12323 = vld [vmem:[#allocation3 + $0x33c] sm:$0xf]
    %v12324 = vld [vmem:[#allocation3 + $0x340] sm:$0xf]
    %v12325 = vld [vmem:[#allocation3 + $0x344] sm:$0xf]
    %v12326 = vld [vmem:[#allocation3 + $0x348] sm:$0xf]
    %v12327 = vld [vmem:[#allocation3 + $0x34c] sm:$0xf]
    %v12328 = vld [vmem:[#allocation3 + $0x350] sm:$0xf]
    %v12329 = vld [vmem:[#allocation3 + $0x354] sm:$0xf]
    %v12330 = vld [vmem:[#allocation3 + $0x358] sm:$0xf]
    %v12331 = vld [vmem:[#allocation3 + $0x35c] sm:$0xf]
    %v12332 = vld [vmem:[#allocation3 + $0x360] sm:$0xf]
    %v12333 = vld [vmem:[#allocation3 + $0x364] sm:$0xf]
    %v12334 = vld [vmem:[#allocation3 + $0x368] sm:$0xf]
    %v12335 = vld [vmem:[#allocation3 + $0x36c] sm:$0xf]
    %v12336 = vld [vmem:[#allocation3 + $0x370] sm:$0xf]
    %v12337 = vld [vmem:[#allocation3 + $0x374] sm:$0xf]
    %v12338 = vld [vmem:[#allocation3 + $0x378] sm:$0xf]
    %v12339 = vld [vmem:[#allocation3 + $0x37c] sm:$0xf]
    %v12340 = vld [vmem:[#allocation3 + $0x380] sm:$0xf]
    %v12341 = vld [vmem:[#allocation3 + $0x384] sm:$0xf]
    %v12342 = vld [vmem:[#allocation3 + $0x388] sm:$0xf]
    %v12343 = vld [vmem:[#allocation3 + $0x38c] sm:$0xf]
    %v12344 = vld [vmem:[#allocation3 + $0x390] sm:$0xf]
    %v12345 = vld [vmem:[#allocation3 + $0x394] sm:$0xf]
    %v12346 = vld [vmem:[#allocation3 + $0x398] sm:$0xf]
    %v12347 = vld [vmem:[#allocation3 + $0x39c] sm:$0xf]
    %v12348 = vld [vmem:[#allocation3 + $0x3a0] sm:$0xf]
    %v12349 = vld [vmem:[#allocation3 + $0x3a4] sm:$0xf]
    %v12350 = vld [vmem:[#allocation3 + $0x3a8] sm:$0xf]
    %v12351 = vld [vmem:[#allocation3 + $0x3ac] sm:$0xf]
    %v12352 = vld [vmem:[#allocation3 + $0x3b0] sm:$0xf]
    %v12353 = vld [vmem:[#allocation3 + $0x3b4] sm:$0xf]
    %v12354 = vld [vmem:[#allocation3 + $0x3b8] sm:$0xf]
    %v12355 = vld [vmem:[#allocation3 + $0x3bc] sm:$0xf]
    %v12356 = vld [vmem:[#allocation3 + $0x3c0] sm:$0xf]
    %v12357 = vld [vmem:[#allocation3 + $0x3c4] sm:$0xf]
    %v12358 = vld [vmem:[#allocation3 + $0x3c8] sm:$0xf]
    %v12359 = vld [vmem:[#allocation3 + $0x3cc] sm:$0xf]
    %v12360 = vld [vmem:[#allocation3 + $0x3d0] sm:$0xf]
    %v12361 = vld [vmem:[#allocation3 + $0x3d4] sm:$0xf]
    %v12362 = vld [vmem:[#allocation3 + $0x3d8] sm:$0xf]
    %v12363 = vld [vmem:[#allocation3 + $0x3dc] sm:$0xf]
    %v12364 = vld [vmem:[#allocation3 + $0x3e0] sm:$0xf]
    %v12365 = vld [vmem:[#allocation3 + $0x3e4] sm:$0xf]
    %v12366 = vld [vmem:[#allocation3 + $0x3e8] sm:$0xf]
    %v12367 = vld [vmem:[#allocation3 + $0x3ec] sm:$0xf]
    %v12368 = vld [vmem:[#allocation3 + $0x3f0] sm:$0xf]
    %v12369 = vld [vmem:[#allocation3 + $0x3f4] sm:$0xf]
    %v12370 = vld [vmem:[#allocation3 + $0x3f8] sm:$0xf]
    %v12371 = vld [vmem:[#allocation3 + $0x3fc] sm:$0xf]
    %v12436 = vunpack.c.l.b16 %v12308
    %v12437 = vunpack.c.l.b16 %v12309
    %v12438 = vunpack.c.l.b16 %v12310
    %v12439 = vunpack.c.l.b16 %v12311
    %v12440 = vunpack.c.l.b16 %v12312
    %v12441 = vunpack.c.l.b16 %v12313
    %v12442 = vunpack.c.l.b16 %v12314
    %v12443 = vunpack.c.l.b16 %v12315
    %v12444 = vunpack.c.l.b16 %v12316
    %v12445 = vunpack.c.l.b16 %v12317
    %v12446 = vunpack.c.l.b16 %v12318
    %v12447 = vunpack.c.l.b16 %v12319
    %v12448 = vunpack.c.l.b16 %v12320
    %v12449 = vunpack.c.l.b16 %v12321
    %v12450 = vunpack.c.l.b16 %v12322
    %v12451 = vunpack.c.l.b16 %v12323
    %v12452 = vunpack.c.l.b16 %v12324
    %v12453 = vunpack.c.l.b16 %v12325
    %v12454 = vunpack.c.l.b16 %v12326
    %v12455 = vunpack.c.l.b16 %v12327
    %v12456 = vunpack.c.l.b16 %v12328
    %v12457 = vunpack.c.l.b16 %v12329
    %v12458 = vunpack.c.l.b16 %v12330
    %v12459 = vunpack.c.l.b16 %v12331
    %v12460 = vunpack.c.l.b16 %v12332
    %v12461 = vunpack.c.l.b16 %v12333
    %v12462 = vunpack.c.l.b16 %v12334
    %v12463 = vunpack.c.l.b16 %v12335
    %v12464 = vunpack.c.l.b16 %v12336
    %v12465 = vunpack.c.l.b16 %v12337
    %v12466 = vunpack.c.l.b16 %v12338
    %v12467 = vunpack.c.l.b16 %v12339
    %v12468 = vunpack.c.l.b16 %v12340
    %v12469 = vunpack.c.l.b16 %v12341
    %v12470 = vunpack.c.l.b16 %v12342
    %v12471 = vunpack.c.l.b16 %v12343
    %v12472 = vunpack.c.l.b16 %v12344
    %v12473 = vunpack.c.l.b16 %v12345
    %v12474 = vunpack.c.l.b16 %v12346
    %v12475 = vunpack.c.l.b16 %v12347
    %v12476 = vunpack.c.l.b16 %v12348
    %v12477 = vunpack.c.l.b16 %v12349
    %v12478 = vunpack.c.l.b16 %v12350
    %v12479 = vunpack.c.l.b16 %v12351
    %v12480 = vunpack.c.l.b16 %v12352
    %v12481 = vunpack.c.l.b16 %v12353
    %v12482 = vunpack.c.l.b16 %v12354
    %v12483 = vunpack.c.l.b16 %v12355
    %v12484 = vunpack.c.l.b16 %v12356
    %v12485 = vunpack.c.l.b16 %v12357
    %v12486 = vunpack.c.l.b16 %v12358
    %v12487 = vunpack.c.l.b16 %v12359
    %v12488 = vunpack.c.l.b16 %v12360
    %v12489 = vunpack.c.l.b16 %v12361
    %v12490 = vunpack.c.l.b16 %v12362
    %v12491 = vunpack.c.l.b16 %v12363
    %v12492 = vunpack.c.l.b16 %v12364
    %v12493 = vunpack.c.l.b16 %v12365
    %v12494 = vunpack.c.l.b16 %v12366
    %v12495 = vunpack.c.l.b16 %v12367
    %v12496 = vunpack.c.l.b16 %v12368
    %v12497 = vunpack.c.l.b16 %v12369
    %v12498 = vunpack.c.l.b16 %v12370
    %v12499 = vunpack.c.l.b16 %v12371
    %v12500 = vpack.c.b16 %v12437, %v12436
    %v12501 = vpack.c.b16 %v12439, %v12438
    %v12502 = vpack.c.b16 %v12441, %v12440
    %v12503 = vpack.c.b16 %v12443, %v12442
    %v12504 = vpack.c.b16 %v12445, %v12444
    %v12505 = vpack.c.b16 %v12447, %v12446
    %v12506 = vpack.c.b16 %v12449, %v12448
    %v12507 = vpack.c.b16 %v12451, %v12450
    %v12508 = vpack.c.b16 %v12453, %v12452
    %v12509 = vpack.c.b16 %v12455, %v12454
    %v12510 = vpack.c.b16 %v12457, %v12456
    %v12511 = vpack.c.b16 %v12459, %v12458
    %v12512 = vpack.c.b16 %v12461, %v12460
    %v12513 = vpack.c.b16 %v12463, %v12462
    %v12514 = vpack.c.b16 %v12465, %v12464
    %v12515 = vpack.c.b16 %v12467, %v12466
    %v12516 = vpack.c.b16 %v12469, %v12468
    %v12517 = vpack.c.b16 %v12471, %v12470
    %v12518 = vpack.c.b16 %v12473, %v12472
    %v12519 = vpack.c.b16 %v12475, %v12474
    %v12520 = vpack.c.b16 %v12477, %v12476
    %v12521 = vpack.c.b16 %v12479, %v12478
    %v12522 = vpack.c.b16 %v12481, %v12480
    %v12523 = vpack.c.b16 %v12483, %v12482
    %v12524 = vpack.c.b16 %v12485, %v12484
    %v12525 = vpack.c.b16 %v12487, %v12486
    %v12526 = vpack.c.b16 %v12489, %v12488
    %v12527 = vpack.c.b16 %v12491, %v12490
    %v12528 = vpack.c.b16 %v12493, %v12492
    %v12529 = vpack.c.b16 %v12495, %v12494
    %v12530 = vpack.c.b16 %v12497, %v12496
    %v12531 = vpack.c.b16 %v12499, %v12498
    %12564 = vmatprep.subr.bf16.mxu0 0
    %12565 = vmatpush1.bf16.msra.mxu0 %v12507
    %12566 = vmatprep.subr.bf16.mxu0 0
    %12567 = vmatpush1.bf16.msra.mxu0 %v12506
    %12568 = vmatprep.subr.bf16.mxu0 0
    %12569 = vmatpush1.bf16.msra.mxu0 %v12505
    %12570 = vmatprep.subr.bf16.mxu0 0
    %12571 = vmatpush1.bf16.msra.mxu0 %v12504
    %12572 = vmatprep.subr.bf16.mxu0 0
    %12573 = vmatpush1.bf16.msra.mxu0 %v12503
    %12574 = vmatprep.subr.bf16.mxu0 0
    %12575 = vmatpush1.bf16.msra.mxu0 %v12502
    %12576 = vmatprep.subr.bf16.mxu0 0
    %12577 = vmatpush1.bf16.msra.mxu0 %v12501
    %12578 = vmatprep.subr.bf16.mxu0 0
    %12579 = vmatpush1.bf16.msra.mxu0 %v12500
    %12580 = vmatprep.subr.bf16.mxu0 0
    %12581 = vmatpush2.bf16.msra.mxu0 %v12515
    %12582 = vmatprep.subr.bf16.mxu0 0
    %12583 = vmatpush2.bf16.msra.mxu0 %v12514
    %12584 = vmatprep.subr.bf16.mxu0 0
    %12585 = vmatpush2.bf16.msra.mxu0 %v12513
    %12586 = vmatprep.subr.bf16.mxu0 0
    %12587 = vmatpush2.bf16.msra.mxu0 %v12512
    %12588 = vmatprep.subr.bf16.mxu0 0
    %12589 = vmatpush2.bf16.msra.mxu0 %v12511
    %12590 = vmatprep.subr.bf16.mxu0 0
    %12591 = vmatpush2.bf16.msra.mxu0 %v12510
    %12592 = vmatprep.subr.bf16.mxu0 0
    %12593 = vmatpush2.bf16.msra.mxu0 %v12509
    %12594 = vmatprep.subr.bf16.mxu0 0
    %12595 = vmatpush2.bf16.msra.mxu0 %v12508
    %12596 = vmatprep.mubr.bf16.mxu0 %v12305
    %12597 = vmatmul.mubr.bf16.gmra.mxu0 %v12304
    %v12598 = vpop.f32.mrf.mxu0
    %v12599 = vadd.f32 0.0, %v12598
    %v12600 = vpop.f32.mrf.mxu0
    %v12601 = vpop.f32.mrf.mxu0
    %v12602 = vadd.f32 0.0, %v12601
    %v12603 = vpop.f32.mrf.mxu0
    %12604 = vdwg.mxu0
    %12605 = vmatprep.subr.bf16.mxu0 0
    %12606 = vmatpush1.bf16.msra.mxu0 %v12523
    %12607 = vmatprep.subr.bf16.mxu0 0
    %12608 = vmatpush1.bf16.msra.mxu0 %v12522
    %12609 = vmatprep.subr.bf16.mxu0 0
    %12610 = vmatpush1.bf16.msra.mxu0 %v12521
    %12611 = vmatprep.subr.bf16.mxu0 0
    %12612 = vmatpush1.bf16.msra.mxu0 %v12520
    %12613 = vmatprep.subr.bf16.mxu0 0
    %12614 = vmatpush1.bf16.msra.mxu0 %v12519
    %12615 = vmatprep.subr.bf16.mxu0 0
    %12616 = vmatpush1.bf16.msra.mxu0 %v12518
    %12617 = vmatprep.subr.bf16.mxu0 0
    %12618 = vmatpush1.bf16.msra.mxu0 %v12517
    %12619 = vmatprep.subr.bf16.mxu0 0
    %12620 = vmatpush1.bf16.msra.mxu0 %v12516
    %12621 = vmatprep.subr.bf16.mxu0 0
    %12622 = vmatpush2.bf16.msra.mxu0 %v12531
    %12623 = vmatprep.subr.bf16.mxu0 0
    %12624 = vmatpush2.bf16.msra.mxu0 %v12530
    %12625 = vmatprep.subr.bf16.mxu0 0
    %12626 = vmatpush2.bf16.msra.mxu0 %v12529
    %12627 = vmatprep.subr.bf16.mxu0 0
    %12628 = vmatpush2.bf16.msra.mxu0 %v12528
    %12629 = vmatprep.subr.bf16.mxu0 0
    %12630 = vmatpush2.bf16.msra.mxu0 %v12527
    %12631 = vmatprep.subr.bf16.mxu0 0
    %12632 = vmatpush2.bf16.msra.mxu0 %v12526
    %12633 = vmatprep.subr.bf16.mxu0 0
    %12634 = vmatpush2.bf16.msra.mxu0 %v12525
    %12635 = vmatprep.subr.bf16.mxu0 0
    %12636 = vmatpush2.bf16.msra.mxu0 %v12524
    %12637 = vmatprep.mubr.bf16.mxu0 %v12307
    %12638 = vmatmul.mubr.bf16.gmra.mxu0 %v12306
    %v12639 = vpop.f32.mrf.mxu0
    %v12640 = vadd.f32 %v12599, %v12639
    %v12641 = vpop.f32.mrf.mxu0
    %v12642 = vpop.f32.mrf.mxu0
    %v12643 = vadd.f32 %v12602, %v12642
    %v12644 = vpop.f32.mrf.mxu0
    %12645 = vdwg.mxu0
    %v12646 = vadd.f32 %v10392, %v12640
    %v12647 = vadd.f32 %v10393, %v12643
    %v12648 = vld [vmem:[#allocation10] sm:$0x1]
    %v12650 = vlaneseq
    %v12651 = vshrl.u32 %v12650, 7
    %v12652 = vsub.s32 0, %v12651
    %v12653 = vrot.slane %v12648, %v12652
    %v12655 = vadd.f32 %v12646, %v12653
    %v12656 = vadd.f32 %v12647, %v12653
    %12657 = vst [vmem:[%s107] sm:$0xff] %v12655
    %12658 = vst [vmem:[%s107 + $0x8] sm:$0xff] %v12656
    %s12659 = sadd.s32 0, 0
    %s12660 = smul.u32 2, %s12659
    %p12661 = scmp.lt.s32.totalorder %s12660, 1
    %s12662 = scalar_select %p12661, %s12660, 1
    %s12663 = smul.addr %s12662, 8
    %s12664 = scalar_lea.vmem %s7, %s12663
    // Predicated region
    $region54: #{richboynet_forward.1} parent=1 // pred_check
      _
    $region55: #{richboynet_forward.1} parent=1 // pred_check_branch
      %12666 = sbr.rel (0) target = $region57
    $region56: #{richboynet_forward.1} parent=1 // pred_region
      %s12667 = sadd.s32 0, 0
      %s12668 = smul.u32 2, %s12667
    $region57: #{richboynet_forward.1} parent=1 // pred_fallthru
      _
    // Predicated region
    $region58: #{richboynet_forward.1} parent=1 // pred_check
      _
    $region59: #{richboynet_forward.1} parent=1 // pred_check_branch
      %12670 = sbr.rel (0) target = $region61
    $region60: #{richboynet_forward.1} parent=1 // pred_region
      %s12671 = sadd.s32 0, 0
      %s12672 = smul.u32 2, %s12671
      %p12673 = scmp.lt.s32.totalorder %s12672, 1
      %s12674 = scalar_select %p12673, %s12672, 1
      %s12675 = smul.addr %s12674, 8
      %s12676 = scalar_lea.vmem %s7, %s12675
    $region61: #{richboynet_forward.1} parent=1 // pred_fallthru
      _
    %12677 = vsyncpa [#allocation6], 1
    %12678 = vsyncpa [#allocation8], 1
    %12679 = vsyncpa [#allocation11], 1
  %12680 = vsyncmov [#allocation4]
  %s12681 = vpop.sfrf %12680
  %p12682 = scmp.eq.s32.totalorder %s12681, 0
  %p12683 = pneg %p12682
  %12685 = shalt.err (%p12683)
  %s12686 = scalar_lea.sflag [#allocation4], 1
  %12687 = vsyncmov %s12686
  %s12688 = vpop.sfrf %12687
  %p12689 = scmp.eq.s32.totalorder %s12688, 0
  %p12690 = pneg %p12689
  %12692 = shalt.err (%p12690)

</llo_original>
